<compile_context>
chip_gen: v7x
topology: tpu7x:2x2x1
jax: 0.10.0
libtpu: 0.0.40
codegen_flags: <defaults>
</compile_context>

<pallas_src>
import functools

import jax
import jax.numpy as jnp
from jax.experimental import pallas as pl
from jax.experimental.pallas import tpu as pltpu


# ----------------------------------------------------------------------------
# Pallas kernels
# ----------------------------------------------------------------------------
def _conv_gemm_kernel(x_ref, w_ref, b_ref, o_ref):
    """o = relu(x @ w + b).  x,w bf16 (MXU), f32 accumulate, bf16 out."""
    y = jnp.dot(x_ref[...], w_ref[...], preferred_element_type=jnp.float32)
    o_ref[...] = jnp.maximum(y + b_ref[...], 0.0).astype(o_ref.dtype)


def _convt_gemm_kernel(x_ref, b_ref, w_ref, o_ref):
    """Previous ConvT's per-channel bias + ReLU fused as a prologue, then the
    per-pixel ConvT GEMM x(M,Cin) @ w(Cin, k*k*Cout)."""
    x = jnp.maximum(x_ref[...].astype(jnp.float32) + b_ref[...], 0.0)
    o_ref[...] = jnp.dot(x.astype(jnp.bfloat16), w_ref[...],
                         preferred_element_type=jnp.float32).astype(o_ref.dtype)


def _fused_core_kernel(*refs, n_act):
    """One pallas_call fusing: encoder conv4 (GEMM+bias+ReLU), [mu|logsd]
    projection, reparameterization, shared-extractor ReLU, decoder dense+ReLU,
    decoder ConvT1 per-pixel GEMM (bias deferred to the next layer's prologue),
    and the block-diagonal policy|value heads with exact softmax."""
    n_heads = (len(refs) - 13) // 2
    (p4_ref, eps_ref, w4_ref, b4_ref, wml_ref, bml_ref,
     wdec_ref, bdec_ref, wct1_ref) = refs[:9]
    head_refs = refs[9:9 + 2 * n_heads]
    lat_ref, pi_ref, val_ref, y1_ref = refs[9 + 2 * n_heads:]

    bs = eps_ref.shape[0]
    zdim = eps_ref.shape[1]
    s_enc = p4_ref.shape[0] // bs          # encoder conv4 output pixels
    c0 = wct1_ref.shape[0]                 # decoder ConvT1 in-channels
    s_dec = wdec_ref.shape[1] // c0        # decoder init-grid pixels

    # ---- encoder conv4: GEMM per output pixel (rows pre-ordered (pixel, batch))
    w4 = w4_ref[...]
    b4 = b4_ref[...]
    h4_parts = []
    for s in range(s_enc):
        p_s = p4_ref[pl.ds(s * bs, bs), :]                      # (B, k*k*Cin) bf16
        h4_parts.append(jnp.maximum(
            jnp.dot(p_s, w4, preferred_element_type=jnp.float32) + b4, 0.0))
    # lane-concatenate per-pixel features -> (B, s_enc*C4), matches w_ml row order
    h4w = jnp.concatenate(h4_parts, axis=1).astype(jnp.bfloat16)

    # ---- fused [mu | logsd] projection ----
    lat = jnp.dot(h4w, wml_ref[...],
                  preferred_element_type=jnp.float32) + bml_ref[...]
    lat_ref[...] = lat                                          # latent = [mu | logsd]

    mu = lat[:, :zdim]
    logsd = lat[:, zdim:]
    z = eps_ref[...] * jnp.exp(logsd) + mu                      # reparameterize
    zr = jnp.maximum(z, 0.0)                                    # shared_extractor=ReLU

    # ---- decoder dense + ReLU (columns pre-ordered (pixel, channel)) ----
    hdec = jnp.dot(z.astype(jnp.bfloat16), wdec_ref[...],
                   preferred_element_type=jnp.float32) + bdec_ref[...]
    hdec = jnp.maximum(hdec, 0.0)                               # (B, s_dec*C0)

    # ---- decoder ConvT1 as one per-pixel GEMM (bias+ReLU deferred to ConvT2) ----
    x_pix = jnp.concatenate(
        [hdec[:, s * c0:(s + 1) * c0] for s in range(s_dec)], axis=0)   # (s_dec*B, C0)
    y1_ref[...] = jnp.dot(x_pix.astype(jnp.bfloat16), wct1_ref[...],
                          preferred_element_type=jnp.float32).astype(y1_ref.dtype)

    # ---- block-diagonal policy|value heads ----
    h = zr
    for li in range(n_heads):
        h = jnp.dot(h.astype(jnp.bfloat16), head_refs[2 * li][...],
                    preferred_element_type=jnp.float32) + head_refs[2 * li + 1][...]
        if li < n_heads - 1:
            h = jnp.maximum(h, 0.0)
    logits = h[:, :n_act]
    logits = logits - jnp.max(logits, axis=-1, keepdims=True)
    e = jnp.exp(logits)
    pi_ref[...] = e / jnp.sum(e, axis=-1, keepdims=True)        # exact softmax
    val_ref[...] = h[:, n_act:]


# ----------------------------------------------------------------------------
# Pallas wrappers (whole-array blocks: no grid splits on these tiny GEMMs)
# ----------------------------------------------------------------------------
def conv_gemm(x, w, b):
    """relu(x @ w + b): x (M,K) bf16, w (K,N) bf16, b (1,N) f32 -> (M,N) bf16."""
    return pl.pallas_call(
        _conv_gemm_kernel,
        out_shape=jax.ShapeDtypeStruct((x.shape[0], w.shape[1]), jnp.bfloat16),
    )(x, w, b)


def convt_gemm(x, prev_bias, w, out_dtype):
    """Per-pixel ConvT GEMM with the previous ConvT's bias+ReLU as a prologue."""
    return pl.pallas_call(
        _convt_gemm_kernel,
        out_shape=jax.ShapeDtypeStruct((x.shape[0], w.shape[1]), out_dtype),
    )(x, prev_bias, w)


def fused_core(pp, patches4, eps, n_act):
    bs, zdim = eps.shape
    n_val = pp["heads"][-1][0].shape[1] - n_act
    w_ct1 = pp["dec"][0][0]
    s_dec = pp["w_dec"].shape[1] // w_ct1.shape[0]
    args = [patches4, eps, pp["w4"], pp["b4"], pp["w_ml"], pp["b_ml"],
            pp["w_dec"], pp["b_dec"], w_ct1]
    for w, b in pp["heads"]:
        args += [w, b]
    return pl.pallas_call(
        functools.partial(_fused_core_kernel, n_act=n_act),
        out_shape=(
            jax.ShapeDtypeStruct((bs, 2 * zdim), jnp.float32),           # latent
            jax.ShapeDtypeStruct((bs, n_act), jnp.float32),              # act_dist
            jax.ShapeDtypeStruct((bs, n_val), jnp.float32),              # value (2-D)
            jax.ShapeDtypeStruct((s_dec * bs, w_ct1.shape[1]), jnp.bfloat16),  # ConvT1
        ),
        compiler_params=pltpu.CompilerParams(vmem_limit_bytes=32 * 1024 * 1024),
    )(*args)


# ----------------------------------------------------------------------------
# XLA glue: im2col (encoder) and col2im overlap-add (decoder ConvT), on bf16
# ----------------------------------------------------------------------------
def _im2col(x, k, stride, pad):
    """x: (N,H,W,C) -> patches (N,OH,OW,k*k*C), flatten order (kh, kw, ci)."""
    n, h, w, c = x.shape
    xp = jnp.pad(x, ((0, 0), (pad, pad), (pad, pad), (0, 0)))
    oh = (h + 2 * pad - k) // stride + 1
    ow = (w + 2 * pad - k) // stride + 1
    cols = []
    for kh in range(k):
        for kw in range(k):
            cols.append(xp[:, kh:kh + stride * oh:stride, kw:kw + stride * ow:stride, :])
    patches = jnp.stack(cols, axis=3)            # (N, OH, OW, k*k, C)
    return patches.reshape(n, oh, ow, k * k * c), oh, ow


def _col2im_stride2(y6):
    """Overlap-add of per-pixel 4x4 tap blocks for ConvTranspose2d(k=4,s=2,p=1).

    y6: (B, h, w, 4, 4, C) with tap order (kh, kw).  Output pixel
    (2i-1+kh, 2j-1+kw) accumulates tap (kh, kw) of input pixel (i, j).
    Returns (B, 2h, 2w, C) (bias / activation NOT applied)."""
    bsz, h, w = y6.shape[0], y6.shape[1], y6.shape[2]
    c = y6.shape[-1]
    t0, t1, t2, t3 = (y6[:, :, :, k] for k in range(4))
    zr = jnp.zeros_like(t0[:, :1])
    even = t1 + jnp.concatenate([zr, t3[:, :-1]], axis=1)
    odd = t2 + jnp.concatenate([t0[:, 1:], zr], axis=1)
    yr = jnp.stack([even, odd], axis=2).reshape(bsz, 2 * h, w, 4, c)
    s0, s1, s2, s3 = (yr[:, :, :, k] for k in range(4))
    zc = jnp.zeros_like(s0[:, :, :1])
    evenc = s1 + jnp.concatenate([zc, s3[:, :, :-1]], axis=2)
    oddc = s2 + jnp.concatenate([s0[:, :, 1:], zc], axis=2)
    return jnp.stack([evenc, oddc], axis=3).reshape(bsz, 2 * h, 2 * w, c)


# ----------------------------------------------------------------------------
# Deterministic parameter init (PyTorch-style uniform fan-in bounds)
# ----------------------------------------------------------------------------
def _uniform(key, shape, bound):
    return jax.random.uniform(key, shape, jnp.float32, -bound, bound)


def _init_linear(key, n_in, n_out):
    kw, kb = jax.random.split(key)
    bound = 1.0 / (n_in ** 0.5)
    return _uniform(kw, (n_out, n_in), bound), _uniform(kb, (n_out,), bound)


def _init_conv(key, c_in, c_out, k=4):
    kw, kb = jax.random.split(key)
    bound = 1.0 / ((c_in * k * k) ** 0.5)
    return _uniform(kw, (c_out, c_in, k, k), bound), _uniform(kb, (c_out,), bound)


def _init_convT(key, c_in, c_out, k=4):
    kw, kb = jax.random.split(key)
    bound = 1.0 / ((c_out * k * k) ** 0.5)
    return _uniform(kw, (c_in, c_out, k, k), bound), _uniform(kb, (c_out,), bound)


def init_params(key, zdim, img_shape, enc_dims, dec_dims, policy_layers, value_layers):
    c, h, _ = img_shape
    keys = iter(jax.random.split(key, 64))
    params = {}

    enc, cin = [], c
    for hd in enc_dims:
        enc.append(_init_conv(next(keys), cin, hd))
        cin = hd
    params["enc_convs"] = enc
    c_enc = (h // 2 ** len(enc_dims)) ** 2
    params["mu"] = _init_linear(next(keys), enc_dims[-1] * c_enc, zdim)
    params["logsd"] = _init_linear(next(keys), enc_dims[-1] * c_enc, zdim)

    init_dim = h // 2 ** len(dec_dims)
    params["dec_lin"] = _init_linear(next(keys), zdim, init_dim * init_dim * dec_dims[0])
    dec, cin = [], dec_dims[0]
    for hd in dec_dims[1:]:
        dec.append(_init_convT(next(keys), cin, hd))
        cin = hd
    dec.append(_init_convT(next(keys), cin, c))
    params["dec_convs"] = dec

    pol, last = [], zdim
    for l in policy_layers:
        pol.append(_init_linear(next(keys), last, l))
        last = l
    params["policy"] = pol

    val, last = [], zdim
    for l in value_layers:
        val.append(_init_linear(next(keys), last, l))
        last = l
    params["value"] = val
    return params


def preprocess_params(params):
    """One-time (outside jit) relayout of PyTorch-layout params into kernel-ready
    layouts.  All matmul weights are bf16 (f32 MXU accumulation); biases are f32
    (1, N) rows.  mu/logsd and decoder-dense weights are permuted from PyTorch's
    NCHW flatten order (channel, pixel) to the kernel's (pixel, channel) order,
    and the policy/value heads are merged into block-diagonal per-layer GEMMs."""
    pp = {}
    enc = params["enc_convs"]
    # encoder convs 1..n-1: (Cout,Cin,k,k) -> (k*k*Cin, Cout), row order (kh,kw,ci)
    pp["enc"] = [
        (jnp.transpose(W, (2, 3, 1, 0)).reshape(-1, W.shape[0]).astype(jnp.bfloat16),
         b.reshape(1, -1).astype(jnp.float32))
        for (W, b) in enc[:-1]
    ]
    # last encoder conv is fused into the core kernel
    W4, b4 = enc[-1]
    c4 = W4.shape[0]
    pp["w4"] = jnp.transpose(W4, (2, 3, 1, 0)).reshape(-1, c4).astype(jnp.bfloat16)
    pp["b4"] = b4.reshape(1, -1).astype(jnp.float32)

    # mu/logsd fused into one projection; rows reordered (channel,pixel)->(pixel,channel)
    Wm, bm = params["mu"]
    Ws, bs_ = params["logsd"]
    zdim = Wm.shape[0]
    s_enc = Wm.shape[1] // c4
    wml = jnp.concatenate([Wm.T, Ws.T], axis=1)                       # rows (c, s)
    wml = wml.reshape(c4, s_enc, 2 * zdim).transpose(1, 0, 2).reshape(-1, 2 * zdim)
    pp["w_ml"] = wml.astype(jnp.bfloat16)
    pp["b_ml"] = jnp.concatenate([bm, bs_]).reshape(1, -1).astype(jnp.float32)

    # decoder dense: columns reordered (channel, pixel) -> (pixel, channel)
    Wl, bl = params["dec_lin"]
    dec = params["dec_convs"]
    c0 = dec[0][0].shape[0]
    s_dec = Wl.shape[0] // c0
    wdec = Wl.T.reshape(zdim, c0, s_dec).transpose(0, 2, 1).reshape(zdim, -1)
    pp["w_dec"] = wdec.astype(jnp.bfloat16)
    pp["b_dec"] = bl.reshape(c0, s_dec).T.reshape(1, -1).astype(jnp.float32)

    # decoder ConvT weights: (Cin,Cout,k,k) -> (Cin, k*k*Cout), col order (kh,kw,co)
    # TODO(synk): per-generation int8/fp8 weight quantization of enc[-1]/dec[0]
    # (v5e/v6e int8, v7x fp8) not implemented; bf16 is kept for portability.
    pp["dec"] = [
        (jnp.transpose(W, (0, 2, 3, 1)).reshape(W.shape[0], -1).astype(jnp.bfloat16),
         b.reshape(1, -1).astype(jnp.float32))
        for (W, b) in dec
    ]

    # policy / value heads fused into block-diagonal per-layer GEMMs
    pol, val = params["policy"], params["value"]
    assert len(pol) == len(val), "fused heads assume equal policy/value depth"
    heads = []
    in_p = in_v = zdim
    for li, ((Wp, bp), (Wv, bv)) in enumerate(zip(pol, val)):
        op, ov = Wp.shape[0], Wv.shape[0]
        if li == 0:
            W = jnp.concatenate([Wp.T, Wv.T], axis=1)
        else:
            W = jnp.zeros((in_p + in_v, op + ov), jnp.float32)
            W = W.at[:in_p, :op].set(Wp.T)
            W = W.at[in_p:, op:].set(Wv.T)
        b = jnp.concatenate([bp, bv]).reshape(1, -1)
        heads.append((W.astype(jnp.bfloat16), b.astype(jnp.float32)))
        in_p, in_v = op, ov
    pp["heads"] = heads
    return pp


# ----------------------------------------------------------------------------
# VaePolicy forward (arch_type=0, noise_prob=0, rae=False, greyscale=False,
# deterministic=False, shared_layers=[])
# ----------------------------------------------------------------------------
def vae_policy_forward(pp, observation, eps, *, n_act):
    """observation: (B, H, W, C) uint8 (lead_dim=1 case of infer_leading_dims).
    Returns (act_dist, value, latent, reconstruction(NCHW), noise_idx=None)."""
    bs = observation.shape[0]
    obs = (observation.astype(jnp.float32) / 255.0).astype(jnp.bfloat16)   # NHWC bf16

    # ---- Encoder convs 1..n-1: bf16 im2col glue + fused Pallas GEMM+bias+ReLU ----
    # TODO(synk): fold the 16-tap im2col into the Pallas conv kernel itself to drop
    # the per-layer patch HBM round trip entirely.
    x = obs
    for w, b in pp["enc"]:
        patches, oh, ow = _im2col(x, 4, 2, 1)
        y = conv_gemm(patches.reshape(bs * oh * ow, -1), w, b)
        x = y.reshape(bs, oh, ow, w.shape[1])

    # Last encoder conv feeds the fused core kernel; rows ordered (pixel, batch).
    patches, oh, ow = _im2col(x, 4, 2, 1)
    p4 = jnp.transpose(patches, (1, 2, 0, 3)).reshape(oh * ow * bs, -1)

    # ---- One fused kernel: conv4, mu/logsd, reparam, dense, ConvT1, both heads ----
    latent, act_dist, val2d, y1 = fused_core(pp, p4, eps, n_act)

    # ---- Decoder tail: col2im for ConvT1, then 3x [Pallas GEMM + XLA col2im] ----
    c1 = pp["dec"][0][0].shape[1] // 16
    s_dec = pp["w_dec"].shape[1] // pp["dec"][0][0].shape[0]
    init_dim = int(round(s_dec ** 0.5))
    y6 = y1.reshape(init_dim, init_dim, bs, 4, 4, c1)          # rows were (i, j, b)
    xd = _col2im_stride2(jnp.transpose(y6, (2, 0, 1, 3, 4, 5)))
    n_dec = len(pp["dec"])
    for li in range(1, n_dec):
        w, _ = pp["dec"][li]
        prev_b = pp["dec"][li - 1][1]              # previous bias+ReLU as prologue
        cout = w.shape[1] // 16
        hh, ww = xd.shape[1], xd.shape[2]
        out_dtype = jnp.float32 if li == n_dec - 1 else jnp.bfloat16
        y = convt_gemm(xd.reshape(bs * hh * ww, xd.shape[3]), prev_b, w, out_dtype)
        xd = _col2im_stride2(y.reshape(bs, hh, ww, 4, 4, cout))
    # TODO(synk): fuse col2im (shift-add) + prologue into a single Pallas decoder
    # kernel so the ConvT intermediates never leave VMEM.
    rec = jax.nn.sigmoid(xd.astype(jnp.float32) + pp["dec"][-1][1].reshape(1, 1, 1, -1))
    reconstruction = jnp.transpose(rec, (0, 3, 1, 2))          # NCHW like PyTorch

    value = val2d[:, 0]                                        # squeeze(-1)
    noise_idx = None
    # TODO(synk): salt_and_pepper noise path (noise_prob>0) uses host-side numpy RNG
    # indices; not implemented for the default noise_prob=0.0.  greyscale=False only.
    return act_dist, value, latent, reconstruction, noise_idx


# ----------------------------------------------------------------------------
if __name__ == "__main__":
    key = jax.random.PRNGKey(0)
    kp, kobs, keps = jax.random.split(key, 3)

    B, H, W, C = 2, 32, 32, 3          # small image consistent with 4 stride-2 convs
    zdim = 16
    enc_dims = [32, 64, 128, 256]
    dec_dims = [256, 128, 64, 32]
    policy_layers = [64, 64, 15]
    value_layers = [64, 64, 1]

    params = init_params(kp, zdim, (C, H, W), enc_dims, dec_dims,
                         policy_layers, value_layers)
    pp = preprocess_params(params)     # weight relayout done once, outside jit

    observation = jax.random.randint(kobs, (B, H, W, C), 0, 256, jnp.int32).astype(jnp.uint8)
    eps = jax.random.normal(keps, (B, zdim), jnp.float32)      # torch.randn([bs, zdim])

    fwd = jax.jit(functools.partial(vae_policy_forward, n_act=policy_layers[-1]))
    act_dist, value, latent, recon, noise_idx = fwd(pp, observation, eps)
    jax.block_until_ready((act_dist, value, latent, recon))

    assert act_dist.shape == (B, policy_layers[-1])
    assert value.shape == (B,)
    assert latent.shape == (B, 2 * zdim)
    assert recon.shape == (B, C, H, W)
    assert noise_idx is None
    assert bool(jnp.all(jnp.isfinite(act_dist)))
    assert bool(jnp.all((recon >= 0.0) & (recon <= 1.0)))
    print("KERNEL_OK")
</pallas_src>

<mosaic_0001>
module attributes {stable_mosaic.version = 11 : i64} {
  func.func @_conv_gemm_kernel(%arg0: memref<512x48xbf16, #tpu.memory_space<vmem>>, %arg1: memref<48x32xbf16, #tpu.memory_space<vmem>>, %arg2: memref<1x32xf32, #tpu.memory_space<vmem>>, %arg3: memref<512x32xbf16, #tpu.memory_space<vmem>>) attributes {dimension_semantics = [], scalar_prefetch = 0 : i64, scratch_operands = 0 : i64, tpu.core_type = #tpu.core_type<tc>} {
    %c0 = arith.constant 0 : index
    %c0_0 = arith.constant 0 : index
    %0 = vector.load %arg0[%c0, %c0_0] : memref<512x48xbf16, #tpu.memory_space<vmem>>, vector<512x48xbf16>
    %c0_1 = arith.constant 0 : index
    %c0_2 = arith.constant 0 : index
    %1 = vector.load %arg1[%c0_1, %c0_2] : memref<48x32xbf16, #tpu.memory_space<vmem>>, vector<48x32xbf16>
    %cst = arith.constant dense<0.000000e+00> : vector<512x32xf32>
    %2 = tpu.matmul %0, %1, %cst {dimension_numbers = #tpu.dot_dimension_numbers<[1], [0], [0], [1], [0, 0, 1, 1], [], []>} : vector<512x48xbf16>, vector<48x32xbf16>, vector<512x32xf32> -> vector<512x32xf32>
    %c0_3 = arith.constant 0 : index
    %c0_4 = arith.constant 0 : index
    %3 = vector.load %arg2[%c0_3, %c0_4] : memref<1x32xf32, #tpu.memory_space<vmem>>, vector<1x32xf32>
    %4 = vector.broadcast %3 : vector<1x32xf32> to vector<512x32xf32>
    %5 = arith.addf %2, %4 : vector<512x32xf32>
    %cst_5 = arith.constant 0.000000e+00 : f32
    %6 = vector.broadcast %cst_5 : f32 to vector<512x32xf32>
    %7 = arith.maximumf %5, %6 : vector<512x32xf32>
    %8 = arith.truncf %7 : vector<512x32xf32> to vector<512x32xbf16>
    %c0_6 = arith.constant 0 : index
    %c0_7 = arith.constant 0 : index
    %9 = vector.load %arg3[%c0_6, %c0_7] : memref<512x32xbf16, #tpu.memory_space<vmem>>, vector<512x32xbf16>
    tpu.vector_store %arg3[%c0_6, %c0_7], %8 {strides = array<i32>} : memref<512x32xbf16, #tpu.memory_space<vmem>>, vector<512x32xbf16>,
    return
  }
}

module attributes {stable_mosaic.version = 11 : i64} {
  func.func @_conv_gemm_kernel(%arg0: memref<128x512xbf16, #tpu.memory_space<vmem>>, %arg1: memref<512x64xbf16, #tpu.memory_space<vmem>>, %arg2: memref<1x64xf32, #tpu.memory_space<vmem>>, %arg3: memref<128x64xbf16, #tpu.memory_space<vmem>>) attributes {dimension_semantics = [], scalar_prefetch = 0 : i64, scratch_operands = 0 : i64, tpu.core_type = #tpu.core_type<tc>} {
    %c0 = arith.constant 0 : index
    %c0_0 = arith.constant 0 : index
    %0 = vector.load %arg0[%c0, %c0_0] : memref<128x512xbf16, #tpu.memory_space<vmem>>, vector<128x512xbf16>
    %c0_1 = arith.constant 0 : index
    %c0_2 = arith.constant 0 : index
    %1 = vector.load %arg1[%c0_1, %c0_2] : memref<512x64xbf16, #tpu.memory_space<vmem>>, vector<512x64xbf16>
    %cst = arith.constant dense<0.000000e+00> : vector<128x64xf32>
    %2 = tpu.matmul %0, %1, %cst {dimension_numbers = #tpu.dot_dimension_numbers<[1], [0], [0], [1], [0, 0, 1, 1], [], []>} : vector<128x512xbf16>, vector<512x64xbf16>, vector<128x64xf32> -> vector<128x64xf32>
    %c0_3 = arith.constant 0 : index
    %c0_4 = arith.constant 0 : index
    %3 = vector.load %arg2[%c0_3, %c0_4] : memref<1x64xf32, #tpu.memory_space<vmem>>, vector<1x64xf32>
    %4 = vector.broadcast %3 : vector<1x64xf32> to vector<128x64xf32>
    %5 = arith.addf %2, %4 : vector<128x64xf32>
    %cst_5 = arith.constant 0.000000e+00 : f32
    %6 = vector.broadcast %cst_5 : f32 to vector<128x64xf32>
    %7 = arith.maximumf %5, %6 : vector<128x64xf32>
    %8 = arith.truncf %7 : vector<128x64xf32> to vector<128x64xbf16>
    %c0_6 = arith.constant 0 : index
    %c0_7 = arith.constant 0 : index
    %9 = vector.load %arg3[%c0_6, %c0_7] : memref<128x64xbf16, #tpu.memory_space<vmem>>, vector<128x64xbf16>
    tpu.vector_store %arg3[%c0_6, %c0_7], %8 {strides = array<i32>} : memref<128x64xbf16, #tpu.memory_space<vmem>>, vector<128x64xbf16>,
    return
  }
}

module attributes {stable_mosaic.version = 11 : i64} {
  func.func @_conv_gemm_kernel(%arg0: memref<32x1024xbf16, #tpu.memory_space<vmem>>, %arg1: memref<1024x128xbf16, #tpu.memory_space<vmem>>, %arg2: memref<1x128xf32, #tpu.memory_space<vmem>>, %arg3: memref<32x128xbf16, #tpu.memory_space<vmem>>) attributes {dimension_semantics = [], scalar_prefetch = 0 : i64, scratch_operands = 0 : i64, tpu.core_type = #tpu.core_type<tc>} {
    %c0 = arith.constant 0 : index
    %c0_0 = arith.constant 0 : index
    %0 = vector.load %arg0[%c0, %c0_0] : memref<32x1024xbf16, #tpu.memory_space<vmem>>, vector<32x1024xbf16>
    %c0_1 = arith.constant 0 : index
    %c0_2 = arith.constant 0 : index
    %1 = vector.load %arg1[%c0_1, %c0_2] : memref<1024x128xbf16, #tpu.memory_space<vmem>>, vector<1024x128xbf16>
    %cst = arith.constant dense<0.000000e+00> : vector<32x128xf32>
    %2 = tpu.matmul %0, %1, %cst {dimension_numbers = #tpu.dot_dimension_numbers<[1], [0], [0], [1], [0, 0, 1, 1], [], []>} : vector<32x1024xbf16>, vector<1024x128xbf16>, vector<32x128xf32> -> vector<32x128xf32>
    %c0_3 = arith.constant 0 : index
    %c0_4 = arith.constant 0 : index
    %3 = vector.load %arg2[%c0_3, %c0_4] : memref<1x128xf32, #tpu.memory_space<vmem>>, vector<1x128xf32>
    %4 = vector.broadcast %3 : vector<1x128xf32> to vector<32x128xf32>
    %5 = arith.addf %2, %4 : vector<32x128xf32>
    %cst_5 = arith.constant 0.000000e+00 : f32
    %6 = vector.broadcast %cst_5 : f32 to vector<32x128xf32>
    %7 = arith.maximumf %5, %6 : vector<32x128xf32>
    %8 = arith.truncf %7 : vector<32x128xf32> to vector<32x128xbf16>
    %c0_6 = arith.constant 0 : index
    %c0_7 = arith.constant 0 : index
    %9 = vector.load %arg3[%c0_6, %c0_7] : memref<32x128xbf16, #tpu.memory_space<vmem>>, vector<32x128xbf16>
    tpu.vector_store %arg3[%c0_6, %c0_7], %8 {strides = array<i32>} : memref<32x128xbf16, #tpu.memory_space<vmem>>, vector<32x128xbf16>,
    return
  }
}

module attributes {stable_mosaic.version = 11 : i64} {
  func.func @_fused_core_kernel(%arg0: memref<8x2048xbf16, #tpu.memory_space<vmem>>, %arg1: memref<2x16xf32, #tpu.memory_space<vmem>>, %arg2: memref<2048x256xbf16, #tpu.memory_space<vmem>>, %arg3: memref<1x256xf32, #tpu.memory_space<vmem>>, %arg4: memref<1024x32xbf16, #tpu.memory_space<vmem>>, %arg5: memref<1x32xf32, #tpu.memory_space<vmem>>, %arg6: memref<16x1024xbf16, #tpu.memory_space<vmem>>, %arg7: memref<1x1024xf32, #tpu.memory_space<vmem>>, %arg8: memref<256x2048xbf16, #tpu.memory_space<vmem>>, %arg9: memref<16x128xbf16, #tpu.memory_space<vmem>>, %arg10: memref<1x128xf32, #tpu.memory_space<vmem>>, %arg11: memref<128x128xbf16, #tpu.memory_space<vmem>>, %arg12: memref<1x128xf32, #tpu.memory_space<vmem>>, %arg13: memref<128x16xbf16, #tpu.memory_space<vmem>>, %arg14: memref<1x16xf32, #tpu.memory_space<vmem>>, %arg15: memref<2x32xf32, #tpu.memory_space<vmem>>, %arg16: memref<2x15xf32, #tpu.memory_space<vmem>>, %arg17: memref<2x1xf32, #tpu.memory_space<vmem>>, %arg18: memref<8x2048xbf16, #tpu.memory_space<vmem>>) attributes {dimension_semantics = [], scalar_prefetch = 0 : i64, scratch_operands = 0 : i64, tpu.core_type = #tpu.core_type<tc>} {
    %c0 = arith.constant 0 : index
    %c0_0 = arith.constant 0 : index
    %0 = vector.load %arg2[%c0, %c0_0] : memref<2048x256xbf16, #tpu.memory_space<vmem>>, vector<2048x256xbf16>
    %c0_1 = arith.constant 0 : index
    %c0_2 = arith.constant 0 : index
    %1 = vector.load %arg3[%c0_1, %c0_2] : memref<1x256xf32, #tpu.memory_space<vmem>>, vector<1x256xf32>
    %c0_3 = arith.constant 0 : index
    %c0_4 = arith.constant 0 : index
    %2 = vector.load %arg0[%c0_3, %c0_4] : memref<8x2048xbf16, #tpu.memory_space<vmem>>, vector<2x2048xbf16>
    %cst = arith.constant dense<0.000000e+00> : vector<2x256xf32>
    %3 = tpu.matmul %2, %0, %cst {dimension_numbers = #tpu.dot_dimension_numbers<[1], [0], [0], [1], [0, 0, 1, 1], [], []>} : vector<2x2048xbf16>, vector<2048x256xbf16>, vector<2x256xf32> -> vector<2x256xf32>
    %4 = vector.broadcast %1 : vector<1x256xf32> to vector<2x256xf32>
    %5 = arith.addf %3, %4 : vector<2x256xf32>
    %cst_5 = arith.constant 0.000000e+00 : f32
    %6 = vector.broadcast %cst_5 : f32 to vector<2x256xf32>
    %7 = arith.maximumf %5, %6 : vector<2x256xf32>
    %c2 = arith.constant 2 : index
    %c0_6 = arith.constant 0 : index
    %8 = vector.load %arg0[%c2, %c0_6] : memref<8x2048xbf16, #tpu.memory_space<vmem>>, vector<2x2048xbf16>
    %cst_7 = arith.constant dense<0.000000e+00> : vector<2x256xf32>
    %9 = tpu.matmul %8, %0, %cst_7 {dimension_numbers = #tpu.dot_dimension_numbers<[1], [0], [0], [1], [0, 0, 1, 1], [], []>} : vector<2x2048xbf16>, vector<2048x256xbf16>, vector<2x256xf32> -> vector<2x256xf32>
    %10 = vector.broadcast %1 : vector<1x256xf32> to vector<2x256xf32>
    %11 = arith.addf %9, %10 : vector<2x256xf32>
    %cst_8 = arith.constant 0.000000e+00 : f32
    %12 = vector.broadcast %cst_8 : f32 to vector<2x256xf32>
    %13 = arith.maximumf %11, %12 : vector<2x256xf32>
    %c4 = arith.constant 4 : index
    %c0_9 = arith.constant 0 : index
    %14 = vector.load %arg0[%c4, %c0_9] : memref<8x2048xbf16, #tpu.memory_space<vmem>>, vector<2x2048xbf16>
    %cst_10 = arith.constant dense<0.000000e+00> : vector<2x256xf32>
    %15 = tpu.matmul %14, %0, %cst_10 {dimension_numbers = #tpu.dot_dimension_numbers<[1], [0], [0], [1], [0, 0, 1, 1], [], []>} : vector<2x2048xbf16>, vector<2048x256xbf16>, vector<2x256xf32> -> vector<2x256xf32>
    %16 = vector.broadcast %1 : vector<1x256xf32> to vector<2x256xf32>
    %17 = arith.addf %15, %16 : vector<2x256xf32>
    %cst_11 = arith.constant 0.000000e+00 : f32
    %18 = vector.broadcast %cst_11 : f32 to vector<2x256xf32>
    %19 = arith.maximumf %17, %18 : vector<2x256xf32>
    %c6 = arith.constant 6 : index
    %c0_12 = arith.constant 0 : index
    %20 = vector.load %arg0[%c6, %c0_12] : memref<8x2048xbf16, #tpu.memory_space<vmem>>, vector<2x2048xbf16>
    %cst_13 = arith.constant dense<0.000000e+00> : vector<2x256xf32>
    %21 = tpu.matmul %20, %0, %cst_13 {dimension_numbers = #tpu.dot_dimension_numbers<[1], [0], [0], [1], [0, 0, 1, 1], [], []>} : vector<2x2048xbf16>, vector<2048x256xbf16>, vector<2x256xf32> -> vector<2x256xf32>
    %22 = vector.broadcast %1 : vector<1x256xf32> to vector<2x256xf32>
    %23 = arith.addf %21, %22 : vector<2x256xf32>
    %cst_14 = arith.constant 0.000000e+00 : f32
    %24 = vector.broadcast %cst_14 : f32 to vector<2x256xf32>
    %25 = arith.maximumf %23, %24 : vector<2x256xf32>
    %26 = tpu.concatenate %7, %13, %19, %25 in 1 : vector<2x256xf32>, vector<2x256xf32>, vector<2x256xf32>, vector<2x256xf32> -> vector<2x1024xf32>
    %27 = arith.truncf %26 : vector<2x1024xf32> to vector<2x1024xbf16>
    %c0_15 = arith.constant 0 : index
    %c0_16 = arith.constant 0 : index
    %28 = vector.load %arg4[%c0_15, %c0_16] : memref<1024x32xbf16, #tpu.memory_space<vmem>>, vector<1024x32xbf16>
    %cst_17 = arith.constant dense<0.000000e+00> : vector<2x32xf32>
    %29 = tpu.matmul %27, %28, %cst_17 {dimension_numbers = #tpu.dot_dimension_numbers<[1], [0], [0], [1], [0, 0, 1, 1], [], []>} : vector<2x1024xbf16>, vector<1024x32xbf16>, vector<2x32xf32> -> vector<2x32xf32>
    %c0_18 = arith.constant 0 : index
    %c0_19 = arith.constant 0 : index
    %30 = vector.load %arg5[%c0_18, %c0_19] : memref<1x32xf32, #tpu.memory_space<vmem>>, vector<1x32xf32>
    %31 = vector.broadcast %30 : vector<1x32xf32> to vector<2x32xf32>
    %32 = arith.addf %29, %31 : vector<2x32xf32>
    %c0_20 = arith.constant 0 : index
    %c0_21 = arith.constant 0 : index
    %33 = vector.load %arg15[%c0_20, %c0_21] : memref<2x32xf32, #tpu.memory_space<vmem>>, vector<2x32xf32>
    tpu.vector_store %arg15[%c0_20, %c0_21], %32 {strides = array<i32>} : memref<2x32xf32, #tpu.memory_space<vmem>>, vector<2x32xf32>,
    %34 = vector.extract_strided_slice %32 {offsets = [0, 0], sizes = [2, 16], strides = [1, 1]} : vector<2x32xf32> to vector<2x16xf32>
    %35 = vector.extract_strided_slice %32 {offsets = [0, 16], sizes = [2, 16], strides = [1, 1]} : vector<2x32xf32> to vector<2x16xf32>
    %c0_22 = arith.constant 0 : index
    %c0_23 = arith.constant 0 : index
    %36 = vector.load %arg1[%c0_22, %c0_23] : memref<2x16xf32, #tpu.memory_space<vmem>>, vector<2x16xf32>
    %37 = math.exp %35 : vector<2x16xf32>
    %38 = arith.mulf %36, %37 : vector<2x16xf32>
    %39 = arith.addf %38, %34 : vector<2x16xf32>
    %cst_24 = arith.constant 0.000000e+00 : f32
    %40 = vector.broadcast %cst_24 : f32 to vector<2x16xf32>
    %41 = arith.maximumf %39, %40 : vector<2x16xf32>
    %42 = arith.truncf %39 : vector<2x16xf32> to vector<2x16xbf16>
    %c0_25 = arith.constant 0 : index
    %c0_26 = arith.constant 0 : index
    %43 = vector.load %arg6[%c0_25, %c0_26] : memref<16x1024xbf16, #tpu.memory_space<vmem>>, vector<16x1024xbf16>
    %cst_27 = arith.constant dense<0.000000e+00> : vector<2x1024xf32>
    %44 = tpu.matmul %42, %43, %cst_27 {dimension_numbers = #tpu.dot_dimension_numbers<[1], [0], [0], [1], [0, 0, 1, 1], [], []>} : vector<2x16xbf16>, vector<16x1024xbf16>, vector<2x1024xf32> -> vector<2x1024xf32>
    %c0_28 = arith.constant 0 : index
    %c0_29 = arith.constant 0 : index
    %45 = vector.load %arg7[%c0_28, %c0_29] : memref<1x1024xf32, #tpu.memory_space<vmem>>, vector<1x1024xf32>
    %46 = vector.broadcast %45 : vector<1x1024xf32> to vector<2x1024xf32>
    %47 = arith.addf %44, %46 : vector<2x1024xf32>
    %cst_30 = arith.constant 0.000000e+00 : f32
    %48 = vector.broadcast %cst_30 : f32 to vector<2x1024xf32>
    %49 = arith.maximumf %47, %48 : vector<2x1024xf32>
    %50 = vector.extract_strided_slice %49 {offsets = [0, 0], sizes = [2, 256], strides = [1, 1]} : vector<2x1024xf32> to vector<2x256xf32>
    %51 = vector.extract_strided_slice %49 {offsets = [0, 256], sizes = [2, 256], strides = [1, 1]} : vector<2x1024xf32> to vector<2x256xf32>
    %52 = vector.extract_strided_slice %49 {offsets = [0, 512], sizes = [2, 256], strides = [1, 1]} : vector<2x1024xf32> to vector<2x256xf32>
    %53 = vector.extract_strided_slice %49 {offsets = [0, 768], sizes = [2, 256], strides = [1, 1]} : vector<2x1024xf32> to vector<2x256xf32>
    %54 = tpu.concatenate %50, %51, %52, %53 in 0 : vector<2x256xf32>, vector<2x256xf32>, vector<2x256xf32>, vector<2x256xf32> -> vector<8x256xf32>
    %55 = arith.truncf %54 : vector<8x256xf32> to vector<8x256xbf16>
    %c0_31 = arith.constant 0 : index
    %c0_32 = arith.constant 0 : index
    %56 = vector.load %arg8[%c0_31, %c0_32] : memref<256x2048xbf16, #tpu.memory_space<vmem>>, vector<256x2048xbf16>
    %cst_33 = arith.constant dense<0.000000e+00> : vector<8x2048xf32>
    %57 = tpu.matmul %55, %56, %cst_33 {dimension_numbers = #tpu.dot_dimension_numbers<[1], [0], [0], [1], [0, 0, 1, 1], [], []>} : vector<8x256xbf16>, vector<256x2048xbf16>, vector<8x2048xf32> -> vector<8x2048xf32>
    %58 = arith.truncf %57 : vector<8x2048xf32> to vector<8x2048xbf16>
    %c0_34 = arith.constant 0 : index
    %c0_35 = arith.constant 0 : index
    %59 = vector.load %arg18[%c0_34, %c0_35] : memref<8x2048xbf16, #tpu.memory_space<vmem>>, vector<8x2048xbf16>
    tpu.vector_store %arg18[%c0_34, %c0_35], %58 {strides = array<i32>} : memref<8x2048xbf16, #tpu.memory_space<vmem>>, vector<8x2048xbf16>,
    %60 = arith.truncf %41 : vector<2x16xf32> to vector<2x16xbf16>
    %c0_36 = arith.constant 0 : index
    %c0_37 = arith.constant 0 : index
    %61 = vector.load %arg9[%c0_36, %c0_37] : memref<16x128xbf16, #tpu.memory_space<vmem>>, vector<16x128xbf16>
    %cst_38 = arith.constant dense<0.000000e+00> : vector<2x128xf32>
    %62 = tpu.matmul %60, %61, %cst_38 {dimension_numbers = #tpu.dot_dimension_numbers<[1], [0], [0], [1], [0, 0, 1, 1], [], []>} : vector<2x16xbf16>, vector<16x128xbf16>, vector<2x128xf32> -> vector<2x128xf32>
    %c0_39 = arith.constant 0 : index
    %c0_40 = arith.constant 0 : index
    %63 = vector.load %arg10[%c0_39, %c0_40] : memref<1x128xf32, #tpu.memory_space<vmem>>, vector<1x128xf32>
    %64 = vector.broadcast %63 : vector<1x128xf32> to vector<2x128xf32>
    %65 = arith.addf %62, %64 : vector<2x128xf32>
    %cst_41 = arith.constant 0.000000e+00 : f32
    %66 = vector.broadcast %cst_41 : f32 to vector<2x128xf32>
    %67 = arith.maximumf %65, %66 : vector<2x128xf32>
    %68 = arith.truncf %67 : vector<2x128xf32> to vector<2x128xbf16>
    %c0_42 = arith.constant 0 : index
    %c0_43 = arith.constant 0 : index
    %69 = vector.load %arg11[%c0_42, %c0_43] : memref<128x128xbf16, #tpu.memory_space<vmem>>, vector<128x128xbf16>
    %cst_44 = arith.constant dense<0.000000e+00> : vector<2x128xf32>
    %70 = tpu.matmul %68, %69, %cst_44 {dimension_numbers = #tpu.dot_dimension_numbers<[1], [0], [0], [1], [0, 0, 1, 1], [], []>} : vector<2x128xbf16>, vector<128x128xbf16>, vector<2x128xf32> -> vector<2x128xf32>
    %c0_45 = arith.constant 0 : index
    %c0_46 = arith.constant 0 : index
    %71 = vector.load %arg12[%c0_45, %c0_46] : memref<1x128xf32, #tpu.memory_space<vmem>>, vector<1x128xf32>
    %72 = vector.broadcast %71 : vector<1x128xf32> to vector<2x128xf32>
    %73 = arith.addf %70, %72 : vector<2x128xf32>
    %cst_47 = arith.constant 0.000000e+00 : f32
    %74 = vector.broadcast %cst_47 : f32 to vector<2x128xf32>
    %75 = arith.maximumf %73, %74 : vector<2x128xf32>
    %76 = arith.truncf %75 : vector<2x128xf32> to vector<2x128xbf16>
    %c0_48 = arith.constant 0 : index
    %c0_49 = arith.constant 0 : index
    %77 = vector.load %arg13[%c0_48, %c0_49] : memref<128x16xbf16, #tpu.memory_space<vmem>>, vector<128x16xbf16>
    %cst_50 = arith.constant dense<0.000000e+00> : vector<2x16xf32>
    %78 = tpu.matmul %76, %77, %cst_50 {dimension_numbers = #tpu.dot_dimension_numbers<[1], [0], [0], [1], [0, 0, 1, 1], [], []>} : vector<2x128xbf16>, vector<128x16xbf16>, vector<2x16xf32> -> vector<2x16xf32>
    %c0_51 = arith.constant 0 : index
    %c0_52 = arith.constant 0 : index
    %79 = vector.load %arg14[%c0_51, %c0_52] : memref<1x16xf32, #tpu.memory_space<vmem>>, vector<1x16xf32>
    %80 = vector.broadcast %79 : vector<1x16xf32> to vector<2x16xf32>
    %81 = arith.addf %78, %80 : vector<2x16xf32>
    %82 = vector.extract_strided_slice %81 {offsets = [0, 0], sizes = [2, 15], strides = [1, 1]} : vector<2x16xf32> to vector<2x15xf32>
    %cst_53 = arith.constant dense<0xFF800000> : vector<2xf32>
    %83 = vector.multi_reduction <maximumf>, %82, %cst_53 [1] : vector<2x15xf32> to vector<2xf32>
    %84 = vector.shape_cast %83 : vector<2xf32> to vector<2x1xf32>
    %85 = vector.broadcast %84 : vector<2x1xf32> to vector<2x15xf32>
    %86 = arith.subf %82, %85 : vector<2x15xf32>
    %87 = math.exp %86 : vector<2x15xf32>
    %cst_54 = arith.constant dense<0.000000e+00> : vector<2xf32>
    %88 = vector.multi_reduction <add>, %87, %cst_54 [1] : vector<2x15xf32> to vector<2xf32>
    %89 = vector.shape_cast %88 : vector<2xf32> to vector<2x1xf32>
    %90 = vector.broadcast %89 : vector<2x1xf32> to vector<2x15xf32>
    %91 = arith.divf %87, %90 : vector<2x15xf32>
    %c0_55 = arith.constant 0 : index
    %c0_56 = arith.constant 0 : index
    %92 = vector.load %arg16[%c0_55, %c0_56] : memref<2x15xf32, #tpu.memory_space<vmem>>, vector<2x15xf32>
    tpu.vector_store %arg16[%c0_55, %c0_56], %91 {strides = array<i32>} : memref<2x15xf32, #tpu.memory_space<vmem>>, vector<2x15xf32>,
    %93 = vector.extract_strided_slice %81 {offsets = [0, 15], sizes = [2, 1], strides = [1, 1]} : vector<2x16xf32> to vector<2x1xf32>
    %c0_57 = arith.constant 0 : index
    %c0_58 = arith.constant 0 : index
    %94 = vector.load %arg17[%c0_57, %c0_58] : memref<2x1xf32, #tpu.memory_space<vmem>>, vector<2x1xf32>
    tpu.vector_store %arg17[%c0_57, %c0_58], %93 {strides = array<i32>} : memref<2x1xf32, #tpu.memory_space<vmem>>, vector<2x1xf32>,
    return
  }
}

module attributes {stable_mosaic.version = 11 : i64} {
  func.func @_convt_gemm_kernel(%arg0: memref<32x128xbf16, #tpu.memory_space<vmem>>, %arg1: memref<1x128xf32, #tpu.memory_space<vmem>>, %arg2: memref<128x1024xbf16, #tpu.memory_space<vmem>>, %arg3: memref<32x1024xbf16, #tpu.memory_space<vmem>>) attributes {dimension_semantics = [], scalar_prefetch = 0 : i64, scratch_operands = 0 : i64, tpu.core_type = #tpu.core_type<tc>} {
    %c0 = arith.constant 0 : index
    %c0_0 = arith.constant 0 : index
    %0 = vector.load %arg0[%c0, %c0_0] : memref<32x128xbf16, #tpu.memory_space<vmem>>, vector<32x128xbf16>
    %1 = arith.extf %0 : vector<32x128xbf16> to vector<32x128xf32>
    %c0_1 = arith.constant 0 : index
    %c0_2 = arith.constant 0 : index
    %2 = vector.load %arg1[%c0_1, %c0_2] : memref<1x128xf32, #tpu.memory_space<vmem>>, vector<1x128xf32>
    %3 = vector.broadcast %2 : vector<1x128xf32> to vector<32x128xf32>
    %4 = arith.addf %1, %3 : vector<32x128xf32>
    %cst = arith.constant 0.000000e+00 : f32
    %5 = vector.broadcast %cst : f32 to vector<32x128xf32>
    %6 = arith.maximumf %4, %5 : vector<32x128xf32>
    %7 = arith.truncf %6 : vector<32x128xf32> to vector<32x128xbf16>
    %c0_3 = arith.constant 0 : index
    %c0_4 = arith.constant 0 : index
    %8 = vector.load %arg2[%c0_3, %c0_4] : memref<128x1024xbf16, #tpu.memory_space<vmem>>, vector<128x1024xbf16>
    %cst_5 = arith.constant dense<0.000000e+00> : vector<32x1024xf32>
    %9 = tpu.matmul %7, %8, %cst_5 {dimension_numbers = #tpu.dot_dimension_numbers<[1], [0], [0], [1], [0, 0, 1, 1], [], []>} : vector<32x128xbf16>, vector<128x1024xbf16>, vector<32x1024xf32> -> vector<32x1024xf32>
    %10 = arith.truncf %9 : vector<32x1024xf32> to vector<32x1024xbf16>
    %c0_6 = arith.constant 0 : index
    %c0_7 = arith.constant 0 : index
    %11 = vector.load %arg3[%c0_6, %c0_7] : memref<32x1024xbf16, #tpu.memory_space<vmem>>, vector<32x1024xbf16>
    tpu.vector_store %arg3[%c0_6, %c0_7], %10 {strides = array<i32>} : memref<32x1024xbf16, #tpu.memory_space<vmem>>, vector<32x1024xbf16>,
    return
  }
}

module attributes {stable_mosaic.version = 11 : i64} {
  func.func @_convt_gemm_kernel(%arg0: memref<128x64xbf16, #tpu.memory_space<vmem>>, %arg1: memref<1x64xf32, #tpu.memory_space<vmem>>, %arg2: memref<64x512xbf16, #tpu.memory_space<vmem>>, %arg3: memref<128x512xbf16, #tpu.memory_space<vmem>>) attributes {dimension_semantics = [], scalar_prefetch = 0 : i64, scratch_operands = 0 : i64, tpu.core_type = #tpu.core_type<tc>} {
    %c0 = arith.constant 0 : index
    %c0_0 = arith.constant 0 : index
    %0 = vector.load %arg0[%c0, %c0_0] : memref<128x64xbf16, #tpu.memory_space<vmem>>, vector<128x64xbf16>
    %1 = arith.extf %0 : vector<128x64xbf16> to vector<128x64xf32>
    %c0_1 = arith.constant 0 : index
    %c0_2 = arith.constant 0 : index
    %2 = vector.load %arg1[%c0_1, %c0_2] : memref<1x64xf32, #tpu.memory_space<vmem>>, vector<1x64xf32>
    %3 = vector.broadcast %2 : vector<1x64xf32> to vector<128x64xf32>
    %4 = arith.addf %1, %3 : vector<128x64xf32>
    %cst = arith.constant 0.000000e+00 : f32
    %5 = vector.broadcast %cst : f32 to vector<128x64xf32>
    %6 = arith.maximumf %4, %5 : vector<128x64xf32>
    %7 = arith.truncf %6 : vector<128x64xf32> to vector<128x64xbf16>
    %c0_3 = arith.constant 0 : index
    %c0_4 = arith.constant 0 : index
    %8 = vector.load %arg2[%c0_3, %c0_4] : memref<64x512xbf16, #tpu.memory_space<vmem>>, vector<64x512xbf16>
    %cst_5 = arith.constant dense<0.000000e+00> : vector<128x512xf32>
    %9 = tpu.matmul %7, %8, %cst_5 {dimension_numbers = #tpu.dot_dimension_numbers<[1], [0], [0], [1], [0, 0, 1, 1], [], []>} : vector<128x64xbf16>, vector<64x512xbf16>, vector<128x512xf32> -> vector<128x512xf32>
    %10 = arith.truncf %9 : vector<128x512xf32> to vector<128x512xbf16>
    %c0_6 = arith.constant 0 : index
    %c0_7 = arith.constant 0 : index
    %11 = vector.load %arg3[%c0_6, %c0_7] : memref<128x512xbf16, #tpu.memory_space<vmem>>, vector<128x512xbf16>
    tpu.vector_store %arg3[%c0_6, %c0_7], %10 {strides = array<i32>} : memref<128x512xbf16, #tpu.memory_space<vmem>>, vector<128x512xbf16>,
    return
  }
}

module attributes {stable_mosaic.version = 11 : i64} {
  func.func @_convt_gemm_kernel(%arg0: memref<512x32xbf16, #tpu.memory_space<vmem>>, %arg1: memref<1x32xf32, #tpu.memory_space<vmem>>, %arg2: memref<32x48xbf16, #tpu.memory_space<vmem>>, %arg3: memref<512x48xf32, #tpu.memory_space<vmem>>) attributes {dimension_semantics = [], scalar_prefetch = 0 : i64, scratch_operands = 0 : i64, tpu.core_type = #tpu.core_type<tc>} {
    %c0 = arith.constant 0 : index
    %c0_0 = arith.constant 0 : index
    %0 = vector.load %arg0[%c0, %c0_0] : memref<512x32xbf16, #tpu.memory_space<vmem>>, vector<512x32xbf16>
    %1 = arith.extf %0 : vector<512x32xbf16> to vector<512x32xf32>
    %c0_1 = arith.constant 0 : index
    %c0_2 = arith.constant 0 : index
    %2 = vector.load %arg1[%c0_1, %c0_2] : memref<1x32xf32, #tpu.memory_space<vmem>>, vector<1x32xf32>
    %3 = vector.broadcast %2 : vector<1x32xf32> to vector<512x32xf32>
    %4 = arith.addf %1, %3 : vector<512x32xf32>
    %cst = arith.constant 0.000000e+00 : f32
    %5 = vector.broadcast %cst : f32 to vector<512x32xf32>
    %6 = arith.maximumf %4, %5 : vector<512x32xf32>
    %7 = arith.truncf %6 : vector<512x32xf32> to vector<512x32xbf16>
    %c0_3 = arith.constant 0 : index
    %c0_4 = arith.constant 0 : index
    %8 = vector.load %arg2[%c0_3, %c0_4] : memref<32x48xbf16, #tpu.memory_space<vmem>>, vector<32x48xbf16>
    %cst_5 = arith.constant dense<0.000000e+00> : vector<512x48xf32>
    %9 = tpu.matmul %7, %8, %cst_5 {dimension_numbers = #tpu.dot_dimension_numbers<[1], [0], [0], [1], [0, 0, 1, 1], [], []>} : vector<512x32xbf16>, vector<32x48xbf16>, vector<512x48xf32> -> vector<512x48xf32>
    %c0_6 = arith.constant 0 : index
    %c0_7 = arith.constant 0 : index
    %10 = vector.load %arg3[%c0_6, %c0_7] : memref<512x48xf32, #tpu.memory_space<vmem>>, vector<512x48xf32>
    tpu.vector_store %arg3[%c0_6, %c0_7], %9 {strides = array<i32>} : memref<512x48xf32, #tpu.memory_space<vmem>>, vector<512x48xf32>,
    return
  }
}

</mosaic_0001>

<llo_original>
// kernel: vae_policy_forward.7
$region0: #{vae_policy_forward.7}
  #allocation0 [shape = 'u32[]', space=smem, size = 0x4, offset = 0x4, fixed_abs, tag = 'smem constant byte address 0x4 - core index']
  #allocation1 [shape = 'u32[144,128]{1,0:T(1,128)}', space=vmem, size = 0x12000, scoped, tag = 'internal scratch']
  %s0 = inlined_call_operand.vmem [shape: bf16[512,48], index: 0, kind: input, shape index: {}]
  %s1 = inlined_call_operand.vmem [shape: bf16[48,32], index: 1, kind: input, shape index: {}]
  %s2 = inlined_call_operand.vmem [shape: f32[1,32], index: 2, kind: input, shape index: {}]
  %s3 = inlined_call_operand.vmem [shape: bf16[512,32], index: 3, kind: output, shape index: {}]
  %s4 = sld [smem:[#allocation0]]
  $region22: #{vae_policy_forward.7} parent=0
    _
  %s6 = ssub.s32 1, %s4
  %s7 = scalar_select 0, %s6, %s4
  // Predicated region
  $region2: #{vae_policy_forward.7} parent=0 // pred_check
    _
  $region3: #{vae_policy_forward.7} parent=0 // pred_check_branch
    %9 = sbr.rel (0) target = $region5
  $region4: #{vae_policy_forward.7} parent=0 // pred_region
    _
  $region5: #{vae_policy_forward.7} parent=0 // pred_fallthru
    _
  // Predicated region
  $region6: #{vae_policy_forward.7} parent=0 // pred_check
    _
  $region7: #{vae_policy_forward.7} parent=0 // pred_check_branch
    %11 = sbr.rel (0) target = $region9
  $region8: #{vae_policy_forward.7} parent=0 // pred_region
    _
  $region9: #{vae_policy_forward.7} parent=0 // pred_fallthru
    _
  // Predicated region
  $region10: #{vae_policy_forward.7} parent=0 // pred_check
    _
  $region11: #{vae_policy_forward.7} parent=0 // pred_check_branch
    %13 = sbr.rel (0) target = $region13
  $region12: #{vae_policy_forward.7} parent=0 // pred_region
    _
  $region13: #{vae_policy_forward.7} parent=0 // pred_fallthru
    _
  %v15 = vld [vmem:[%s0] sm:$0xf]
  %v16 = vld [vmem:[%s0 + $0x4] sm:$0xf]
  %v17 = vld [vmem:[%s0 + $0x8] sm:$0xf]
  %v18 = vld [vmem:[%s0 + $0xc] sm:$0xf]
  %v19 = vld [vmem:[%s0 + $0x10] sm:$0xf]
  %v20 = vld [vmem:[%s0 + $0x14] sm:$0xf]
  %v21 = vld [vmem:[%s0 + $0x18] sm:$0xf]
  %v22 = vld [vmem:[%s0 + $0x1c] sm:$0xf]
  %v23 = vld [vmem:[%s0 + $0x20] sm:$0xf]
  %v24 = vld [vmem:[%s0 + $0x24] sm:$0xf]
  %v25 = vld [vmem:[%s0 + $0x28] sm:$0xf]
  %v26 = vld [vmem:[%s0 + $0x2c] sm:$0xf]
  %v27 = vld [vmem:[%s0 + $0x30] sm:$0xf]
  %v28 = vld [vmem:[%s0 + $0x34] sm:$0xf]
  %v29 = vld [vmem:[%s0 + $0x38] sm:$0xf]
  %v30 = vld [vmem:[%s0 + $0x3c] sm:$0xf]
  %v31 = vld [vmem:[%s0 + $0x40] sm:$0xf]
  %v32 = vld [vmem:[%s0 + $0x44] sm:$0xf]
  %v33 = vld [vmem:[%s0 + $0x48] sm:$0xf]
  %v34 = vld [vmem:[%s0 + $0x4c] sm:$0xf]
  %v35 = vld [vmem:[%s0 + $0x50] sm:$0xf]
  %v36 = vld [vmem:[%s0 + $0x54] sm:$0xf]
  %v37 = vld [vmem:[%s0 + $0x58] sm:$0xf]
  %v38 = vld [vmem:[%s0 + $0x5c] sm:$0xf]
  %v39 = vld [vmem:[%s0 + $0x60] sm:$0xf]
  %v40 = vld [vmem:[%s0 + $0x64] sm:$0xf]
  %v41 = vld [vmem:[%s0 + $0x68] sm:$0xf]
  %v42 = vld [vmem:[%s0 + $0x6c] sm:$0xf]
  %v43 = vld [vmem:[%s0 + $0x70] sm:$0xf]
  %v44 = vld [vmem:[%s0 + $0x74] sm:$0xf]
  %v45 = vld [vmem:[%s0 + $0x78] sm:$0xf]
  %v46 = vld [vmem:[%s0 + $0x7c] sm:$0xf]
  %v47 = vld [vmem:[%s0 + $0x80] sm:$0xf]
  %v48 = vld [vmem:[%s0 + $0x84] sm:$0xf]
  %v49 = vld [vmem:[%s0 + $0x88] sm:$0xf]
  %v50 = vld [vmem:[%s0 + $0x8c] sm:$0xf]
  %v51 = vld [vmem:[%s0 + $0x90] sm:$0xf]
  %v52 = vld [vmem:[%s0 + $0x94] sm:$0xf]
  %v53 = vld [vmem:[%s0 + $0x98] sm:$0xf]
  %v54 = vld [vmem:[%s0 + $0x9c] sm:$0xf]
  %v55 = vld [vmem:[%s0 + $0xa0] sm:$0xf]
  %v56 = vld [vmem:[%s0 + $0xa4] sm:$0xf]
  %v57 = vld [vmem:[%s0 + $0xa8] sm:$0xf]
  %v58 = vld [vmem:[%s0 + $0xac] sm:$0xf]
  %v59 = vld [vmem:[%s0 + $0xb0] sm:$0xf]
  %v60 = vld [vmem:[%s0 + $0xb4] sm:$0xf]
  %v61 = vld [vmem:[%s0 + $0xb8] sm:$0xf]
  %v62 = vld [vmem:[%s0 + $0xbc] sm:$0xf]
  %v63 = vld [vmem:[%s0 + $0xc0] sm:$0xf]
  %v64 = vld [vmem:[%s0 + $0xc4] sm:$0xf]
  %v65 = vld [vmem:[%s0 + $0xc8] sm:$0xf]
  %v66 = vld [vmem:[%s0 + $0xcc] sm:$0xf]
  %v67 = vld [vmem:[%s0 + $0xd0] sm:$0xf]
  %v68 = vld [vmem:[%s0 + $0xd4] sm:$0xf]
  %v69 = vld [vmem:[%s0 + $0xd8] sm:$0xf]
  %v70 = vld [vmem:[%s0 + $0xdc] sm:$0xf]
  %v71 = vld [vmem:[%s0 + $0xe0] sm:$0xf]
  %v72 = vld [vmem:[%s0 + $0xe4] sm:$0xf]
  %v73 = vld [vmem:[%s0 + $0xe8] sm:$0xf]
  %v74 = vld [vmem:[%s0 + $0xec] sm:$0xf]
  %v75 = vld [vmem:[%s0 + $0xf0] sm:$0xf]
  %v76 = vld [vmem:[%s0 + $0xf4] sm:$0xf]
  %v77 = vld [vmem:[%s0 + $0xf8] sm:$0xf]
  %v78 = vld [vmem:[%s0 + $0xfc] sm:$0xf]
  %v79 = vld [vmem:[%s1] sm:$0xf]
  %v80 = vld [vmem:[%s1 + $0x4] sm:$0xf]
  %v81 = vld [vmem:[%s1 + $0x8] sm:$0xf]
  %v82 = vld [vmem:[%s1 + $0xc] sm:$0xf]
  %v83 = vld [vmem:[%s1 + $0x10] sm:$0xf]
  %v84 = vld [vmem:[%s1 + $0x14] sm:$0xf]
  %v85 = vld [vmem:[%s2] sm:$0x1]
  %v87 = vlaneseq
  %v88 = vshrl.u32 %v87, 7
  %v89 = vsub.s32 0, %v88
  %v90 = vrot.slane %v85, %v89
  %v156 = vunpack.c.l.b16 %v15
  %v157 = vunpack.c.l.b16 %v16
  %v158 = vunpack.c.l.b16 %v17
  %v159 = vunpack.c.l.b16 %v18
  %v160 = vunpack.c.l.b16 %v19
  %v161 = vunpack.c.l.b16 %v20
  %v162 = vunpack.c.l.b16 %v21
  %v163 = vunpack.c.l.b16 %v22
  %v164 = vunpack.c.l.b16 %v23
  %v165 = vunpack.c.l.b16 %v24
  %v166 = vunpack.c.l.b16 %v25
  %v167 = vunpack.c.l.b16 %v26
  %v168 = vunpack.c.l.b16 %v27
  %v169 = vunpack.c.l.b16 %v28
  %v170 = vunpack.c.l.b16 %v29
  %v171 = vunpack.c.l.b16 %v30
  %v172 = vunpack.c.l.b16 %v31
  %v173 = vunpack.c.l.b16 %v32
  %v174 = vunpack.c.l.b16 %v33
  %v175 = vunpack.c.l.b16 %v34
  %v176 = vunpack.c.l.b16 %v35
  %v177 = vunpack.c.l.b16 %v36
  %v178 = vunpack.c.l.b16 %v37
  %v179 = vunpack.c.l.b16 %v38
  %v180 = vunpack.c.l.b16 %v39
  %v181 = vunpack.c.l.b16 %v40
  %v182 = vunpack.c.l.b16 %v41
  %v183 = vunpack.c.l.b16 %v42
  %v184 = vunpack.c.l.b16 %v43
  %v185 = vunpack.c.l.b16 %v44
  %v186 = vunpack.c.l.b16 %v45
  %v187 = vunpack.c.l.b16 %v46
  %v188 = vunpack.c.l.b16 %v47
  %v189 = vunpack.c.l.b16 %v48
  %v190 = vunpack.c.l.b16 %v49
  %v191 = vunpack.c.l.b16 %v50
  %v192 = vunpack.c.l.b16 %v51
  %v193 = vunpack.c.l.b16 %v52
  %v194 = vunpack.c.l.b16 %v53
  %v195 = vunpack.c.l.b16 %v54
  %v196 = vunpack.c.l.b16 %v55
  %v197 = vunpack.c.l.b16 %v56
  %v198 = vunpack.c.l.b16 %v57
  %v199 = vunpack.c.l.b16 %v58
  %v200 = vunpack.c.l.b16 %v59
  %v201 = vunpack.c.l.b16 %v60
  %v202 = vunpack.c.l.b16 %v61
  %v203 = vunpack.c.l.b16 %v62
  %v204 = vunpack.c.l.b16 %v63
  %v205 = vunpack.c.l.b16 %v64
  %v206 = vunpack.c.l.b16 %v65
  %v207 = vunpack.c.l.b16 %v66
  %v208 = vunpack.c.l.b16 %v67
  %v209 = vunpack.c.l.b16 %v68
  %v210 = vunpack.c.l.b16 %v69
  %v211 = vunpack.c.l.b16 %v70
  %v212 = vunpack.c.l.b16 %v71
  %v213 = vunpack.c.l.b16 %v72
  %v214 = vunpack.c.l.b16 %v73
  %v215 = vunpack.c.l.b16 %v74
  %v216 = vunpack.c.l.b16 %v75
  %v217 = vunpack.c.l.b16 %v76
  %v218 = vunpack.c.l.b16 %v77
  %v219 = vunpack.c.l.b16 %v78
  %v220 = vpack.c.b16 %v157, %v156
  %v221 = vpack.c.b16 %v159, %v158
  %v222 = vpack.c.b16 %v161, %v160
  %v223 = vpack.c.b16 %v163, %v162
  %v224 = vpack.c.b16 %v165, %v164
  %v225 = vpack.c.b16 %v167, %v166
  %v226 = vpack.c.b16 %v169, %v168
  %v227 = vpack.c.b16 %v171, %v170
  %v228 = vpack.c.b16 %v173, %v172
  %v229 = vpack.c.b16 %v175, %v174
  %v230 = vpack.c.b16 %v177, %v176
  %v231 = vpack.c.b16 %v179, %v178
  %v232 = vpack.c.b16 %v181, %v180
  %v233 = vpack.c.b16 %v183, %v182
  %v234 = vpack.c.b16 %v185, %v184
  %v235 = vpack.c.b16 %v187, %v186
  %v236 = vpack.c.b16 %v189, %v188
  %v237 = vpack.c.b16 %v191, %v190
  %v238 = vpack.c.b16 %v193, %v192
  %v239 = vpack.c.b16 %v195, %v194
  %v240 = vpack.c.b16 %v197, %v196
  %v241 = vpack.c.b16 %v199, %v198
  %v242 = vpack.c.b16 %v201, %v200
  %v243 = vpack.c.b16 %v203, %v202
  %v244 = vpack.c.b16 %v205, %v204
  %v245 = vpack.c.b16 %v207, %v206
  %v246 = vpack.c.b16 %v209, %v208
  %v247 = vpack.c.b16 %v211, %v210
  %v248 = vpack.c.b16 %v213, %v212
  %v249 = vpack.c.b16 %v215, %v214
  %v250 = vpack.c.b16 %v217, %v216
  %v251 = vpack.c.b16 %v219, %v218
  %v258 = vunpack.c.l.b16 %v79
  %v259 = vunpack.c.l.b16 %v80
  %v260 = vunpack.c.l.b16 %v81
  %v261 = vunpack.c.l.b16 %v82
  %v262 = vunpack.c.l.b16 %v83
  %v263 = vunpack.c.l.b16 %v84
  %v264 = vpack.c.b16 %v259, %v258
  %v265 = vpack.c.b16 %v261, %v260
  %v266 = vpack.c.b16 %v263, %v262
  %vm270 = vcmask 392192
  %v272 = vsel %vm270, %v220, 0
  %v275 = vsel %vm270, %v221, 0
  %v278 = vsel %vm270, %v222, 0
  %v281 = vsel %vm270, %v223, 0
  %v284 = vsel %vm270, %v224, 0
  %v287 = vsel %vm270, %v225, 0
  %v290 = vsel %vm270, %v226, 0
  %v293 = vsel %vm270, %v227, 0
  %v296 = vsel %vm270, %v228, 0
  %v299 = vsel %vm270, %v229, 0
  %v302 = vsel %vm270, %v230, 0
  %v305 = vsel %vm270, %v231, 0
  %v308 = vsel %vm270, %v232, 0
  %v311 = vsel %vm270, %v233, 0
  %v314 = vsel %vm270, %v234, 0
  %v317 = vsel %vm270, %v235, 0
  %v320 = vsel %vm270, %v236, 0
  %v323 = vsel %vm270, %v237, 0
  %v326 = vsel %vm270, %v238, 0
  %v329 = vsel %vm270, %v239, 0
  %v332 = vsel %vm270, %v240, 0
  %v335 = vsel %vm270, %v241, 0
  %v338 = vsel %vm270, %v242, 0
  %v341 = vsel %vm270, %v243, 0
  %v344 = vsel %vm270, %v244, 0
  %v347 = vsel %vm270, %v245, 0
  %v350 = vsel %vm270, %v246, 0
  %v353 = vsel %vm270, %v247, 0
  %v356 = vsel %vm270, %v248, 0
  %v359 = vsel %vm270, %v249, 0
  %v362 = vsel %vm270, %v250, 0
  %v365 = vsel %vm270, %v251, 0
  %367 = vmatprep.subr.bf16.mxu0 0
  %368 = vmatpush1.bf16.msra.mxu0 %v264
  %369 = vmatprep.subr.bf16.mxu0 0
  %370 = vmatpush1.bf16.msra.mxu0 %v265
  %371 = vmatprep.subr.bf16.mxu0 0
  %372 = vmatpush1.bf16.msra.mxu0 %v266
  %373 = vmatprep.subr.bf16.mxu0 0
  %374 = vmatpush1.bf16.msra.mxu0 0
  %375 = vmatprep.subr.bf16.mxu0 0
  %376 = vmatpush1.bf16.msra.mxu0 0
  %377 = vmatprep.subr.bf16.mxu0 0
  %378 = vmatpush1.bf16.msra.mxu0 0
  %379 = vmatprep.subr.bf16.mxu0 0
  %380 = vmatpush1.bf16.msra.mxu0 0
  %381 = vmatprep.subr.bf16.mxu0 0
  %382 = vmatpush1.bf16.msra.mxu0 0
  %383 = vmatprep.subr.bf16.mxu0 0
  %384 = vmatpush1.bf16.msra.mxu0 0
  %385 = vmatprep.subr.bf16.mxu0 0
  %386 = vmatpush1.bf16.msra.mxu0 0
  %387 = vmatprep.subr.bf16.mxu0 0
  %388 = vmatpush1.bf16.msra.mxu0 0
  %389 = vmatprep.subr.bf16.mxu0 0
  %390 = vmatpush1.bf16.msra.mxu0 0
  %391 = vmatprep.subr.bf16.mxu0 0
  %392 = vmatpush1.bf16.msra.mxu0 0
  %393 = vmatprep.subr.bf16.mxu0 0
  %394 = vmatpush1.bf16.msra.mxu0 0
  %395 = vmatprep.subr.bf16.mxu0 0
  %396 = vmatpush1.bf16.msra.mxu0 0
  %397 = vmatprep.subr.bf16.mxu0 0
  %398 = vmatpush1.bf16.msra.mxu0 0
  %399 = vmatprep.mubr.bf16.mxu0 0
  %400 = vmatmul.mubr.bf16.gmra.mrb[0].mxu0 %v272
  %v401 = vpop.f32.mrb[0].mxu0
  %v402 = vadd.f32 %v90, %v401
  %v403 = vpop.f32.mrb[0].mxu0
  %v404 = vpop.f32.mrb[0].mxu0
  %v405 = vadd.f32 %v90, %v404
  %v406 = vpop.f32.mrb[0].mxu0
  %407 = vmatprep.mubr.bf16.mxu0 0
  %408 = vmatmul.mubr.bf16.gmra.mrb[0].mxu0 %v275
  %v409 = vpop.f32.mrb[0].mxu0
  %v410 = vadd.f32 %v90, %v409
  %v411 = vpop.f32.mrb[0].mxu0
  %v412 = vpop.f32.mrb[0].mxu0
  %v413 = vadd.f32 %v90, %v412
  %v414 = vpop.f32.mrb[0].mxu0
  %415 = vmatprep.mubr.bf16.mxu0 0
  %416 = vmatmul.mubr.bf16.gmra.mrb[0].mxu0 %v278
  %v417 = vpop.f32.mrb[0].mxu0
  %v418 = vadd.f32 %v90, %v417
  %v419 = vpop.f32.mrb[0].mxu0
  %v420 = vpop.f32.mrb[0].mxu0
  %v421 = vadd.f32 %v90, %v420
  %v422 = vpop.f32.mrb[0].mxu0
  %423 = vmatprep.mubr.bf16.mxu0 0
  %424 = vmatmul.mubr.bf16.gmra.mrb[0].mxu0 %v281
  %v425 = vpop.f32.mrb[0].mxu0
  %v426 = vadd.f32 %v90, %v425
  %v427 = vpop.f32.mrb[0].mxu0
  %v428 = vpop.f32.mrb[0].mxu0
  %v429 = vadd.f32 %v90, %v428
  %v430 = vpop.f32.mrb[0].mxu0
  %431 = vmatprep.mubr.bf16.mxu0 0
  %432 = vmatmul.mubr.bf16.gmra.mrb[0].mxu0 %v284
  %v433 = vpop.f32.mrb[0].mxu0
  %v434 = vadd.f32 %v90, %v433
  %v435 = vpop.f32.mrb[0].mxu0
  %v436 = vpop.f32.mrb[0].mxu0
  %v437 = vadd.f32 %v90, %v436
  %v438 = vpop.f32.mrb[0].mxu0
  %439 = vmatprep.mubr.bf16.mxu0 0
  %440 = vmatmul.mubr.bf16.gmra.mrb[0].mxu0 %v287
  %v441 = vpop.f32.mrb[0].mxu0
  %v442 = vadd.f32 %v90, %v441
  %v443 = vpop.f32.mrb[0].mxu0
  %v444 = vpop.f32.mrb[0].mxu0
  %v445 = vadd.f32 %v90, %v444
  %v446 = vpop.f32.mrb[0].mxu0
  %447 = vmatprep.mubr.bf16.mxu0 0
  %448 = vmatmul.mubr.bf16.gmra.mrb[0].mxu0 %v290
  %v449 = vpop.f32.mrb[0].mxu0
  %v450 = vadd.f32 %v90, %v449
  %v451 = vpop.f32.mrb[0].mxu0
  %v452 = vpop.f32.mrb[0].mxu0
  %v453 = vadd.f32 %v90, %v452
  %v454 = vpop.f32.mrb[0].mxu0
  %455 = vmatprep.mubr.bf16.mxu0 0
  %456 = vmatmul.mubr.bf16.gmra.mrb[0].mxu0 %v293
  %v457 = vpop.f32.mrb[0].mxu0
  %v458 = vadd.f32 %v90, %v457
  %v459 = vpop.f32.mrb[0].mxu0
  %v460 = vpop.f32.mrb[0].mxu0
  %v461 = vadd.f32 %v90, %v460
  %v462 = vpop.f32.mrb[0].mxu0
  %463 = vmatprep.mubr.bf16.mxu0 0
  %464 = vmatmul.mubr.bf16.gmra.mrb[0].mxu0 %v296
  %v465 = vpop.f32.mrb[0].mxu0
  %v466 = vadd.f32 %v90, %v465
  %v467 = vpop.f32.mrb[0].mxu0
  %v468 = vpop.f32.mrb[0].mxu0
  %v469 = vadd.f32 %v90, %v468
  %v470 = vpop.f32.mrb[0].mxu0
  %471 = vmatprep.mubr.bf16.mxu0 0
  %472 = vmatmul.mubr.bf16.gmra.mrb[0].mxu0 %v299
  %v473 = vpop.f32.mrb[0].mxu0
  %v474 = vadd.f32 %v90, %v473
  %v475 = vpop.f32.mrb[0].mxu0
  %v476 = vpop.f32.mrb[0].mxu0
  %v477 = vadd.f32 %v90, %v476
  %v478 = vpop.f32.mrb[0].mxu0
  %479 = vmatprep.mubr.bf16.mxu0 0
  %480 = vmatmul.mubr.bf16.gmra.mrb[0].mxu0 %v302
  %v481 = vpop.f32.mrb[0].mxu0
  %v482 = vadd.f32 %v90, %v481
  %v483 = vpop.f32.mrb[0].mxu0
  %v484 = vpop.f32.mrb[0].mxu0
  %v485 = vadd.f32 %v90, %v484
  %v486 = vpop.f32.mrb[0].mxu0
  %487 = vmatprep.mubr.bf16.mxu0 0
  %488 = vmatmul.mubr.bf16.gmra.mrb[0].mxu0 %v305
  %v489 = vpop.f32.mrb[0].mxu0
  %v490 = vadd.f32 %v90, %v489
  %v491 = vpop.f32.mrb[0].mxu0
  %v492 = vpop.f32.mrb[0].mxu0
  %v493 = vadd.f32 %v90, %v492
  %v494 = vpop.f32.mrb[0].mxu0
  %495 = vmatprep.mubr.bf16.mxu0 0
  %496 = vmatmul.mubr.bf16.gmra.mrb[0].mxu0 %v308
  %v497 = vpop.f32.mrb[0].mxu0
  %v498 = vadd.f32 %v90, %v497
  %v499 = vpop.f32.mrb[0].mxu0
  %v500 = vpop.f32.mrb[0].mxu0
  %v501 = vadd.f32 %v90, %v500
  %v502 = vpop.f32.mrb[0].mxu0
  %503 = vmatprep.mubr.bf16.mxu0 0
  %504 = vmatmul.mubr.bf16.gmra.mrb[0].mxu0 %v311
  %v505 = vpop.f32.mrb[0].mxu0
  %v506 = vadd.f32 %v90, %v505
  %v507 = vpop.f32.mrb[0].mxu0
  %v508 = vpop.f32.mrb[0].mxu0
  %v509 = vadd.f32 %v90, %v508
  %v510 = vpop.f32.mrb[0].mxu0
  %511 = vmatprep.mubr.bf16.mxu0 0
  %512 = vmatmul.mubr.bf16.gmra.mrb[0].mxu0 %v314
  %v513 = vpop.f32.mrb[0].mxu0
  %v514 = vadd.f32 %v90, %v513
  %v515 = vpop.f32.mrb[0].mxu0
  %v516 = vpop.f32.mrb[0].mxu0
  %v517 = vadd.f32 %v90, %v516
  %v518 = vpop.f32.mrb[0].mxu0
  %519 = vmatprep.mubr.bf16.mxu0 0
  %520 = vmatmul.mubr.bf16.gmra.mrb[0].mxu0 %v317
  %v521 = vpop.f32.mrb[0].mxu0
  %v522 = vadd.f32 %v90, %v521
  %v523 = vpop.f32.mrb[0].mxu0
  %v524 = vpop.f32.mrb[0].mxu0
  %v525 = vadd.f32 %v90, %v524
  %v526 = vpop.f32.mrb[0].mxu0
  %527 = vmatprep.mubr.bf16.mxu0 0
  %528 = vmatmul.mubr.bf16.gmra.mrb[0].mxu0 %v320
  %v529 = vpop.f32.mrb[0].mxu0
  %v530 = vadd.f32 %v90, %v529
  %v531 = vpop.f32.mrb[0].mxu0
  %v532 = vpop.f32.mrb[0].mxu0
  %v533 = vadd.f32 %v90, %v532
  %v534 = vpop.f32.mrb[0].mxu0
  %535 = vmatprep.mubr.bf16.mxu0 0
  %536 = vmatmul.mubr.bf16.gmra.mrb[0].mxu0 %v323
  %v537 = vpop.f32.mrb[0].mxu0
  %v538 = vadd.f32 %v90, %v537
  %v539 = vpop.f32.mrb[0].mxu0
  %v540 = vpop.f32.mrb[0].mxu0
  %v541 = vadd.f32 %v90, %v540
  %v542 = vpop.f32.mrb[0].mxu0
  %543 = vmatprep.mubr.bf16.mxu0 0
  %544 = vmatmul.mubr.bf16.gmra.mrb[0].mxu0 %v326
  %v545 = vpop.f32.mrb[0].mxu0
  %v546 = vadd.f32 %v90, %v545
  %v547 = vpop.f32.mrb[0].mxu0
  %v548 = vpop.f32.mrb[0].mxu0
  %v549 = vadd.f32 %v90, %v548
  %v550 = vpop.f32.mrb[0].mxu0
  %551 = vmatprep.mubr.bf16.mxu0 0
  %552 = vmatmul.mubr.bf16.gmra.mrb[0].mxu0 %v329
  %v553 = vpop.f32.mrb[0].mxu0
  %v554 = vadd.f32 %v90, %v553
  %v555 = vpop.f32.mrb[0].mxu0
  %v556 = vpop.f32.mrb[0].mxu0
  %v557 = vadd.f32 %v90, %v556
  %v558 = vpop.f32.mrb[0].mxu0
  %559 = vmatprep.mubr.bf16.mxu0 0
  %560 = vmatmul.mubr.bf16.gmra.mrb[0].mxu0 %v332
  %v561 = vpop.f32.mrb[0].mxu0
  %v562 = vadd.f32 %v90, %v561
  %v563 = vpop.f32.mrb[0].mxu0
  %v564 = vpop.f32.mrb[0].mxu0
  %v565 = vadd.f32 %v90, %v564
  %v566 = vpop.f32.mrb[0].mxu0
  %567 = vmatprep.mubr.bf16.mxu0 0
  %568 = vmatmul.mubr.bf16.gmra.mrb[0].mxu0 %v335
  %v569 = vpop.f32.mrb[0].mxu0
  %v570 = vadd.f32 %v90, %v569
  %v571 = vpop.f32.mrb[0].mxu0
  %v572 = vpop.f32.mrb[0].mxu0
  %v573 = vadd.f32 %v90, %v572
  %v574 = vpop.f32.mrb[0].mxu0
  %575 = vmatprep.mubr.bf16.mxu0 0
  %576 = vmatmul.mubr.bf16.gmra.mrb[0].mxu0 %v338
  %v577 = vpop.f32.mrb[0].mxu0
  %v578 = vadd.f32 %v90, %v577
  %v579 = vpop.f32.mrb[0].mxu0
  %v580 = vpop.f32.mrb[0].mxu0
  %v581 = vadd.f32 %v90, %v580
  %v582 = vpop.f32.mrb[0].mxu0
  %583 = vmatprep.mubr.bf16.mxu0 0
  %584 = vmatmul.mubr.bf16.gmra.mrb[0].mxu0 %v341
  %v585 = vpop.f32.mrb[0].mxu0
  %v586 = vadd.f32 %v90, %v585
  %v587 = vpop.f32.mrb[0].mxu0
  %v588 = vpop.f32.mrb[0].mxu0
  %v589 = vadd.f32 %v90, %v588
  %v590 = vpop.f32.mrb[0].mxu0
  %591 = vmatprep.mubr.bf16.mxu0 0
  %592 = vmatmul.mubr.bf16.gmra.mrb[0].mxu0 %v344
  %v593 = vpop.f32.mrb[0].mxu0
  %v594 = vadd.f32 %v90, %v593
  %v595 = vpop.f32.mrb[0].mxu0
  %v596 = vpop.f32.mrb[0].mxu0
  %v597 = vadd.f32 %v90, %v596
  %v598 = vpop.f32.mrb[0].mxu0
  %599 = vmatprep.mubr.bf16.mxu0 0
  %600 = vmatmul.mubr.bf16.gmra.mrb[0].mxu0 %v347
  %v601 = vpop.f32.mrb[0].mxu0
  %v602 = vadd.f32 %v90, %v601
  %v603 = vpop.f32.mrb[0].mxu0
  %v604 = vpop.f32.mrb[0].mxu0
  %v605 = vadd.f32 %v90, %v604
  %v606 = vpop.f32.mrb[0].mxu0
  %607 = vmatprep.mubr.bf16.mxu0 0
  %608 = vmatmul.mubr.bf16.gmra.mrb[0].mxu0 %v350
  %v609 = vpop.f32.mrb[0].mxu0
  %v610 = vadd.f32 %v90, %v609
  %v611 = vpop.f32.mrb[0].mxu0
  %v612 = vpop.f32.mrb[0].mxu0
  %v613 = vadd.f32 %v90, %v612
  %v614 = vpop.f32.mrb[0].mxu0
  %615 = vmatprep.mubr.bf16.mxu0 0
  %616 = vmatmul.mubr.bf16.gmra.mrb[0].mxu0 %v353
  %v617 = vpop.f32.mrb[0].mxu0
  %v618 = vadd.f32 %v90, %v617
  %v619 = vpop.f32.mrb[0].mxu0
  %v620 = vpop.f32.mrb[0].mxu0
  %v621 = vadd.f32 %v90, %v620
  %v622 = vpop.f32.mrb[0].mxu0
  %623 = vmatprep.mubr.bf16.mxu0 0
  %624 = vmatmul.mubr.bf16.gmra.mrb[0].mxu0 %v356
  %v625 = vpop.f32.mrb[0].mxu0
  %v626 = vadd.f32 %v90, %v625
  %v627 = vpop.f32.mrb[0].mxu0
  %v628 = vpop.f32.mrb[0].mxu0
  %v629 = vadd.f32 %v90, %v628
  %v630 = vpop.f32.mrb[0].mxu0
  %631 = vmatprep.mubr.bf16.mxu0 0
  %632 = vmatmul.mubr.bf16.gmra.mrb[0].mxu0 %v359
  %v633 = vpop.f32.mrb[0].mxu0
  %v634 = vadd.f32 %v90, %v633
  %v635 = vpop.f32.mrb[0].mxu0
  %v636 = vpop.f32.mrb[0].mxu0
  %v637 = vadd.f32 %v90, %v636
  %v638 = vpop.f32.mrb[0].mxu0
  %639 = vmatprep.mubr.bf16.mxu0 0
  %640 = vmatmul.mubr.bf16.gmra.mrb[0].mxu0 %v362
  %v641 = vpop.f32.mrb[0].mxu0
  %v642 = vadd.f32 %v90, %v641
  %v643 = vpop.f32.mrb[0].mxu0
  %v644 = vpop.f32.mrb[0].mxu0
  %v645 = vadd.f32 %v90, %v644
  %v646 = vpop.f32.mrb[0].mxu0
  %647 = vmatprep.mubr.bf16.mxu0 0
  %648 = vmatmul.mubr.bf16.gmra.mrb[0].mxu0 %v365
  %v649 = vpop.f32.mrb[0].mxu0
  %v650 = vadd.f32 %v90, %v649
  %v651 = vpop.f32.mrb[0].mxu0
  %v652 = vpop.f32.mrb[0].mxu0
  %v653 = vadd.f32 %v90, %v652
  %v654 = vpop.f32.mrb[0].mxu0
  %655 = vdwg.mxu0
  %v656 = vmax.f32 %v402, 0.0
  %v657 = vmax.f32 %v405, 0.0
  %v658 = vmax.f32 %v410, 0.0
  %v659 = vmax.f32 %v413, 0.0
  %v660 = vmax.f32 %v418, 0.0
  %v661 = vmax.f32 %v421, 0.0
  %v662 = vmax.f32 %v426, 0.0
  %v663 = vmax.f32 %v429, 0.0
  %v664 = vmax.f32 %v434, 0.0
  %v665 = vmax.f32 %v437, 0.0
  %v666 = vmax.f32 %v442, 0.0
  %v667 = vmax.f32 %v445, 0.0
  %v668 = vmax.f32 %v450, 0.0
  %v669 = vmax.f32 %v453, 0.0
  %v670 = vmax.f32 %v458, 0.0
  %v671 = vmax.f32 %v461, 0.0
  %v672 = vmax.f32 %v466, 0.0
  %v673 = vmax.f32 %v469, 0.0
  %v674 = vmax.f32 %v474, 0.0
  %v675 = vmax.f32 %v477, 0.0
  %v676 = vmax.f32 %v482, 0.0
  %v677 = vmax.f32 %v485, 0.0
  %v678 = vmax.f32 %v490, 0.0
  %v679 = vmax.f32 %v493, 0.0
  %v680 = vmax.f32 %v498, 0.0
  %v681 = vmax.f32 %v501, 0.0
  %v682 = vmax.f32 %v506, 0.0
  %v683 = vmax.f32 %v509, 0.0
  %v684 = vmax.f32 %v514, 0.0
  %v685 = vmax.f32 %v517, 0.0
  %v686 = vmax.f32 %v522, 0.0
  %v687 = vmax.f32 %v525, 0.0
  %v688 = vmax.f32 %v530, 0.0
  %v689 = vmax.f32 %v533, 0.0
  %v690 = vmax.f32 %v538, 0.0
  %v691 = vmax.f32 %v541, 0.0
  %v692 = vmax.f32 %v546, 0.0
  %v693 = vmax.f32 %v549, 0.0
  %v694 = vmax.f32 %v554, 0.0
  %v695 = vmax.f32 %v557, 0.0
  %v696 = vmax.f32 %v562, 0.0
  %v697 = vmax.f32 %v565, 0.0
  %v698 = vmax.f32 %v570, 0.0
  %v699 = vmax.f32 %v573, 0.0
  %v700 = vmax.f32 %v578, 0.0
  %v701 = vmax.f32 %v581, 0.0
  %v702 = vmax.f32 %v586, 0.0
  %v703 = vmax.f32 %v589, 0.0
  %v704 = vmax.f32 %v594, 0.0
  %v705 = vmax.f32 %v597, 0.0
  %v706 = vmax.f32 %v602, 0.0
  %v707 = vmax.f32 %v605, 0.0
  %v708 = vmax.f32 %v610, 0.0
  %v709 = vmax.f32 %v613, 0.0
  %v710 = vmax.f32 %v618, 0.0
  %v711 = vmax.f32 %v621, 0.0
  %v712 = vmax.f32 %v626, 0.0
  %v713 = vmax.f32 %v629, 0.0
  %v714 = vmax.f32 %v634, 0.0
  %v715 = vmax.f32 %v637, 0.0
  %v716 = vmax.f32 %v642, 0.0
  %v717 = vmax.f32 %v645, 0.0
  %v718 = vmax.f32 %v650, 0.0
  %v719 = vmax.f32 %v653, 0.0
  %v720 = vpack.c.bf16 %v657, %v656
  %v721 = vpack.c.bf16 %v659, %v658
  %v722 = vpack.c.bf16 %v661, %v660
  %v723 = vpack.c.bf16 %v663, %v662
  %v724 = vpack.c.bf16 %v665, %v664
  %v725 = vpack.c.bf16 %v667, %v666
  %v726 = vpack.c.bf16 %v669, %v668
  %v727 = vpack.c.bf16 %v671, %v670
  %v728 = vpack.c.bf16 %v673, %v672
  %v729 = vpack.c.bf16 %v675, %v674
  %v730 = vpack.c.bf16 %v677, %v676
  %v731 = vpack.c.bf16 %v679, %v678
  %v732 = vpack.c.bf16 %v681, %v680
  %v733 = vpack.c.bf16 %v683, %v682
  %v734 = vpack.c.bf16 %v685, %v684
  %v735 = vpack.c.bf16 %v687, %v686
  %v736 = vpack.c.bf16 %v689, %v688
  %v737 = vpack.c.bf16 %v691, %v690
  %v738 = vpack.c.bf16 %v693, %v692
  %v739 = vpack.c.bf16 %v695, %v694
  %v740 = vpack.c.bf16 %v697, %v696
  %v741 = vpack.c.bf16 %v699, %v698
  %v742 = vpack.c.bf16 %v701, %v700
  %v743 = vpack.c.bf16 %v703, %v702
  %v744 = vpack.c.bf16 %v705, %v704
  %v745 = vpack.c.bf16 %v707, %v706
  %v746 = vpack.c.bf16 %v709, %v708
  %v747 = vpack.c.bf16 %v711, %v710
  %v748 = vpack.c.bf16 %v713, %v712
  %v749 = vpack.c.bf16 %v715, %v714
  %v750 = vpack.c.bf16 %v717, %v716
  %v751 = vpack.c.bf16 %v719, %v718
  %v784 = vunpack.c.l.b16 %v720
  %v785 = vunpack.c.h.b16 %v720
  %v786 = vunpack.c.l.b16 %v721
  %v787 = vunpack.c.h.b16 %v721
  %v788 = vunpack.c.l.b16 %v722
  %v789 = vunpack.c.h.b16 %v722
  %v790 = vunpack.c.l.b16 %v723
  %v791 = vunpack.c.h.b16 %v723
  %v792 = vunpack.c.l.b16 %v724
  %v793 = vunpack.c.h.b16 %v724
  %v794 = vunpack.c.l.b16 %v725
  %v795 = vunpack.c.h.b16 %v725
  %v796 = vunpack.c.l.b16 %v726
  %v797 = vunpack.c.h.b16 %v726
  %v798 = vunpack.c.l.b16 %v727
  %v799 = vunpack.c.h.b16 %v727
  %v800 = vunpack.c.l.b16 %v728
  %v801 = vunpack.c.h.b16 %v728
  %v802 = vunpack.c.l.b16 %v729
  %v803 = vunpack.c.h.b16 %v729
  %v804 = vunpack.c.l.b16 %v730
  %v805 = vunpack.c.h.b16 %v730
  %v806 = vunpack.c.l.b16 %v731
  %v807 = vunpack.c.h.b16 %v731
  %v808 = vunpack.c.l.b16 %v732
  %v809 = vunpack.c.h.b16 %v732
  %v810 = vunpack.c.l.b16 %v733
  %v811 = vunpack.c.h.b16 %v733
  %v812 = vunpack.c.l.b16 %v734
  %v813 = vunpack.c.h.b16 %v734
  %v814 = vunpack.c.l.b16 %v735
  %v815 = vunpack.c.h.b16 %v735
  %v816 = vunpack.c.l.b16 %v736
  %v817 = vunpack.c.h.b16 %v736
  %v818 = vunpack.c.l.b16 %v737
  %v819 = vunpack.c.h.b16 %v737
  %v820 = vunpack.c.l.b16 %v738
  %v821 = vunpack.c.h.b16 %v738
  %v822 = vunpack.c.l.b16 %v739
  %v823 = vunpack.c.h.b16 %v739
  %v824 = vunpack.c.l.b16 %v740
  %v825 = vunpack.c.h.b16 %v740
  %v826 = vunpack.c.l.b16 %v741
  %v827 = vunpack.c.h.b16 %v741
  %v828 = vunpack.c.l.b16 %v742
  %v829 = vunpack.c.h.b16 %v742
  %v830 = vunpack.c.l.b16 %v743
  %v831 = vunpack.c.h.b16 %v743
  %v832 = vunpack.c.l.b16 %v744
  %v833 = vunpack.c.h.b16 %v744
  %v834 = vunpack.c.l.b16 %v745
  %v835 = vunpack.c.h.b16 %v745
  %v836 = vunpack.c.l.b16 %v746
  %v837 = vunpack.c.h.b16 %v746
  %v838 = vunpack.c.l.b16 %v747
  %v839 = vunpack.c.h.b16 %v747
  %v840 = vunpack.c.l.b16 %v748
  %v841 = vunpack.c.h.b16 %v748
  %v842 = vunpack.c.l.b16 %v749
  %v843 = vunpack.c.h.b16 %v749
  %v844 = vunpack.c.l.b16 %v750
  %v845 = vunpack.c.h.b16 %v750
  %v846 = vunpack.c.l.b16 %v751
  %v847 = vunpack.c.h.b16 %v751
  %v848 = vpack.c.b16 %v784, %v784
  %v849 = vpack.c.b16 %v785, %v785
  %v850 = vpack.c.b16 %v786, %v786
  %v851 = vpack.c.b16 %v787, %v787
  %v852 = vpack.c.b16 %v788, %v788
  %v853 = vpack.c.b16 %v789, %v789
  %v854 = vpack.c.b16 %v790, %v790
  %v855 = vpack.c.b16 %v791, %v791
  %v856 = vpack.c.b16 %v792, %v792
  %v857 = vpack.c.b16 %v793, %v793
  %v858 = vpack.c.b16 %v794, %v794
  %v859 = vpack.c.b16 %v795, %v795
  %v860 = vpack.c.b16 %v796, %v796
  %v861 = vpack.c.b16 %v797, %v797
  %v862 = vpack.c.b16 %v798, %v798
  %v863 = vpack.c.b16 %v799, %v799
  %v864 = vpack.c.b16 %v800, %v800
  %v865 = vpack.c.b16 %v801, %v801
  %v866 = vpack.c.b16 %v802, %v802
  %v867 = vpack.c.b16 %v803, %v803
  %v868 = vpack.c.b16 %v804, %v804
  %v869 = vpack.c.b16 %v805, %v805
  %v870 = vpack.c.b16 %v806, %v806
  %v871 = vpack.c.b16 %v807, %v807
  %v872 = vpack.c.b16 %v808, %v808
  %v873 = vpack.c.b16 %v809, %v809
  %v874 = vpack.c.b16 %v810, %v810
  %v875 = vpack.c.b16 %v811, %v811
  %v876 = vpack.c.b16 %v812, %v812
  %v877 = vpack.c.b16 %v813, %v813
  %v878 = vpack.c.b16 %v814, %v814
  %v879 = vpack.c.b16 %v815, %v815
  %v880 = vpack.c.b16 %v816, %v816
  %v881 = vpack.c.b16 %v817, %v817
  %v882 = vpack.c.b16 %v818, %v818
  %v883 = vpack.c.b16 %v819, %v819
  %v884 = vpack.c.b16 %v820, %v820
  %v885 = vpack.c.b16 %v821, %v821
  %v886 = vpack.c.b16 %v822, %v822
  %v887 = vpack.c.b16 %v823, %v823
  %v888 = vpack.c.b16 %v824, %v824
  %v889 = vpack.c.b16 %v825, %v825
  %v890 = vpack.c.b16 %v826, %v826
  %v891 = vpack.c.b16 %v827, %v827
  %v892 = vpack.c.b16 %v828, %v828
  %v893 = vpack.c.b16 %v829, %v829
  %v894 = vpack.c.b16 %v830, %v830
  %v895 = vpack.c.b16 %v831, %v831
  %v896 = vpack.c.b16 %v832, %v832
  %v897 = vpack.c.b16 %v833, %v833
  %v898 = vpack.c.b16 %v834, %v834
  %v899 = vpack.c.b16 %v835, %v835
  %v900 = vpack.c.b16 %v836, %v836
  %v901 = vpack.c.b16 %v837, %v837
  %v902 = vpack.c.b16 %v838, %v838
  %v903 = vpack.c.b16 %v839, %v839
  %v904 = vpack.c.b16 %v840, %v840
  %v905 = vpack.c.b16 %v841, %v841
  %v906 = vpack.c.b16 %v842, %v842
  %v907 = vpack.c.b16 %v843, %v843
  %v908 = vpack.c.b16 %v844, %v844
  %v909 = vpack.c.b16 %v845, %v845
  %v910 = vpack.c.b16 %v846, %v846
  %v911 = vpack.c.b16 %v847, %v847
  %vm976 = vcmask 257024
  %977 = vst.msk [vmem:[%s3] sm:$0xf] %vm976, %v848
  %978 = vst.msk [vmem:[%s3 + $0x4] sm:$0xf] %vm976, %v849
  %979 = vst.msk [vmem:[%s3 + $0x8] sm:$0xf] %vm976, %v850
  %980 = vst.msk [vmem:[%s3 + $0xc] sm:$0xf] %vm976, %v851
  %981 = vst.msk [vmem:[%s3 + $0x10] sm:$0xf] %vm976, %v852
  %982 = vst.msk [vmem:[%s3 + $0x14] sm:$0xf] %vm976, %v853
  %983 = vst.msk [vmem:[%s3 + $0x18] sm:$0xf] %vm976, %v854
  %984 = vst.msk [vmem:[%s3 + $0x1c] sm:$0xf] %vm976, %v855
  %985 = vst.msk [vmem:[%s3 + $0x20] sm:$0xf] %vm976, %v856
  %986 = vst.msk [vmem:[%s3 + $0x24] sm:$0xf] %vm976, %v857
  %987 = vst.msk [vmem:[%s3 + $0x28] sm:$0xf] %vm976, %v858
  %988 = vst.msk [vmem:[%s3 + $0x2c] sm:$0xf] %vm976, %v859
  %989 = vst.msk [vmem:[%s3 + $0x30] sm:$0xf] %vm976, %v860
  %990 = vst.msk [vmem:[%s3 + $0x34] sm:$0xf] %vm976, %v861
  %991 = vst.msk [vmem:[%s3 + $0x38] sm:$0xf] %vm976, %v862
  %992 = vst.msk [vmem:[%s3 + $0x3c] sm:$0xf] %vm976, %v863
  %993 = vst.msk [vmem:[%s3 + $0x40] sm:$0xf] %vm976, %v864
  %994 = vst.msk [vmem:[%s3 + $0x44] sm:$0xf] %vm976, %v865
  %995 = vst.msk [vmem:[%s3 + $0x48] sm:$0xf] %vm976, %v866
  %996 = vst.msk [vmem:[%s3 + $0x4c] sm:$0xf] %vm976, %v867
  %997 = vst.msk [vmem:[%s3 + $0x50] sm:$0xf] %vm976, %v868
  %998 = vst.msk [vmem:[%s3 + $0x54] sm:$0xf] %vm976, %v869
  %999 = vst.msk [vmem:[%s3 + $0x58] sm:$0xf] %vm976, %v870
  %1000 = vst.msk [vmem:[%s3 + $0x5c] sm:$0xf] %vm976, %v871
  %1001 = vst.msk [vmem:[%s3 + $0x60] sm:$0xf] %vm976, %v872
  %1002 = vst.msk [vmem:[%s3 + $0x64] sm:$0xf] %vm976, %v873
  %1003 = vst.msk [vmem:[%s3 + $0x68] sm:$0xf] %vm976, %v874
  %1004 = vst.msk [vmem:[%s3 + $0x6c] sm:$0xf] %vm976, %v875
  %1005 = vst.msk [vmem:[%s3 + $0x70] sm:$0xf] %vm976, %v876
  %1006 = vst.msk [vmem:[%s3 + $0x74] sm:$0xf] %vm976, %v877
  %1007 = vst.msk [vmem:[%s3 + $0x78] sm:$0xf] %vm976, %v878
  %1008 = vst.msk [vmem:[%s3 + $0x7c] sm:$0xf] %vm976, %v879
  %1009 = vst.msk [vmem:[%s3 + $0x80] sm:$0xf] %vm976, %v880
  %1010 = vst.msk [vmem:[%s3 + $0x84] sm:$0xf] %vm976, %v881
  %1011 = vst.msk [vmem:[%s3 + $0x88] sm:$0xf] %vm976, %v882
  %1012 = vst.msk [vmem:[%s3 + $0x8c] sm:$0xf] %vm976, %v883
  %1013 = vst.msk [vmem:[%s3 + $0x90] sm:$0xf] %vm976, %v884
  %1014 = vst.msk [vmem:[%s3 + $0x94] sm:$0xf] %vm976, %v885
  %1015 = vst.msk [vmem:[%s3 + $0x98] sm:$0xf] %vm976, %v886
  %1016 = vst.msk [vmem:[%s3 + $0x9c] sm:$0xf] %vm976, %v887
  %1017 = vst.msk [vmem:[%s3 + $0xa0] sm:$0xf] %vm976, %v888
  %1018 = vst.msk [vmem:[%s3 + $0xa4] sm:$0xf] %vm976, %v889
  %1019 = vst.msk [vmem:[%s3 + $0xa8] sm:$0xf] %vm976, %v890
  %1020 = vst.msk [vmem:[%s3 + $0xac] sm:$0xf] %vm976, %v891
  %1021 = vst.msk [vmem:[%s3 + $0xb0] sm:$0xf] %vm976, %v892
  %1022 = vst.msk [vmem:[%s3 + $0xb4] sm:$0xf] %vm976, %v893
  %1023 = vst.msk [vmem:[%s3 + $0xb8] sm:$0xf] %vm976, %v894
  %1024 = vst.msk [vmem:[%s3 + $0xbc] sm:$0xf] %vm976, %v895
  %1025 = vst.msk [vmem:[%s3 + $0xc0] sm:$0xf] %vm976, %v896
  %1026 = vst.msk [vmem:[%s3 + $0xc4] sm:$0xf] %vm976, %v897
  %1027 = vst.msk [vmem:[%s3 + $0xc8] sm:$0xf] %vm976, %v898
  %1028 = vst.msk [vmem:[%s3 + $0xcc] sm:$0xf] %vm976, %v899
  %1029 = vst.msk [vmem:[%s3 + $0xd0] sm:$0xf] %vm976, %v900
  %1030 = vst.msk [vmem:[%s3 + $0xd4] sm:$0xf] %vm976, %v901
  %1031 = vst.msk [vmem:[%s3 + $0xd8] sm:$0xf] %vm976, %v902
  %1032 = vst.msk [vmem:[%s3 + $0xdc] sm:$0xf] %vm976, %v903
  %1033 = vst.msk [vmem:[%s3 + $0xe0] sm:$0xf] %vm976, %v904
  %1034 = vst.msk [vmem:[%s3 + $0xe4] sm:$0xf] %vm976, %v905
  %1035 = vst.msk [vmem:[%s3 + $0xe8] sm:$0xf] %vm976, %v906
  %1036 = vst.msk [vmem:[%s3 + $0xec] sm:$0xf] %vm976, %v907
  %1037 = vst.msk [vmem:[%s3 + $0xf0] sm:$0xf] %vm976, %v908
  %1038 = vst.msk [vmem:[%s3 + $0xf4] sm:$0xf] %vm976, %v909
  %1039 = vst.msk [vmem:[%s3 + $0xf8] sm:$0xf] %vm976, %v910
  %1040 = vst.msk [vmem:[%s3 + $0xfc] sm:$0xf] %vm976, %v911
  // Predicated region
  $region14: #{vae_policy_forward.7} parent=0 // pred_check
    _
  $region15: #{vae_policy_forward.7} parent=0 // pred_check_branch
    %1042 = sbr.rel (0) target = $region17
  $region16: #{vae_policy_forward.7} parent=0 // pred_region
    _
  $region17: #{vae_policy_forward.7} parent=0 // pred_fallthru
    _
  // Predicated region
  $region18: #{vae_policy_forward.7} parent=0 // pred_check
    _
  $region19: #{vae_policy_forward.7} parent=0 // pred_check_branch
    %1044 = sbr.rel (0) target = $region21
  $region20: #{vae_policy_forward.7} parent=0 // pred_region
    _
  $region21: #{vae_policy_forward.7} parent=0 // pred_fallthru
    _

// kernel: vae_policy_forward.8
$region0: #{vae_policy_forward.8}
  #allocation0 [shape = 'u32[]', space=smem, size = 0x4, offset = 0x4, fixed_abs, tag = 'smem constant byte address 0x4 - core index']
  #allocation1 [shape = 'u32[144,128]{1,0:T(1,128)}', space=vmem, size = 0x12000, scoped, tag = 'internal scratch']
  %s0 = inlined_call_operand.vmem [shape: bf16[128,512], index: 0, kind: input, shape index: {}]
  %s1 = inlined_call_operand.vmem [shape: bf16[512,64], index: 1, kind: input, shape index: {}]
  %s2 = inlined_call_operand.vmem [shape: f32[1,64], index: 2, kind: input, shape index: {}]
  %s3 = inlined_call_operand.vmem [shape: bf16[128,64], index: 3, kind: output, shape index: {}]
  %s4 = sld [smem:[#allocation0]]
  $region22: #{vae_policy_forward.8} parent=0
    _
  %s6 = ssub.s32 1, %s4
  %s7 = scalar_select 0, %s6, %s4
  // Predicated region
  $region2: #{vae_policy_forward.8} parent=0 // pred_check
    _
  $region3: #{vae_policy_forward.8} parent=0 // pred_check_branch
    %9 = sbr.rel (0) target = $region5
  $region4: #{vae_policy_forward.8} parent=0 // pred_region
    _
  $region5: #{vae_policy_forward.8} parent=0 // pred_fallthru
    _
  // Predicated region
  $region6: #{vae_policy_forward.8} parent=0 // pred_check
    _
  $region7: #{vae_policy_forward.8} parent=0 // pred_check_branch
    %11 = sbr.rel (0) target = $region9
  $region8: #{vae_policy_forward.8} parent=0 // pred_region
    _
  $region9: #{vae_policy_forward.8} parent=0 // pred_fallthru
    _
  // Predicated region
  $region10: #{vae_policy_forward.8} parent=0 // pred_check
    _
  $region11: #{vae_policy_forward.8} parent=0 // pred_check_branch
    %13 = sbr.rel (0) target = $region13
  $region12: #{vae_policy_forward.8} parent=0 // pred_region
    _
  $region13: #{vae_policy_forward.8} parent=0 // pred_fallthru
    _
  %v15 = vld [vmem:[%s0] sm:$0xff]
  %v16 = vld [vmem:[%s0 + $0x8] sm:$0xff]
  %v17 = vld [vmem:[%s0 + $0x10] sm:$0xff]
  %v18 = vld [vmem:[%s0 + $0x18] sm:$0xff]
  %v19 = vld [vmem:[%s0 + $0x20] sm:$0xff]
  %v20 = vld [vmem:[%s0 + $0x28] sm:$0xff]
  %v21 = vld [vmem:[%s0 + $0x30] sm:$0xff]
  %v22 = vld [vmem:[%s0 + $0x38] sm:$0xff]
  %v23 = vld [vmem:[%s0 + $0x40] sm:$0xff]
  %v24 = vld [vmem:[%s0 + $0x48] sm:$0xff]
  %v25 = vld [vmem:[%s0 + $0x50] sm:$0xff]
  %v26 = vld [vmem:[%s0 + $0x58] sm:$0xff]
  %v27 = vld [vmem:[%s0 + $0x60] sm:$0xff]
  %v28 = vld [vmem:[%s0 + $0x68] sm:$0xff]
  %v29 = vld [vmem:[%s0 + $0x70] sm:$0xff]
  %v30 = vld [vmem:[%s0 + $0x78] sm:$0xff]
  %v31 = vld [vmem:[%s0 + $0x80] sm:$0xff]
  %v32 = vld [vmem:[%s0 + $0x88] sm:$0xff]
  %v33 = vld [vmem:[%s0 + $0x90] sm:$0xff]
  %v34 = vld [vmem:[%s0 + $0x98] sm:$0xff]
  %v35 = vld [vmem:[%s0 + $0xa0] sm:$0xff]
  %v36 = vld [vmem:[%s0 + $0xa8] sm:$0xff]
  %v37 = vld [vmem:[%s0 + $0xb0] sm:$0xff]
  %v38 = vld [vmem:[%s0 + $0xb8] sm:$0xff]
  %v39 = vld [vmem:[%s0 + $0xc0] sm:$0xff]
  %v40 = vld [vmem:[%s0 + $0xc8] sm:$0xff]
  %v41 = vld [vmem:[%s0 + $0xd0] sm:$0xff]
  %v42 = vld [vmem:[%s0 + $0xd8] sm:$0xff]
  %v43 = vld [vmem:[%s0 + $0xe0] sm:$0xff]
  %v44 = vld [vmem:[%s0 + $0xe8] sm:$0xff]
  %v45 = vld [vmem:[%s0 + $0xf0] sm:$0xff]
  %v46 = vld [vmem:[%s0 + $0xf8] sm:$0xff]
  %v47 = vld [vmem:[%s1] sm:$0xf]
  %v48 = vld [vmem:[%s1 + $0x4] sm:$0xf]
  %v49 = vld [vmem:[%s1 + $0x8] sm:$0xf]
  %v50 = vld [vmem:[%s1 + $0xc] sm:$0xf]
  %v51 = vld [vmem:[%s1 + $0x10] sm:$0xf]
  %v52 = vld [vmem:[%s1 + $0x14] sm:$0xf]
  %v53 = vld [vmem:[%s1 + $0x18] sm:$0xf]
  %v54 = vld [vmem:[%s1 + $0x1c] sm:$0xf]
  %v55 = vld [vmem:[%s1 + $0x20] sm:$0xf]
  %v56 = vld [vmem:[%s1 + $0x24] sm:$0xf]
  %v57 = vld [vmem:[%s1 + $0x28] sm:$0xf]
  %v58 = vld [vmem:[%s1 + $0x2c] sm:$0xf]
  %v59 = vld [vmem:[%s1 + $0x30] sm:$0xf]
  %v60 = vld [vmem:[%s1 + $0x34] sm:$0xf]
  %v61 = vld [vmem:[%s1 + $0x38] sm:$0xf]
  %v62 = vld [vmem:[%s1 + $0x3c] sm:$0xf]
  %v63 = vld [vmem:[%s1 + $0x40] sm:$0xf]
  %v64 = vld [vmem:[%s1 + $0x44] sm:$0xf]
  %v65 = vld [vmem:[%s1 + $0x48] sm:$0xf]
  %v66 = vld [vmem:[%s1 + $0x4c] sm:$0xf]
  %v67 = vld [vmem:[%s1 + $0x50] sm:$0xf]
  %v68 = vld [vmem:[%s1 + $0x54] sm:$0xf]
  %v69 = vld [vmem:[%s1 + $0x58] sm:$0xf]
  %v70 = vld [vmem:[%s1 + $0x5c] sm:$0xf]
  %v71 = vld [vmem:[%s1 + $0x60] sm:$0xf]
  %v72 = vld [vmem:[%s1 + $0x64] sm:$0xf]
  %v73 = vld [vmem:[%s1 + $0x68] sm:$0xf]
  %v74 = vld [vmem:[%s1 + $0x6c] sm:$0xf]
  %v75 = vld [vmem:[%s1 + $0x70] sm:$0xf]
  %v76 = vld [vmem:[%s1 + $0x74] sm:$0xf]
  %v77 = vld [vmem:[%s1 + $0x78] sm:$0xf]
  %v78 = vld [vmem:[%s1 + $0x7c] sm:$0xf]
  %v79 = vld [vmem:[%s1 + $0x80] sm:$0xf]
  %v80 = vld [vmem:[%s1 + $0x84] sm:$0xf]
  %v81 = vld [vmem:[%s1 + $0x88] sm:$0xf]
  %v82 = vld [vmem:[%s1 + $0x8c] sm:$0xf]
  %v83 = vld [vmem:[%s1 + $0x90] sm:$0xf]
  %v84 = vld [vmem:[%s1 + $0x94] sm:$0xf]
  %v85 = vld [vmem:[%s1 + $0x98] sm:$0xf]
  %v86 = vld [vmem:[%s1 + $0x9c] sm:$0xf]
  %v87 = vld [vmem:[%s1 + $0xa0] sm:$0xf]
  %v88 = vld [vmem:[%s1 + $0xa4] sm:$0xf]
  %v89 = vld [vmem:[%s1 + $0xa8] sm:$0xf]
  %v90 = vld [vmem:[%s1 + $0xac] sm:$0xf]
  %v91 = vld [vmem:[%s1 + $0xb0] sm:$0xf]
  %v92 = vld [vmem:[%s1 + $0xb4] sm:$0xf]
  %v93 = vld [vmem:[%s1 + $0xb8] sm:$0xf]
  %v94 = vld [vmem:[%s1 + $0xbc] sm:$0xf]
  %v95 = vld [vmem:[%s1 + $0xc0] sm:$0xf]
  %v96 = vld [vmem:[%s1 + $0xc4] sm:$0xf]
  %v97 = vld [vmem:[%s1 + $0xc8] sm:$0xf]
  %v98 = vld [vmem:[%s1 + $0xcc] sm:$0xf]
  %v99 = vld [vmem:[%s1 + $0xd0] sm:$0xf]
  %v100 = vld [vmem:[%s1 + $0xd4] sm:$0xf]
  %v101 = vld [vmem:[%s1 + $0xd8] sm:$0xf]
  %v102 = vld [vmem:[%s1 + $0xdc] sm:$0xf]
  %v103 = vld [vmem:[%s1 + $0xe0] sm:$0xf]
  %v104 = vld [vmem:[%s1 + $0xe4] sm:$0xf]
  %v105 = vld [vmem:[%s1 + $0xe8] sm:$0xf]
  %v106 = vld [vmem:[%s1 + $0xec] sm:$0xf]
  %v107 = vld [vmem:[%s1 + $0xf0] sm:$0xf]
  %v108 = vld [vmem:[%s1 + $0xf4] sm:$0xf]
  %v109 = vld [vmem:[%s1 + $0xf8] sm:$0xf]
  %v110 = vld [vmem:[%s1 + $0xfc] sm:$0xf]
  %v111 = vld [vmem:[%s2] sm:$0x1]
  %v113 = vlaneseq
  %v114 = vshrl.u32 %v113, 7
  %v115 = vsub.s32 0, %v114
  %v116 = vrot.slane %v111, %v115
  %v150 = vunpack.c.l.b16 %v15
  %v151 = vunpack.c.h.b16 %v15
  %v152 = vunpack.c.l.b16 %v16
  %v153 = vunpack.c.h.b16 %v16
  %v154 = vunpack.c.l.b16 %v17
  %v155 = vunpack.c.h.b16 %v17
  %v156 = vunpack.c.l.b16 %v18
  %v157 = vunpack.c.h.b16 %v18
  %v158 = vunpack.c.l.b16 %v19
  %v159 = vunpack.c.h.b16 %v19
  %v160 = vunpack.c.l.b16 %v20
  %v161 = vunpack.c.h.b16 %v20
  %v162 = vunpack.c.l.b16 %v21
  %v163 = vunpack.c.h.b16 %v21
  %v164 = vunpack.c.l.b16 %v22
  %v165 = vunpack.c.h.b16 %v22
  %v166 = vunpack.c.l.b16 %v23
  %v167 = vunpack.c.h.b16 %v23
  %v168 = vunpack.c.l.b16 %v24
  %v169 = vunpack.c.h.b16 %v24
  %v170 = vunpack.c.l.b16 %v25
  %v171 = vunpack.c.h.b16 %v25
  %v172 = vunpack.c.l.b16 %v26
  %v173 = vunpack.c.h.b16 %v26
  %v174 = vunpack.c.l.b16 %v27
  %v175 = vunpack.c.h.b16 %v27
  %v176 = vunpack.c.l.b16 %v28
  %v177 = vunpack.c.h.b16 %v28
  %v178 = vunpack.c.l.b16 %v29
  %v179 = vunpack.c.h.b16 %v29
  %v180 = vunpack.c.l.b16 %v30
  %v181 = vunpack.c.h.b16 %v30
  %v182 = vunpack.c.l.b16 %v31
  %v183 = vunpack.c.h.b16 %v31
  %v184 = vunpack.c.l.b16 %v32
  %v185 = vunpack.c.h.b16 %v32
  %v186 = vunpack.c.l.b16 %v33
  %v187 = vunpack.c.h.b16 %v33
  %v188 = vunpack.c.l.b16 %v34
  %v189 = vunpack.c.h.b16 %v34
  %v190 = vunpack.c.l.b16 %v35
  %v191 = vunpack.c.h.b16 %v35
  %v192 = vunpack.c.l.b16 %v36
  %v193 = vunpack.c.h.b16 %v36
  %v194 = vunpack.c.l.b16 %v37
  %v195 = vunpack.c.h.b16 %v37
  %v196 = vunpack.c.l.b16 %v38
  %v197 = vunpack.c.h.b16 %v38
  %v198 = vunpack.c.l.b16 %v39
  %v199 = vunpack.c.h.b16 %v39
  %v200 = vunpack.c.l.b16 %v40
  %v201 = vunpack.c.h.b16 %v40
  %v202 = vunpack.c.l.b16 %v41
  %v203 = vunpack.c.h.b16 %v41
  %v204 = vunpack.c.l.b16 %v42
  %v205 = vunpack.c.h.b16 %v42
  %v206 = vunpack.c.l.b16 %v43
  %v207 = vunpack.c.h.b16 %v43
  %v208 = vunpack.c.l.b16 %v44
  %v209 = vunpack.c.h.b16 %v44
  %v210 = vunpack.c.l.b16 %v45
  %v211 = vunpack.c.h.b16 %v45
  %v212 = vunpack.c.l.b16 %v46
  %v213 = vunpack.c.h.b16 %v46
  %v214 = vpack.c.b16 %v154, %v150
  %v215 = vpack.c.b16 %v155, %v151
  %v216 = vpack.c.b16 %v156, %v152
  %v217 = vpack.c.b16 %v157, %v153
  %v218 = vpack.c.b16 %v162, %v158
  %v219 = vpack.c.b16 %v163, %v159
  %v220 = vpack.c.b16 %v164, %v160
  %v221 = vpack.c.b16 %v165, %v161
  %v222 = vpack.c.b16 %v170, %v166
  %v223 = vpack.c.b16 %v171, %v167
  %v224 = vpack.c.b16 %v172, %v168
  %v225 = vpack.c.b16 %v173, %v169
  %v226 = vpack.c.b16 %v178, %v174
  %v227 = vpack.c.b16 %v179, %v175
  %v228 = vpack.c.b16 %v180, %v176
  %v229 = vpack.c.b16 %v181, %v177
  %v230 = vpack.c.b16 %v186, %v182
  %v231 = vpack.c.b16 %v187, %v183
  %v232 = vpack.c.b16 %v188, %v184
  %v233 = vpack.c.b16 %v189, %v185
  %v234 = vpack.c.b16 %v194, %v190
  %v235 = vpack.c.b16 %v195, %v191
  %v236 = vpack.c.b16 %v196, %v192
  %v237 = vpack.c.b16 %v197, %v193
  %v238 = vpack.c.b16 %v202, %v198
  %v239 = vpack.c.b16 %v203, %v199
  %v240 = vpack.c.b16 %v204, %v200
  %v241 = vpack.c.b16 %v205, %v201
  %v242 = vpack.c.b16 %v210, %v206
  %v243 = vpack.c.b16 %v211, %v207
  %v244 = vpack.c.b16 %v212, %v208
  %v245 = vpack.c.b16 %v213, %v209
  %v342 = vunpack.c.l.b16 %v47
  %v343 = vunpack.c.l.b16 %v48
  %v344 = vunpack.c.l.b16 %v49
  %v345 = vunpack.c.l.b16 %v50
  %v346 = vunpack.c.l.b16 %v51
  %v347 = vunpack.c.l.b16 %v52
  %v348 = vunpack.c.l.b16 %v53
  %v349 = vunpack.c.l.b16 %v54
  %v350 = vunpack.c.l.b16 %v55
  %v351 = vunpack.c.l.b16 %v56
  %v352 = vunpack.c.l.b16 %v57
  %v353 = vunpack.c.l.b16 %v58
  %v354 = vunpack.c.l.b16 %v59
  %v355 = vunpack.c.l.b16 %v60
  %v356 = vunpack.c.l.b16 %v61
  %v357 = vunpack.c.l.b16 %v62
  %v358 = vunpack.c.l.b16 %v63
  %v359 = vunpack.c.l.b16 %v64
  %v360 = vunpack.c.l.b16 %v65
  %v361 = vunpack.c.l.b16 %v66
  %v362 = vunpack.c.l.b16 %v67
  %v363 = vunpack.c.l.b16 %v68
  %v364 = vunpack.c.l.b16 %v69
  %v365 = vunpack.c.l.b16 %v70
  %v366 = vunpack.c.l.b16 %v71
  %v367 = vunpack.c.l.b16 %v72
  %v368 = vunpack.c.l.b16 %v73
  %v369 = vunpack.c.l.b16 %v74
  %v370 = vunpack.c.l.b16 %v75
  %v371 = vunpack.c.l.b16 %v76
  %v372 = vunpack.c.l.b16 %v77
  %v373 = vunpack.c.l.b16 %v78
  %v374 = vunpack.c.l.b16 %v79
  %v375 = vunpack.c.l.b16 %v80
  %v376 = vunpack.c.l.b16 %v81
  %v377 = vunpack.c.l.b16 %v82
  %v378 = vunpack.c.l.b16 %v83
  %v379 = vunpack.c.l.b16 %v84
  %v380 = vunpack.c.l.b16 %v85
  %v381 = vunpack.c.l.b16 %v86
  %v382 = vunpack.c.l.b16 %v87
  %v383 = vunpack.c.l.b16 %v88
  %v384 = vunpack.c.l.b16 %v89
  %v385 = vunpack.c.l.b16 %v90
  %v386 = vunpack.c.l.b16 %v91
  %v387 = vunpack.c.l.b16 %v92
  %v388 = vunpack.c.l.b16 %v93
  %v389 = vunpack.c.l.b16 %v94
  %v390 = vunpack.c.l.b16 %v95
  %v391 = vunpack.c.l.b16 %v96
  %v392 = vunpack.c.l.b16 %v97
  %v393 = vunpack.c.l.b16 %v98
  %v394 = vunpack.c.l.b16 %v99
  %v395 = vunpack.c.l.b16 %v100
  %v396 = vunpack.c.l.b16 %v101
  %v397 = vunpack.c.l.b16 %v102
  %v398 = vunpack.c.l.b16 %v103
  %v399 = vunpack.c.l.b16 %v104
  %v400 = vunpack.c.l.b16 %v105
  %v401 = vunpack.c.l.b16 %v106
  %v402 = vunpack.c.l.b16 %v107
  %v403 = vunpack.c.l.b16 %v108
  %v404 = vunpack.c.l.b16 %v109
  %v405 = vunpack.c.l.b16 %v110
  %v406 = vpack.c.b16 %v343, %v342
  %v407 = vpack.c.b16 %v345, %v344
  %v408 = vpack.c.b16 %v347, %v346
  %v409 = vpack.c.b16 %v349, %v348
  %v410 = vpack.c.b16 %v351, %v350
  %v411 = vpack.c.b16 %v353, %v352
  %v412 = vpack.c.b16 %v355, %v354
  %v413 = vpack.c.b16 %v357, %v356
  %v414 = vpack.c.b16 %v359, %v358
  %v415 = vpack.c.b16 %v361, %v360
  %v416 = vpack.c.b16 %v363, %v362
  %v417 = vpack.c.b16 %v365, %v364
  %v418 = vpack.c.b16 %v367, %v366
  %v419 = vpack.c.b16 %v369, %v368
  %v420 = vpack.c.b16 %v371, %v370
  %v421 = vpack.c.b16 %v373, %v372
  %v422 = vpack.c.b16 %v375, %v374
  %v423 = vpack.c.b16 %v377, %v376
  %v424 = vpack.c.b16 %v379, %v378
  %v425 = vpack.c.b16 %v381, %v380
  %v426 = vpack.c.b16 %v383, %v382
  %v427 = vpack.c.b16 %v385, %v384
  %v428 = vpack.c.b16 %v387, %v386
  %v429 = vpack.c.b16 %v389, %v388
  %v430 = vpack.c.b16 %v391, %v390
  %v431 = vpack.c.b16 %v393, %v392
  %v432 = vpack.c.b16 %v395, %v394
  %v433 = vpack.c.b16 %v397, %v396
  %v434 = vpack.c.b16 %v399, %v398
  %v435 = vpack.c.b16 %v401, %v400
  %v436 = vpack.c.b16 %v403, %v402
  %v437 = vpack.c.b16 %v405, %v404
  %470 = vmatprep.subr.bf16.mxu0 0
  %471 = vmatpush1.bf16.msra.mxu0 %v406
  %472 = vmatprep.subr.bf16.mxu0 0
  %473 = vmatpush1.bf16.msra.mxu0 %v407
  %474 = vmatprep.subr.bf16.mxu0 0
  %475 = vmatpush1.bf16.msra.mxu0 %v408
  %476 = vmatprep.subr.bf16.mxu0 0
  %477 = vmatpush1.bf16.msra.mxu0 %v409
  %478 = vmatprep.subr.bf16.mxu0 0
  %479 = vmatpush1.bf16.msra.mxu0 %v410
  %480 = vmatprep.subr.bf16.mxu0 0
  %481 = vmatpush1.bf16.msra.mxu0 %v411
  %482 = vmatprep.subr.bf16.mxu0 0
  %483 = vmatpush1.bf16.msra.mxu0 %v412
  %484 = vmatprep.subr.bf16.mxu0 0
  %485 = vmatpush1.bf16.msra.mxu0 %v413
  %486 = vmatprep.subr.bf16.mxu0 0
  %487 = vmatpush1.bf16.msra.mxu0 %v414
  %488 = vmatprep.subr.bf16.mxu0 0
  %489 = vmatpush1.bf16.msra.mxu0 %v415
  %490 = vmatprep.subr.bf16.mxu0 0
  %491 = vmatpush1.bf16.msra.mxu0 %v416
  %492 = vmatprep.subr.bf16.mxu0 0
  %493 = vmatpush1.bf16.msra.mxu0 %v417
  %494 = vmatprep.subr.bf16.mxu0 0
  %495 = vmatpush1.bf16.msra.mxu0 %v418
  %496 = vmatprep.subr.bf16.mxu0 0
  %497 = vmatpush1.bf16.msra.mxu0 %v419
  %498 = vmatprep.subr.bf16.mxu0 0
  %499 = vmatpush1.bf16.msra.mxu0 %v420
  %500 = vmatprep.subr.bf16.mxu0 0
  %501 = vmatpush1.bf16.msra.mxu0 %v421
  %502 = vmatprep.mubr.bf16.mxu0 %v215
  %503 = vmatmul.mubr.bf16.gmra.mrb[0].mxu0 %v214
  %v504 = vpop.f32.mrb[0].mxu0
  %v505 = vadd.f32 %v116, %v504
  %v506 = vpop.f32.mrb[0].mxu0
  %v507 = vpop.f32.mrb[0].mxu0
  %v508 = vadd.f32 %v116, %v507
  %v509 = vpop.f32.mrb[0].mxu0
  %510 = vmatprep.mubr.bf16.mxu0 %v219
  %511 = vmatmul.mubr.bf16.gmra.mrb[0].mxu0 %v218
  %v512 = vpop.f32.mrb[0].mxu0
  %v513 = vadd.f32 %v116, %v512
  %v514 = vpop.f32.mrb[0].mxu0
  %v515 = vpop.f32.mrb[0].mxu0
  %v516 = vadd.f32 %v116, %v515
  %v517 = vpop.f32.mrb[0].mxu0
  %518 = vmatprep.mubr.bf16.mxu0 %v223
  %519 = vmatmul.mubr.bf16.gmra.mrb[0].mxu0 %v222
  %v520 = vpop.f32.mrb[0].mxu0
  %v521 = vadd.f32 %v116, %v520
  %v522 = vpop.f32.mrb[0].mxu0
  %v523 = vpop.f32.mrb[0].mxu0
  %v524 = vadd.f32 %v116, %v523
  %v525 = vpop.f32.mrb[0].mxu0
  %526 = vmatprep.mubr.bf16.mxu0 %v227
  %527 = vmatmul.mubr.bf16.gmra.mrb[0].mxu0 %v226
  %v528 = vpop.f32.mrb[0].mxu0
  %v529 = vadd.f32 %v116, %v528
  %v530 = vpop.f32.mrb[0].mxu0
  %v531 = vpop.f32.mrb[0].mxu0
  %v532 = vadd.f32 %v116, %v531
  %v533 = vpop.f32.mrb[0].mxu0
  %534 = vmatprep.mubr.bf16.mxu0 %v231
  %535 = vmatmul.mubr.bf16.gmra.mrb[0].mxu0 %v230
  %v536 = vpop.f32.mrb[0].mxu0
  %v537 = vadd.f32 %v116, %v536
  %v538 = vpop.f32.mrb[0].mxu0
  %v539 = vpop.f32.mrb[0].mxu0
  %v540 = vadd.f32 %v116, %v539
  %v541 = vpop.f32.mrb[0].mxu0
  %542 = vmatprep.mubr.bf16.mxu0 %v235
  %543 = vmatmul.mubr.bf16.gmra.mrb[0].mxu0 %v234
  %v544 = vpop.f32.mrb[0].mxu0
  %v545 = vadd.f32 %v116, %v544
  %v546 = vpop.f32.mrb[0].mxu0
  %v547 = vpop.f32.mrb[0].mxu0
  %v548 = vadd.f32 %v116, %v547
  %v549 = vpop.f32.mrb[0].mxu0
  %550 = vmatprep.mubr.bf16.mxu0 %v239
  %551 = vmatmul.mubr.bf16.gmra.mrb[0].mxu0 %v238
  %v552 = vpop.f32.mrb[0].mxu0
  %v553 = vadd.f32 %v116, %v552
  %v554 = vpop.f32.mrb[0].mxu0
  %v555 = vpop.f32.mrb[0].mxu0
  %v556 = vadd.f32 %v116, %v555
  %v557 = vpop.f32.mrb[0].mxu0
  %558 = vmatprep.mubr.bf16.mxu0 %v243
  %559 = vmatmul.mubr.bf16.gmra.mrb[0].mxu0 %v242
  %v560 = vpop.f32.mrb[0].mxu0
  %v561 = vadd.f32 %v116, %v560
  %v562 = vpop.f32.mrb[0].mxu0
  %v563 = vpop.f32.mrb[0].mxu0
  %v564 = vadd.f32 %v116, %v563
  %v565 = vpop.f32.mrb[0].mxu0
  %566 = vdwg.mxu0
  %567 = vmatprep.subr.bf16.mxu0 0
  %568 = vmatpush1.bf16.msra.mxu0 %v422
  %569 = vmatprep.subr.bf16.mxu0 0
  %570 = vmatpush1.bf16.msra.mxu0 %v423
  %571 = vmatprep.subr.bf16.mxu0 0
  %572 = vmatpush1.bf16.msra.mxu0 %v424
  %573 = vmatprep.subr.bf16.mxu0 0
  %574 = vmatpush1.bf16.msra.mxu0 %v425
  %575 = vmatprep.subr.bf16.mxu0 0
  %576 = vmatpush1.bf16.msra.mxu0 %v426
  %577 = vmatprep.subr.bf16.mxu0 0
  %578 = vmatpush1.bf16.msra.mxu0 %v427
  %579 = vmatprep.subr.bf16.mxu0 0
  %580 = vmatpush1.bf16.msra.mxu0 %v428
  %581 = vmatprep.subr.bf16.mxu0 0
  %582 = vmatpush1.bf16.msra.mxu0 %v429
  %583 = vmatprep.subr.bf16.mxu0 0
  %584 = vmatpush1.bf16.msra.mxu0 %v430
  %585 = vmatprep.subr.bf16.mxu0 0
  %586 = vmatpush1.bf16.msra.mxu0 %v431
  %587 = vmatprep.subr.bf16.mxu0 0
  %588 = vmatpush1.bf16.msra.mxu0 %v432
  %589 = vmatprep.subr.bf16.mxu0 0
  %590 = vmatpush1.bf16.msra.mxu0 %v433
  %591 = vmatprep.subr.bf16.mxu0 0
  %592 = vmatpush1.bf16.msra.mxu0 %v434
  %593 = vmatprep.subr.bf16.mxu0 0
  %594 = vmatpush1.bf16.msra.mxu0 %v435
  %595 = vmatprep.subr.bf16.mxu0 0
  %596 = vmatpush1.bf16.msra.mxu0 %v436
  %597 = vmatprep.subr.bf16.mxu0 0
  %598 = vmatpush1.bf16.msra.mxu0 %v437
  %599 = vmatprep.mubr.bf16.mxu0 %v217
  %600 = vmatmul.mubr.bf16.gmra.mrb[0].mxu0 %v216
  %v601 = vpop.f32.mrb[0].mxu0
  %v602 = vadd.f32 %v505, %v601
  %v603 = vpop.f32.mrb[0].mxu0
  %v604 = vpop.f32.mrb[0].mxu0
  %v605 = vadd.f32 %v508, %v604
  %v606 = vpop.f32.mrb[0].mxu0
  %607 = vmatprep.mubr.bf16.mxu0 %v221
  %608 = vmatmul.mubr.bf16.gmra.mrb[0].mxu0 %v220
  %v609 = vpop.f32.mrb[0].mxu0
  %v610 = vadd.f32 %v513, %v609
  %v611 = vpop.f32.mrb[0].mxu0
  %v612 = vpop.f32.mrb[0].mxu0
  %v613 = vadd.f32 %v516, %v612
  %v614 = vpop.f32.mrb[0].mxu0
  %615 = vmatprep.mubr.bf16.mxu0 %v225
  %616 = vmatmul.mubr.bf16.gmra.mrb[0].mxu0 %v224
  %v617 = vpop.f32.mrb[0].mxu0
  %v618 = vadd.f32 %v521, %v617
  %v619 = vpop.f32.mrb[0].mxu0
  %v620 = vpop.f32.mrb[0].mxu0
  %v621 = vadd.f32 %v524, %v620
  %v622 = vpop.f32.mrb[0].mxu0
  %623 = vmatprep.mubr.bf16.mxu0 %v229
  %624 = vmatmul.mubr.bf16.gmra.mrb[0].mxu0 %v228
  %v625 = vpop.f32.mrb[0].mxu0
  %v626 = vadd.f32 %v529, %v625
  %v627 = vpop.f32.mrb[0].mxu0
  %v628 = vpop.f32.mrb[0].mxu0
  %v629 = vadd.f32 %v532, %v628
  %v630 = vpop.f32.mrb[0].mxu0
  %631 = vmatprep.mubr.bf16.mxu0 %v233
  %632 = vmatmul.mubr.bf16.gmra.mrb[0].mxu0 %v232
  %v633 = vpop.f32.mrb[0].mxu0
  %v634 = vadd.f32 %v537, %v633
  %v635 = vpop.f32.mrb[0].mxu0
  %v636 = vpop.f32.mrb[0].mxu0
  %v637 = vadd.f32 %v540, %v636
  %v638 = vpop.f32.mrb[0].mxu0
  %639 = vmatprep.mubr.bf16.mxu0 %v237
  %640 = vmatmul.mubr.bf16.gmra.mrb[0].mxu0 %v236
  %v641 = vpop.f32.mrb[0].mxu0
  %v642 = vadd.f32 %v545, %v641
  %v643 = vpop.f32.mrb[0].mxu0
  %v644 = vpop.f32.mrb[0].mxu0
  %v645 = vadd.f32 %v548, %v644
  %v646 = vpop.f32.mrb[0].mxu0
  %647 = vmatprep.mubr.bf16.mxu0 %v241
  %648 = vmatmul.mubr.bf16.gmra.mrb[0].mxu0 %v240
  %v649 = vpop.f32.mrb[0].mxu0
  %v650 = vadd.f32 %v553, %v649
  %v651 = vpop.f32.mrb[0].mxu0
  %v652 = vpop.f32.mrb[0].mxu0
  %v653 = vadd.f32 %v556, %v652
  %v654 = vpop.f32.mrb[0].mxu0
  %655 = vmatprep.mubr.bf16.mxu0 %v245
  %656 = vmatmul.mubr.bf16.gmra.mrb[0].mxu0 %v244
  %v657 = vpop.f32.mrb[0].mxu0
  %v658 = vadd.f32 %v561, %v657
  %v659 = vpop.f32.mrb[0].mxu0
  %v660 = vpop.f32.mrb[0].mxu0
  %v661 = vadd.f32 %v564, %v660
  %v662 = vpop.f32.mrb[0].mxu0
  %663 = vdwg.mxu0
  %v664 = vmax.f32 %v602, 0.0
  %v665 = vmax.f32 %v605, 0.0
  %v666 = vmax.f32 %v610, 0.0
  %v667 = vmax.f32 %v613, 0.0
  %v668 = vmax.f32 %v618, 0.0
  %v669 = vmax.f32 %v621, 0.0
  %v670 = vmax.f32 %v626, 0.0
  %v671 = vmax.f32 %v629, 0.0
  %v672 = vmax.f32 %v634, 0.0
  %v673 = vmax.f32 %v637, 0.0
  %v674 = vmax.f32 %v642, 0.0
  %v675 = vmax.f32 %v645, 0.0
  %v676 = vmax.f32 %v650, 0.0
  %v677 = vmax.f32 %v653, 0.0
  %v678 = vmax.f32 %v658, 0.0
  %v679 = vmax.f32 %v661, 0.0
  %v680 = vpack.c.bf16 %v665, %v664
  %v681 = vpack.c.bf16 %v667, %v666
  %v682 = vpack.c.bf16 %v669, %v668
  %v683 = vpack.c.bf16 %v671, %v670
  %v684 = vpack.c.bf16 %v673, %v672
  %v685 = vpack.c.bf16 %v675, %v674
  %v686 = vpack.c.bf16 %v677, %v676
  %v687 = vpack.c.bf16 %v679, %v678
  %v696 = vunpack.c.l.b16 %v680
  %v697 = vunpack.c.h.b16 %v680
  %v698 = vunpack.c.l.b16 %v681
  %v699 = vunpack.c.h.b16 %v681
  %v700 = vunpack.c.l.b16 %v682
  %v701 = vunpack.c.h.b16 %v682
  %v702 = vunpack.c.l.b16 %v683
  %v703 = vunpack.c.h.b16 %v683
  %v704 = vunpack.c.l.b16 %v684
  %v705 = vunpack.c.h.b16 %v684
  %v706 = vunpack.c.l.b16 %v685
  %v707 = vunpack.c.h.b16 %v685
  %v708 = vunpack.c.l.b16 %v686
  %v709 = vunpack.c.h.b16 %v686
  %v710 = vunpack.c.l.b16 %v687
  %v711 = vunpack.c.h.b16 %v687
  %v712 = vpack.c.b16 %v696, %v696
  %v713 = vpack.c.b16 %v697, %v697
  %v714 = vpack.c.b16 %v698, %v698
  %v715 = vpack.c.b16 %v699, %v699
  %v716 = vpack.c.b16 %v700, %v700
  %v717 = vpack.c.b16 %v701, %v701
  %v718 = vpack.c.b16 %v702, %v702
  %v719 = vpack.c.b16 %v703, %v703
  %v720 = vpack.c.b16 %v704, %v704
  %v721 = vpack.c.b16 %v705, %v705
  %v722 = vpack.c.b16 %v706, %v706
  %v723 = vpack.c.b16 %v707, %v707
  %v724 = vpack.c.b16 %v708, %v708
  %v725 = vpack.c.b16 %v709, %v709
  %v726 = vpack.c.b16 %v710, %v710
  %v727 = vpack.c.b16 %v711, %v711
  %vm744 = vcmask 519168
  %745 = vst.msk [vmem:[%s3] sm:$0xf] %vm744, %v712
  %746 = vst.msk [vmem:[%s3 + $0x4] sm:$0xf] %vm744, %v713
  %747 = vst.msk [vmem:[%s3 + $0x8] sm:$0xf] %vm744, %v714
  %748 = vst.msk [vmem:[%s3 + $0xc] sm:$0xf] %vm744, %v715
  %749 = vst.msk [vmem:[%s3 + $0x10] sm:$0xf] %vm744, %v716
  %750 = vst.msk [vmem:[%s3 + $0x14] sm:$0xf] %vm744, %v717
  %751 = vst.msk [vmem:[%s3 + $0x18] sm:$0xf] %vm744, %v718
  %752 = vst.msk [vmem:[%s3 + $0x1c] sm:$0xf] %vm744, %v719
  %753 = vst.msk [vmem:[%s3 + $0x20] sm:$0xf] %vm744, %v720
  %754 = vst.msk [vmem:[%s3 + $0x24] sm:$0xf] %vm744, %v721
  %755 = vst.msk [vmem:[%s3 + $0x28] sm:$0xf] %vm744, %v722
  %756 = vst.msk [vmem:[%s3 + $0x2c] sm:$0xf] %vm744, %v723
  %757 = vst.msk [vmem:[%s3 + $0x30] sm:$0xf] %vm744, %v724
  %758 = vst.msk [vmem:[%s3 + $0x34] sm:$0xf] %vm744, %v725
  %759 = vst.msk [vmem:[%s3 + $0x38] sm:$0xf] %vm744, %v726
  %760 = vst.msk [vmem:[%s3 + $0x3c] sm:$0xf] %vm744, %v727
  // Predicated region
  $region14: #{vae_policy_forward.8} parent=0 // pred_check
    _
  $region15: #{vae_policy_forward.8} parent=0 // pred_check_branch
    %762 = sbr.rel (0) target = $region17
  $region16: #{vae_policy_forward.8} parent=0 // pred_region
    _
  $region17: #{vae_policy_forward.8} parent=0 // pred_fallthru
    _
  // Predicated region
  $region18: #{vae_policy_forward.8} parent=0 // pred_check
    _
  $region19: #{vae_policy_forward.8} parent=0 // pred_check_branch
    %764 = sbr.rel (0) target = $region21
  $region20: #{vae_policy_forward.8} parent=0 // pred_region
    _
  $region21: #{vae_policy_forward.8} parent=0 // pred_fallthru
    _

// kernel: vae_policy_forward.9
$region0: #{vae_policy_forward.9}
  #allocation0 [shape = 'u32[]', space=smem, size = 0x4, offset = 0x4, fixed_abs, tag = 'smem constant byte address 0x4 - core index']
  #allocation1 [shape = 'u32[144,128]{1,0:T(1,128)}', space=vmem, size = 0x12000, scoped, tag = 'internal scratch']
  %s0 = inlined_call_operand.vmem [shape: bf16[32,1024], index: 0, kind: input, shape index: {}]
  %s1 = inlined_call_operand.vmem [shape: bf16[1024,128], index: 1, kind: input, shape index: {}]
  %s2 = inlined_call_operand.vmem [shape: f32[1,128], index: 2, kind: input, shape index: {}]
  %s3 = inlined_call_operand.vmem [shape: bf16[32,128], index: 3, kind: output, shape index: {}]
  %s4 = sld [smem:[#allocation0]]
  $region22: #{vae_policy_forward.9} parent=0
    _
  %s6 = ssub.s32 1, %s4
  %s7 = scalar_select 0, %s6, %s4
  // Predicated region
  $region2: #{vae_policy_forward.9} parent=0 // pred_check
    _
  $region3: #{vae_policy_forward.9} parent=0 // pred_check_branch
    %9 = sbr.rel (0) target = $region5
  $region4: #{vae_policy_forward.9} parent=0 // pred_region
    _
  $region5: #{vae_policy_forward.9} parent=0 // pred_fallthru
    _
  // Predicated region
  $region6: #{vae_policy_forward.9} parent=0 // pred_check
    _
  $region7: #{vae_policy_forward.9} parent=0 // pred_check_branch
    %11 = sbr.rel (0) target = $region9
  $region8: #{vae_policy_forward.9} parent=0 // pred_region
    _
  $region9: #{vae_policy_forward.9} parent=0 // pred_fallthru
    _
  // Predicated region
  $region10: #{vae_policy_forward.9} parent=0 // pred_check
    _
  $region11: #{vae_policy_forward.9} parent=0 // pred_check_branch
    %13 = sbr.rel (0) target = $region13
  $region12: #{vae_policy_forward.9} parent=0 // pred_region
    _
  $region13: #{vae_policy_forward.9} parent=0 // pred_fallthru
    _
  %v15 = vld [vmem:[%s0] sm:$0xff]
  %v16 = vld [vmem:[%s0 + $0x8] sm:$0xff]
  %v17 = vld [vmem:[%s0 + $0x10] sm:$0xff]
  %v18 = vld [vmem:[%s0 + $0x18] sm:$0xff]
  %v19 = vld [vmem:[%s0 + $0x20] sm:$0xff]
  %v20 = vld [vmem:[%s0 + $0x28] sm:$0xff]
  %v21 = vld [vmem:[%s0 + $0x30] sm:$0xff]
  %v22 = vld [vmem:[%s0 + $0x38] sm:$0xff]
  %v23 = vld [vmem:[%s0 + $0x40] sm:$0xff]
  %v24 = vld [vmem:[%s0 + $0x48] sm:$0xff]
  %v25 = vld [vmem:[%s0 + $0x50] sm:$0xff]
  %v26 = vld [vmem:[%s0 + $0x58] sm:$0xff]
  %v27 = vld [vmem:[%s0 + $0x60] sm:$0xff]
  %v28 = vld [vmem:[%s0 + $0x68] sm:$0xff]
  %v29 = vld [vmem:[%s0 + $0x70] sm:$0xff]
  %v30 = vld [vmem:[%s0 + $0x78] sm:$0xff]
  %v31 = vld [vmem:[%s1] sm:$0xf]
  %v32 = vld [vmem:[%s1 + $0x4] sm:$0xf]
  %v33 = vld [vmem:[%s1 + $0x8] sm:$0xf]
  %v34 = vld [vmem:[%s1 + $0xc] sm:$0xf]
  %v35 = vld [vmem:[%s1 + $0x10] sm:$0xf]
  %v36 = vld [vmem:[%s1 + $0x14] sm:$0xf]
  %v37 = vld [vmem:[%s1 + $0x18] sm:$0xf]
  %v38 = vld [vmem:[%s1 + $0x1c] sm:$0xf]
  %v39 = vld [vmem:[%s1 + $0x20] sm:$0xf]
  %v40 = vld [vmem:[%s1 + $0x24] sm:$0xf]
  %v41 = vld [vmem:[%s1 + $0x28] sm:$0xf]
  %v42 = vld [vmem:[%s1 + $0x2c] sm:$0xf]
  %v43 = vld [vmem:[%s1 + $0x30] sm:$0xf]
  %v44 = vld [vmem:[%s1 + $0x34] sm:$0xf]
  %v45 = vld [vmem:[%s1 + $0x38] sm:$0xf]
  %v46 = vld [vmem:[%s1 + $0x3c] sm:$0xf]
  %v47 = vld [vmem:[%s1 + $0x40] sm:$0xf]
  %v48 = vld [vmem:[%s1 + $0x44] sm:$0xf]
  %v49 = vld [vmem:[%s1 + $0x48] sm:$0xf]
  %v50 = vld [vmem:[%s1 + $0x4c] sm:$0xf]
  %v51 = vld [vmem:[%s1 + $0x50] sm:$0xf]
  %v52 = vld [vmem:[%s1 + $0x54] sm:$0xf]
  %v53 = vld [vmem:[%s1 + $0x58] sm:$0xf]
  %v54 = vld [vmem:[%s1 + $0x5c] sm:$0xf]
  %v55 = vld [vmem:[%s1 + $0x60] sm:$0xf]
  %v56 = vld [vmem:[%s1 + $0x64] sm:$0xf]
  %v57 = vld [vmem:[%s1 + $0x68] sm:$0xf]
  %v58 = vld [vmem:[%s1 + $0x6c] sm:$0xf]
  %v59 = vld [vmem:[%s1 + $0x70] sm:$0xf]
  %v60 = vld [vmem:[%s1 + $0x74] sm:$0xf]
  %v61 = vld [vmem:[%s1 + $0x78] sm:$0xf]
  %v62 = vld [vmem:[%s1 + $0x7c] sm:$0xf]
  %v63 = vld [vmem:[%s1 + $0x80] sm:$0xf]
  %v64 = vld [vmem:[%s1 + $0x84] sm:$0xf]
  %v65 = vld [vmem:[%s1 + $0x88] sm:$0xf]
  %v66 = vld [vmem:[%s1 + $0x8c] sm:$0xf]
  %v67 = vld [vmem:[%s1 + $0x90] sm:$0xf]
  %v68 = vld [vmem:[%s1 + $0x94] sm:$0xf]
  %v69 = vld [vmem:[%s1 + $0x98] sm:$0xf]
  %v70 = vld [vmem:[%s1 + $0x9c] sm:$0xf]
  %v71 = vld [vmem:[%s1 + $0xa0] sm:$0xf]
  %v72 = vld [vmem:[%s1 + $0xa4] sm:$0xf]
  %v73 = vld [vmem:[%s1 + $0xa8] sm:$0xf]
  %v74 = vld [vmem:[%s1 + $0xac] sm:$0xf]
  %v75 = vld [vmem:[%s1 + $0xb0] sm:$0xf]
  %v76 = vld [vmem:[%s1 + $0xb4] sm:$0xf]
  %v77 = vld [vmem:[%s1 + $0xb8] sm:$0xf]
  %v78 = vld [vmem:[%s1 + $0xbc] sm:$0xf]
  %v79 = vld [vmem:[%s1 + $0xc0] sm:$0xf]
  %v80 = vld [vmem:[%s1 + $0xc4] sm:$0xf]
  %v81 = vld [vmem:[%s1 + $0xc8] sm:$0xf]
  %v82 = vld [vmem:[%s1 + $0xcc] sm:$0xf]
  %v83 = vld [vmem:[%s1 + $0xd0] sm:$0xf]
  %v84 = vld [vmem:[%s1 + $0xd4] sm:$0xf]
  %v85 = vld [vmem:[%s1 + $0xd8] sm:$0xf]
  %v86 = vld [vmem:[%s1 + $0xdc] sm:$0xf]
  %v87 = vld [vmem:[%s1 + $0xe0] sm:$0xf]
  %v88 = vld [vmem:[%s1 + $0xe4] sm:$0xf]
  %v89 = vld [vmem:[%s1 + $0xe8] sm:$0xf]
  %v90 = vld [vmem:[%s1 + $0xec] sm:$0xf]
  %v91 = vld [vmem:[%s1 + $0xf0] sm:$0xf]
  %v92 = vld [vmem:[%s1 + $0xf4] sm:$0xf]
  %v93 = vld [vmem:[%s1 + $0xf8] sm:$0xf]
  %v94 = vld [vmem:[%s1 + $0xfc] sm:$0xf]
  %v95 = vld [vmem:[%s1 + $0x100] sm:$0xf]
  %v96 = vld [vmem:[%s1 + $0x104] sm:$0xf]
  %v97 = vld [vmem:[%s1 + $0x108] sm:$0xf]
  %v98 = vld [vmem:[%s1 + $0x10c] sm:$0xf]
  %v99 = vld [vmem:[%s1 + $0x110] sm:$0xf]
  %v100 = vld [vmem:[%s1 + $0x114] sm:$0xf]
  %v101 = vld [vmem:[%s1 + $0x118] sm:$0xf]
  %v102 = vld [vmem:[%s1 + $0x11c] sm:$0xf]
  %v103 = vld [vmem:[%s1 + $0x120] sm:$0xf]
  %v104 = vld [vmem:[%s1 + $0x124] sm:$0xf]
  %v105 = vld [vmem:[%s1 + $0x128] sm:$0xf]
  %v106 = vld [vmem:[%s1 + $0x12c] sm:$0xf]
  %v107 = vld [vmem:[%s1 + $0x130] sm:$0xf]
  %v108 = vld [vmem:[%s1 + $0x134] sm:$0xf]
  %v109 = vld [vmem:[%s1 + $0x138] sm:$0xf]
  %v110 = vld [vmem:[%s1 + $0x13c] sm:$0xf]
  %v111 = vld [vmem:[%s1 + $0x140] sm:$0xf]
  %v112 = vld [vmem:[%s1 + $0x144] sm:$0xf]
  %v113 = vld [vmem:[%s1 + $0x148] sm:$0xf]
  %v114 = vld [vmem:[%s1 + $0x14c] sm:$0xf]
  %v115 = vld [vmem:[%s1 + $0x150] sm:$0xf]
  %v116 = vld [vmem:[%s1 + $0x154] sm:$0xf]
  %v117 = vld [vmem:[%s1 + $0x158] sm:$0xf]
  %v118 = vld [vmem:[%s1 + $0x15c] sm:$0xf]
  %v119 = vld [vmem:[%s1 + $0x160] sm:$0xf]
  %v120 = vld [vmem:[%s1 + $0x164] sm:$0xf]
  %v121 = vld [vmem:[%s1 + $0x168] sm:$0xf]
  %v122 = vld [vmem:[%s1 + $0x16c] sm:$0xf]
  %v123 = vld [vmem:[%s1 + $0x170] sm:$0xf]
  %v124 = vld [vmem:[%s1 + $0x174] sm:$0xf]
  %v125 = vld [vmem:[%s1 + $0x178] sm:$0xf]
  %v126 = vld [vmem:[%s1 + $0x17c] sm:$0xf]
  %v127 = vld [vmem:[%s1 + $0x180] sm:$0xf]
  %v128 = vld [vmem:[%s1 + $0x184] sm:$0xf]
  %v129 = vld [vmem:[%s1 + $0x188] sm:$0xf]
  %v130 = vld [vmem:[%s1 + $0x18c] sm:$0xf]
  %v131 = vld [vmem:[%s1 + $0x190] sm:$0xf]
  %v132 = vld [vmem:[%s1 + $0x194] sm:$0xf]
  %v133 = vld [vmem:[%s1 + $0x198] sm:$0xf]
  %v134 = vld [vmem:[%s1 + $0x19c] sm:$0xf]
  %v135 = vld [vmem:[%s1 + $0x1a0] sm:$0xf]
  %v136 = vld [vmem:[%s1 + $0x1a4] sm:$0xf]
  %v137 = vld [vmem:[%s1 + $0x1a8] sm:$0xf]
  %v138 = vld [vmem:[%s1 + $0x1ac] sm:$0xf]
  %v139 = vld [vmem:[%s1 + $0x1b0] sm:$0xf]
  %v140 = vld [vmem:[%s1 + $0x1b4] sm:$0xf]
  %v141 = vld [vmem:[%s1 + $0x1b8] sm:$0xf]
  %v142 = vld [vmem:[%s1 + $0x1bc] sm:$0xf]
  %v143 = vld [vmem:[%s1 + $0x1c0] sm:$0xf]
  %v144 = vld [vmem:[%s1 + $0x1c4] sm:$0xf]
  %v145 = vld [vmem:[%s1 + $0x1c8] sm:$0xf]
  %v146 = vld [vmem:[%s1 + $0x1cc] sm:$0xf]
  %v147 = vld [vmem:[%s1 + $0x1d0] sm:$0xf]
  %v148 = vld [vmem:[%s1 + $0x1d4] sm:$0xf]
  %v149 = vld [vmem:[%s1 + $0x1d8] sm:$0xf]
  %v150 = vld [vmem:[%s1 + $0x1dc] sm:$0xf]
  %v151 = vld [vmem:[%s1 + $0x1e0] sm:$0xf]
  %v152 = vld [vmem:[%s1 + $0x1e4] sm:$0xf]
  %v153 = vld [vmem:[%s1 + $0x1e8] sm:$0xf]
  %v154 = vld [vmem:[%s1 + $0x1ec] sm:$0xf]
  %v155 = vld [vmem:[%s1 + $0x1f0] sm:$0xf]
  %v156 = vld [vmem:[%s1 + $0x1f4] sm:$0xf]
  %v157 = vld [vmem:[%s1 + $0x1f8] sm:$0xf]
  %v158 = vld [vmem:[%s1 + $0x1fc] sm:$0xf]
  %v159 = vld [vmem:[%s2] sm:$0x1]
  %v161 = vlaneseq
  %v162 = vshrl.u32 %v161, 7
  %v163 = vsub.s32 0, %v162
  %v164 = vrot.slane %v159, %v163
  %v182 = vunpack.c.l.b16 %v15
  %v183 = vunpack.c.h.b16 %v15
  %v184 = vunpack.c.l.b16 %v16
  %v185 = vunpack.c.h.b16 %v16
  %v186 = vunpack.c.l.b16 %v17
  %v187 = vunpack.c.h.b16 %v17
  %v188 = vunpack.c.l.b16 %v18
  %v189 = vunpack.c.h.b16 %v18
  %v190 = vunpack.c.l.b16 %v19
  %v191 = vunpack.c.h.b16 %v19
  %v192 = vunpack.c.l.b16 %v20
  %v193 = vunpack.c.h.b16 %v20
  %v194 = vunpack.c.l.b16 %v21
  %v195 = vunpack.c.h.b16 %v21
  %v196 = vunpack.c.l.b16 %v22
  %v197 = vunpack.c.h.b16 %v22
  %v198 = vunpack.c.l.b16 %v23
  %v199 = vunpack.c.h.b16 %v23
  %v200 = vunpack.c.l.b16 %v24
  %v201 = vunpack.c.h.b16 %v24
  %v202 = vunpack.c.l.b16 %v25
  %v203 = vunpack.c.h.b16 %v25
  %v204 = vunpack.c.l.b16 %v26
  %v205 = vunpack.c.h.b16 %v26
  %v206 = vunpack.c.l.b16 %v27
  %v207 = vunpack.c.h.b16 %v27
  %v208 = vunpack.c.l.b16 %v28
  %v209 = vunpack.c.h.b16 %v28
  %v210 = vunpack.c.l.b16 %v29
  %v211 = vunpack.c.h.b16 %v29
  %v212 = vunpack.c.l.b16 %v30
  %v213 = vunpack.c.h.b16 %v30
  %v214 = vpack.c.b16 %v190, %v182
  %v215 = vpack.c.b16 %v191, %v183
  %v216 = vpack.c.b16 %v192, %v184
  %v217 = vpack.c.b16 %v193, %v185
  %v218 = vpack.c.b16 %v194, %v186
  %v219 = vpack.c.b16 %v195, %v187
  %v220 = vpack.c.b16 %v196, %v188
  %v221 = vpack.c.b16 %v197, %v189
  %v222 = vpack.c.b16 %v206, %v198
  %v223 = vpack.c.b16 %v207, %v199
  %v224 = vpack.c.b16 %v208, %v200
  %v225 = vpack.c.b16 %v209, %v201
  %v226 = vpack.c.b16 %v210, %v202
  %v227 = vpack.c.b16 %v211, %v203
  %v228 = vpack.c.b16 %v212, %v204
  %v229 = vpack.c.b16 %v213, %v205
  %v374 = vunpack.c.l.b16 %v31
  %v375 = vunpack.c.l.b16 %v32
  %v376 = vunpack.c.l.b16 %v33
  %v377 = vunpack.c.l.b16 %v34
  %v378 = vunpack.c.l.b16 %v35
  %v379 = vunpack.c.l.b16 %v36
  %v380 = vunpack.c.l.b16 %v37
  %v381 = vunpack.c.l.b16 %v38
  %v382 = vunpack.c.l.b16 %v39
  %v383 = vunpack.c.l.b16 %v40
  %v384 = vunpack.c.l.b16 %v41
  %v385 = vunpack.c.l.b16 %v42
  %v386 = vunpack.c.l.b16 %v43
  %v387 = vunpack.c.l.b16 %v44
  %v388 = vunpack.c.l.b16 %v45
  %v389 = vunpack.c.l.b16 %v46
  %v390 = vunpack.c.l.b16 %v47
  %v391 = vunpack.c.l.b16 %v48
  %v392 = vunpack.c.l.b16 %v49
  %v393 = vunpack.c.l.b16 %v50
  %v394 = vunpack.c.l.b16 %v51
  %v395 = vunpack.c.l.b16 %v52
  %v396 = vunpack.c.l.b16 %v53
  %v397 = vunpack.c.l.b16 %v54
  %v398 = vunpack.c.l.b16 %v55
  %v399 = vunpack.c.l.b16 %v56
  %v400 = vunpack.c.l.b16 %v57
  %v401 = vunpack.c.l.b16 %v58
  %v402 = vunpack.c.l.b16 %v59
  %v403 = vunpack.c.l.b16 %v60
  %v404 = vunpack.c.l.b16 %v61
  %v405 = vunpack.c.l.b16 %v62
  %v406 = vunpack.c.l.b16 %v63
  %v407 = vunpack.c.l.b16 %v64
  %v408 = vunpack.c.l.b16 %v65
  %v409 = vunpack.c.l.b16 %v66
  %v410 = vunpack.c.l.b16 %v67
  %v411 = vunpack.c.l.b16 %v68
  %v412 = vunpack.c.l.b16 %v69
  %v413 = vunpack.c.l.b16 %v70
  %v414 = vunpack.c.l.b16 %v71
  %v415 = vunpack.c.l.b16 %v72
  %v416 = vunpack.c.l.b16 %v73
  %v417 = vunpack.c.l.b16 %v74
  %v418 = vunpack.c.l.b16 %v75
  %v419 = vunpack.c.l.b16 %v76
  %v420 = vunpack.c.l.b16 %v77
  %v421 = vunpack.c.l.b16 %v78
  %v422 = vunpack.c.l.b16 %v79
  %v423 = vunpack.c.l.b16 %v80
  %v424 = vunpack.c.l.b16 %v81
  %v425 = vunpack.c.l.b16 %v82
  %v426 = vunpack.c.l.b16 %v83
  %v427 = vunpack.c.l.b16 %v84
  %v428 = vunpack.c.l.b16 %v85
  %v429 = vunpack.c.l.b16 %v86
  %v430 = vunpack.c.l.b16 %v87
  %v431 = vunpack.c.l.b16 %v88
  %v432 = vunpack.c.l.b16 %v89
  %v433 = vunpack.c.l.b16 %v90
  %v434 = vunpack.c.l.b16 %v91
  %v435 = vunpack.c.l.b16 %v92
  %v436 = vunpack.c.l.b16 %v93
  %v437 = vunpack.c.l.b16 %v94
  %v438 = vunpack.c.l.b16 %v95
  %v439 = vunpack.c.l.b16 %v96
  %v440 = vunpack.c.l.b16 %v97
  %v441 = vunpack.c.l.b16 %v98
  %v442 = vunpack.c.l.b16 %v99
  %v443 = vunpack.c.l.b16 %v100
  %v444 = vunpack.c.l.b16 %v101
  %v445 = vunpack.c.l.b16 %v102
  %v446 = vunpack.c.l.b16 %v103
  %v447 = vunpack.c.l.b16 %v104
  %v448 = vunpack.c.l.b16 %v105
  %v449 = vunpack.c.l.b16 %v106
  %v450 = vunpack.c.l.b16 %v107
  %v451 = vunpack.c.l.b16 %v108
  %v452 = vunpack.c.l.b16 %v109
  %v453 = vunpack.c.l.b16 %v110
  %v454 = vunpack.c.l.b16 %v111
  %v455 = vunpack.c.l.b16 %v112
  %v456 = vunpack.c.l.b16 %v113
  %v457 = vunpack.c.l.b16 %v114
  %v458 = vunpack.c.l.b16 %v115
  %v459 = vunpack.c.l.b16 %v116
  %v460 = vunpack.c.l.b16 %v117
  %v461 = vunpack.c.l.b16 %v118
  %v462 = vunpack.c.l.b16 %v119
  %v463 = vunpack.c.l.b16 %v120
  %v464 = vunpack.c.l.b16 %v121
  %v465 = vunpack.c.l.b16 %v122
  %v466 = vunpack.c.l.b16 %v123
  %v467 = vunpack.c.l.b16 %v124
  %v468 = vunpack.c.l.b16 %v125
  %v469 = vunpack.c.l.b16 %v126
  %v470 = vunpack.c.l.b16 %v127
  %v471 = vunpack.c.l.b16 %v128
  %v472 = vunpack.c.l.b16 %v129
  %v473 = vunpack.c.l.b16 %v130
  %v474 = vunpack.c.l.b16 %v131
  %v475 = vunpack.c.l.b16 %v132
  %v476 = vunpack.c.l.b16 %v133
  %v477 = vunpack.c.l.b16 %v134
  %v478 = vunpack.c.l.b16 %v135
  %v479 = vunpack.c.l.b16 %v136
  %v480 = vunpack.c.l.b16 %v137
  %v481 = vunpack.c.l.b16 %v138
  %v482 = vunpack.c.l.b16 %v139
  %v483 = vunpack.c.l.b16 %v140
  %v484 = vunpack.c.l.b16 %v141
  %v485 = vunpack.c.l.b16 %v142
  %v486 = vunpack.c.l.b16 %v143
  %v487 = vunpack.c.l.b16 %v144
  %v488 = vunpack.c.l.b16 %v145
  %v489 = vunpack.c.l.b16 %v146
  %v490 = vunpack.c.l.b16 %v147
  %v491 = vunpack.c.l.b16 %v148
  %v492 = vunpack.c.l.b16 %v149
  %v493 = vunpack.c.l.b16 %v150
  %v494 = vunpack.c.l.b16 %v151
  %v495 = vunpack.c.l.b16 %v152
  %v496 = vunpack.c.l.b16 %v153
  %v497 = vunpack.c.l.b16 %v154
  %v498 = vunpack.c.l.b16 %v155
  %v499 = vunpack.c.l.b16 %v156
  %v500 = vunpack.c.l.b16 %v157
  %v501 = vunpack.c.l.b16 %v158
  %v502 = vpack.c.b16 %v375, %v374
  %v503 = vpack.c.b16 %v377, %v376
  %v504 = vpack.c.b16 %v379, %v378
  %v505 = vpack.c.b16 %v381, %v380
  %v506 = vpack.c.b16 %v383, %v382
  %v507 = vpack.c.b16 %v385, %v384
  %v508 = vpack.c.b16 %v387, %v386
  %v509 = vpack.c.b16 %v389, %v388
  %v510 = vpack.c.b16 %v391, %v390
  %v511 = vpack.c.b16 %v393, %v392
  %v512 = vpack.c.b16 %v395, %v394
  %v513 = vpack.c.b16 %v397, %v396
  %v514 = vpack.c.b16 %v399, %v398
  %v515 = vpack.c.b16 %v401, %v400
  %v516 = vpack.c.b16 %v403, %v402
  %v517 = vpack.c.b16 %v405, %v404
  %v518 = vpack.c.b16 %v407, %v406
  %v519 = vpack.c.b16 %v409, %v408
  %v520 = vpack.c.b16 %v411, %v410
  %v521 = vpack.c.b16 %v413, %v412
  %v522 = vpack.c.b16 %v415, %v414
  %v523 = vpack.c.b16 %v417, %v416
  %v524 = vpack.c.b16 %v419, %v418
  %v525 = vpack.c.b16 %v421, %v420
  %v526 = vpack.c.b16 %v423, %v422
  %v527 = vpack.c.b16 %v425, %v424
  %v528 = vpack.c.b16 %v427, %v426
  %v529 = vpack.c.b16 %v429, %v428
  %v530 = vpack.c.b16 %v431, %v430
  %v531 = vpack.c.b16 %v433, %v432
  %v532 = vpack.c.b16 %v435, %v434
  %v533 = vpack.c.b16 %v437, %v436
  %v534 = vpack.c.b16 %v439, %v438
  %v535 = vpack.c.b16 %v441, %v440
  %v536 = vpack.c.b16 %v443, %v442
  %v537 = vpack.c.b16 %v445, %v444
  %v538 = vpack.c.b16 %v447, %v446
  %v539 = vpack.c.b16 %v449, %v448
  %v540 = vpack.c.b16 %v451, %v450
  %v541 = vpack.c.b16 %v453, %v452
  %v542 = vpack.c.b16 %v455, %v454
  %v543 = vpack.c.b16 %v457, %v456
  %v544 = vpack.c.b16 %v459, %v458
  %v545 = vpack.c.b16 %v461, %v460
  %v546 = vpack.c.b16 %v463, %v462
  %v547 = vpack.c.b16 %v465, %v464
  %v548 = vpack.c.b16 %v467, %v466
  %v549 = vpack.c.b16 %v469, %v468
  %v550 = vpack.c.b16 %v471, %v470
  %v551 = vpack.c.b16 %v473, %v472
  %v552 = vpack.c.b16 %v475, %v474
  %v553 = vpack.c.b16 %v477, %v476
  %v554 = vpack.c.b16 %v479, %v478
  %v555 = vpack.c.b16 %v481, %v480
  %v556 = vpack.c.b16 %v483, %v482
  %v557 = vpack.c.b16 %v485, %v484
  %v558 = vpack.c.b16 %v487, %v486
  %v559 = vpack.c.b16 %v489, %v488
  %v560 = vpack.c.b16 %v491, %v490
  %v561 = vpack.c.b16 %v493, %v492
  %v562 = vpack.c.b16 %v495, %v494
  %v563 = vpack.c.b16 %v497, %v496
  %v564 = vpack.c.b16 %v499, %v498
  %v565 = vpack.c.b16 %v501, %v500
  %630 = vmatprep.subr.bf16.mxu0 0
  %631 = vmatpush1.bf16.msra.mxu0 %v502
  %632 = vmatprep.subr.bf16.mxu0 0
  %633 = vmatpush1.bf16.msra.mxu0 %v503
  %634 = vmatprep.subr.bf16.mxu0 0
  %635 = vmatpush1.bf16.msra.mxu0 %v504
  %636 = vmatprep.subr.bf16.mxu0 0
  %637 = vmatpush1.bf16.msra.mxu0 %v505
  %638 = vmatprep.subr.bf16.mxu0 0
  %639 = vmatpush1.bf16.msra.mxu0 %v506
  %640 = vmatprep.subr.bf16.mxu0 0
  %641 = vmatpush1.bf16.msra.mxu0 %v507
  %642 = vmatprep.subr.bf16.mxu0 0
  %643 = vmatpush1.bf16.msra.mxu0 %v508
  %644 = vmatprep.subr.bf16.mxu0 0
  %645 = vmatpush1.bf16.msra.mxu0 %v509
  %646 = vmatprep.subr.bf16.mxu0 0
  %647 = vmatpush1.bf16.msra.mxu0 %v510
  %648 = vmatprep.subr.bf16.mxu0 0
  %649 = vmatpush1.bf16.msra.mxu0 %v511
  %650 = vmatprep.subr.bf16.mxu0 0
  %651 = vmatpush1.bf16.msra.mxu0 %v512
  %652 = vmatprep.subr.bf16.mxu0 0
  %653 = vmatpush1.bf16.msra.mxu0 %v513
  %654 = vmatprep.subr.bf16.mxu0 0
  %655 = vmatpush1.bf16.msra.mxu0 %v514
  %656 = vmatprep.subr.bf16.mxu0 0
  %657 = vmatpush1.bf16.msra.mxu0 %v515
  %658 = vmatprep.subr.bf16.mxu0 0
  %659 = vmatpush1.bf16.msra.mxu0 %v516
  %660 = vmatprep.subr.bf16.mxu0 0
  %661 = vmatpush1.bf16.msra.mxu0 %v517
  %662 = vmatprep.mubr.bf16.mxu0 %v215
  %663 = vmatmul.mubr.bf16.gmra.mrb[0].mxu0 %v214
  %v664 = vpop.f32.mrb[0].mxu0
  %v665 = vadd.f32 %v164, %v664
  %v666 = vpop.f32.mrb[0].mxu0
  %v667 = vpop.f32.mrb[0].mxu0
  %v668 = vadd.f32 %v164, %v667
  %v669 = vpop.f32.mrb[0].mxu0
  %670 = vmatprep.mubr.bf16.mxu0 %v223
  %671 = vmatmul.mubr.bf16.gmra.mrb[0].mxu0 %v222
  %v672 = vpop.f32.mrb[0].mxu0
  %v673 = vadd.f32 %v164, %v672
  %v674 = vpop.f32.mrb[0].mxu0
  %v675 = vpop.f32.mrb[0].mxu0
  %v676 = vadd.f32 %v164, %v675
  %v677 = vpop.f32.mrb[0].mxu0
  %678 = vdwg.mxu0
  %679 = vmatprep.subr.bf16.mxu0 0
  %680 = vmatpush1.bf16.msra.mxu0 %v518
  %681 = vmatprep.subr.bf16.mxu0 0
  %682 = vmatpush1.bf16.msra.mxu0 %v519
  %683 = vmatprep.subr.bf16.mxu0 0
  %684 = vmatpush1.bf16.msra.mxu0 %v520
  %685 = vmatprep.subr.bf16.mxu0 0
  %686 = vmatpush1.bf16.msra.mxu0 %v521
  %687 = vmatprep.subr.bf16.mxu0 0
  %688 = vmatpush1.bf16.msra.mxu0 %v522
  %689 = vmatprep.subr.bf16.mxu0 0
  %690 = vmatpush1.bf16.msra.mxu0 %v523
  %691 = vmatprep.subr.bf16.mxu0 0
  %692 = vmatpush1.bf16.msra.mxu0 %v524
  %693 = vmatprep.subr.bf16.mxu0 0
  %694 = vmatpush1.bf16.msra.mxu0 %v525
  %695 = vmatprep.subr.bf16.mxu0 0
  %696 = vmatpush1.bf16.msra.mxu0 %v526
  %697 = vmatprep.subr.bf16.mxu0 0
  %698 = vmatpush1.bf16.msra.mxu0 %v527
  %699 = vmatprep.subr.bf16.mxu0 0
  %700 = vmatpush1.bf16.msra.mxu0 %v528
  %701 = vmatprep.subr.bf16.mxu0 0
  %702 = vmatpush1.bf16.msra.mxu0 %v529
  %703 = vmatprep.subr.bf16.mxu0 0
  %704 = vmatpush1.bf16.msra.mxu0 %v530
  %705 = vmatprep.subr.bf16.mxu0 0
  %706 = vmatpush1.bf16.msra.mxu0 %v531
  %707 = vmatprep.subr.bf16.mxu0 0
  %708 = vmatpush1.bf16.msra.mxu0 %v532
  %709 = vmatprep.subr.bf16.mxu0 0
  %710 = vmatpush1.bf16.msra.mxu0 %v533
  %711 = vmatprep.mubr.bf16.mxu0 %v217
  %712 = vmatmul.mubr.bf16.gmra.mrb[0].mxu0 %v216
  %v713 = vpop.f32.mrb[0].mxu0
  %v714 = vadd.f32 %v665, %v713
  %v715 = vpop.f32.mrb[0].mxu0
  %v716 = vpop.f32.mrb[0].mxu0
  %v717 = vadd.f32 %v668, %v716
  %v718 = vpop.f32.mrb[0].mxu0
  %719 = vmatprep.mubr.bf16.mxu0 %v225
  %720 = vmatmul.mubr.bf16.gmra.mrb[0].mxu0 %v224
  %v721 = vpop.f32.mrb[0].mxu0
  %v722 = vadd.f32 %v673, %v721
  %v723 = vpop.f32.mrb[0].mxu0
  %v724 = vpop.f32.mrb[0].mxu0
  %v725 = vadd.f32 %v676, %v724
  %v726 = vpop.f32.mrb[0].mxu0
  %727 = vdwg.mxu0
  %728 = vmatprep.subr.bf16.mxu0 0
  %729 = vmatpush1.bf16.msra.mxu0 %v534
  %730 = vmatprep.subr.bf16.mxu0 0
  %731 = vmatpush1.bf16.msra.mxu0 %v535
  %732 = vmatprep.subr.bf16.mxu0 0
  %733 = vmatpush1.bf16.msra.mxu0 %v536
  %734 = vmatprep.subr.bf16.mxu0 0
  %735 = vmatpush1.bf16.msra.mxu0 %v537
  %736 = vmatprep.subr.bf16.mxu0 0
  %737 = vmatpush1.bf16.msra.mxu0 %v538
  %738 = vmatprep.subr.bf16.mxu0 0
  %739 = vmatpush1.bf16.msra.mxu0 %v539
  %740 = vmatprep.subr.bf16.mxu0 0
  %741 = vmatpush1.bf16.msra.mxu0 %v540
  %742 = vmatprep.subr.bf16.mxu0 0
  %743 = vmatpush1.bf16.msra.mxu0 %v541
  %744 = vmatprep.subr.bf16.mxu0 0
  %745 = vmatpush1.bf16.msra.mxu0 %v542
  %746 = vmatprep.subr.bf16.mxu0 0
  %747 = vmatpush1.bf16.msra.mxu0 %v543
  %748 = vmatprep.subr.bf16.mxu0 0
  %749 = vmatpush1.bf16.msra.mxu0 %v544
  %750 = vmatprep.subr.bf16.mxu0 0
  %751 = vmatpush1.bf16.msra.mxu0 %v545
  %752 = vmatprep.subr.bf16.mxu0 0
  %753 = vmatpush1.bf16.msra.mxu0 %v546
  %754 = vmatprep.subr.bf16.mxu0 0
  %755 = vmatpush1.bf16.msra.mxu0 %v547
  %756 = vmatprep.subr.bf16.mxu0 0
  %757 = vmatpush1.bf16.msra.mxu0 %v548
  %758 = vmatprep.subr.bf16.mxu0 0
  %759 = vmatpush1.bf16.msra.mxu0 %v549
  %760 = vmatprep.mubr.bf16.mxu0 %v219
  %761 = vmatmul.mubr.bf16.gmra.mrb[0].mxu0 %v218
  %v762 = vpop.f32.mrb[0].mxu0
  %v763 = vadd.f32 %v714, %v762
  %v764 = vpop.f32.mrb[0].mxu0
  %v765 = vpop.f32.mrb[0].mxu0
  %v766 = vadd.f32 %v717, %v765
  %v767 = vpop.f32.mrb[0].mxu0
  %768 = vmatprep.mubr.bf16.mxu0 %v227
  %769 = vmatmul.mubr.bf16.gmra.mrb[0].mxu0 %v226
  %v770 = vpop.f32.mrb[0].mxu0
  %v771 = vadd.f32 %v722, %v770
  %v772 = vpop.f32.mrb[0].mxu0
  %v773 = vpop.f32.mrb[0].mxu0
  %v774 = vadd.f32 %v725, %v773
  %v775 = vpop.f32.mrb[0].mxu0
  %776 = vdwg.mxu0
  %777 = vmatprep.subr.bf16.mxu0 0
  %778 = vmatpush1.bf16.msra.mxu0 %v550
  %779 = vmatprep.subr.bf16.mxu0 0
  %780 = vmatpush1.bf16.msra.mxu0 %v551
  %781 = vmatprep.subr.bf16.mxu0 0
  %782 = vmatpush1.bf16.msra.mxu0 %v552
  %783 = vmatprep.subr.bf16.mxu0 0
  %784 = vmatpush1.bf16.msra.mxu0 %v553
  %785 = vmatprep.subr.bf16.mxu0 0
  %786 = vmatpush1.bf16.msra.mxu0 %v554
  %787 = vmatprep.subr.bf16.mxu0 0
  %788 = vmatpush1.bf16.msra.mxu0 %v555
  %789 = vmatprep.subr.bf16.mxu0 0
  %790 = vmatpush1.bf16.msra.mxu0 %v556
  %791 = vmatprep.subr.bf16.mxu0 0
  %792 = vmatpush1.bf16.msra.mxu0 %v557
  %793 = vmatprep.subr.bf16.mxu0 0
  %794 = vmatpush1.bf16.msra.mxu0 %v558
  %795 = vmatprep.subr.bf16.mxu0 0
  %796 = vmatpush1.bf16.msra.mxu0 %v559
  %797 = vmatprep.subr.bf16.mxu0 0
  %798 = vmatpush1.bf16.msra.mxu0 %v560
  %799 = vmatprep.subr.bf16.mxu0 0
  %800 = vmatpush1.bf16.msra.mxu0 %v561
  %801 = vmatprep.subr.bf16.mxu0 0
  %802 = vmatpush1.bf16.msra.mxu0 %v562
  %803 = vmatprep.subr.bf16.mxu0 0
  %804 = vmatpush1.bf16.msra.mxu0 %v563
  %805 = vmatprep.subr.bf16.mxu0 0
  %806 = vmatpush1.bf16.msra.mxu0 %v564
  %807 = vmatprep.subr.bf16.mxu0 0
  %808 = vmatpush1.bf16.msra.mxu0 %v565
  %809 = vmatprep.mubr.bf16.mxu0 %v221
  %810 = vmatmul.mubr.bf16.gmra.mrb[0].mxu0 %v220
  %v811 = vpop.f32.mrb[0].mxu0
  %v812 = vadd.f32 %v763, %v811
  %v813 = vpop.f32.mrb[0].mxu0
  %v814 = vpop.f32.mrb[0].mxu0
  %v815 = vadd.f32 %v766, %v814
  %v816 = vpop.f32.mrb[0].mxu0
  %817 = vmatprep.mubr.bf16.mxu0 %v229
  %818 = vmatmul.mubr.bf16.gmra.mrb[0].mxu0 %v228
  %v819 = vpop.f32.mrb[0].mxu0
  %v820 = vadd.f32 %v771, %v819
  %v821 = vpop.f32.mrb[0].mxu0
  %v822 = vpop.f32.mrb[0].mxu0
  %v823 = vadd.f32 %v774, %v822
  %v824 = vpop.f32.mrb[0].mxu0
  %825 = vdwg.mxu0
  %v826 = vmax.f32 %v812, 0.0
  %v827 = vmax.f32 %v815, 0.0
  %v828 = vmax.f32 %v820, 0.0
  %v829 = vmax.f32 %v823, 0.0
  %v830 = vpack.c.bf16 %v827, %v826
  %v831 = vpack.c.bf16 %v829, %v828
  %v834 = vunpack.c.l.b16 %v830
  %v835 = vunpack.c.h.b16 %v830
  %v836 = vunpack.c.l.b16 %v831
  %v837 = vunpack.c.h.b16 %v831
  %v838 = vpack.c.b16 %v834, %v834
  %v839 = vpack.c.b16 %v835, %v835
  %v840 = vpack.c.b16 %v836, %v836
  %v841 = vpack.c.b16 %v837, %v837
  %846 = vst [vmem:[%s3] sm:$0xf] %v838
  %847 = vst [vmem:[%s3 + $0x4] sm:$0xf] %v839
  %848 = vst [vmem:[%s3 + $0x8] sm:$0xf] %v840
  %849 = vst [vmem:[%s3 + $0xc] sm:$0xf] %v841
  // Predicated region
  $region14: #{vae_policy_forward.9} parent=0 // pred_check
    _
  $region15: #{vae_policy_forward.9} parent=0 // pred_check_branch
    %851 = sbr.rel (0) target = $region17
  $region16: #{vae_policy_forward.9} parent=0 // pred_region
    _
  $region17: #{vae_policy_forward.9} parent=0 // pred_fallthru
    _
  // Predicated region
  $region18: #{vae_policy_forward.9} parent=0 // pred_check
    _
  $region19: #{vae_policy_forward.9} parent=0 // pred_check_branch
    %853 = sbr.rel (0) target = $region21
  $region20: #{vae_policy_forward.9} parent=0 // pred_region
    _
  $region21: #{vae_policy_forward.9} parent=0 // pred_fallthru
    _

// kernel: vae_policy_forward.11
$region0: #{vae_policy_forward.11}
  #allocation0 [shape = 'u32[]', space=smem, size = 0x4, offset = 0x4, fixed_abs, tag = 'smem constant byte address 0x4 - core index']
  #allocation1 [shape = 'u32[144,128]{1,0:T(1,128)}', space=vmem, size = 0x12000, scoped, tag = 'internal scratch']
  %s0 = inlined_call_operand.vmem [shape: bf16[32,128], index: 0, kind: input, shape index: {}]
  %s1 = inlined_call_operand.vmem [shape: f32[1,128], index: 1, kind: input, shape index: {}]
  %s2 = inlined_call_operand.vmem [shape: bf16[128,1024], index: 2, kind: input, shape index: {}]
  %s3 = inlined_call_operand.vmem [shape: bf16[32,1024], index: 3, kind: output, shape index: {}]
  %s4 = sld [smem:[#allocation0]]
  $region22: #{vae_policy_forward.11} parent=0
    _
  %s6 = ssub.s32 1, %s4
  %s7 = scalar_select 0, %s6, %s4
  // Predicated region
  $region2: #{vae_policy_forward.11} parent=0 // pred_check
    _
  $region3: #{vae_policy_forward.11} parent=0 // pred_check_branch
    %9 = sbr.rel (0) target = $region5
  $region4: #{vae_policy_forward.11} parent=0 // pred_region
    _
  $region5: #{vae_policy_forward.11} parent=0 // pred_fallthru
    _
  // Predicated region
  $region6: #{vae_policy_forward.11} parent=0 // pred_check
    _
  $region7: #{vae_policy_forward.11} parent=0 // pred_check_branch
    %11 = sbr.rel (0) target = $region9
  $region8: #{vae_policy_forward.11} parent=0 // pred_region
    _
  $region9: #{vae_policy_forward.11} parent=0 // pred_fallthru
    _
  // Predicated region
  $region10: #{vae_policy_forward.11} parent=0 // pred_check
    _
  $region11: #{vae_policy_forward.11} parent=0 // pred_check_branch
    %13 = sbr.rel (0) target = $region13
  $region12: #{vae_policy_forward.11} parent=0 // pred_region
    _
  $region13: #{vae_policy_forward.11} parent=0 // pred_fallthru
    _
  %v15 = vld [vmem:[%s0] sm:$0xf]
  %v16 = vld [vmem:[%s0 + $0x4] sm:$0xf]
  %v17 = vld [vmem:[%s0 + $0x8] sm:$0xf]
  %v18 = vld [vmem:[%s0 + $0xc] sm:$0xf]
  %v19 = vunpack.c.l.bf16 %v15
  %v20 = vunpack.c.l.bf16 %v16
  %v21 = vunpack.c.l.bf16 %v17
  %v22 = vunpack.c.l.bf16 %v18
  %v23 = vld [vmem:[%s1] sm:$0x1]
  %v25 = vlaneseq
  %v26 = vshrl.u32 %v25, 7
  %v27 = vsub.s32 0, %v26
  %v28 = vrot.slane %v23, %v27
  %v30 = vadd.f32 %v19, %v28
  %v31 = vadd.f32 %v20, %v28
  %v32 = vadd.f32 %v21, %v28
  %v33 = vadd.f32 %v22, %v28
  %v34 = vmax.f32 %v30, 0.0
  %v35 = vmax.f32 %v31, 0.0
  %v36 = vmax.f32 %v32, 0.0
  %v37 = vmax.f32 %v33, 0.0
  %v38 = vpack.c.bf16 %v35, %v34
  %v39 = vpack.c.bf16 %v37, %v36
  %v40 = vld [vmem:[%s2] sm:$0xff]
  %v41 = vld [vmem:[%s2 + $0x8] sm:$0xff]
  %v42 = vld [vmem:[%s2 + $0x10] sm:$0xff]
  %v43 = vld [vmem:[%s2 + $0x18] sm:$0xff]
  %v44 = vld [vmem:[%s2 + $0x20] sm:$0xff]
  %v45 = vld [vmem:[%s2 + $0x28] sm:$0xff]
  %v46 = vld [vmem:[%s2 + $0x30] sm:$0xff]
  %v47 = vld [vmem:[%s2 + $0x38] sm:$0xff]
  %v48 = vld [vmem:[%s2 + $0x40] sm:$0xff]
  %v49 = vld [vmem:[%s2 + $0x48] sm:$0xff]
  %v50 = vld [vmem:[%s2 + $0x50] sm:$0xff]
  %v51 = vld [vmem:[%s2 + $0x58] sm:$0xff]
  %v52 = vld [vmem:[%s2 + $0x60] sm:$0xff]
  %v53 = vld [vmem:[%s2 + $0x68] sm:$0xff]
  %v54 = vld [vmem:[%s2 + $0x70] sm:$0xff]
  %v55 = vld [vmem:[%s2 + $0x78] sm:$0xff]
  %v56 = vld [vmem:[%s2 + $0x80] sm:$0xff]
  %v57 = vld [vmem:[%s2 + $0x88] sm:$0xff]
  %v58 = vld [vmem:[%s2 + $0x90] sm:$0xff]
  %v59 = vld [vmem:[%s2 + $0x98] sm:$0xff]
  %v60 = vld [vmem:[%s2 + $0xa0] sm:$0xff]
  %v61 = vld [vmem:[%s2 + $0xa8] sm:$0xff]
  %v62 = vld [vmem:[%s2 + $0xb0] sm:$0xff]
  %v63 = vld [vmem:[%s2 + $0xb8] sm:$0xff]
  %v64 = vld [vmem:[%s2 + $0xc0] sm:$0xff]
  %v65 = vld [vmem:[%s2 + $0xc8] sm:$0xff]
  %v66 = vld [vmem:[%s2 + $0xd0] sm:$0xff]
  %v67 = vld [vmem:[%s2 + $0xd8] sm:$0xff]
  %v68 = vld [vmem:[%s2 + $0xe0] sm:$0xff]
  %v69 = vld [vmem:[%s2 + $0xe8] sm:$0xff]
  %v70 = vld [vmem:[%s2 + $0xf0] sm:$0xff]
  %v71 = vld [vmem:[%s2 + $0xf8] sm:$0xff]
  %v72 = vld [vmem:[%s2 + $0x100] sm:$0xff]
  %v73 = vld [vmem:[%s2 + $0x108] sm:$0xff]
  %v74 = vld [vmem:[%s2 + $0x110] sm:$0xff]
  %v75 = vld [vmem:[%s2 + $0x118] sm:$0xff]
  %v76 = vld [vmem:[%s2 + $0x120] sm:$0xff]
  %v77 = vld [vmem:[%s2 + $0x128] sm:$0xff]
  %v78 = vld [vmem:[%s2 + $0x130] sm:$0xff]
  %v79 = vld [vmem:[%s2 + $0x138] sm:$0xff]
  %v80 = vld [vmem:[%s2 + $0x140] sm:$0xff]
  %v81 = vld [vmem:[%s2 + $0x148] sm:$0xff]
  %v82 = vld [vmem:[%s2 + $0x150] sm:$0xff]
  %v83 = vld [vmem:[%s2 + $0x158] sm:$0xff]
  %v84 = vld [vmem:[%s2 + $0x160] sm:$0xff]
  %v85 = vld [vmem:[%s2 + $0x168] sm:$0xff]
  %v86 = vld [vmem:[%s2 + $0x170] sm:$0xff]
  %v87 = vld [vmem:[%s2 + $0x178] sm:$0xff]
  %v88 = vld [vmem:[%s2 + $0x180] sm:$0xff]
  %v89 = vld [vmem:[%s2 + $0x188] sm:$0xff]
  %v90 = vld [vmem:[%s2 + $0x190] sm:$0xff]
  %v91 = vld [vmem:[%s2 + $0x198] sm:$0xff]
  %v92 = vld [vmem:[%s2 + $0x1a0] sm:$0xff]
  %v93 = vld [vmem:[%s2 + $0x1a8] sm:$0xff]
  %v94 = vld [vmem:[%s2 + $0x1b0] sm:$0xff]
  %v95 = vld [vmem:[%s2 + $0x1b8] sm:$0xff]
  %v96 = vld [vmem:[%s2 + $0x1c0] sm:$0xff]
  %v97 = vld [vmem:[%s2 + $0x1c8] sm:$0xff]
  %v98 = vld [vmem:[%s2 + $0x1d0] sm:$0xff]
  %v99 = vld [vmem:[%s2 + $0x1d8] sm:$0xff]
  %v100 = vld [vmem:[%s2 + $0x1e0] sm:$0xff]
  %v101 = vld [vmem:[%s2 + $0x1e8] sm:$0xff]
  %v102 = vld [vmem:[%s2 + $0x1f0] sm:$0xff]
  %v103 = vld [vmem:[%s2 + $0x1f8] sm:$0xff]
  %v168 = vunpack.c.l.b16 %v40
  %v169 = vunpack.c.h.b16 %v40
  %v170 = vunpack.c.l.b16 %v41
  %v171 = vunpack.c.h.b16 %v41
  %v172 = vunpack.c.l.b16 %v42
  %v173 = vunpack.c.h.b16 %v42
  %v174 = vunpack.c.l.b16 %v43
  %v175 = vunpack.c.h.b16 %v43
  %v176 = vunpack.c.l.b16 %v44
  %v177 = vunpack.c.h.b16 %v44
  %v178 = vunpack.c.l.b16 %v45
  %v179 = vunpack.c.h.b16 %v45
  %v180 = vunpack.c.l.b16 %v46
  %v181 = vunpack.c.h.b16 %v46
  %v182 = vunpack.c.l.b16 %v47
  %v183 = vunpack.c.h.b16 %v47
  %v184 = vunpack.c.l.b16 %v48
  %v185 = vunpack.c.h.b16 %v48
  %v186 = vunpack.c.l.b16 %v49
  %v187 = vunpack.c.h.b16 %v49
  %v188 = vunpack.c.l.b16 %v50
  %v189 = vunpack.c.h.b16 %v50
  %v190 = vunpack.c.l.b16 %v51
  %v191 = vunpack.c.h.b16 %v51
  %v192 = vunpack.c.l.b16 %v52
  %v193 = vunpack.c.h.b16 %v52
  %v194 = vunpack.c.l.b16 %v53
  %v195 = vunpack.c.h.b16 %v53
  %v196 = vunpack.c.l.b16 %v54
  %v197 = vunpack.c.h.b16 %v54
  %v198 = vunpack.c.l.b16 %v55
  %v199 = vunpack.c.h.b16 %v55
  %v200 = vunpack.c.l.b16 %v56
  %v201 = vunpack.c.h.b16 %v56
  %v202 = vunpack.c.l.b16 %v57
  %v203 = vunpack.c.h.b16 %v57
  %v204 = vunpack.c.l.b16 %v58
  %v205 = vunpack.c.h.b16 %v58
  %v206 = vunpack.c.l.b16 %v59
  %v207 = vunpack.c.h.b16 %v59
  %v208 = vunpack.c.l.b16 %v60
  %v209 = vunpack.c.h.b16 %v60
  %v210 = vunpack.c.l.b16 %v61
  %v211 = vunpack.c.h.b16 %v61
  %v212 = vunpack.c.l.b16 %v62
  %v213 = vunpack.c.h.b16 %v62
  %v214 = vunpack.c.l.b16 %v63
  %v215 = vunpack.c.h.b16 %v63
  %v216 = vunpack.c.l.b16 %v64
  %v217 = vunpack.c.h.b16 %v64
  %v218 = vunpack.c.l.b16 %v65
  %v219 = vunpack.c.h.b16 %v65
  %v220 = vunpack.c.l.b16 %v66
  %v221 = vunpack.c.h.b16 %v66
  %v222 = vunpack.c.l.b16 %v67
  %v223 = vunpack.c.h.b16 %v67
  %v224 = vunpack.c.l.b16 %v68
  %v225 = vunpack.c.h.b16 %v68
  %v226 = vunpack.c.l.b16 %v69
  %v227 = vunpack.c.h.b16 %v69
  %v228 = vunpack.c.l.b16 %v70
  %v229 = vunpack.c.h.b16 %v70
  %v230 = vunpack.c.l.b16 %v71
  %v231 = vunpack.c.h.b16 %v71
  %v232 = vunpack.c.l.b16 %v72
  %v233 = vunpack.c.h.b16 %v72
  %v234 = vunpack.c.l.b16 %v73
  %v235 = vunpack.c.h.b16 %v73
  %v236 = vunpack.c.l.b16 %v74
  %v237 = vunpack.c.h.b16 %v74
  %v238 = vunpack.c.l.b16 %v75
  %v239 = vunpack.c.h.b16 %v75
  %v240 = vunpack.c.l.b16 %v76
  %v241 = vunpack.c.h.b16 %v76
  %v242 = vunpack.c.l.b16 %v77
  %v243 = vunpack.c.h.b16 %v77
  %v244 = vunpack.c.l.b16 %v78
  %v245 = vunpack.c.h.b16 %v78
  %v246 = vunpack.c.l.b16 %v79
  %v247 = vunpack.c.h.b16 %v79
  %v248 = vunpack.c.l.b16 %v80
  %v249 = vunpack.c.h.b16 %v80
  %v250 = vunpack.c.l.b16 %v81
  %v251 = vunpack.c.h.b16 %v81
  %v252 = vunpack.c.l.b16 %v82
  %v253 = vunpack.c.h.b16 %v82
  %v254 = vunpack.c.l.b16 %v83
  %v255 = vunpack.c.h.b16 %v83
  %v256 = vunpack.c.l.b16 %v84
  %v257 = vunpack.c.h.b16 %v84
  %v258 = vunpack.c.l.b16 %v85
  %v259 = vunpack.c.h.b16 %v85
  %v260 = vunpack.c.l.b16 %v86
  %v261 = vunpack.c.h.b16 %v86
  %v262 = vunpack.c.l.b16 %v87
  %v263 = vunpack.c.h.b16 %v87
  %v264 = vunpack.c.l.b16 %v88
  %v265 = vunpack.c.h.b16 %v88
  %v266 = vunpack.c.l.b16 %v89
  %v267 = vunpack.c.h.b16 %v89
  %v268 = vunpack.c.l.b16 %v90
  %v269 = vunpack.c.h.b16 %v90
  %v270 = vunpack.c.l.b16 %v91
  %v271 = vunpack.c.h.b16 %v91
  %v272 = vunpack.c.l.b16 %v92
  %v273 = vunpack.c.h.b16 %v92
  %v274 = vunpack.c.l.b16 %v93
  %v275 = vunpack.c.h.b16 %v93
  %v276 = vunpack.c.l.b16 %v94
  %v277 = vunpack.c.h.b16 %v94
  %v278 = vunpack.c.l.b16 %v95
  %v279 = vunpack.c.h.b16 %v95
  %v280 = vunpack.c.l.b16 %v96
  %v281 = vunpack.c.h.b16 %v96
  %v282 = vunpack.c.l.b16 %v97
  %v283 = vunpack.c.h.b16 %v97
  %v284 = vunpack.c.l.b16 %v98
  %v285 = vunpack.c.h.b16 %v98
  %v286 = vunpack.c.l.b16 %v99
  %v287 = vunpack.c.h.b16 %v99
  %v288 = vunpack.c.l.b16 %v100
  %v289 = vunpack.c.h.b16 %v100
  %v290 = vunpack.c.l.b16 %v101
  %v291 = vunpack.c.h.b16 %v101
  %v292 = vunpack.c.l.b16 %v102
  %v293 = vunpack.c.h.b16 %v102
  %v294 = vunpack.c.l.b16 %v103
  %v295 = vunpack.c.h.b16 %v103
  %v296 = vpack.c.b16 %v176, %v168
  %v297 = vpack.c.b16 %v177, %v169
  %v298 = vpack.c.b16 %v178, %v170
  %v299 = vpack.c.b16 %v179, %v171
  %v300 = vpack.c.b16 %v180, %v172
  %v301 = vpack.c.b16 %v181, %v173
  %v302 = vpack.c.b16 %v182, %v174
  %v303 = vpack.c.b16 %v183, %v175
  %v304 = vpack.c.b16 %v192, %v184
  %v305 = vpack.c.b16 %v193, %v185
  %v306 = vpack.c.b16 %v194, %v186
  %v307 = vpack.c.b16 %v195, %v187
  %v308 = vpack.c.b16 %v196, %v188
  %v309 = vpack.c.b16 %v197, %v189
  %v310 = vpack.c.b16 %v198, %v190
  %v311 = vpack.c.b16 %v199, %v191
  %v312 = vpack.c.b16 %v208, %v200
  %v313 = vpack.c.b16 %v209, %v201
  %v314 = vpack.c.b16 %v210, %v202
  %v315 = vpack.c.b16 %v211, %v203
  %v316 = vpack.c.b16 %v212, %v204
  %v317 = vpack.c.b16 %v213, %v205
  %v318 = vpack.c.b16 %v214, %v206
  %v319 = vpack.c.b16 %v215, %v207
  %v320 = vpack.c.b16 %v224, %v216
  %v321 = vpack.c.b16 %v225, %v217
  %v322 = vpack.c.b16 %v226, %v218
  %v323 = vpack.c.b16 %v227, %v219
  %v324 = vpack.c.b16 %v228, %v220
  %v325 = vpack.c.b16 %v229, %v221
  %v326 = vpack.c.b16 %v230, %v222
  %v327 = vpack.c.b16 %v231, %v223
  %v328 = vpack.c.b16 %v240, %v232
  %v329 = vpack.c.b16 %v241, %v233
  %v330 = vpack.c.b16 %v242, %v234
  %v331 = vpack.c.b16 %v243, %v235
  %v332 = vpack.c.b16 %v244, %v236
  %v333 = vpack.c.b16 %v245, %v237
  %v334 = vpack.c.b16 %v246, %v238
  %v335 = vpack.c.b16 %v247, %v239
  %v336 = vpack.c.b16 %v256, %v248
  %v337 = vpack.c.b16 %v257, %v249
  %v338 = vpack.c.b16 %v258, %v250
  %v339 = vpack.c.b16 %v259, %v251
  %v340 = vpack.c.b16 %v260, %v252
  %v341 = vpack.c.b16 %v261, %v253
  %v342 = vpack.c.b16 %v262, %v254
  %v343 = vpack.c.b16 %v263, %v255
  %v344 = vpack.c.b16 %v272, %v264
  %v345 = vpack.c.b16 %v273, %v265
  %v346 = vpack.c.b16 %v274, %v266
  %v347 = vpack.c.b16 %v275, %v267
  %v348 = vpack.c.b16 %v276, %v268
  %v349 = vpack.c.b16 %v277, %v269
  %v350 = vpack.c.b16 %v278, %v270
  %v351 = vpack.c.b16 %v279, %v271
  %v352 = vpack.c.b16 %v288, %v280
  %v353 = vpack.c.b16 %v289, %v281
  %v354 = vpack.c.b16 %v290, %v282
  %v355 = vpack.c.b16 %v291, %v283
  %v356 = vpack.c.b16 %v292, %v284
  %v357 = vpack.c.b16 %v293, %v285
  %v358 = vpack.c.b16 %v294, %v286
  %v359 = vpack.c.b16 %v295, %v287
  %424 = vmatprep.subr.bf16.mxu0 %v297
  %425 = vmatpush1.bf16.msra.mxu0 %v296
  %426 = vmatprep.subr.bf16.mxu0 %v305
  %427 = vmatpush1.bf16.msra.mxu0 %v304
  %428 = vmatprep.subr.bf16.mxu0 %v313
  %429 = vmatpush1.bf16.msra.mxu0 %v312
  %430 = vmatprep.subr.bf16.mxu0 %v321
  %431 = vmatpush1.bf16.msra.mxu0 %v320
  %432 = vmatprep.subr.bf16.mxu0 %v329
  %433 = vmatpush1.bf16.msra.mxu0 %v328
  %434 = vmatprep.subr.bf16.mxu0 %v337
  %435 = vmatpush1.bf16.msra.mxu0 %v336
  %436 = vmatprep.subr.bf16.mxu0 %v345
  %437 = vmatpush1.bf16.msra.mxu0 %v344
  %438 = vmatprep.subr.bf16.mxu0 %v353
  %439 = vmatpush1.bf16.msra.mxu0 %v352
  %440 = vmatprep.subr.bf16.mxu0 0
  %441 = vmatpush1.bf16.msra.mxu0 0
  %442 = vmatprep.subr.bf16.mxu0 0
  %443 = vmatpush1.bf16.msra.mxu0 0
  %444 = vmatprep.subr.bf16.mxu0 0
  %445 = vmatpush1.bf16.msra.mxu0 0
  %446 = vmatprep.subr.bf16.mxu0 0
  %447 = vmatpush1.bf16.msra.mxu0 0
  %448 = vmatprep.subr.bf16.mxu0 0
  %449 = vmatpush1.bf16.msra.mxu0 0
  %450 = vmatprep.subr.bf16.mxu0 0
  %451 = vmatpush1.bf16.msra.mxu0 0
  %452 = vmatprep.subr.bf16.mxu0 0
  %453 = vmatpush1.bf16.msra.mxu0 0
  %454 = vmatprep.subr.bf16.mxu0 0
  %455 = vmatpush1.bf16.msra.mxu0 0
  %456 = vmatprep.mubr.bf16.mxu0 0
  %457 = vmatmul.mubr.bf16.gmra.mrb[0].mxu0 %v38
  %v458 = vpop.f32.mrb[0].mxu0
  %v459 = vadd.f32 0.0, %v458
  %v460 = vpop.f32.mrb[0].mxu0
  %v461 = vadd.f32 0.0, %v460
  %v462 = vpop.f32.mrb[0].mxu0
  %v463 = vadd.f32 0.0, %v462
  %v464 = vpop.f32.mrb[0].mxu0
  %v465 = vadd.f32 0.0, %v464
  %466 = vmatprep.mubr.bf16.mxu0 0
  %467 = vmatmul.mubr.bf16.gmra.mrb[0].mxu0 %v39
  %v468 = vpop.f32.mrb[0].mxu0
  %v469 = vadd.f32 0.0, %v468
  %v470 = vpop.f32.mrb[0].mxu0
  %v471 = vadd.f32 0.0, %v470
  %v472 = vpop.f32.mrb[0].mxu0
  %v473 = vadd.f32 0.0, %v472
  %v474 = vpop.f32.mrb[0].mxu0
  %v475 = vadd.f32 0.0, %v474
  %476 = vdwg.mxu0
  %477 = vmatprep.subr.bf16.mxu0 %v299
  %478 = vmatpush1.bf16.msra.mxu0 %v298
  %479 = vmatprep.subr.bf16.mxu0 %v307
  %480 = vmatpush1.bf16.msra.mxu0 %v306
  %481 = vmatprep.subr.bf16.mxu0 %v315
  %482 = vmatpush1.bf16.msra.mxu0 %v314
  %483 = vmatprep.subr.bf16.mxu0 %v323
  %484 = vmatpush1.bf16.msra.mxu0 %v322
  %485 = vmatprep.subr.bf16.mxu0 %v331
  %486 = vmatpush1.bf16.msra.mxu0 %v330
  %487 = vmatprep.subr.bf16.mxu0 %v339
  %488 = vmatpush1.bf16.msra.mxu0 %v338
  %489 = vmatprep.subr.bf16.mxu0 %v347
  %490 = vmatpush1.bf16.msra.mxu0 %v346
  %491 = vmatprep.subr.bf16.mxu0 %v355
  %492 = vmatpush1.bf16.msra.mxu0 %v354
  %493 = vmatprep.subr.bf16.mxu0 0
  %494 = vmatpush1.bf16.msra.mxu0 0
  %495 = vmatprep.subr.bf16.mxu0 0
  %496 = vmatpush1.bf16.msra.mxu0 0
  %497 = vmatprep.subr.bf16.mxu0 0
  %498 = vmatpush1.bf16.msra.mxu0 0
  %499 = vmatprep.subr.bf16.mxu0 0
  %500 = vmatpush1.bf16.msra.mxu0 0
  %501 = vmatprep.subr.bf16.mxu0 0
  %502 = vmatpush1.bf16.msra.mxu0 0
  %503 = vmatprep.subr.bf16.mxu0 0
  %504 = vmatpush1.bf16.msra.mxu0 0
  %505 = vmatprep.subr.bf16.mxu0 0
  %506 = vmatpush1.bf16.msra.mxu0 0
  %507 = vmatprep.subr.bf16.mxu0 0
  %508 = vmatpush1.bf16.msra.mxu0 0
  %509 = vmatprep.mubr.bf16.mxu0 0
  %510 = vmatmul.mubr.bf16.gmra.mrb[0].mxu0 %v38
  %v511 = vpop.f32.mrb[0].mxu0
  %v512 = vadd.f32 0.0, %v511
  %v513 = vpop.f32.mrb[0].mxu0
  %v514 = vadd.f32 0.0, %v513
  %v515 = vpop.f32.mrb[0].mxu0
  %v516 = vadd.f32 0.0, %v515
  %v517 = vpop.f32.mrb[0].mxu0
  %v518 = vadd.f32 0.0, %v517
  %519 = vmatprep.mubr.bf16.mxu0 0
  %520 = vmatmul.mubr.bf16.gmra.mrb[0].mxu0 %v39
  %v521 = vpop.f32.mrb[0].mxu0
  %v522 = vadd.f32 0.0, %v521
  %v523 = vpop.f32.mrb[0].mxu0
  %v524 = vadd.f32 0.0, %v523
  %v525 = vpop.f32.mrb[0].mxu0
  %v526 = vadd.f32 0.0, %v525
  %v527 = vpop.f32.mrb[0].mxu0
  %v528 = vadd.f32 0.0, %v527
  %529 = vdwg.mxu0
  %530 = vmatprep.subr.bf16.mxu0 %v301
  %531 = vmatpush1.bf16.msra.mxu0 %v300
  %532 = vmatprep.subr.bf16.mxu0 %v309
  %533 = vmatpush1.bf16.msra.mxu0 %v308
  %534 = vmatprep.subr.bf16.mxu0 %v317
  %535 = vmatpush1.bf16.msra.mxu0 %v316
  %536 = vmatprep.subr.bf16.mxu0 %v325
  %537 = vmatpush1.bf16.msra.mxu0 %v324
  %538 = vmatprep.subr.bf16.mxu0 %v333
  %539 = vmatpush1.bf16.msra.mxu0 %v332
  %540 = vmatprep.subr.bf16.mxu0 %v341
  %541 = vmatpush1.bf16.msra.mxu0 %v340
  %542 = vmatprep.subr.bf16.mxu0 %v349
  %543 = vmatpush1.bf16.msra.mxu0 %v348
  %544 = vmatprep.subr.bf16.mxu0 %v357
  %545 = vmatpush1.bf16.msra.mxu0 %v356
  %546 = vmatprep.subr.bf16.mxu0 0
  %547 = vmatpush1.bf16.msra.mxu0 0
  %548 = vmatprep.subr.bf16.mxu0 0
  %549 = vmatpush1.bf16.msra.mxu0 0
  %550 = vmatprep.subr.bf16.mxu0 0
  %551 = vmatpush1.bf16.msra.mxu0 0
  %552 = vmatprep.subr.bf16.mxu0 0
  %553 = vmatpush1.bf16.msra.mxu0 0
  %554 = vmatprep.subr.bf16.mxu0 0
  %555 = vmatpush1.bf16.msra.mxu0 0
  %556 = vmatprep.subr.bf16.mxu0 0
  %557 = vmatpush1.bf16.msra.mxu0 0
  %558 = vmatprep.subr.bf16.mxu0 0
  %559 = vmatpush1.bf16.msra.mxu0 0
  %560 = vmatprep.subr.bf16.mxu0 0
  %561 = vmatpush1.bf16.msra.mxu0 0
  %562 = vmatprep.mubr.bf16.mxu0 0
  %563 = vmatmul.mubr.bf16.gmra.mrb[0].mxu0 %v38
  %v564 = vpop.f32.mrb[0].mxu0
  %v565 = vadd.f32 0.0, %v564
  %v566 = vpop.f32.mrb[0].mxu0
  %v567 = vadd.f32 0.0, %v566
  %v568 = vpop.f32.mrb[0].mxu0
  %v569 = vadd.f32 0.0, %v568
  %v570 = vpop.f32.mrb[0].mxu0
  %v571 = vadd.f32 0.0, %v570
  %572 = vmatprep.mubr.bf16.mxu0 0
  %573 = vmatmul.mubr.bf16.gmra.mrb[0].mxu0 %v39
  %v574 = vpop.f32.mrb[0].mxu0
  %v575 = vadd.f32 0.0, %v574
  %v576 = vpop.f32.mrb[0].mxu0
  %v577 = vadd.f32 0.0, %v576
  %v578 = vpop.f32.mrb[0].mxu0
  %v579 = vadd.f32 0.0, %v578
  %v580 = vpop.f32.mrb[0].mxu0
  %v581 = vadd.f32 0.0, %v580
  %582 = vdwg.mxu0
  %583 = vmatprep.subr.bf16.mxu0 %v303
  %584 = vmatpush1.bf16.msra.mxu0 %v302
  %585 = vmatprep.subr.bf16.mxu0 %v311
  %586 = vmatpush1.bf16.msra.mxu0 %v310
  %587 = vmatprep.subr.bf16.mxu0 %v319
  %588 = vmatpush1.bf16.msra.mxu0 %v318
  %589 = vmatprep.subr.bf16.mxu0 %v327
  %590 = vmatpush1.bf16.msra.mxu0 %v326
  %591 = vmatprep.subr.bf16.mxu0 %v335
  %592 = vmatpush1.bf16.msra.mxu0 %v334
  %593 = vmatprep.subr.bf16.mxu0 %v343
  %594 = vmatpush1.bf16.msra.mxu0 %v342
  %595 = vmatprep.subr.bf16.mxu0 %v351
  %596 = vmatpush1.bf16.msra.mxu0 %v350
  %597 = vmatprep.subr.bf16.mxu0 %v359
  %598 = vmatpush1.bf16.msra.mxu0 %v358
  %599 = vmatprep.subr.bf16.mxu0 0
  %600 = vmatpush1.bf16.msra.mxu0 0
  %601 = vmatprep.subr.bf16.mxu0 0
  %602 = vmatpush1.bf16.msra.mxu0 0
  %603 = vmatprep.subr.bf16.mxu0 0
  %604 = vmatpush1.bf16.msra.mxu0 0
  %605 = vmatprep.subr.bf16.mxu0 0
  %606 = vmatpush1.bf16.msra.mxu0 0
  %607 = vmatprep.subr.bf16.mxu0 0
  %608 = vmatpush1.bf16.msra.mxu0 0
  %609 = vmatprep.subr.bf16.mxu0 0
  %610 = vmatpush1.bf16.msra.mxu0 0
  %611 = vmatprep.subr.bf16.mxu0 0
  %612 = vmatpush1.bf16.msra.mxu0 0
  %613 = vmatprep.subr.bf16.mxu0 0
  %614 = vmatpush1.bf16.msra.mxu0 0
  %615 = vmatprep.mubr.bf16.mxu0 0
  %616 = vmatmul.mubr.bf16.gmra.mrb[0].mxu0 %v38
  %v617 = vpop.f32.mrb[0].mxu0
  %v618 = vadd.f32 0.0, %v617
  %v619 = vpop.f32.mrb[0].mxu0
  %v620 = vadd.f32 0.0, %v619
  %v621 = vpop.f32.mrb[0].mxu0
  %v622 = vadd.f32 0.0, %v621
  %v623 = vpop.f32.mrb[0].mxu0
  %v624 = vadd.f32 0.0, %v623
  %625 = vmatprep.mubr.bf16.mxu0 0
  %626 = vmatmul.mubr.bf16.gmra.mrb[0].mxu0 %v39
  %v627 = vpop.f32.mrb[0].mxu0
  %v628 = vadd.f32 0.0, %v627
  %v629 = vpop.f32.mrb[0].mxu0
  %v630 = vadd.f32 0.0, %v629
  %v631 = vpop.f32.mrb[0].mxu0
  %v632 = vadd.f32 0.0, %v631
  %v633 = vpop.f32.mrb[0].mxu0
  %v634 = vadd.f32 0.0, %v633
  %635 = vdwg.mxu0
  %v636 = vpack.c.bf16 %v463, %v459
  %v637 = vpack.c.bf16 %v465, %v461
  %v638 = vpack.c.bf16 %v516, %v512
  %v639 = vpack.c.bf16 %v518, %v514
  %v640 = vpack.c.bf16 %v569, %v565
  %v641 = vpack.c.bf16 %v571, %v567
  %v642 = vpack.c.bf16 %v622, %v618
  %v643 = vpack.c.bf16 %v624, %v620
  %v644 = vpack.c.bf16 %v473, %v469
  %v645 = vpack.c.bf16 %v475, %v471
  %v646 = vpack.c.bf16 %v526, %v522
  %v647 = vpack.c.bf16 %v528, %v524
  %v648 = vpack.c.bf16 %v579, %v575
  %v649 = vpack.c.bf16 %v581, %v577
  %v650 = vpack.c.bf16 %v632, %v628
  %v651 = vpack.c.bf16 %v634, %v630
  %v668 = vunpack.c.l.b16 %v636
  %v669 = vunpack.c.l.b16 %v637
  %v670 = vunpack.c.l.b16 %v638
  %v671 = vunpack.c.l.b16 %v639
  %v672 = vunpack.c.l.b16 %v640
  %v673 = vunpack.c.l.b16 %v641
  %v674 = vunpack.c.l.b16 %v642
  %v675 = vunpack.c.l.b16 %v643
  %v676 = vunpack.c.h.b16 %v636
  %v677 = vunpack.c.h.b16 %v637
  %v678 = vunpack.c.h.b16 %v638
  %v679 = vunpack.c.h.b16 %v639
  %v680 = vunpack.c.h.b16 %v640
  %v681 = vunpack.c.h.b16 %v641
  %v682 = vunpack.c.h.b16 %v642
  %v683 = vunpack.c.h.b16 %v643
  %v684 = vunpack.c.l.b16 %v644
  %v685 = vunpack.c.l.b16 %v645
  %v686 = vunpack.c.l.b16 %v646
  %v687 = vunpack.c.l.b16 %v647
  %v688 = vunpack.c.l.b16 %v648
  %v689 = vunpack.c.l.b16 %v649
  %v690 = vunpack.c.l.b16 %v650
  %v691 = vunpack.c.l.b16 %v651
  %v692 = vunpack.c.h.b16 %v644
  %v693 = vunpack.c.h.b16 %v645
  %v694 = vunpack.c.h.b16 %v646
  %v695 = vunpack.c.h.b16 %v647
  %v696 = vunpack.c.h.b16 %v648
  %v697 = vunpack.c.h.b16 %v649
  %v698 = vunpack.c.h.b16 %v650
  %v699 = vunpack.c.h.b16 %v651
  %v700 = vpack.c.b16 %v669, %v668
  %v701 = vpack.c.b16 %v671, %v670
  %v702 = vpack.c.b16 %v673, %v672
  %v703 = vpack.c.b16 %v675, %v674
  %v704 = vpack.c.b16 %v677, %v676
  %v705 = vpack.c.b16 %v679, %v678
  %v706 = vpack.c.b16 %v681, %v680
  %v707 = vpack.c.b16 %v683, %v682
  %v708 = vpack.c.b16 %v685, %v684
  %v709 = vpack.c.b16 %v687, %v686
  %v710 = vpack.c.b16 %v689, %v688
  %v711 = vpack.c.b16 %v691, %v690
  %v712 = vpack.c.b16 %v693, %v692
  %v713 = vpack.c.b16 %v695, %v694
  %v714 = vpack.c.b16 %v697, %v696
  %v715 = vpack.c.b16 %v699, %v698
  %732 = vst [vmem:[%s3] sm:$0xff] %v700
  %733 = vst [vmem:[%s3 + $0x8] sm:$0xff] %v701
  %734 = vst [vmem:[%s3 + $0x10] sm:$0xff] %v702
  %735 = vst [vmem:[%s3 + $0x18] sm:$0xff] %v703
  %736 = vst [vmem:[%s3 + $0x20] sm:$0xff] %v704
  %737 = vst [vmem:[%s3 + $0x28] sm:$0xff] %v705
  %738 = vst [vmem:[%s3 + $0x30] sm:$0xff] %v706
  %739 = vst [vmem:[%s3 + $0x38] sm:$0xff] %v707
  %740 = vst [vmem:[%s3 + $0x40] sm:$0xff] %v708
  %741 = vst [vmem:[%s3 + $0x48] sm:$0xff] %v709
  %742 = vst [vmem:[%s3 + $0x50] sm:$0xff] %v710
  %743 = vst [vmem:[%s3 + $0x58] sm:$0xff] %v711
  %744 = vst [vmem:[%s3 + $0x60] sm:$0xff] %v712
  %745 = vst [vmem:[%s3 + $0x68] sm:$0xff] %v713
  %746 = vst [vmem:[%s3 + $0x70] sm:$0xff] %v714
  %747 = vst [vmem:[%s3 + $0x78] sm:$0xff] %v715
  // Predicated region
  $region14: #{vae_policy_forward.11} parent=0 // pred_check
    _
  $region15: #{vae_policy_forward.11} parent=0 // pred_check_branch
    %749 = sbr.rel (0) target = $region17
  $region16: #{vae_policy_forward.11} parent=0 // pred_region
    _
  $region17: #{vae_policy_forward.11} parent=0 // pred_fallthru
    _
  // Predicated region
  $region18: #{vae_policy_forward.11} parent=0 // pred_check
    _
  $region19: #{vae_policy_forward.11} parent=0 // pred_check_branch
    %751 = sbr.rel (0) target = $region21
  $region20: #{vae_policy_forward.11} parent=0 // pred_region
    _
  $region21: #{vae_policy_forward.11} parent=0 // pred_fallthru
    _

// kernel: vae_policy_forward.12
$region0: #{vae_policy_forward.12}
  #allocation0 [shape = 'u32[]', space=smem, size = 0x4, offset = 0x4, fixed_abs, tag = 'smem constant byte address 0x4 - core index']
  #allocation1 [shape = 'u32[144,128]{1,0:T(1,128)}', space=vmem, size = 0x12000, scoped, tag = 'internal scratch']
  %s0 = inlined_call_operand.vmem [shape: bf16[128,64], index: 0, kind: input, shape index: {}]
  %s1 = inlined_call_operand.vmem [shape: f32[1,64], index: 1, kind: input, shape index: {}]
  %s2 = inlined_call_operand.vmem [shape: bf16[64,512], index: 2, kind: input, shape index: {}]
  %s3 = inlined_call_operand.vmem [shape: bf16[128,512], index: 3, kind: output, shape index: {}]
  %s4 = sld [smem:[#allocation0]]
  $region22: #{vae_policy_forward.12} parent=0
    _
  %s6 = ssub.s32 1, %s4
  %s7 = scalar_select 0, %s6, %s4
  // Predicated region
  $region2: #{vae_policy_forward.12} parent=0 // pred_check
    _
  $region3: #{vae_policy_forward.12} parent=0 // pred_check_branch
    %9 = sbr.rel (0) target = $region5
  $region4: #{vae_policy_forward.12} parent=0 // pred_region
    _
  $region5: #{vae_policy_forward.12} parent=0 // pred_fallthru
    _
  // Predicated region
  $region6: #{vae_policy_forward.12} parent=0 // pred_check
    _
  $region7: #{vae_policy_forward.12} parent=0 // pred_check_branch
    %11 = sbr.rel (0) target = $region9
  $region8: #{vae_policy_forward.12} parent=0 // pred_region
    _
  $region9: #{vae_policy_forward.12} parent=0 // pred_fallthru
    _
  // Predicated region
  $region10: #{vae_policy_forward.12} parent=0 // pred_check
    _
  $region11: #{vae_policy_forward.12} parent=0 // pred_check_branch
    %13 = sbr.rel (0) target = $region13
  $region12: #{vae_policy_forward.12} parent=0 // pred_region
    _
  $region13: #{vae_policy_forward.12} parent=0 // pred_fallthru
    _
  %v15 = vld [vmem:[%s0] sm:$0xf]
  %v16 = vld [vmem:[%s0 + $0x4] sm:$0xf]
  %v17 = vld [vmem:[%s0 + $0x8] sm:$0xf]
  %v18 = vld [vmem:[%s0 + $0xc] sm:$0xf]
  %v19 = vld [vmem:[%s0 + $0x10] sm:$0xf]
  %v20 = vld [vmem:[%s0 + $0x14] sm:$0xf]
  %v21 = vld [vmem:[%s0 + $0x18] sm:$0xf]
  %v22 = vld [vmem:[%s0 + $0x1c] sm:$0xf]
  %v23 = vld [vmem:[%s0 + $0x20] sm:$0xf]
  %v24 = vld [vmem:[%s0 + $0x24] sm:$0xf]
  %v25 = vld [vmem:[%s0 + $0x28] sm:$0xf]
  %v26 = vld [vmem:[%s0 + $0x2c] sm:$0xf]
  %v27 = vld [vmem:[%s0 + $0x30] sm:$0xf]
  %v28 = vld [vmem:[%s0 + $0x34] sm:$0xf]
  %v29 = vld [vmem:[%s0 + $0x38] sm:$0xf]
  %v30 = vld [vmem:[%s0 + $0x3c] sm:$0xf]
  %v31 = vunpack.c.l.bf16 %v15
  %v32 = vunpack.c.l.bf16 %v16
  %v33 = vunpack.c.l.bf16 %v17
  %v34 = vunpack.c.l.bf16 %v18
  %v35 = vunpack.c.l.bf16 %v19
  %v36 = vunpack.c.l.bf16 %v20
  %v37 = vunpack.c.l.bf16 %v21
  %v38 = vunpack.c.l.bf16 %v22
  %v39 = vunpack.c.l.bf16 %v23
  %v40 = vunpack.c.l.bf16 %v24
  %v41 = vunpack.c.l.bf16 %v25
  %v42 = vunpack.c.l.bf16 %v26
  %v43 = vunpack.c.l.bf16 %v27
  %v44 = vunpack.c.l.bf16 %v28
  %v45 = vunpack.c.l.bf16 %v29
  %v46 = vunpack.c.l.bf16 %v30
  %v47 = vld [vmem:[%s1] sm:$0x1]
  %v49 = vlaneseq
  %v50 = vshrl.u32 %v49, 7
  %v51 = vsub.s32 0, %v50
  %v52 = vrot.slane %v47, %v51
  %v54 = vadd.f32 %v31, %v52
  %v55 = vadd.f32 %v32, %v52
  %v56 = vadd.f32 %v33, %v52
  %v57 = vadd.f32 %v34, %v52
  %v58 = vadd.f32 %v35, %v52
  %v59 = vadd.f32 %v36, %v52
  %v60 = vadd.f32 %v37, %v52
  %v61 = vadd.f32 %v38, %v52
  %v62 = vadd.f32 %v39, %v52
  %v63 = vadd.f32 %v40, %v52
  %v64 = vadd.f32 %v41, %v52
  %v65 = vadd.f32 %v42, %v52
  %v66 = vadd.f32 %v43, %v52
  %v67 = vadd.f32 %v44, %v52
  %v68 = vadd.f32 %v45, %v52
  %v69 = vadd.f32 %v46, %v52
  %v70 = vmax.f32 %v54, 0.0
  %v71 = vmax.f32 %v55, 0.0
  %v72 = vmax.f32 %v56, 0.0
  %v73 = vmax.f32 %v57, 0.0
  %v74 = vmax.f32 %v58, 0.0
  %v75 = vmax.f32 %v59, 0.0
  %v76 = vmax.f32 %v60, 0.0
  %v77 = vmax.f32 %v61, 0.0
  %v78 = vmax.f32 %v62, 0.0
  %v79 = vmax.f32 %v63, 0.0
  %v80 = vmax.f32 %v64, 0.0
  %v81 = vmax.f32 %v65, 0.0
  %v82 = vmax.f32 %v66, 0.0
  %v83 = vmax.f32 %v67, 0.0
  %v84 = vmax.f32 %v68, 0.0
  %v85 = vmax.f32 %v69, 0.0
  %v86 = vpack.c.bf16 %v71, %v70
  %v87 = vpack.c.bf16 %v73, %v72
  %v88 = vpack.c.bf16 %v75, %v74
  %v89 = vpack.c.bf16 %v77, %v76
  %v90 = vpack.c.bf16 %v79, %v78
  %v91 = vpack.c.bf16 %v81, %v80
  %v92 = vpack.c.bf16 %v83, %v82
  %v93 = vpack.c.bf16 %v85, %v84
  %v94 = vld [vmem:[%s2] sm:$0xff]
  %v95 = vld [vmem:[%s2 + $0x8] sm:$0xff]
  %v96 = vld [vmem:[%s2 + $0x10] sm:$0xff]
  %v97 = vld [vmem:[%s2 + $0x18] sm:$0xff]
  %v98 = vld [vmem:[%s2 + $0x20] sm:$0xff]
  %v99 = vld [vmem:[%s2 + $0x28] sm:$0xff]
  %v100 = vld [vmem:[%s2 + $0x30] sm:$0xff]
  %v101 = vld [vmem:[%s2 + $0x38] sm:$0xff]
  %v102 = vld [vmem:[%s2 + $0x40] sm:$0xff]
  %v103 = vld [vmem:[%s2 + $0x48] sm:$0xff]
  %v104 = vld [vmem:[%s2 + $0x50] sm:$0xff]
  %v105 = vld [vmem:[%s2 + $0x58] sm:$0xff]
  %v106 = vld [vmem:[%s2 + $0x60] sm:$0xff]
  %v107 = vld [vmem:[%s2 + $0x68] sm:$0xff]
  %v108 = vld [vmem:[%s2 + $0x70] sm:$0xff]
  %v109 = vld [vmem:[%s2 + $0x78] sm:$0xff]
  %v126 = vunpack.c.l.b16 %v94
  %v127 = vunpack.c.h.b16 %v94
  %v128 = vunpack.c.l.b16 %v95
  %v129 = vunpack.c.h.b16 %v95
  %v130 = vunpack.c.l.b16 %v96
  %v131 = vunpack.c.h.b16 %v96
  %v132 = vunpack.c.l.b16 %v97
  %v133 = vunpack.c.h.b16 %v97
  %v134 = vunpack.c.l.b16 %v98
  %v135 = vunpack.c.h.b16 %v98
  %v136 = vunpack.c.l.b16 %v99
  %v137 = vunpack.c.h.b16 %v99
  %v138 = vunpack.c.l.b16 %v100
  %v139 = vunpack.c.h.b16 %v100
  %v140 = vunpack.c.l.b16 %v101
  %v141 = vunpack.c.h.b16 %v101
  %v142 = vunpack.c.l.b16 %v102
  %v143 = vunpack.c.h.b16 %v102
  %v144 = vunpack.c.l.b16 %v103
  %v145 = vunpack.c.h.b16 %v103
  %v146 = vunpack.c.l.b16 %v104
  %v147 = vunpack.c.h.b16 %v104
  %v148 = vunpack.c.l.b16 %v105
  %v149 = vunpack.c.h.b16 %v105
  %v150 = vunpack.c.l.b16 %v106
  %v151 = vunpack.c.h.b16 %v106
  %v152 = vunpack.c.l.b16 %v107
  %v153 = vunpack.c.h.b16 %v107
  %v154 = vunpack.c.l.b16 %v108
  %v155 = vunpack.c.h.b16 %v108
  %v156 = vunpack.c.l.b16 %v109
  %v157 = vunpack.c.h.b16 %v109
  %v158 = vpack.c.b16 %v130, %v126
  %v159 = vpack.c.b16 %v131, %v127
  %v160 = vpack.c.b16 %v132, %v128
  %v161 = vpack.c.b16 %v133, %v129
  %v162 = vpack.c.b16 %v138, %v134
  %v163 = vpack.c.b16 %v139, %v135
  %v164 = vpack.c.b16 %v140, %v136
  %v165 = vpack.c.b16 %v141, %v137
  %v166 = vpack.c.b16 %v146, %v142
  %v167 = vpack.c.b16 %v147, %v143
  %v168 = vpack.c.b16 %v148, %v144
  %v169 = vpack.c.b16 %v149, %v145
  %v170 = vpack.c.b16 %v154, %v150
  %v171 = vpack.c.b16 %v155, %v151
  %v172 = vpack.c.b16 %v156, %v152
  %v173 = vpack.c.b16 %v157, %v153
  %vm190 = vcmask 523264
  %v192 = vsel %vm190, %v86, 0
  %v195 = vsel %vm190, %v87, 0
  %v198 = vsel %vm190, %v88, 0
  %v201 = vsel %vm190, %v89, 0
  %v204 = vsel %vm190, %v90, 0
  %v207 = vsel %vm190, %v91, 0
  %v210 = vsel %vm190, %v92, 0
  %v213 = vsel %vm190, %v93, 0
  %215 = vmatprep.subr.bf16.mxu0 %v159
  %216 = vmatpush1.bf16.msra.mxu0 %v158
  %217 = vmatprep.subr.bf16.mxu0 %v163
  %218 = vmatpush1.bf16.msra.mxu0 %v162
  %219 = vmatprep.subr.bf16.mxu0 %v167
  %220 = vmatpush1.bf16.msra.mxu0 %v166
  %221 = vmatprep.subr.bf16.mxu0 %v171
  %222 = vmatpush1.bf16.msra.mxu0 %v170
  %223 = vmatprep.subr.bf16.mxu0 0
  %224 = vmatpush1.bf16.msra.mxu0 0
  %225 = vmatprep.subr.bf16.mxu0 0
  %226 = vmatpush1.bf16.msra.mxu0 0
  %227 = vmatprep.subr.bf16.mxu0 0
  %228 = vmatpush1.bf16.msra.mxu0 0
  %229 = vmatprep.subr.bf16.mxu0 0
  %230 = vmatpush1.bf16.msra.mxu0 0
  %231 = vmatprep.subr.bf16.mxu0 0
  %232 = vmatpush1.bf16.msra.mxu0 0
  %233 = vmatprep.subr.bf16.mxu0 0
  %234 = vmatpush1.bf16.msra.mxu0 0
  %235 = vmatprep.subr.bf16.mxu0 0
  %236 = vmatpush1.bf16.msra.mxu0 0
  %237 = vmatprep.subr.bf16.mxu0 0
  %238 = vmatpush1.bf16.msra.mxu0 0
  %239 = vmatprep.subr.bf16.mxu0 0
  %240 = vmatpush1.bf16.msra.mxu0 0
  %241 = vmatprep.subr.bf16.mxu0 0
  %242 = vmatpush1.bf16.msra.mxu0 0
  %243 = vmatprep.subr.bf16.mxu0 0
  %244 = vmatpush1.bf16.msra.mxu0 0
  %245 = vmatprep.subr.bf16.mxu0 0
  %246 = vmatpush1.bf16.msra.mxu0 0
  %247 = vmatprep.mubr.bf16.mxu0 0
  %248 = vmatmul.mubr.bf16.gmra.mrb[0].mxu0 %v192
  %v249 = vpop.f32.mrb[0].mxu0
  %v250 = vadd.f32 0.0, %v249
  %v251 = vpop.f32.mrb[0].mxu0
  %v252 = vadd.f32 0.0, %v251
  %v253 = vpop.f32.mrb[0].mxu0
  %v254 = vadd.f32 0.0, %v253
  %v255 = vpop.f32.mrb[0].mxu0
  %v256 = vadd.f32 0.0, %v255
  %257 = vmatprep.mubr.bf16.mxu0 0
  %258 = vmatmul.mubr.bf16.gmra.mrb[0].mxu0 %v195
  %v259 = vpop.f32.mrb[0].mxu0
  %v260 = vadd.f32 0.0, %v259
  %v261 = vpop.f32.mrb[0].mxu0
  %v262 = vadd.f32 0.0, %v261
  %v263 = vpop.f32.mrb[0].mxu0
  %v264 = vadd.f32 0.0, %v263
  %v265 = vpop.f32.mrb[0].mxu0
  %v266 = vadd.f32 0.0, %v265
  %267 = vmatprep.mubr.bf16.mxu0 0
  %268 = vmatmul.mubr.bf16.gmra.mrb[0].mxu0 %v198
  %v269 = vpop.f32.mrb[0].mxu0
  %v270 = vadd.f32 0.0, %v269
  %v271 = vpop.f32.mrb[0].mxu0
  %v272 = vadd.f32 0.0, %v271
  %v273 = vpop.f32.mrb[0].mxu0
  %v274 = vadd.f32 0.0, %v273
  %v275 = vpop.f32.mrb[0].mxu0
  %v276 = vadd.f32 0.0, %v275
  %277 = vmatprep.mubr.bf16.mxu0 0
  %278 = vmatmul.mubr.bf16.gmra.mrb[0].mxu0 %v201
  %v279 = vpop.f32.mrb[0].mxu0
  %v280 = vadd.f32 0.0, %v279
  %v281 = vpop.f32.mrb[0].mxu0
  %v282 = vadd.f32 0.0, %v281
  %v283 = vpop.f32.mrb[0].mxu0
  %v284 = vadd.f32 0.0, %v283
  %v285 = vpop.f32.mrb[0].mxu0
  %v286 = vadd.f32 0.0, %v285
  %287 = vmatprep.mubr.bf16.mxu0 0
  %288 = vmatmul.mubr.bf16.gmra.mrb[0].mxu0 %v204
  %v289 = vpop.f32.mrb[0].mxu0
  %v290 = vadd.f32 0.0, %v289
  %v291 = vpop.f32.mrb[0].mxu0
  %v292 = vadd.f32 0.0, %v291
  %v293 = vpop.f32.mrb[0].mxu0
  %v294 = vadd.f32 0.0, %v293
  %v295 = vpop.f32.mrb[0].mxu0
  %v296 = vadd.f32 0.0, %v295
  %297 = vmatprep.mubr.bf16.mxu0 0
  %298 = vmatmul.mubr.bf16.gmra.mrb[0].mxu0 %v207
  %v299 = vpop.f32.mrb[0].mxu0
  %v300 = vadd.f32 0.0, %v299
  %v301 = vpop.f32.mrb[0].mxu0
  %v302 = vadd.f32 0.0, %v301
  %v303 = vpop.f32.mrb[0].mxu0
  %v304 = vadd.f32 0.0, %v303
  %v305 = vpop.f32.mrb[0].mxu0
  %v306 = vadd.f32 0.0, %v305
  %307 = vmatprep.mubr.bf16.mxu0 0
  %308 = vmatmul.mubr.bf16.gmra.mrb[0].mxu0 %v210
  %v309 = vpop.f32.mrb[0].mxu0
  %v310 = vadd.f32 0.0, %v309
  %v311 = vpop.f32.mrb[0].mxu0
  %v312 = vadd.f32 0.0, %v311
  %v313 = vpop.f32.mrb[0].mxu0
  %v314 = vadd.f32 0.0, %v313
  %v315 = vpop.f32.mrb[0].mxu0
  %v316 = vadd.f32 0.0, %v315
  %317 = vmatprep.mubr.bf16.mxu0 0
  %318 = vmatmul.mubr.bf16.gmra.mrb[0].mxu0 %v213
  %v319 = vpop.f32.mrb[0].mxu0
  %v320 = vadd.f32 0.0, %v319
  %v321 = vpop.f32.mrb[0].mxu0
  %v322 = vadd.f32 0.0, %v321
  %v323 = vpop.f32.mrb[0].mxu0
  %v324 = vadd.f32 0.0, %v323
  %v325 = vpop.f32.mrb[0].mxu0
  %v326 = vadd.f32 0.0, %v325
  %327 = vdwg.mxu0
  %328 = vmatprep.subr.bf16.mxu0 %v161
  %329 = vmatpush1.bf16.msra.mxu0 %v160
  %330 = vmatprep.subr.bf16.mxu0 %v165
  %331 = vmatpush1.bf16.msra.mxu0 %v164
  %332 = vmatprep.subr.bf16.mxu0 %v169
  %333 = vmatpush1.bf16.msra.mxu0 %v168
  %334 = vmatprep.subr.bf16.mxu0 %v173
  %335 = vmatpush1.bf16.msra.mxu0 %v172
  %336 = vmatprep.subr.bf16.mxu0 0
  %337 = vmatpush1.bf16.msra.mxu0 0
  %338 = vmatprep.subr.bf16.mxu0 0
  %339 = vmatpush1.bf16.msra.mxu0 0
  %340 = vmatprep.subr.bf16.mxu0 0
  %341 = vmatpush1.bf16.msra.mxu0 0
  %342 = vmatprep.subr.bf16.mxu0 0
  %343 = vmatpush1.bf16.msra.mxu0 0
  %344 = vmatprep.subr.bf16.mxu0 0
  %345 = vmatpush1.bf16.msra.mxu0 0
  %346 = vmatprep.subr.bf16.mxu0 0
  %347 = vmatpush1.bf16.msra.mxu0 0
  %348 = vmatprep.subr.bf16.mxu0 0
  %349 = vmatpush1.bf16.msra.mxu0 0
  %350 = vmatprep.subr.bf16.mxu0 0
  %351 = vmatpush1.bf16.msra.mxu0 0
  %352 = vmatprep.subr.bf16.mxu0 0
  %353 = vmatpush1.bf16.msra.mxu0 0
  %354 = vmatprep.subr.bf16.mxu0 0
  %355 = vmatpush1.bf16.msra.mxu0 0
  %356 = vmatprep.subr.bf16.mxu0 0
  %357 = vmatpush1.bf16.msra.mxu0 0
  %358 = vmatprep.subr.bf16.mxu0 0
  %359 = vmatpush1.bf16.msra.mxu0 0
  %360 = vmatprep.mubr.bf16.mxu0 0
  %361 = vmatmul.mubr.bf16.gmra.mrb[0].mxu0 %v192
  %v362 = vpop.f32.mrb[0].mxu0
  %v363 = vadd.f32 0.0, %v362
  %v364 = vpop.f32.mrb[0].mxu0
  %v365 = vadd.f32 0.0, %v364
  %v366 = vpop.f32.mrb[0].mxu0
  %v367 = vadd.f32 0.0, %v366
  %v368 = vpop.f32.mrb[0].mxu0
  %v369 = vadd.f32 0.0, %v368
  %370 = vmatprep.mubr.bf16.mxu0 0
  %371 = vmatmul.mubr.bf16.gmra.mrb[0].mxu0 %v195
  %v372 = vpop.f32.mrb[0].mxu0
  %v373 = vadd.f32 0.0, %v372
  %v374 = vpop.f32.mrb[0].mxu0
  %v375 = vadd.f32 0.0, %v374
  %v376 = vpop.f32.mrb[0].mxu0
  %v377 = vadd.f32 0.0, %v376
  %v378 = vpop.f32.mrb[0].mxu0
  %v379 = vadd.f32 0.0, %v378
  %380 = vmatprep.mubr.bf16.mxu0 0
  %381 = vmatmul.mubr.bf16.gmra.mrb[0].mxu0 %v198
  %v382 = vpop.f32.mrb[0].mxu0
  %v383 = vadd.f32 0.0, %v382
  %v384 = vpop.f32.mrb[0].mxu0
  %v385 = vadd.f32 0.0, %v384
  %v386 = vpop.f32.mrb[0].mxu0
  %v387 = vadd.f32 0.0, %v386
  %v388 = vpop.f32.mrb[0].mxu0
  %v389 = vadd.f32 0.0, %v388
  %390 = vmatprep.mubr.bf16.mxu0 0
  %391 = vmatmul.mubr.bf16.gmra.mrb[0].mxu0 %v201
  %v392 = vpop.f32.mrb[0].mxu0
  %v393 = vadd.f32 0.0, %v392
  %v394 = vpop.f32.mrb[0].mxu0
  %v395 = vadd.f32 0.0, %v394
  %v396 = vpop.f32.mrb[0].mxu0
  %v397 = vadd.f32 0.0, %v396
  %v398 = vpop.f32.mrb[0].mxu0
  %v399 = vadd.f32 0.0, %v398
  %400 = vmatprep.mubr.bf16.mxu0 0
  %401 = vmatmul.mubr.bf16.gmra.mrb[0].mxu0 %v204
  %v402 = vpop.f32.mrb[0].mxu0
  %v403 = vadd.f32 0.0, %v402
  %v404 = vpop.f32.mrb[0].mxu0
  %v405 = vadd.f32 0.0, %v404
  %v406 = vpop.f32.mrb[0].mxu0
  %v407 = vadd.f32 0.0, %v406
  %v408 = vpop.f32.mrb[0].mxu0
  %v409 = vadd.f32 0.0, %v408
  %410 = vmatprep.mubr.bf16.mxu0 0
  %411 = vmatmul.mubr.bf16.gmra.mrb[0].mxu0 %v207
  %v412 = vpop.f32.mrb[0].mxu0
  %v413 = vadd.f32 0.0, %v412
  %v414 = vpop.f32.mrb[0].mxu0
  %v415 = vadd.f32 0.0, %v414
  %v416 = vpop.f32.mrb[0].mxu0
  %v417 = vadd.f32 0.0, %v416
  %v418 = vpop.f32.mrb[0].mxu0
  %v419 = vadd.f32 0.0, %v418
  %420 = vmatprep.mubr.bf16.mxu0 0
  %421 = vmatmul.mubr.bf16.gmra.mrb[0].mxu0 %v210
  %v422 = vpop.f32.mrb[0].mxu0
  %v423 = vadd.f32 0.0, %v422
  %v424 = vpop.f32.mrb[0].mxu0
  %v425 = vadd.f32 0.0, %v424
  %v426 = vpop.f32.mrb[0].mxu0
  %v427 = vadd.f32 0.0, %v426
  %v428 = vpop.f32.mrb[0].mxu0
  %v429 = vadd.f32 0.0, %v428
  %430 = vmatprep.mubr.bf16.mxu0 0
  %431 = vmatmul.mubr.bf16.gmra.mrb[0].mxu0 %v213
  %v432 = vpop.f32.mrb[0].mxu0
  %v433 = vadd.f32 0.0, %v432
  %v434 = vpop.f32.mrb[0].mxu0
  %v435 = vadd.f32 0.0, %v434
  %v436 = vpop.f32.mrb[0].mxu0
  %v437 = vadd.f32 0.0, %v436
  %v438 = vpop.f32.mrb[0].mxu0
  %v439 = vadd.f32 0.0, %v438
  %440 = vdwg.mxu0
  %v441 = vpack.c.bf16 %v254, %v250
  %v442 = vpack.c.bf16 %v256, %v252
  %v443 = vpack.c.bf16 %v367, %v363
  %v444 = vpack.c.bf16 %v369, %v365
  %v445 = vpack.c.bf16 %v264, %v260
  %v446 = vpack.c.bf16 %v266, %v262
  %v447 = vpack.c.bf16 %v377, %v373
  %v448 = vpack.c.bf16 %v379, %v375
  %v449 = vpack.c.bf16 %v274, %v270
  %v450 = vpack.c.bf16 %v276, %v272
  %v451 = vpack.c.bf16 %v387, %v383
  %v452 = vpack.c.bf16 %v389, %v385
  %v453 = vpack.c.bf16 %v284, %v280
  %v454 = vpack.c.bf16 %v286, %v282
  %v455 = vpack.c.bf16 %v397, %v393
  %v456 = vpack.c.bf16 %v399, %v395
  %v457 = vpack.c.bf16 %v294, %v290
  %v458 = vpack.c.bf16 %v296, %v292
  %v459 = vpack.c.bf16 %v407, %v403
  %v460 = vpack.c.bf16 %v409, %v405
  %v461 = vpack.c.bf16 %v304, %v300
  %v462 = vpack.c.bf16 %v306, %v302
  %v463 = vpack.c.bf16 %v417, %v413
  %v464 = vpack.c.bf16 %v419, %v415
  %v465 = vpack.c.bf16 %v314, %v310
  %v466 = vpack.c.bf16 %v316, %v312
  %v467 = vpack.c.bf16 %v427, %v423
  %v468 = vpack.c.bf16 %v429, %v425
  %v469 = vpack.c.bf16 %v324, %v320
  %v470 = vpack.c.bf16 %v326, %v322
  %v471 = vpack.c.bf16 %v437, %v433
  %v472 = vpack.c.bf16 %v439, %v435
  %v505 = vunpack.c.l.b16 %v441
  %v506 = vunpack.c.l.b16 %v442
  %v507 = vunpack.c.l.b16 %v443
  %v508 = vunpack.c.l.b16 %v444
  %v509 = vunpack.c.h.b16 %v441
  %v510 = vunpack.c.h.b16 %v442
  %v511 = vunpack.c.h.b16 %v443
  %v512 = vunpack.c.h.b16 %v444
  %v513 = vunpack.c.l.b16 %v445
  %v514 = vunpack.c.l.b16 %v446
  %v515 = vunpack.c.l.b16 %v447
  %v516 = vunpack.c.l.b16 %v448
  %v517 = vunpack.c.h.b16 %v445
  %v518 = vunpack.c.h.b16 %v446
  %v519 = vunpack.c.h.b16 %v447
  %v520 = vunpack.c.h.b16 %v448
  %v521 = vunpack.c.l.b16 %v449
  %v522 = vunpack.c.l.b16 %v450
  %v523 = vunpack.c.l.b16 %v451
  %v524 = vunpack.c.l.b16 %v452
  %v525 = vunpack.c.h.b16 %v449
  %v526 = vunpack.c.h.b16 %v450
  %v527 = vunpack.c.h.b16 %v451
  %v528 = vunpack.c.h.b16 %v452
  %v529 = vunpack.c.l.b16 %v453
  %v530 = vunpack.c.l.b16 %v454
  %v531 = vunpack.c.l.b16 %v455
  %v532 = vunpack.c.l.b16 %v456
  %v533 = vunpack.c.h.b16 %v453
  %v534 = vunpack.c.h.b16 %v454
  %v535 = vunpack.c.h.b16 %v455
  %v536 = vunpack.c.h.b16 %v456
  %v537 = vunpack.c.l.b16 %v457
  %v538 = vunpack.c.l.b16 %v458
  %v539 = vunpack.c.l.b16 %v459
  %v540 = vunpack.c.l.b16 %v460
  %v541 = vunpack.c.h.b16 %v457
  %v542 = vunpack.c.h.b16 %v458
  %v543 = vunpack.c.h.b16 %v459
  %v544 = vunpack.c.h.b16 %v460
  %v545 = vunpack.c.l.b16 %v461
  %v546 = vunpack.c.l.b16 %v462
  %v547 = vunpack.c.l.b16 %v463
  %v548 = vunpack.c.l.b16 %v464
  %v549 = vunpack.c.h.b16 %v461
  %v550 = vunpack.c.h.b16 %v462
  %v551 = vunpack.c.h.b16 %v463
  %v552 = vunpack.c.h.b16 %v464
  %v553 = vunpack.c.l.b16 %v465
  %v554 = vunpack.c.l.b16 %v466
  %v555 = vunpack.c.l.b16 %v467
  %v556 = vunpack.c.l.b16 %v468
  %v557 = vunpack.c.h.b16 %v465
  %v558 = vunpack.c.h.b16 %v466
  %v559 = vunpack.c.h.b16 %v467
  %v560 = vunpack.c.h.b16 %v468
  %v561 = vunpack.c.l.b16 %v469
  %v562 = vunpack.c.l.b16 %v470
  %v563 = vunpack.c.l.b16 %v471
  %v564 = vunpack.c.l.b16 %v472
  %v565 = vunpack.c.h.b16 %v469
  %v566 = vunpack.c.h.b16 %v470
  %v567 = vunpack.c.h.b16 %v471
  %v568 = vunpack.c.h.b16 %v472
  %v569 = vpack.c.b16 %v506, %v505
  %v570 = vpack.c.b16 %v508, %v507
  %v571 = vpack.c.b16 %v510, %v509
  %v572 = vpack.c.b16 %v512, %v511
  %v573 = vpack.c.b16 %v514, %v513
  %v574 = vpack.c.b16 %v516, %v515
  %v575 = vpack.c.b16 %v518, %v517
  %v576 = vpack.c.b16 %v520, %v519
  %v577 = vpack.c.b16 %v522, %v521
  %v578 = vpack.c.b16 %v524, %v523
  %v579 = vpack.c.b16 %v526, %v525
  %v580 = vpack.c.b16 %v528, %v527
  %v581 = vpack.c.b16 %v530, %v529
  %v582 = vpack.c.b16 %v532, %v531
  %v583 = vpack.c.b16 %v534, %v533
  %v584 = vpack.c.b16 %v536, %v535
  %v585 = vpack.c.b16 %v538, %v537
  %v586 = vpack.c.b16 %v540, %v539
  %v587 = vpack.c.b16 %v542, %v541
  %v588 = vpack.c.b16 %v544, %v543
  %v589 = vpack.c.b16 %v546, %v545
  %v590 = vpack.c.b16 %v548, %v547
  %v591 = vpack.c.b16 %v550, %v549
  %v592 = vpack.c.b16 %v552, %v551
  %v593 = vpack.c.b16 %v554, %v553
  %v594 = vpack.c.b16 %v556, %v555
  %v595 = vpack.c.b16 %v558, %v557
  %v596 = vpack.c.b16 %v560, %v559
  %v597 = vpack.c.b16 %v562, %v561
  %v598 = vpack.c.b16 %v564, %v563
  %v599 = vpack.c.b16 %v566, %v565
  %v600 = vpack.c.b16 %v568, %v567
  %633 = vst [vmem:[%s3] sm:$0xff] %v569
  %634 = vst [vmem:[%s3 + $0x8] sm:$0xff] %v570
  %635 = vst [vmem:[%s3 + $0x10] sm:$0xff] %v571
  %636 = vst [vmem:[%s3 + $0x18] sm:$0xff] %v572
  %637 = vst [vmem:[%s3 + $0x20] sm:$0xff] %v573
  %638 = vst [vmem:[%s3 + $0x28] sm:$0xff] %v574
  %639 = vst [vmem:[%s3 + $0x30] sm:$0xff] %v575
  %640 = vst [vmem:[%s3 + $0x38] sm:$0xff] %v576
  %641 = vst [vmem:[%s3 + $0x40] sm:$0xff] %v577
  %642 = vst [vmem:[%s3 + $0x48] sm:$0xff] %v578
  %643 = vst [vmem:[%s3 + $0x50] sm:$0xff] %v579
  %644 = vst [vmem:[%s3 + $0x58] sm:$0xff] %v580
  %645 = vst [vmem:[%s3 + $0x60] sm:$0xff] %v581
  %646 = vst [vmem:[%s3 + $0x68] sm:$0xff] %v582
  %647 = vst [vmem:[%s3 + $0x70] sm:$0xff] %v583
  %648 = vst [vmem:[%s3 + $0x78] sm:$0xff] %v584
  %649 = vst [vmem:[%s3 + $0x80] sm:$0xff] %v585
  %650 = vst [vmem:[%s3 + $0x88] sm:$0xff] %v586
  %651 = vst [vmem:[%s3 + $0x90] sm:$0xff] %v587
  %652 = vst [vmem:[%s3 + $0x98] sm:$0xff] %v588
  %653 = vst [vmem:[%s3 + $0xa0] sm:$0xff] %v589
  %654 = vst [vmem:[%s3 + $0xa8] sm:$0xff] %v590
  %655 = vst [vmem:[%s3 + $0xb0] sm:$0xff] %v591
  %656 = vst [vmem:[%s3 + $0xb8] sm:$0xff] %v592
  %657 = vst [vmem:[%s3 + $0xc0] sm:$0xff] %v593
  %658 = vst [vmem:[%s3 + $0xc8] sm:$0xff] %v594
  %659 = vst [vmem:[%s3 + $0xd0] sm:$0xff] %v595
  %660 = vst [vmem:[%s3 + $0xd8] sm:$0xff] %v596
  %661 = vst [vmem:[%s3 + $0xe0] sm:$0xff] %v597
  %662 = vst [vmem:[%s3 + $0xe8] sm:$0xff] %v598
  %663 = vst [vmem:[%s3 + $0xf0] sm:$0xff] %v599
  %664 = vst [vmem:[%s3 + $0xf8] sm:$0xff] %v600
  // Predicated region
  $region14: #{vae_policy_forward.12} parent=0 // pred_check
    _
  $region15: #{vae_policy_forward.12} parent=0 // pred_check_branch
    %666 = sbr.rel (0) target = $region17
  $region16: #{vae_policy_forward.12} parent=0 // pred_region
    _
  $region17: #{vae_policy_forward.12} parent=0 // pred_fallthru
    _
  // Predicated region
  $region18: #{vae_policy_forward.12} parent=0 // pred_check
    _
  $region19: #{vae_policy_forward.12} parent=0 // pred_check_branch
    %668 = sbr.rel (0) target = $region21
  $region20: #{vae_policy_forward.12} parent=0 // pred_region
    _
  $region21: #{vae_policy_forward.12} parent=0 // pred_fallthru
    _

// kernel: vae_policy_forward.10
$region0: #{vae_policy_forward.10}
  #allocation0 [shape = 'u32[]', space=smem, size = 0x4, offset = 0x4, fixed_abs, tag = 'smem constant byte address 0x4 - core index']
  #allocation1 [shape = 'u32[144,128]{1,0:T(1,128)}', space=vmem, size = 0x12000, scoped, tag = 'internal scratch']
  %s0 = inlined_call_operand.vmem [shape: bf16[8,2048], index: 0, kind: input, shape index: {}]
  %s1 = inlined_call_operand.vmem [shape: f32[2,16], index: 1, kind: input, shape index: {}]
  %s2 = inlined_call_operand.vmem [shape: bf16[2048,256], index: 2, kind: input, shape index: {}]
  %s3 = inlined_call_operand.vmem [shape: f32[1,256], index: 3, kind: input, shape index: {}]
  %s4 = inlined_call_operand.vmem [shape: bf16[1024,32], index: 4, kind: input, shape index: {}]
  %s5 = inlined_call_operand.vmem [shape: f32[1,32], index: 5, kind: input, shape index: {}]
  %s6 = inlined_call_operand.vmem [shape: bf16[16,1024], index: 6, kind: input, shape index: {}]
  %s7 = inlined_call_operand.vmem [shape: f32[1,1024], index: 7, kind: input, shape index: {}]
  %s8 = inlined_call_operand.vmem [shape: bf16[256,2048], index: 8, kind: input, shape index: {}]
  %s9 = inlined_call_operand.vmem [shape: bf16[16,128], index: 9, kind: input, shape index: {}]
  %s10 = inlined_call_operand.vmem [shape: f32[1,128], index: 10, kind: input, shape index: {}]
  %s11 = inlined_call_operand.vmem [shape: bf16[128,128], index: 11, kind: input, shape index: {}]
  %s12 = inlined_call_operand.vmem [shape: f32[1,128], index: 12, kind: input, shape index: {}]
  %s13 = inlined_call_operand.vmem [shape: bf16[128,16], index: 13, kind: input, shape index: {}]
  %s14 = inlined_call_operand.vmem [shape: f32[1,16], index: 14, kind: input, shape index: {}]
  %s15 = inlined_call_operand.hbm [shape: f32[2,32], index: 15, kind: output, shape index: {0}]
  %s16 = inlined_call_operand.hbm [shape: f32[2,15], index: 16, kind: output, shape index: {1}]
  %s17 = inlined_call_operand.vmem [shape: f32[2,1], index: 17, kind: output, shape index: {2}]
  %s18 = inlined_call_operand.vmem [shape: bf16[8,2048], index: 18, kind: output, shape index: {3}]
  %19 = xla_tuple %s15, %s16, %s17, %s18
  %s20 = sld [smem:[#allocation0]]
  $region94: #{vae_policy_forward.10} parent=0
    _
  %s22 = ssub.s32 1, %s20
  %s23 = scalar_select 0, %s22, %s20
  $region1: #{vae_policy_forward.10} parent=0
    #allocation2 [shape = 'u8[1024]{0}', space=vmem, size = 0x400, scoped, tag = 'output window, operand 0, single buffered']
    #allocation3 [shape = 's32[1]{0}', space=sflag, size = 0x4, scoped, tag = 'scoped memory for vae_policy_forward.10']
    #allocation4 [shape = 'u8[1024]{0}', space=vmem, size = 0x400, scoped, tag = 'output window, operand 1, single buffered']
    #allocation5 [shape = 's32[1]{0}', space=sflag, size = 0x4, scoped, tag = 'scoped memory for vae_policy_forward.10']
    %24 = vsyncpa [#allocation3], 0
    %25 = vsyncpa [#allocation5], 0
    // Predicated region
    $region2: #{vae_policy_forward.10} parent=1 // pred_check
      _
    $region3: #{vae_policy_forward.10} parent=1 // pred_check_branch
      %27 = sbr.rel (0) target = $region5
    $region4: #{vae_policy_forward.10} parent=1 // pred_region
      _
    $region5: #{vae_policy_forward.10} parent=1 // pred_fallthru
      _
    // Predicated region
    $region6: #{vae_policy_forward.10} parent=1 // pred_check
      _
    $region7: #{vae_policy_forward.10} parent=1 // pred_check_branch
      %29 = sbr.rel (0) target = $region9
    $region8: #{vae_policy_forward.10} parent=1 // pred_region
      _
    $region9: #{vae_policy_forward.10} parent=1 // pred_fallthru
      _
    // Predicated region
    $region10: #{vae_policy_forward.10} parent=1 // pred_check
      _
    $region11: #{vae_policy_forward.10} parent=1 // pred_check_branch
      %31 = sbr.rel (0) target = $region13
    $region12: #{vae_policy_forward.10} parent=1 // pred_region
      _
    $region13: #{vae_policy_forward.10} parent=1 // pred_fallthru
      _
    // Predicated region
    $region14: #{vae_policy_forward.10} parent=1 // pred_check
      _
    $region15: #{vae_policy_forward.10} parent=1 // pred_check_branch
      %33 = sbr.rel (0) target = $region17
    $region16: #{vae_policy_forward.10} parent=1 // pred_region
      _
    $region17: #{vae_policy_forward.10} parent=1 // pred_fallthru
      _
    // Predicated region
    $region18: #{vae_policy_forward.10} parent=1 // pred_check
      _
    $region19: #{vae_policy_forward.10} parent=1 // pred_check_branch
      %35 = sbr.rel (0) target = $region21
    $region20: #{vae_policy_forward.10} parent=1 // pred_region
      _
    $region21: #{vae_policy_forward.10} parent=1 // pred_fallthru
      _
    // Predicated region
    $region22: #{vae_policy_forward.10} parent=1 // pred_check
      _
    $region23: #{vae_policy_forward.10} parent=1 // pred_check_branch
      %37 = sbr.rel (0) target = $region25
    $region24: #{vae_policy_forward.10} parent=1 // pred_region
      _
    $region25: #{vae_policy_forward.10} parent=1 // pred_fallthru
      _
    // Predicated region
    $region26: #{vae_policy_forward.10} parent=1 // pred_check
      _
    $region27: #{vae_policy_forward.10} parent=1 // pred_check_branch
      %39 = sbr.rel (0) target = $region29
    $region28: #{vae_policy_forward.10} parent=1 // pred_region
      _
    $region29: #{vae_policy_forward.10} parent=1 // pred_fallthru
      _
    // Predicated region
    $region30: #{vae_policy_forward.10} parent=1 // pred_check
      _
    $region31: #{vae_policy_forward.10} parent=1 // pred_check_branch
      %41 = sbr.rel (0) target = $region33
    $region32: #{vae_policy_forward.10} parent=1 // pred_region
      _
    $region33: #{vae_policy_forward.10} parent=1 // pred_fallthru
      _
    // Predicated region
    $region34: #{vae_policy_forward.10} parent=1 // pred_check
      _
    $region35: #{vae_policy_forward.10} parent=1 // pred_check_branch
      %43 = sbr.rel (0) target = $region37
    $region36: #{vae_policy_forward.10} parent=1 // pred_region
      _
    $region37: #{vae_policy_forward.10} parent=1 // pred_fallthru
      _
    // Predicated region
    $region38: #{vae_policy_forward.10} parent=1 // pred_check
      _
    $region39: #{vae_policy_forward.10} parent=1 // pred_check_branch
      %45 = sbr.rel (0) target = $region41
    $region40: #{vae_policy_forward.10} parent=1 // pred_region
      _
    $region41: #{vae_policy_forward.10} parent=1 // pred_fallthru
      _
    // Predicated region
    $region42: #{vae_policy_forward.10} parent=1 // pred_check
      _
    $region43: #{vae_policy_forward.10} parent=1 // pred_check_branch
      %47 = sbr.rel (0) target = $region45
    $region44: #{vae_policy_forward.10} parent=1 // pred_region
      _
    $region45: #{vae_policy_forward.10} parent=1 // pred_fallthru
      _
    // Predicated region
    $region46: #{vae_policy_forward.10} parent=1 // pred_check
      _
    $region47: #{vae_policy_forward.10} parent=1 // pred_check_branch
      %49 = sbr.rel (0) target = $region49
    $region48: #{vae_policy_forward.10} parent=1 // pred_region
      _
    $region49: #{vae_policy_forward.10} parent=1 // pred_fallthru
      _
    // Predicated region
    $region50: #{vae_policy_forward.10} parent=1 // pred_check
      _
    $region51: #{vae_policy_forward.10} parent=1 // pred_check_branch
      %51 = sbr.rel (0) target = $region53
    $region52: #{vae_policy_forward.10} parent=1 // pred_region
      _
    $region53: #{vae_policy_forward.10} parent=1 // pred_fallthru
      _
    // Predicated region
    $region54: #{vae_policy_forward.10} parent=1 // pred_check
      _
    $region55: #{vae_policy_forward.10} parent=1 // pred_check_branch
      %53 = sbr.rel (0) target = $region57
    $region56: #{vae_policy_forward.10} parent=1 // pred_region
      _
    $region57: #{vae_policy_forward.10} parent=1 // pred_fallthru
      _
    // Predicated region
    $region58: #{vae_policy_forward.10} parent=1 // pred_check
      _
    $region59: #{vae_policy_forward.10} parent=1 // pred_check_branch
      %55 = sbr.rel (0) target = $region61
    $region60: #{vae_policy_forward.10} parent=1 // pred_region
      _
    $region61: #{vae_policy_forward.10} parent=1 // pred_fallthru
      _
    %v57 = vld [vmem:[%s2] sm:$0xff]
    %v58 = vld [vmem:[%s2 + $0x8] sm:$0xff]
    %v59 = vld [vmem:[%s2 + $0x10] sm:$0xff]
    %v60 = vld [vmem:[%s2 + $0x18] sm:$0xff]
    %v61 = vld [vmem:[%s2 + $0x20] sm:$0xff]
    %v62 = vld [vmem:[%s2 + $0x28] sm:$0xff]
    %v63 = vld [vmem:[%s2 + $0x30] sm:$0xff]
    %v64 = vld [vmem:[%s2 + $0x38] sm:$0xff]
    %v65 = vld [vmem:[%s2 + $0x40] sm:$0xff]
    %v66 = vld [vmem:[%s2 + $0x48] sm:$0xff]
    %v67 = vld [vmem:[%s2 + $0x50] sm:$0xff]
    %v68 = vld [vmem:[%s2 + $0x58] sm:$0xff]
    %v69 = vld [vmem:[%s2 + $0x60] sm:$0xff]
    %v70 = vld [vmem:[%s2 + $0x68] sm:$0xff]
    %v71 = vld [vmem:[%s2 + $0x70] sm:$0xff]
    %v72 = vld [vmem:[%s2 + $0x78] sm:$0xff]
    %v73 = vld [vmem:[%s2 + $0x80] sm:$0xff]
    %v74 = vld [vmem:[%s2 + $0x88] sm:$0xff]
    %v75 = vld [vmem:[%s2 + $0x90] sm:$0xff]
    %v76 = vld [vmem:[%s2 + $0x98] sm:$0xff]
    %v77 = vld [vmem:[%s2 + $0xa0] sm:$0xff]
    %v78 = vld [vmem:[%s2 + $0xa8] sm:$0xff]
    %v79 = vld [vmem:[%s2 + $0xb0] sm:$0xff]
    %v80 = vld [vmem:[%s2 + $0xb8] sm:$0xff]
    %v81 = vld [vmem:[%s2 + $0xc0] sm:$0xff]
    %v82 = vld [vmem:[%s2 + $0xc8] sm:$0xff]
    %v83 = vld [vmem:[%s2 + $0xd0] sm:$0xff]
    %v84 = vld [vmem:[%s2 + $0xd8] sm:$0xff]
    %v85 = vld [vmem:[%s2 + $0xe0] sm:$0xff]
    %v86 = vld [vmem:[%s2 + $0xe8] sm:$0xff]
    %v87 = vld [vmem:[%s2 + $0xf0] sm:$0xff]
    %v88 = vld [vmem:[%s2 + $0xf8] sm:$0xff]
    %v89 = vld [vmem:[%s2 + $0x100] sm:$0xff]
    %v90 = vld [vmem:[%s2 + $0x108] sm:$0xff]
    %v91 = vld [vmem:[%s2 + $0x110] sm:$0xff]
    %v92 = vld [vmem:[%s2 + $0x118] sm:$0xff]
    %v93 = vld [vmem:[%s2 + $0x120] sm:$0xff]
    %v94 = vld [vmem:[%s2 + $0x128] sm:$0xff]
    %v95 = vld [vmem:[%s2 + $0x130] sm:$0xff]
    %v96 = vld [vmem:[%s2 + $0x138] sm:$0xff]
    %v97 = vld [vmem:[%s2 + $0x140] sm:$0xff]
    %v98 = vld [vmem:[%s2 + $0x148] sm:$0xff]
    %v99 = vld [vmem:[%s2 + $0x150] sm:$0xff]
    %v100 = vld [vmem:[%s2 + $0x158] sm:$0xff]
    %v101 = vld [vmem:[%s2 + $0x160] sm:$0xff]
    %v102 = vld [vmem:[%s2 + $0x168] sm:$0xff]
    %v103 = vld [vmem:[%s2 + $0x170] sm:$0xff]
    %v104 = vld [vmem:[%s2 + $0x178] sm:$0xff]
    %v105 = vld [vmem:[%s2 + $0x180] sm:$0xff]
    %v106 = vld [vmem:[%s2 + $0x188] sm:$0xff]
    %v107 = vld [vmem:[%s2 + $0x190] sm:$0xff]
    %v108 = vld [vmem:[%s2 + $0x198] sm:$0xff]
    %v109 = vld [vmem:[%s2 + $0x1a0] sm:$0xff]
    %v110 = vld [vmem:[%s2 + $0x1a8] sm:$0xff]
    %v111 = vld [vmem:[%s2 + $0x1b0] sm:$0xff]
    %v112 = vld [vmem:[%s2 + $0x1b8] sm:$0xff]
    %v113 = vld [vmem:[%s2 + $0x1c0] sm:$0xff]
    %v114 = vld [vmem:[%s2 + $0x1c8] sm:$0xff]
    %v115 = vld [vmem:[%s2 + $0x1d0] sm:$0xff]
    %v116 = vld [vmem:[%s2 + $0x1d8] sm:$0xff]
    %v117 = vld [vmem:[%s2 + $0x1e0] sm:$0xff]
    %v118 = vld [vmem:[%s2 + $0x1e8] sm:$0xff]
    %v119 = vld [vmem:[%s2 + $0x1f0] sm:$0xff]
    %v120 = vld [vmem:[%s2 + $0x1f8] sm:$0xff]
    %v121 = vld [vmem:[%s2 + $0x200] sm:$0xff]
    %v122 = vld [vmem:[%s2 + $0x208] sm:$0xff]
    %v123 = vld [vmem:[%s2 + $0x210] sm:$0xff]
    %v124 = vld [vmem:[%s2 + $0x218] sm:$0xff]
    %v125 = vld [vmem:[%s2 + $0x220] sm:$0xff]
    %v126 = vld [vmem:[%s2 + $0x228] sm:$0xff]
    %v127 = vld [vmem:[%s2 + $0x230] sm:$0xff]
    %v128 = vld [vmem:[%s2 + $0x238] sm:$0xff]
    %v129 = vld [vmem:[%s2 + $0x240] sm:$0xff]
    %v130 = vld [vmem:[%s2 + $0x248] sm:$0xff]
    %v131 = vld [vmem:[%s2 + $0x250] sm:$0xff]
    %v132 = vld [vmem:[%s2 + $0x258] sm:$0xff]
    %v133 = vld [vmem:[%s2 + $0x260] sm:$0xff]
    %v134 = vld [vmem:[%s2 + $0x268] sm:$0xff]
    %v135 = vld [vmem:[%s2 + $0x270] sm:$0xff]
    %v136 = vld [vmem:[%s2 + $0x278] sm:$0xff]
    %v137 = vld [vmem:[%s2 + $0x280] sm:$0xff]
    %v138 = vld [vmem:[%s2 + $0x288] sm:$0xff]
    %v139 = vld [vmem:[%s2 + $0x290] sm:$0xff]
    %v140 = vld [vmem:[%s2 + $0x298] sm:$0xff]
    %v141 = vld [vmem:[%s2 + $0x2a0] sm:$0xff]
    %v142 = vld [vmem:[%s2 + $0x2a8] sm:$0xff]
    %v143 = vld [vmem:[%s2 + $0x2b0] sm:$0xff]
    %v144 = vld [vmem:[%s2 + $0x2b8] sm:$0xff]
    %v145 = vld [vmem:[%s2 + $0x2c0] sm:$0xff]
    %v146 = vld [vmem:[%s2 + $0x2c8] sm:$0xff]
    %v147 = vld [vmem:[%s2 + $0x2d0] sm:$0xff]
    %v148 = vld [vmem:[%s2 + $0x2d8] sm:$0xff]
    %v149 = vld [vmem:[%s2 + $0x2e0] sm:$0xff]
    %v150 = vld [vmem:[%s2 + $0x2e8] sm:$0xff]
    %v151 = vld [vmem:[%s2 + $0x2f0] sm:$0xff]
    %v152 = vld [vmem:[%s2 + $0x2f8] sm:$0xff]
    %v153 = vld [vmem:[%s2 + $0x300] sm:$0xff]
    %v154 = vld [vmem:[%s2 + $0x308] sm:$0xff]
    %v155 = vld [vmem:[%s2 + $0x310] sm:$0xff]
    %v156 = vld [vmem:[%s2 + $0x318] sm:$0xff]
    %v157 = vld [vmem:[%s2 + $0x320] sm:$0xff]
    %v158 = vld [vmem:[%s2 + $0x328] sm:$0xff]
    %v159 = vld [vmem:[%s2 + $0x330] sm:$0xff]
    %v160 = vld [vmem:[%s2 + $0x338] sm:$0xff]
    %v161 = vld [vmem:[%s2 + $0x340] sm:$0xff]
    %v162 = vld [vmem:[%s2 + $0x348] sm:$0xff]
    %v163 = vld [vmem:[%s2 + $0x350] sm:$0xff]
    %v164 = vld [vmem:[%s2 + $0x358] sm:$0xff]
    %v165 = vld [vmem:[%s2 + $0x360] sm:$0xff]
    %v166 = vld [vmem:[%s2 + $0x368] sm:$0xff]
    %v167 = vld [vmem:[%s2 + $0x370] sm:$0xff]
    %v168 = vld [vmem:[%s2 + $0x378] sm:$0xff]
    %v169 = vld [vmem:[%s2 + $0x380] sm:$0xff]
    %v170 = vld [vmem:[%s2 + $0x388] sm:$0xff]
    %v171 = vld [vmem:[%s2 + $0x390] sm:$0xff]
    %v172 = vld [vmem:[%s2 + $0x398] sm:$0xff]
    %v173 = vld [vmem:[%s2 + $0x3a0] sm:$0xff]
    %v174 = vld [vmem:[%s2 + $0x3a8] sm:$0xff]
    %v175 = vld [vmem:[%s2 + $0x3b0] sm:$0xff]
    %v176 = vld [vmem:[%s2 + $0x3b8] sm:$0xff]
    %v177 = vld [vmem:[%s2 + $0x3c0] sm:$0xff]
    %v178 = vld [vmem:[%s2 + $0x3c8] sm:$0xff]
    %v179 = vld [vmem:[%s2 + $0x3d0] sm:$0xff]
    %v180 = vld [vmem:[%s2 + $0x3d8] sm:$0xff]
    %v181 = vld [vmem:[%s2 + $0x3e0] sm:$0xff]
    %v182 = vld [vmem:[%s2 + $0x3e8] sm:$0xff]
    %v183 = vld [vmem:[%s2 + $0x3f0] sm:$0xff]
    %v184 = vld [vmem:[%s2 + $0x3f8] sm:$0xff]
    %v185 = vld [vmem:[%s2 + $0x400] sm:$0xff]
    %v186 = vld [vmem:[%s2 + $0x408] sm:$0xff]
    %v187 = vld [vmem:[%s2 + $0x410] sm:$0xff]
    %v188 = vld [vmem:[%s2 + $0x418] sm:$0xff]
    %v189 = vld [vmem:[%s2 + $0x420] sm:$0xff]
    %v190 = vld [vmem:[%s2 + $0x428] sm:$0xff]
    %v191 = vld [vmem:[%s2 + $0x430] sm:$0xff]
    %v192 = vld [vmem:[%s2 + $0x438] sm:$0xff]
    %v193 = vld [vmem:[%s2 + $0x440] sm:$0xff]
    %v194 = vld [vmem:[%s2 + $0x448] sm:$0xff]
    %v195 = vld [vmem:[%s2 + $0x450] sm:$0xff]
    %v196 = vld [vmem:[%s2 + $0x458] sm:$0xff]
    %v197 = vld [vmem:[%s2 + $0x460] sm:$0xff]
    %v198 = vld [vmem:[%s2 + $0x468] sm:$0xff]
    %v199 = vld [vmem:[%s2 + $0x470] sm:$0xff]
    %v200 = vld [vmem:[%s2 + $0x478] sm:$0xff]
    %v201 = vld [vmem:[%s2 + $0x480] sm:$0xff]
    %v202 = vld [vmem:[%s2 + $0x488] sm:$0xff]
    %v203 = vld [vmem:[%s2 + $0x490] sm:$0xff]
    %v204 = vld [vmem:[%s2 + $0x498] sm:$0xff]
    %v205 = vld [vmem:[%s2 + $0x4a0] sm:$0xff]
    %v206 = vld [vmem:[%s2 + $0x4a8] sm:$0xff]
    %v207 = vld [vmem:[%s2 + $0x4b0] sm:$0xff]
    %v208 = vld [vmem:[%s2 + $0x4b8] sm:$0xff]
    %v209 = vld [vmem:[%s2 + $0x4c0] sm:$0xff]
    %v210 = vld [vmem:[%s2 + $0x4c8] sm:$0xff]
    %v211 = vld [vmem:[%s2 + $0x4d0] sm:$0xff]
    %v212 = vld [vmem:[%s2 + $0x4d8] sm:$0xff]
    %v213 = vld [vmem:[%s2 + $0x4e0] sm:$0xff]
    %v214 = vld [vmem:[%s2 + $0x4e8] sm:$0xff]
    %v215 = vld [vmem:[%s2 + $0x4f0] sm:$0xff]
    %v216 = vld [vmem:[%s2 + $0x4f8] sm:$0xff]
    %v217 = vld [vmem:[%s2 + $0x500] sm:$0xff]
    %v218 = vld [vmem:[%s2 + $0x508] sm:$0xff]
    %v219 = vld [vmem:[%s2 + $0x510] sm:$0xff]
    %v220 = vld [vmem:[%s2 + $0x518] sm:$0xff]
    %v221 = vld [vmem:[%s2 + $0x520] sm:$0xff]
    %v222 = vld [vmem:[%s2 + $0x528] sm:$0xff]
    %v223 = vld [vmem:[%s2 + $0x530] sm:$0xff]
    %v224 = vld [vmem:[%s2 + $0x538] sm:$0xff]
    %v225 = vld [vmem:[%s2 + $0x540] sm:$0xff]
    %v226 = vld [vmem:[%s2 + $0x548] sm:$0xff]
    %v227 = vld [vmem:[%s2 + $0x550] sm:$0xff]
    %v228 = vld [vmem:[%s2 + $0x558] sm:$0xff]
    %v229 = vld [vmem:[%s2 + $0x560] sm:$0xff]
    %v230 = vld [vmem:[%s2 + $0x568] sm:$0xff]
    %v231 = vld [vmem:[%s2 + $0x570] sm:$0xff]
    %v232 = vld [vmem:[%s2 + $0x578] sm:$0xff]
    %v233 = vld [vmem:[%s2 + $0x580] sm:$0xff]
    %v234 = vld [vmem:[%s2 + $0x588] sm:$0xff]
    %v235 = vld [vmem:[%s2 + $0x590] sm:$0xff]
    %v236 = vld [vmem:[%s2 + $0x598] sm:$0xff]
    %v237 = vld [vmem:[%s2 + $0x5a0] sm:$0xff]
    %v238 = vld [vmem:[%s2 + $0x5a8] sm:$0xff]
    %v239 = vld [vmem:[%s2 + $0x5b0] sm:$0xff]
    %v240 = vld [vmem:[%s2 + $0x5b8] sm:$0xff]
    %v241 = vld [vmem:[%s2 + $0x5c0] sm:$0xff]
    %v242 = vld [vmem:[%s2 + $0x5c8] sm:$0xff]
    %v243 = vld [vmem:[%s2 + $0x5d0] sm:$0xff]
    %v244 = vld [vmem:[%s2 + $0x5d8] sm:$0xff]
    %v245 = vld [vmem:[%s2 + $0x5e0] sm:$0xff]
    %v246 = vld [vmem:[%s2 + $0x5e8] sm:$0xff]
    %v247 = vld [vmem:[%s2 + $0x5f0] sm:$0xff]
    %v248 = vld [vmem:[%s2 + $0x5f8] sm:$0xff]
    %v249 = vld [vmem:[%s2 + $0x600] sm:$0xff]
    %v250 = vld [vmem:[%s2 + $0x608] sm:$0xff]
    %v251 = vld [vmem:[%s2 + $0x610] sm:$0xff]
    %v252 = vld [vmem:[%s2 + $0x618] sm:$0xff]
    %v253 = vld [vmem:[%s2 + $0x620] sm:$0xff]
    %v254 = vld [vmem:[%s2 + $0x628] sm:$0xff]
    %v255 = vld [vmem:[%s2 + $0x630] sm:$0xff]
    %v256 = vld [vmem:[%s2 + $0x638] sm:$0xff]
    %v257 = vld [vmem:[%s2 + $0x640] sm:$0xff]
    %v258 = vld [vmem:[%s2 + $0x648] sm:$0xff]
    %v259 = vld [vmem:[%s2 + $0x650] sm:$0xff]
    %v260 = vld [vmem:[%s2 + $0x658] sm:$0xff]
    %v261 = vld [vmem:[%s2 + $0x660] sm:$0xff]
    %v262 = vld [vmem:[%s2 + $0x668] sm:$0xff]
    %v263 = vld [vmem:[%s2 + $0x670] sm:$0xff]
    %v264 = vld [vmem:[%s2 + $0x678] sm:$0xff]
    %v265 = vld [vmem:[%s2 + $0x680] sm:$0xff]
    %v266 = vld [vmem:[%s2 + $0x688] sm:$0xff]
    %v267 = vld [vmem:[%s2 + $0x690] sm:$0xff]
    %v268 = vld [vmem:[%s2 + $0x698] sm:$0xff]
    %v269 = vld [vmem:[%s2 + $0x6a0] sm:$0xff]
    %v270 = vld [vmem:[%s2 + $0x6a8] sm:$0xff]
    %v271 = vld [vmem:[%s2 + $0x6b0] sm:$0xff]
    %v272 = vld [vmem:[%s2 + $0x6b8] sm:$0xff]
    %v273 = vld [vmem:[%s2 + $0x6c0] sm:$0xff]
    %v274 = vld [vmem:[%s2 + $0x6c8] sm:$0xff]
    %v275 = vld [vmem:[%s2 + $0x6d0] sm:$0xff]
    %v276 = vld [vmem:[%s2 + $0x6d8] sm:$0xff]
    %v277 = vld [vmem:[%s2 + $0x6e0] sm:$0xff]
    %v278 = vld [vmem:[%s2 + $0x6e8] sm:$0xff]
    %v279 = vld [vmem:[%s2 + $0x6f0] sm:$0xff]
    %v280 = vld [vmem:[%s2 + $0x6f8] sm:$0xff]
    %v281 = vld [vmem:[%s2 + $0x700] sm:$0xff]
    %v282 = vld [vmem:[%s2 + $0x708] sm:$0xff]
    %v283 = vld [vmem:[%s2 + $0x710] sm:$0xff]
    %v284 = vld [vmem:[%s2 + $0x718] sm:$0xff]
    %v285 = vld [vmem:[%s2 + $0x720] sm:$0xff]
    %v286 = vld [vmem:[%s2 + $0x728] sm:$0xff]
    %v287 = vld [vmem:[%s2 + $0x730] sm:$0xff]
    %v288 = vld [vmem:[%s2 + $0x738] sm:$0xff]
    %v289 = vld [vmem:[%s2 + $0x740] sm:$0xff]
    %v290 = vld [vmem:[%s2 + $0x748] sm:$0xff]
    %v291 = vld [vmem:[%s2 + $0x750] sm:$0xff]
    %v292 = vld [vmem:[%s2 + $0x758] sm:$0xff]
    %v293 = vld [vmem:[%s2 + $0x760] sm:$0xff]
    %v294 = vld [vmem:[%s2 + $0x768] sm:$0xff]
    %v295 = vld [vmem:[%s2 + $0x770] sm:$0xff]
    %v296 = vld [vmem:[%s2 + $0x778] sm:$0xff]
    %v297 = vld [vmem:[%s2 + $0x780] sm:$0xff]
    %v298 = vld [vmem:[%s2 + $0x788] sm:$0xff]
    %v299 = vld [vmem:[%s2 + $0x790] sm:$0xff]
    %v300 = vld [vmem:[%s2 + $0x798] sm:$0xff]
    %v301 = vld [vmem:[%s2 + $0x7a0] sm:$0xff]
    %v302 = vld [vmem:[%s2 + $0x7a8] sm:$0xff]
    %v303 = vld [vmem:[%s2 + $0x7b0] sm:$0xff]
    %v304 = vld [vmem:[%s2 + $0x7b8] sm:$0xff]
    %v305 = vld [vmem:[%s2 + $0x7c0] sm:$0xff]
    %v306 = vld [vmem:[%s2 + $0x7c8] sm:$0xff]
    %v307 = vld [vmem:[%s2 + $0x7d0] sm:$0xff]
    %v308 = vld [vmem:[%s2 + $0x7d8] sm:$0xff]
    %v309 = vld [vmem:[%s2 + $0x7e0] sm:$0xff]
    %v310 = vld [vmem:[%s2 + $0x7e8] sm:$0xff]
    %v311 = vld [vmem:[%s2 + $0x7f0] sm:$0xff]
    %v312 = vld [vmem:[%s2 + $0x7f8] sm:$0xff]
    %v313 = vld [vmem:[%s3] sm:$0x3]
    %v314 = vld [vmem:[%s0] sm:$0x11]
    %v315 = vld [vmem:[%s0 + $0x8] sm:$0x11]
    %v316 = vld [vmem:[%s0 + $0x10] sm:$0x11]
    %v317 = vld [vmem:[%s0 + $0x18] sm:$0x11]
    %v318 = vld [vmem:[%s0 + $0x20] sm:$0x11]
    %v319 = vld [vmem:[%s0 + $0x28] sm:$0x11]
    %v320 = vld [vmem:[%s0 + $0x30] sm:$0x11]
    %v321 = vld [vmem:[%s0 + $0x38] sm:$0x11]
    %v323 = vlaneseq
    %v324 = vshrl.u32 %v323, 7
    %v325 = vsub.s32 0, %v324
    %v326 = vrot.slane %v313, %v325
    %v327 = vlaneseq
    %v328 = vshrl.u32 %v327, 7
    %v329 = vsub.s32 1, %v328
    %v330 = vrot.slane %v313, %v329
    %v341 = vunpack.c.l.b16 %v314
    %v342 = vunpack.c.h.b16 %v314
    %v343 = vunpack.c.l.b16 %v315
    %v344 = vunpack.c.h.b16 %v315
    %v345 = vunpack.c.l.b16 %v316
    %v346 = vunpack.c.h.b16 %v316
    %v347 = vunpack.c.l.b16 %v317
    %v348 = vunpack.c.h.b16 %v317
    %v349 = vunpack.c.l.b16 %v318
    %v350 = vunpack.c.h.b16 %v318
    %v351 = vunpack.c.l.b16 %v319
    %v352 = vunpack.c.h.b16 %v319
    %v353 = vunpack.c.l.b16 %v320
    %v354 = vunpack.c.h.b16 %v320
    %v355 = vunpack.c.l.b16 %v321
    %v356 = vunpack.c.h.b16 %v321
    %v357 = vpack.c.b16 %v341, %v341
    %v358 = vpack.c.b16 %v342, %v342
    %v359 = vpack.c.b16 %v343, %v343
    %v360 = vpack.c.b16 %v344, %v344
    %v361 = vpack.c.b16 %v345, %v345
    %v362 = vpack.c.b16 %v346, %v346
    %v363 = vpack.c.b16 %v347, %v347
    %v364 = vpack.c.b16 %v348, %v348
    %v365 = vpack.c.b16 %v349, %v349
    %v366 = vpack.c.b16 %v350, %v350
    %v367 = vpack.c.b16 %v351, %v351
    %v368 = vpack.c.b16 %v352, %v352
    %v369 = vpack.c.b16 %v353, %v353
    %v370 = vpack.c.b16 %v354, %v354
    %v371 = vpack.c.b16 %v355, %v355
    %v372 = vpack.c.b16 %v356, %v356
    %v645 = vunpack.c.l.b16 %v57
    %v646 = vunpack.c.h.b16 %v57
    %v647 = vunpack.c.l.b16 %v58
    %v648 = vunpack.c.h.b16 %v58
    %v649 = vunpack.c.l.b16 %v59
    %v650 = vunpack.c.h.b16 %v59
    %v651 = vunpack.c.l.b16 %v60
    %v652 = vunpack.c.h.b16 %v60
    %v653 = vunpack.c.l.b16 %v61
    %v654 = vunpack.c.h.b16 %v61
    %v655 = vunpack.c.l.b16 %v62
    %v656 = vunpack.c.h.b16 %v62
    %v657 = vunpack.c.l.b16 %v63
    %v658 = vunpack.c.h.b16 %v63
    %v659 = vunpack.c.l.b16 %v64
    %v660 = vunpack.c.h.b16 %v64
    %v661 = vunpack.c.l.b16 %v65
    %v662 = vunpack.c.h.b16 %v65
    %v663 = vunpack.c.l.b16 %v66
    %v664 = vunpack.c.h.b16 %v66
    %v665 = vunpack.c.l.b16 %v67
    %v666 = vunpack.c.h.b16 %v67
    %v667 = vunpack.c.l.b16 %v68
    %v668 = vunpack.c.h.b16 %v68
    %v669 = vunpack.c.l.b16 %v69
    %v670 = vunpack.c.h.b16 %v69
    %v671 = vunpack.c.l.b16 %v70
    %v672 = vunpack.c.h.b16 %v70
    %v673 = vunpack.c.l.b16 %v71
    %v674 = vunpack.c.h.b16 %v71
    %v675 = vunpack.c.l.b16 %v72
    %v676 = vunpack.c.h.b16 %v72
    %v677 = vunpack.c.l.b16 %v73
    %v678 = vunpack.c.h.b16 %v73
    %v679 = vunpack.c.l.b16 %v74
    %v680 = vunpack.c.h.b16 %v74
    %v681 = vunpack.c.l.b16 %v75
    %v682 = vunpack.c.h.b16 %v75
    %v683 = vunpack.c.l.b16 %v76
    %v684 = vunpack.c.h.b16 %v76
    %v685 = vunpack.c.l.b16 %v77
    %v686 = vunpack.c.h.b16 %v77
    %v687 = vunpack.c.l.b16 %v78
    %v688 = vunpack.c.h.b16 %v78
    %v689 = vunpack.c.l.b16 %v79
    %v690 = vunpack.c.h.b16 %v79
    %v691 = vunpack.c.l.b16 %v80
    %v692 = vunpack.c.h.b16 %v80
    %v693 = vunpack.c.l.b16 %v81
    %v694 = vunpack.c.h.b16 %v81
    %v695 = vunpack.c.l.b16 %v82
    %v696 = vunpack.c.h.b16 %v82
    %v697 = vunpack.c.l.b16 %v83
    %v698 = vunpack.c.h.b16 %v83
    %v699 = vunpack.c.l.b16 %v84
    %v700 = vunpack.c.h.b16 %v84
    %v701 = vunpack.c.l.b16 %v85
    %v702 = vunpack.c.h.b16 %v85
    %v703 = vunpack.c.l.b16 %v86
    %v704 = vunpack.c.h.b16 %v86
    %v705 = vunpack.c.l.b16 %v87
    %v706 = vunpack.c.h.b16 %v87
    %v707 = vunpack.c.l.b16 %v88
    %v708 = vunpack.c.h.b16 %v88
    %v709 = vunpack.c.l.b16 %v89
    %v710 = vunpack.c.h.b16 %v89
    %v711 = vunpack.c.l.b16 %v90
    %v712 = vunpack.c.h.b16 %v90
    %v713 = vunpack.c.l.b16 %v91
    %v714 = vunpack.c.h.b16 %v91
    %v715 = vunpack.c.l.b16 %v92
    %v716 = vunpack.c.h.b16 %v92
    %v717 = vunpack.c.l.b16 %v93
    %v718 = vunpack.c.h.b16 %v93
    %v719 = vunpack.c.l.b16 %v94
    %v720 = vunpack.c.h.b16 %v94
    %v721 = vunpack.c.l.b16 %v95
    %v722 = vunpack.c.h.b16 %v95
    %v723 = vunpack.c.l.b16 %v96
    %v724 = vunpack.c.h.b16 %v96
    %v725 = vunpack.c.l.b16 %v97
    %v726 = vunpack.c.h.b16 %v97
    %v727 = vunpack.c.l.b16 %v98
    %v728 = vunpack.c.h.b16 %v98
    %v729 = vunpack.c.l.b16 %v99
    %v730 = vunpack.c.h.b16 %v99
    %v731 = vunpack.c.l.b16 %v100
    %v732 = vunpack.c.h.b16 %v100
    %v733 = vunpack.c.l.b16 %v101
    %v734 = vunpack.c.h.b16 %v101
    %v735 = vunpack.c.l.b16 %v102
    %v736 = vunpack.c.h.b16 %v102
    %v737 = vunpack.c.l.b16 %v103
    %v738 = vunpack.c.h.b16 %v103
    %v739 = vunpack.c.l.b16 %v104
    %v740 = vunpack.c.h.b16 %v104
    %v741 = vunpack.c.l.b16 %v105
    %v742 = vunpack.c.h.b16 %v105
    %v743 = vunpack.c.l.b16 %v106
    %v744 = vunpack.c.h.b16 %v106
    %v745 = vunpack.c.l.b16 %v107
    %v746 = vunpack.c.h.b16 %v107
    %v747 = vunpack.c.l.b16 %v108
    %v748 = vunpack.c.h.b16 %v108
    %v749 = vunpack.c.l.b16 %v109
    %v750 = vunpack.c.h.b16 %v109
    %v751 = vunpack.c.l.b16 %v110
    %v752 = vunpack.c.h.b16 %v110
    %v753 = vunpack.c.l.b16 %v111
    %v754 = vunpack.c.h.b16 %v111
    %v755 = vunpack.c.l.b16 %v112
    %v756 = vunpack.c.h.b16 %v112
    %v757 = vunpack.c.l.b16 %v113
    %v758 = vunpack.c.h.b16 %v113
    %v759 = vunpack.c.l.b16 %v114
    %v760 = vunpack.c.h.b16 %v114
    %v761 = vunpack.c.l.b16 %v115
    %v762 = vunpack.c.h.b16 %v115
    %v763 = vunpack.c.l.b16 %v116
    %v764 = vunpack.c.h.b16 %v116
    %v765 = vunpack.c.l.b16 %v117
    %v766 = vunpack.c.h.b16 %v117
    %v767 = vunpack.c.l.b16 %v118
    %v768 = vunpack.c.h.b16 %v118
    %v769 = vunpack.c.l.b16 %v119
    %v770 = vunpack.c.h.b16 %v119
    %v771 = vunpack.c.l.b16 %v120
    %v772 = vunpack.c.h.b16 %v120
    %v773 = vunpack.c.l.b16 %v121
    %v774 = vunpack.c.h.b16 %v121
    %v775 = vunpack.c.l.b16 %v122
    %v776 = vunpack.c.h.b16 %v122
    %v777 = vunpack.c.l.b16 %v123
    %v778 = vunpack.c.h.b16 %v123
    %v779 = vunpack.c.l.b16 %v124
    %v780 = vunpack.c.h.b16 %v124
    %v781 = vunpack.c.l.b16 %v125
    %v782 = vunpack.c.h.b16 %v125
    %v783 = vunpack.c.l.b16 %v126
    %v784 = vunpack.c.h.b16 %v126
    %v785 = vunpack.c.l.b16 %v127
    %v786 = vunpack.c.h.b16 %v127
    %v787 = vunpack.c.l.b16 %v128
    %v788 = vunpack.c.h.b16 %v128
    %v789 = vunpack.c.l.b16 %v129
    %v790 = vunpack.c.h.b16 %v129
    %v791 = vunpack.c.l.b16 %v130
    %v792 = vunpack.c.h.b16 %v130
    %v793 = vunpack.c.l.b16 %v131
    %v794 = vunpack.c.h.b16 %v131
    %v795 = vunpack.c.l.b16 %v132
    %v796 = vunpack.c.h.b16 %v132
    %v797 = vunpack.c.l.b16 %v133
    %v798 = vunpack.c.h.b16 %v133
    %v799 = vunpack.c.l.b16 %v134
    %v800 = vunpack.c.h.b16 %v134
    %v801 = vunpack.c.l.b16 %v135
    %v802 = vunpack.c.h.b16 %v135
    %v803 = vunpack.c.l.b16 %v136
    %v804 = vunpack.c.h.b16 %v136
    %v805 = vunpack.c.l.b16 %v137
    %v806 = vunpack.c.h.b16 %v137
    %v807 = vunpack.c.l.b16 %v138
    %v808 = vunpack.c.h.b16 %v138
    %v809 = vunpack.c.l.b16 %v139
    %v810 = vunpack.c.h.b16 %v139
    %v811 = vunpack.c.l.b16 %v140
    %v812 = vunpack.c.h.b16 %v140
    %v813 = vunpack.c.l.b16 %v141
    %v814 = vunpack.c.h.b16 %v141
    %v815 = vunpack.c.l.b16 %v142
    %v816 = vunpack.c.h.b16 %v142
    %v817 = vunpack.c.l.b16 %v143
    %v818 = vunpack.c.h.b16 %v143
    %v819 = vunpack.c.l.b16 %v144
    %v820 = vunpack.c.h.b16 %v144
    %v821 = vunpack.c.l.b16 %v145
    %v822 = vunpack.c.h.b16 %v145
    %v823 = vunpack.c.l.b16 %v146
    %v824 = vunpack.c.h.b16 %v146
    %v825 = vunpack.c.l.b16 %v147
    %v826 = vunpack.c.h.b16 %v147
    %v827 = vunpack.c.l.b16 %v148
    %v828 = vunpack.c.h.b16 %v148
    %v829 = vunpack.c.l.b16 %v149
    %v830 = vunpack.c.h.b16 %v149
    %v831 = vunpack.c.l.b16 %v150
    %v832 = vunpack.c.h.b16 %v150
    %v833 = vunpack.c.l.b16 %v151
    %v834 = vunpack.c.h.b16 %v151
    %v835 = vunpack.c.l.b16 %v152
    %v836 = vunpack.c.h.b16 %v152
    %v837 = vunpack.c.l.b16 %v153
    %v838 = vunpack.c.h.b16 %v153
    %v839 = vunpack.c.l.b16 %v154
    %v840 = vunpack.c.h.b16 %v154
    %v841 = vunpack.c.l.b16 %v155
    %v842 = vunpack.c.h.b16 %v155
    %v843 = vunpack.c.l.b16 %v156
    %v844 = vunpack.c.h.b16 %v156
    %v845 = vunpack.c.l.b16 %v157
    %v846 = vunpack.c.h.b16 %v157
    %v847 = vunpack.c.l.b16 %v158
    %v848 = vunpack.c.h.b16 %v158
    %v849 = vunpack.c.l.b16 %v159
    %v850 = vunpack.c.h.b16 %v159
    %v851 = vunpack.c.l.b16 %v160
    %v852 = vunpack.c.h.b16 %v160
    %v853 = vunpack.c.l.b16 %v161
    %v854 = vunpack.c.h.b16 %v161
    %v855 = vunpack.c.l.b16 %v162
    %v856 = vunpack.c.h.b16 %v162
    %v857 = vunpack.c.l.b16 %v163
    %v858 = vunpack.c.h.b16 %v163
    %v859 = vunpack.c.l.b16 %v164
    %v860 = vunpack.c.h.b16 %v164
    %v861 = vunpack.c.l.b16 %v165
    %v862 = vunpack.c.h.b16 %v165
    %v863 = vunpack.c.l.b16 %v166
    %v864 = vunpack.c.h.b16 %v166
    %v865 = vunpack.c.l.b16 %v167
    %v866 = vunpack.c.h.b16 %v167
    %v867 = vunpack.c.l.b16 %v168
    %v868 = vunpack.c.h.b16 %v168
    %v869 = vunpack.c.l.b16 %v169
    %v870 = vunpack.c.h.b16 %v169
    %v871 = vunpack.c.l.b16 %v170
    %v872 = vunpack.c.h.b16 %v170
    %v873 = vunpack.c.l.b16 %v171
    %v874 = vunpack.c.h.b16 %v171
    %v875 = vunpack.c.l.b16 %v172
    %v876 = vunpack.c.h.b16 %v172
    %v877 = vunpack.c.l.b16 %v173
    %v878 = vunpack.c.h.b16 %v173
    %v879 = vunpack.c.l.b16 %v174
    %v880 = vunpack.c.h.b16 %v174
    %v881 = vunpack.c.l.b16 %v175
    %v882 = vunpack.c.h.b16 %v175
    %v883 = vunpack.c.l.b16 %v176
    %v884 = vunpack.c.h.b16 %v176
    %v885 = vunpack.c.l.b16 %v177
    %v886 = vunpack.c.h.b16 %v177
    %v887 = vunpack.c.l.b16 %v178
    %v888 = vunpack.c.h.b16 %v178
    %v889 = vunpack.c.l.b16 %v179
    %v890 = vunpack.c.h.b16 %v179
    %v891 = vunpack.c.l.b16 %v180
    %v892 = vunpack.c.h.b16 %v180
    %v893 = vunpack.c.l.b16 %v181
    %v894 = vunpack.c.h.b16 %v181
    %v895 = vunpack.c.l.b16 %v182
    %v896 = vunpack.c.h.b16 %v182
    %v897 = vunpack.c.l.b16 %v183
    %v898 = vunpack.c.h.b16 %v183
    %v899 = vunpack.c.l.b16 %v184
    %v900 = vunpack.c.h.b16 %v184
    %v901 = vunpack.c.l.b16 %v185
    %v902 = vunpack.c.h.b16 %v185
    %v903 = vunpack.c.l.b16 %v186
    %v904 = vunpack.c.h.b16 %v186
    %v905 = vunpack.c.l.b16 %v187
    %v906 = vunpack.c.h.b16 %v187
    %v907 = vunpack.c.l.b16 %v188
    %v908 = vunpack.c.h.b16 %v188
    %v909 = vunpack.c.l.b16 %v189
    %v910 = vunpack.c.h.b16 %v189
    %v911 = vunpack.c.l.b16 %v190
    %v912 = vunpack.c.h.b16 %v190
    %v913 = vunpack.c.l.b16 %v191
    %v914 = vunpack.c.h.b16 %v191
    %v915 = vunpack.c.l.b16 %v192
    %v916 = vunpack.c.h.b16 %v192
    %v917 = vunpack.c.l.b16 %v193
    %v918 = vunpack.c.h.b16 %v193
    %v919 = vunpack.c.l.b16 %v194
    %v920 = vunpack.c.h.b16 %v194
    %v921 = vunpack.c.l.b16 %v195
    %v922 = vunpack.c.h.b16 %v195
    %v923 = vunpack.c.l.b16 %v196
    %v924 = vunpack.c.h.b16 %v196
    %v925 = vunpack.c.l.b16 %v197
    %v926 = vunpack.c.h.b16 %v197
    %v927 = vunpack.c.l.b16 %v198
    %v928 = vunpack.c.h.b16 %v198
    %v929 = vunpack.c.l.b16 %v199
    %v930 = vunpack.c.h.b16 %v199
    %v931 = vunpack.c.l.b16 %v200
    %v932 = vunpack.c.h.b16 %v200
    %v933 = vunpack.c.l.b16 %v201
    %v934 = vunpack.c.h.b16 %v201
    %v935 = vunpack.c.l.b16 %v202
    %v936 = vunpack.c.h.b16 %v202
    %v937 = vunpack.c.l.b16 %v203
    %v938 = vunpack.c.h.b16 %v203
    %v939 = vunpack.c.l.b16 %v204
    %v940 = vunpack.c.h.b16 %v204
    %v941 = vunpack.c.l.b16 %v205
    %v942 = vunpack.c.h.b16 %v205
    %v943 = vunpack.c.l.b16 %v206
    %v944 = vunpack.c.h.b16 %v206
    %v945 = vunpack.c.l.b16 %v207
    %v946 = vunpack.c.h.b16 %v207
    %v947 = vunpack.c.l.b16 %v208
    %v948 = vunpack.c.h.b16 %v208
    %v949 = vunpack.c.l.b16 %v209
    %v950 = vunpack.c.h.b16 %v209
    %v951 = vunpack.c.l.b16 %v210
    %v952 = vunpack.c.h.b16 %v210
    %v953 = vunpack.c.l.b16 %v211
    %v954 = vunpack.c.h.b16 %v211
    %v955 = vunpack.c.l.b16 %v212
    %v956 = vunpack.c.h.b16 %v212
    %v957 = vunpack.c.l.b16 %v213
    %v958 = vunpack.c.h.b16 %v213
    %v959 = vunpack.c.l.b16 %v214
    %v960 = vunpack.c.h.b16 %v214
    %v961 = vunpack.c.l.b16 %v215
    %v962 = vunpack.c.h.b16 %v215
    %v963 = vunpack.c.l.b16 %v216
    %v964 = vunpack.c.h.b16 %v216
    %v965 = vunpack.c.l.b16 %v217
    %v966 = vunpack.c.h.b16 %v217
    %v967 = vunpack.c.l.b16 %v218
    %v968 = vunpack.c.h.b16 %v218
    %v969 = vunpack.c.l.b16 %v219
    %v970 = vunpack.c.h.b16 %v219
    %v971 = vunpack.c.l.b16 %v220
    %v972 = vunpack.c.h.b16 %v220
    %v973 = vunpack.c.l.b16 %v221
    %v974 = vunpack.c.h.b16 %v221
    %v975 = vunpack.c.l.b16 %v222
    %v976 = vunpack.c.h.b16 %v222
    %v977 = vunpack.c.l.b16 %v223
    %v978 = vunpack.c.h.b16 %v223
    %v979 = vunpack.c.l.b16 %v224
    %v980 = vunpack.c.h.b16 %v224
    %v981 = vunpack.c.l.b16 %v225
    %v982 = vunpack.c.h.b16 %v225
    %v983 = vunpack.c.l.b16 %v226
    %v984 = vunpack.c.h.b16 %v226
    %v985 = vunpack.c.l.b16 %v227
    %v986 = vunpack.c.h.b16 %v227
    %v987 = vunpack.c.l.b16 %v228
    %v988 = vunpack.c.h.b16 %v228
    %v989 = vunpack.c.l.b16 %v229
    %v990 = vunpack.c.h.b16 %v229
    %v991 = vunpack.c.l.b16 %v230
    %v992 = vunpack.c.h.b16 %v230
    %v993 = vunpack.c.l.b16 %v231
    %v994 = vunpack.c.h.b16 %v231
    %v995 = vunpack.c.l.b16 %v232
    %v996 = vunpack.c.h.b16 %v232
    %v997 = vunpack.c.l.b16 %v233
    %v998 = vunpack.c.h.b16 %v233
    %v999 = vunpack.c.l.b16 %v234
    %v1000 = vunpack.c.h.b16 %v234
    %v1001 = vunpack.c.l.b16 %v235
    %v1002 = vunpack.c.h.b16 %v235
    %v1003 = vunpack.c.l.b16 %v236
    %v1004 = vunpack.c.h.b16 %v236
    %v1005 = vunpack.c.l.b16 %v237
    %v1006 = vunpack.c.h.b16 %v237
    %v1007 = vunpack.c.l.b16 %v238
    %v1008 = vunpack.c.h.b16 %v238
    %v1009 = vunpack.c.l.b16 %v239
    %v1010 = vunpack.c.h.b16 %v239
    %v1011 = vunpack.c.l.b16 %v240
    %v1012 = vunpack.c.h.b16 %v240
    %v1013 = vunpack.c.l.b16 %v241
    %v1014 = vunpack.c.h.b16 %v241
    %v1015 = vunpack.c.l.b16 %v242
    %v1016 = vunpack.c.h.b16 %v242
    %v1017 = vunpack.c.l.b16 %v243
    %v1018 = vunpack.c.h.b16 %v243
    %v1019 = vunpack.c.l.b16 %v244
    %v1020 = vunpack.c.h.b16 %v244
    %v1021 = vunpack.c.l.b16 %v245
    %v1022 = vunpack.c.h.b16 %v245
    %v1023 = vunpack.c.l.b16 %v246
    %v1024 = vunpack.c.h.b16 %v246
    %v1025 = vunpack.c.l.b16 %v247
    %v1026 = vunpack.c.h.b16 %v247
    %v1027 = vunpack.c.l.b16 %v248
    %v1028 = vunpack.c.h.b16 %v248
    %v1029 = vunpack.c.l.b16 %v249
    %v1030 = vunpack.c.h.b16 %v249
    %v1031 = vunpack.c.l.b16 %v250
    %v1032 = vunpack.c.h.b16 %v250
    %v1033 = vunpack.c.l.b16 %v251
    %v1034 = vunpack.c.h.b16 %v251
    %v1035 = vunpack.c.l.b16 %v252
    %v1036 = vunpack.c.h.b16 %v252
    %v1037 = vunpack.c.l.b16 %v253
    %v1038 = vunpack.c.h.b16 %v253
    %v1039 = vunpack.c.l.b16 %v254
    %v1040 = vunpack.c.h.b16 %v254
    %v1041 = vunpack.c.l.b16 %v255
    %v1042 = vunpack.c.h.b16 %v255
    %v1043 = vunpack.c.l.b16 %v256
    %v1044 = vunpack.c.h.b16 %v256
    %v1045 = vunpack.c.l.b16 %v257
    %v1046 = vunpack.c.h.b16 %v257
    %v1047 = vunpack.c.l.b16 %v258
    %v1048 = vunpack.c.h.b16 %v258
    %v1049 = vunpack.c.l.b16 %v259
    %v1050 = vunpack.c.h.b16 %v259
    %v1051 = vunpack.c.l.b16 %v260
    %v1052 = vunpack.c.h.b16 %v260
    %v1053 = vunpack.c.l.b16 %v261
    %v1054 = vunpack.c.h.b16 %v261
    %v1055 = vunpack.c.l.b16 %v262
    %v1056 = vunpack.c.h.b16 %v262
    %v1057 = vunpack.c.l.b16 %v263
    %v1058 = vunpack.c.h.b16 %v263
    %v1059 = vunpack.c.l.b16 %v264
    %v1060 = vunpack.c.h.b16 %v264
    %v1061 = vunpack.c.l.b16 %v265
    %v1062 = vunpack.c.h.b16 %v265
    %v1063 = vunpack.c.l.b16 %v266
    %v1064 = vunpack.c.h.b16 %v266
    %v1065 = vunpack.c.l.b16 %v267
    %v1066 = vunpack.c.h.b16 %v267
    %v1067 = vunpack.c.l.b16 %v268
    %v1068 = vunpack.c.h.b16 %v268
    %v1069 = vunpack.c.l.b16 %v269
    %v1070 = vunpack.c.h.b16 %v269
    %v1071 = vunpack.c.l.b16 %v270
    %v1072 = vunpack.c.h.b16 %v270
    %v1073 = vunpack.c.l.b16 %v271
    %v1074 = vunpack.c.h.b16 %v271
    %v1075 = vunpack.c.l.b16 %v272
    %v1076 = vunpack.c.h.b16 %v272
    %v1077 = vunpack.c.l.b16 %v273
    %v1078 = vunpack.c.h.b16 %v273
    %v1079 = vunpack.c.l.b16 %v274
    %v1080 = vunpack.c.h.b16 %v274
    %v1081 = vunpack.c.l.b16 %v275
    %v1082 = vunpack.c.h.b16 %v275
    %v1083 = vunpack.c.l.b16 %v276
    %v1084 = vunpack.c.h.b16 %v276
    %v1085 = vunpack.c.l.b16 %v277
    %v1086 = vunpack.c.h.b16 %v277
    %v1087 = vunpack.c.l.b16 %v278
    %v1088 = vunpack.c.h.b16 %v278
    %v1089 = vunpack.c.l.b16 %v279
    %v1090 = vunpack.c.h.b16 %v279
    %v1091 = vunpack.c.l.b16 %v280
    %v1092 = vunpack.c.h.b16 %v280
    %v1093 = vunpack.c.l.b16 %v281
    %v1094 = vunpack.c.h.b16 %v281
    %v1095 = vunpack.c.l.b16 %v282
    %v1096 = vunpack.c.h.b16 %v282
    %v1097 = vunpack.c.l.b16 %v283
    %v1098 = vunpack.c.h.b16 %v283
    %v1099 = vunpack.c.l.b16 %v284
    %v1100 = vunpack.c.h.b16 %v284
    %v1101 = vunpack.c.l.b16 %v285
    %v1102 = vunpack.c.h.b16 %v285
    %v1103 = vunpack.c.l.b16 %v286
    %v1104 = vunpack.c.h.b16 %v286
    %v1105 = vunpack.c.l.b16 %v287
    %v1106 = vunpack.c.h.b16 %v287
    %v1107 = vunpack.c.l.b16 %v288
    %v1108 = vunpack.c.h.b16 %v288
    %v1109 = vunpack.c.l.b16 %v289
    %v1110 = vunpack.c.h.b16 %v289
    %v1111 = vunpack.c.l.b16 %v290
    %v1112 = vunpack.c.h.b16 %v290
    %v1113 = vunpack.c.l.b16 %v291
    %v1114 = vunpack.c.h.b16 %v291
    %v1115 = vunpack.c.l.b16 %v292
    %v1116 = vunpack.c.h.b16 %v292
    %v1117 = vunpack.c.l.b16 %v293
    %v1118 = vunpack.c.h.b16 %v293
    %v1119 = vunpack.c.l.b16 %v294
    %v1120 = vunpack.c.h.b16 %v294
    %v1121 = vunpack.c.l.b16 %v295
    %v1122 = vunpack.c.h.b16 %v295
    %v1123 = vunpack.c.l.b16 %v296
    %v1124 = vunpack.c.h.b16 %v296
    %v1125 = vunpack.c.l.b16 %v297
    %v1126 = vunpack.c.h.b16 %v297
    %v1127 = vunpack.c.l.b16 %v298
    %v1128 = vunpack.c.h.b16 %v298
    %v1129 = vunpack.c.l.b16 %v299
    %v1130 = vunpack.c.h.b16 %v299
    %v1131 = vunpack.c.l.b16 %v300
    %v1132 = vunpack.c.h.b16 %v300
    %v1133 = vunpack.c.l.b16 %v301
    %v1134 = vunpack.c.h.b16 %v301
    %v1135 = vunpack.c.l.b16 %v302
    %v1136 = vunpack.c.h.b16 %v302
    %v1137 = vunpack.c.l.b16 %v303
    %v1138 = vunpack.c.h.b16 %v303
    %v1139 = vunpack.c.l.b16 %v304
    %v1140 = vunpack.c.h.b16 %v304
    %v1141 = vunpack.c.l.b16 %v305
    %v1142 = vunpack.c.h.b16 %v305
    %v1143 = vunpack.c.l.b16 %v306
    %v1144 = vunpack.c.h.b16 %v306
    %v1145 = vunpack.c.l.b16 %v307
    %v1146 = vunpack.c.h.b16 %v307
    %v1147 = vunpack.c.l.b16 %v308
    %v1148 = vunpack.c.h.b16 %v308
    %v1149 = vunpack.c.l.b16 %v309
    %v1150 = vunpack.c.h.b16 %v309
    %v1151 = vunpack.c.l.b16 %v310
    %v1152 = vunpack.c.h.b16 %v310
    %v1153 = vunpack.c.l.b16 %v311
    %v1154 = vunpack.c.h.b16 %v311
    %v1155 = vunpack.c.l.b16 %v312
    %v1156 = vunpack.c.h.b16 %v312
    %v1157 = vpack.c.b16 %v647, %v645
    %v1158 = vpack.c.b16 %v648, %v646
    %v1159 = vpack.c.b16 %v651, %v649
    %v1160 = vpack.c.b16 %v652, %v650
    %v1161 = vpack.c.b16 %v655, %v653
    %v1162 = vpack.c.b16 %v656, %v654
    %v1163 = vpack.c.b16 %v659, %v657
    %v1164 = vpack.c.b16 %v660, %v658
    %v1165 = vpack.c.b16 %v663, %v661
    %v1166 = vpack.c.b16 %v664, %v662
    %v1167 = vpack.c.b16 %v667, %v665
    %v1168 = vpack.c.b16 %v668, %v666
    %v1169 = vpack.c.b16 %v671, %v669
    %v1170 = vpack.c.b16 %v672, %v670
    %v1171 = vpack.c.b16 %v675, %v673
    %v1172 = vpack.c.b16 %v676, %v674
    %v1173 = vpack.c.b16 %v679, %v677
    %v1174 = vpack.c.b16 %v680, %v678
    %v1175 = vpack.c.b16 %v683, %v681
    %v1176 = vpack.c.b16 %v684, %v682
    %v1177 = vpack.c.b16 %v687, %v685
    %v1178 = vpack.c.b16 %v688, %v686
    %v1179 = vpack.c.b16 %v691, %v689
    %v1180 = vpack.c.b16 %v692, %v690
    %v1181 = vpack.c.b16 %v695, %v693
    %v1182 = vpack.c.b16 %v696, %v694
    %v1183 = vpack.c.b16 %v699, %v697
    %v1184 = vpack.c.b16 %v700, %v698
    %v1185 = vpack.c.b16 %v703, %v701
    %v1186 = vpack.c.b16 %v704, %v702
    %v1187 = vpack.c.b16 %v707, %v705
    %v1188 = vpack.c.b16 %v708, %v706
    %v1189 = vpack.c.b16 %v711, %v709
    %v1190 = vpack.c.b16 %v712, %v710
    %v1191 = vpack.c.b16 %v715, %v713
    %v1192 = vpack.c.b16 %v716, %v714
    %v1193 = vpack.c.b16 %v719, %v717
    %v1194 = vpack.c.b16 %v720, %v718
    %v1195 = vpack.c.b16 %v723, %v721
    %v1196 = vpack.c.b16 %v724, %v722
    %v1197 = vpack.c.b16 %v727, %v725
    %v1198 = vpack.c.b16 %v728, %v726
    %v1199 = vpack.c.b16 %v731, %v729
    %v1200 = vpack.c.b16 %v732, %v730
    %v1201 = vpack.c.b16 %v735, %v733
    %v1202 = vpack.c.b16 %v736, %v734
    %v1203 = vpack.c.b16 %v739, %v737
    %v1204 = vpack.c.b16 %v740, %v738
    %v1205 = vpack.c.b16 %v743, %v741
    %v1206 = vpack.c.b16 %v744, %v742
    %v1207 = vpack.c.b16 %v747, %v745
    %v1208 = vpack.c.b16 %v748, %v746
    %v1209 = vpack.c.b16 %v751, %v749
    %v1210 = vpack.c.b16 %v752, %v750
    %v1211 = vpack.c.b16 %v755, %v753
    %v1212 = vpack.c.b16 %v756, %v754
    %v1213 = vpack.c.b16 %v759, %v757
    %v1214 = vpack.c.b16 %v760, %v758
    %v1215 = vpack.c.b16 %v763, %v761
    %v1216 = vpack.c.b16 %v764, %v762
    %v1217 = vpack.c.b16 %v767, %v765
    %v1218 = vpack.c.b16 %v768, %v766
    %v1219 = vpack.c.b16 %v771, %v769
    %v1220 = vpack.c.b16 %v772, %v770
    %v1221 = vpack.c.b16 %v775, %v773
    %v1222 = vpack.c.b16 %v776, %v774
    %v1223 = vpack.c.b16 %v779, %v777
    %v1224 = vpack.c.b16 %v780, %v778
    %v1225 = vpack.c.b16 %v783, %v781
    %v1226 = vpack.c.b16 %v784, %v782
    %v1227 = vpack.c.b16 %v787, %v785
    %v1228 = vpack.c.b16 %v788, %v786
    %v1229 = vpack.c.b16 %v791, %v789
    %v1230 = vpack.c.b16 %v792, %v790
    %v1231 = vpack.c.b16 %v795, %v793
    %v1232 = vpack.c.b16 %v796, %v794
    %v1233 = vpack.c.b16 %v799, %v797
    %v1234 = vpack.c.b16 %v800, %v798
    %v1235 = vpack.c.b16 %v803, %v801
    %v1236 = vpack.c.b16 %v804, %v802
    %v1237 = vpack.c.b16 %v807, %v805
    %v1238 = vpack.c.b16 %v808, %v806
    %v1239 = vpack.c.b16 %v811, %v809
    %v1240 = vpack.c.b16 %v812, %v810
    %v1241 = vpack.c.b16 %v815, %v813
    %v1242 = vpack.c.b16 %v816, %v814
    %v1243 = vpack.c.b16 %v819, %v817
    %v1244 = vpack.c.b16 %v820, %v818
    %v1245 = vpack.c.b16 %v823, %v821
    %v1246 = vpack.c.b16 %v824, %v822
    %v1247 = vpack.c.b16 %v827, %v825
    %v1248 = vpack.c.b16 %v828, %v826
    %v1249 = vpack.c.b16 %v831, %v829
    %v1250 = vpack.c.b16 %v832, %v830
    %v1251 = vpack.c.b16 %v835, %v833
    %v1252 = vpack.c.b16 %v836, %v834
    %v1253 = vpack.c.b16 %v839, %v837
    %v1254 = vpack.c.b16 %v840, %v838
    %v1255 = vpack.c.b16 %v843, %v841
    %v1256 = vpack.c.b16 %v844, %v842
    %v1257 = vpack.c.b16 %v847, %v845
    %v1258 = vpack.c.b16 %v848, %v846
    %v1259 = vpack.c.b16 %v851, %v849
    %v1260 = vpack.c.b16 %v852, %v850
    %v1261 = vpack.c.b16 %v855, %v853
    %v1262 = vpack.c.b16 %v856, %v854
    %v1263 = vpack.c.b16 %v859, %v857
    %v1264 = vpack.c.b16 %v860, %v858
    %v1265 = vpack.c.b16 %v863, %v861
    %v1266 = vpack.c.b16 %v864, %v862
    %v1267 = vpack.c.b16 %v867, %v865
    %v1268 = vpack.c.b16 %v868, %v866
    %v1269 = vpack.c.b16 %v871, %v869
    %v1270 = vpack.c.b16 %v872, %v870
    %v1271 = vpack.c.b16 %v875, %v873
    %v1272 = vpack.c.b16 %v876, %v874
    %v1273 = vpack.c.b16 %v879, %v877
    %v1274 = vpack.c.b16 %v880, %v878
    %v1275 = vpack.c.b16 %v883, %v881
    %v1276 = vpack.c.b16 %v884, %v882
    %v1277 = vpack.c.b16 %v887, %v885
    %v1278 = vpack.c.b16 %v888, %v886
    %v1279 = vpack.c.b16 %v891, %v889
    %v1280 = vpack.c.b16 %v892, %v890
    %v1281 = vpack.c.b16 %v895, %v893
    %v1282 = vpack.c.b16 %v896, %v894
    %v1283 = vpack.c.b16 %v899, %v897
    %v1284 = vpack.c.b16 %v900, %v898
    %v1285 = vpack.c.b16 %v903, %v901
    %v1286 = vpack.c.b16 %v904, %v902
    %v1287 = vpack.c.b16 %v907, %v905
    %v1288 = vpack.c.b16 %v908, %v906
    %v1289 = vpack.c.b16 %v911, %v909
    %v1290 = vpack.c.b16 %v912, %v910
    %v1291 = vpack.c.b16 %v915, %v913
    %v1292 = vpack.c.b16 %v916, %v914
    %v1293 = vpack.c.b16 %v919, %v917
    %v1294 = vpack.c.b16 %v920, %v918
    %v1295 = vpack.c.b16 %v923, %v921
    %v1296 = vpack.c.b16 %v924, %v922
    %v1297 = vpack.c.b16 %v927, %v925
    %v1298 = vpack.c.b16 %v928, %v926
    %v1299 = vpack.c.b16 %v931, %v929
    %v1300 = vpack.c.b16 %v932, %v930
    %v1301 = vpack.c.b16 %v935, %v933
    %v1302 = vpack.c.b16 %v936, %v934
    %v1303 = vpack.c.b16 %v939, %v937
    %v1304 = vpack.c.b16 %v940, %v938
    %v1305 = vpack.c.b16 %v943, %v941
    %v1306 = vpack.c.b16 %v944, %v942
    %v1307 = vpack.c.b16 %v947, %v945
    %v1308 = vpack.c.b16 %v948, %v946
    %v1309 = vpack.c.b16 %v951, %v949
    %v1310 = vpack.c.b16 %v952, %v950
    %v1311 = vpack.c.b16 %v955, %v953
    %v1312 = vpack.c.b16 %v956, %v954
    %v1313 = vpack.c.b16 %v959, %v957
    %v1314 = vpack.c.b16 %v960, %v958
    %v1315 = vpack.c.b16 %v963, %v961
    %v1316 = vpack.c.b16 %v964, %v962
    %v1317 = vpack.c.b16 %v967, %v965
    %v1318 = vpack.c.b16 %v968, %v966
    %v1319 = vpack.c.b16 %v971, %v969
    %v1320 = vpack.c.b16 %v972, %v970
    %v1321 = vpack.c.b16 %v975, %v973
    %v1322 = vpack.c.b16 %v976, %v974
    %v1323 = vpack.c.b16 %v979, %v977
    %v1324 = vpack.c.b16 %v980, %v978
    %v1325 = vpack.c.b16 %v983, %v981
    %v1326 = vpack.c.b16 %v984, %v982
    %v1327 = vpack.c.b16 %v987, %v985
    %v1328 = vpack.c.b16 %v988, %v986
    %v1329 = vpack.c.b16 %v991, %v989
    %v1330 = vpack.c.b16 %v992, %v990
    %v1331 = vpack.c.b16 %v995, %v993
    %v1332 = vpack.c.b16 %v996, %v994
    %v1333 = vpack.c.b16 %v999, %v997
    %v1334 = vpack.c.b16 %v1000, %v998
    %v1335 = vpack.c.b16 %v1003, %v1001
    %v1336 = vpack.c.b16 %v1004, %v1002
    %v1337 = vpack.c.b16 %v1007, %v1005
    %v1338 = vpack.c.b16 %v1008, %v1006
    %v1339 = vpack.c.b16 %v1011, %v1009
    %v1340 = vpack.c.b16 %v1012, %v1010
    %v1341 = vpack.c.b16 %v1015, %v1013
    %v1342 = vpack.c.b16 %v1016, %v1014
    %v1343 = vpack.c.b16 %v1019, %v1017
    %v1344 = vpack.c.b16 %v1020, %v1018
    %v1345 = vpack.c.b16 %v1023, %v1021
    %v1346 = vpack.c.b16 %v1024, %v1022
    %v1347 = vpack.c.b16 %v1027, %v1025
    %v1348 = vpack.c.b16 %v1028, %v1026
    %v1349 = vpack.c.b16 %v1031, %v1029
    %v1350 = vpack.c.b16 %v1032, %v1030
    %v1351 = vpack.c.b16 %v1035, %v1033
    %v1352 = vpack.c.b16 %v1036, %v1034
    %v1353 = vpack.c.b16 %v1039, %v1037
    %v1354 = vpack.c.b16 %v1040, %v1038
    %v1355 = vpack.c.b16 %v1043, %v1041
    %v1356 = vpack.c.b16 %v1044, %v1042
    %v1357 = vpack.c.b16 %v1047, %v1045
    %v1358 = vpack.c.b16 %v1048, %v1046
    %v1359 = vpack.c.b16 %v1051, %v1049
    %v1360 = vpack.c.b16 %v1052, %v1050
    %v1361 = vpack.c.b16 %v1055, %v1053
    %v1362 = vpack.c.b16 %v1056, %v1054
    %v1363 = vpack.c.b16 %v1059, %v1057
    %v1364 = vpack.c.b16 %v1060, %v1058
    %v1365 = vpack.c.b16 %v1063, %v1061
    %v1366 = vpack.c.b16 %v1064, %v1062
    %v1367 = vpack.c.b16 %v1067, %v1065
    %v1368 = vpack.c.b16 %v1068, %v1066
    %v1369 = vpack.c.b16 %v1071, %v1069
    %v1370 = vpack.c.b16 %v1072, %v1070
    %v1371 = vpack.c.b16 %v1075, %v1073
    %v1372 = vpack.c.b16 %v1076, %v1074
    %v1373 = vpack.c.b16 %v1079, %v1077
    %v1374 = vpack.c.b16 %v1080, %v1078
    %v1375 = vpack.c.b16 %v1083, %v1081
    %v1376 = vpack.c.b16 %v1084, %v1082
    %v1377 = vpack.c.b16 %v1087, %v1085
    %v1378 = vpack.c.b16 %v1088, %v1086
    %v1379 = vpack.c.b16 %v1091, %v1089
    %v1380 = vpack.c.b16 %v1092, %v1090
    %v1381 = vpack.c.b16 %v1095, %v1093
    %v1382 = vpack.c.b16 %v1096, %v1094
    %v1383 = vpack.c.b16 %v1099, %v1097
    %v1384 = vpack.c.b16 %v1100, %v1098
    %v1385 = vpack.c.b16 %v1103, %v1101
    %v1386 = vpack.c.b16 %v1104, %v1102
    %v1387 = vpack.c.b16 %v1107, %v1105
    %v1388 = vpack.c.b16 %v1108, %v1106
    %v1389 = vpack.c.b16 %v1111, %v1109
    %v1390 = vpack.c.b16 %v1112, %v1110
    %v1391 = vpack.c.b16 %v1115, %v1113
    %v1392 = vpack.c.b16 %v1116, %v1114
    %v1393 = vpack.c.b16 %v1119, %v1117
    %v1394 = vpack.c.b16 %v1120, %v1118
    %v1395 = vpack.c.b16 %v1123, %v1121
    %v1396 = vpack.c.b16 %v1124, %v1122
    %v1397 = vpack.c.b16 %v1127, %v1125
    %v1398 = vpack.c.b16 %v1128, %v1126
    %v1399 = vpack.c.b16 %v1131, %v1129
    %v1400 = vpack.c.b16 %v1132, %v1130
    %v1401 = vpack.c.b16 %v1135, %v1133
    %v1402 = vpack.c.b16 %v1136, %v1134
    %v1403 = vpack.c.b16 %v1139, %v1137
    %v1404 = vpack.c.b16 %v1140, %v1138
    %v1405 = vpack.c.b16 %v1143, %v1141
    %v1406 = vpack.c.b16 %v1144, %v1142
    %v1407 = vpack.c.b16 %v1147, %v1145
    %v1408 = vpack.c.b16 %v1148, %v1146
    %v1409 = vpack.c.b16 %v1151, %v1149
    %v1410 = vpack.c.b16 %v1152, %v1150
    %v1411 = vpack.c.b16 %v1155, %v1153
    %v1412 = vpack.c.b16 %v1156, %v1154
    %1669 = vmatprep.subr.bf16.mxu0 %v1158
    %1670 = vmatpush1.bf16.msra.mxu0 %v1157
    %1671 = vmatprep.subr.bf16.mxu0 %v1160
    %1672 = vmatpush1.bf16.msra.mxu0 %v1159
    %1673 = vmatprep.subr.bf16.mxu0 %v1162
    %1674 = vmatpush1.bf16.msra.mxu0 %v1161
    %1675 = vmatprep.subr.bf16.mxu0 %v1164
    %1676 = vmatpush1.bf16.msra.mxu0 %v1163
    %1677 = vmatprep.subr.bf16.mxu0 %v1166
    %1678 = vmatpush1.bf16.msra.mxu0 %v1165
    %1679 = vmatprep.subr.bf16.mxu0 %v1168
    %1680 = vmatpush1.bf16.msra.mxu0 %v1167
    %1681 = vmatprep.subr.bf16.mxu0 %v1170
    %1682 = vmatpush1.bf16.msra.mxu0 %v1169
    %1683 = vmatprep.subr.bf16.mxu0 %v1172
    %1684 = vmatpush1.bf16.msra.mxu0 %v1171
    %1685 = vmatprep.subr.bf16.mxu0 %v1174
    %1686 = vmatpush1.bf16.msra.mxu0 %v1173
    %1687 = vmatprep.subr.bf16.mxu0 %v1176
    %1688 = vmatpush1.bf16.msra.mxu0 %v1175
    %1689 = vmatprep.subr.bf16.mxu0 %v1178
    %1690 = vmatpush1.bf16.msra.mxu0 %v1177
    %1691 = vmatprep.subr.bf16.mxu0 %v1180
    %1692 = vmatpush1.bf16.msra.mxu0 %v1179
    %1693 = vmatprep.subr.bf16.mxu0 %v1182
    %1694 = vmatpush1.bf16.msra.mxu0 %v1181
    %1695 = vmatprep.subr.bf16.mxu0 %v1184
    %1696 = vmatpush1.bf16.msra.mxu0 %v1183
    %1697 = vmatprep.subr.bf16.mxu0 %v1186
    %1698 = vmatpush1.bf16.msra.mxu0 %v1185
    %1699 = vmatprep.subr.bf16.mxu0 %v1188
    %1700 = vmatpush1.bf16.msra.mxu0 %v1187
    %1701 = vmatprep.mubr.bf16.mxu0 %v358
    %1702 = vmatmul.mubr.bf16.gmra.mrb[0].mxu0 %v357
    %v1703 = vpop.f32.mrb[0].mxu0
    %v1704 = vadd.f32 %v326, %v1703
    %v1705 = vpop.f32.mrb[0].mxu0
    %v1706 = vadd.f32 %v330, %v1705
    %v1707 = vpop.f32.mrb[0].mxu0
    %v1708 = vpop.f32.mrb[0].mxu0
    %1709 = vdwg.mxu0
    %1710 = vmatprep.subr.bf16.mxu0 %v1190
    %1711 = vmatpush1.bf16.msra.mxu0 %v1189
    %1712 = vmatprep.subr.bf16.mxu0 %v1192
    %1713 = vmatpush1.bf16.msra.mxu0 %v1191
    %1714 = vmatprep.subr.bf16.mxu0 %v1194
    %1715 = vmatpush1.bf16.msra.mxu0 %v1193
    %1716 = vmatprep.subr.bf16.mxu0 %v1196
    %1717 = vmatpush1.bf16.msra.mxu0 %v1195
    %1718 = vmatprep.subr.bf16.mxu0 %v1198
    %1719 = vmatpush1.bf16.msra.mxu0 %v1197
    %1720 = vmatprep.subr.bf16.mxu0 %v1200
    %1721 = vmatpush1.bf16.msra.mxu0 %v1199
    %1722 = vmatprep.subr.bf16.mxu0 %v1202
    %1723 = vmatpush1.bf16.msra.mxu0 %v1201
    %1724 = vmatprep.subr.bf16.mxu0 %v1204
    %1725 = vmatpush1.bf16.msra.mxu0 %v1203
    %1726 = vmatprep.subr.bf16.mxu0 %v1206
    %1727 = vmatpush1.bf16.msra.mxu0 %v1205
    %1728 = vmatprep.subr.bf16.mxu0 %v1208
    %1729 = vmatpush1.bf16.msra.mxu0 %v1207
    %1730 = vmatprep.subr.bf16.mxu0 %v1210
    %1731 = vmatpush1.bf16.msra.mxu0 %v1209
    %1732 = vmatprep.subr.bf16.mxu0 %v1212
    %1733 = vmatpush1.bf16.msra.mxu0 %v1211
    %1734 = vmatprep.subr.bf16.mxu0 %v1214
    %1735 = vmatpush1.bf16.msra.mxu0 %v1213
    %1736 = vmatprep.subr.bf16.mxu0 %v1216
    %1737 = vmatpush1.bf16.msra.mxu0 %v1215
    %1738 = vmatprep.subr.bf16.mxu0 %v1218
    %1739 = vmatpush1.bf16.msra.mxu0 %v1217
    %1740 = vmatprep.subr.bf16.mxu0 %v1220
    %1741 = vmatpush1.bf16.msra.mxu0 %v1219
    %1742 = vmatprep.mubr.bf16.mxu0 %v360
    %1743 = vmatmul.mubr.bf16.gmra.mrb[0].mxu0 %v359
    %v1744 = vpop.f32.mrb[0].mxu0
    %v1745 = vadd.f32 %v1704, %v1744
    %v1746 = vpop.f32.mrb[0].mxu0
    %v1747 = vadd.f32 %v1706, %v1746
    %v1748 = vpop.f32.mrb[0].mxu0
    %v1749 = vpop.f32.mrb[0].mxu0
    %1750 = vdwg.mxu0
    %1751 = vmatprep.subr.bf16.mxu0 %v1222
    %1752 = vmatpush1.bf16.msra.mxu0 %v1221
    %1753 = vmatprep.subr.bf16.mxu0 %v1224
    %1754 = vmatpush1.bf16.msra.mxu0 %v1223
    %1755 = vmatprep.subr.bf16.mxu0 %v1226
    %1756 = vmatpush1.bf16.msra.mxu0 %v1225
    %1757 = vmatprep.subr.bf16.mxu0 %v1228
    %1758 = vmatpush1.bf16.msra.mxu0 %v1227
    %1759 = vmatprep.subr.bf16.mxu0 %v1230
    %1760 = vmatpush1.bf16.msra.mxu0 %v1229
    %1761 = vmatprep.subr.bf16.mxu0 %v1232
    %1762 = vmatpush1.bf16.msra.mxu0 %v1231
    %1763 = vmatprep.subr.bf16.mxu0 %v1234
    %1764 = vmatpush1.bf16.msra.mxu0 %v1233
    %1765 = vmatprep.subr.bf16.mxu0 %v1236
    %1766 = vmatpush1.bf16.msra.mxu0 %v1235
    %1767 = vmatprep.subr.bf16.mxu0 %v1238
    %1768 = vmatpush1.bf16.msra.mxu0 %v1237
    %1769 = vmatprep.subr.bf16.mxu0 %v1240
    %1770 = vmatpush1.bf16.msra.mxu0 %v1239
    %1771 = vmatprep.subr.bf16.mxu0 %v1242
    %1772 = vmatpush1.bf16.msra.mxu0 %v1241
    %1773 = vmatprep.subr.bf16.mxu0 %v1244
    %1774 = vmatpush1.bf16.msra.mxu0 %v1243
    %1775 = vmatprep.subr.bf16.mxu0 %v1246
    %1776 = vmatpush1.bf16.msra.mxu0 %v1245
    %1777 = vmatprep.subr.bf16.mxu0 %v1248
    %1778 = vmatpush1.bf16.msra.mxu0 %v1247
    %1779 = vmatprep.subr.bf16.mxu0 %v1250
    %1780 = vmatpush1.bf16.msra.mxu0 %v1249
    %1781 = vmatprep.subr.bf16.mxu0 %v1252
    %1782 = vmatpush1.bf16.msra.mxu0 %v1251
    %1783 = vmatprep.mubr.bf16.mxu0 %v362
    %1784 = vmatmul.mubr.bf16.gmra.mrb[0].mxu0 %v361
    %v1785 = vpop.f32.mrb[0].mxu0
    %v1786 = vadd.f32 %v1745, %v1785
    %v1787 = vpop.f32.mrb[0].mxu0
    %v1788 = vadd.f32 %v1747, %v1787
    %v1789 = vpop.f32.mrb[0].mxu0
    %v1790 = vpop.f32.mrb[0].mxu0
    %1791 = vdwg.mxu0
    %1792 = vmatprep.subr.bf16.mxu0 %v1254
    %1793 = vmatpush1.bf16.msra.mxu0 %v1253
    %1794 = vmatprep.subr.bf16.mxu0 %v1256
    %1795 = vmatpush1.bf16.msra.mxu0 %v1255
    %1796 = vmatprep.subr.bf16.mxu0 %v1258
    %1797 = vmatpush1.bf16.msra.mxu0 %v1257
    %1798 = vmatprep.subr.bf16.mxu0 %v1260
    %1799 = vmatpush1.bf16.msra.mxu0 %v1259
    %1800 = vmatprep.subr.bf16.mxu0 %v1262
    %1801 = vmatpush1.bf16.msra.mxu0 %v1261
    %1802 = vmatprep.subr.bf16.mxu0 %v1264
    %1803 = vmatpush1.bf16.msra.mxu0 %v1263
    %1804 = vmatprep.subr.bf16.mxu0 %v1266
    %1805 = vmatpush1.bf16.msra.mxu0 %v1265
    %1806 = vmatprep.subr.bf16.mxu0 %v1268
    %1807 = vmatpush1.bf16.msra.mxu0 %v1267
    %1808 = vmatprep.subr.bf16.mxu0 %v1270
    %1809 = vmatpush1.bf16.msra.mxu0 %v1269
    %1810 = vmatprep.subr.bf16.mxu0 %v1272
    %1811 = vmatpush1.bf16.msra.mxu0 %v1271
    %1812 = vmatprep.subr.bf16.mxu0 %v1274
    %1813 = vmatpush1.bf16.msra.mxu0 %v1273
    %1814 = vmatprep.subr.bf16.mxu0 %v1276
    %1815 = vmatpush1.bf16.msra.mxu0 %v1275
    %1816 = vmatprep.subr.bf16.mxu0 %v1278
    %1817 = vmatpush1.bf16.msra.mxu0 %v1277
    %1818 = vmatprep.subr.bf16.mxu0 %v1280
    %1819 = vmatpush1.bf16.msra.mxu0 %v1279
    %1820 = vmatprep.subr.bf16.mxu0 %v1282
    %1821 = vmatpush1.bf16.msra.mxu0 %v1281
    %1822 = vmatprep.subr.bf16.mxu0 %v1284
    %1823 = vmatpush1.bf16.msra.mxu0 %v1283
    %1824 = vmatprep.mubr.bf16.mxu0 %v364
    %1825 = vmatmul.mubr.bf16.gmra.mrb[0].mxu0 %v363
    %v1826 = vpop.f32.mrb[0].mxu0
    %v1827 = vadd.f32 %v1786, %v1826
    %v1828 = vpop.f32.mrb[0].mxu0
    %v1829 = vadd.f32 %v1788, %v1828
    %v1830 = vpop.f32.mrb[0].mxu0
    %v1831 = vpop.f32.mrb[0].mxu0
    %1832 = vdwg.mxu0
    %1833 = vmatprep.subr.bf16.mxu0 %v1286
    %1834 = vmatpush1.bf16.msra.mxu0 %v1285
    %1835 = vmatprep.subr.bf16.mxu0 %v1288
    %1836 = vmatpush1.bf16.msra.mxu0 %v1287
    %1837 = vmatprep.subr.bf16.mxu0 %v1290
    %1838 = vmatpush1.bf16.msra.mxu0 %v1289
    %1839 = vmatprep.subr.bf16.mxu0 %v1292
    %1840 = vmatpush1.bf16.msra.mxu0 %v1291
    %1841 = vmatprep.subr.bf16.mxu0 %v1294
    %1842 = vmatpush1.bf16.msra.mxu0 %v1293
    %1843 = vmatprep.subr.bf16.mxu0 %v1296
    %1844 = vmatpush1.bf16.msra.mxu0 %v1295
    %1845 = vmatprep.subr.bf16.mxu0 %v1298
    %1846 = vmatpush1.bf16.msra.mxu0 %v1297
    %1847 = vmatprep.subr.bf16.mxu0 %v1300
    %1848 = vmatpush1.bf16.msra.mxu0 %v1299
    %1849 = vmatprep.subr.bf16.mxu0 %v1302
    %1850 = vmatpush1.bf16.msra.mxu0 %v1301
    %1851 = vmatprep.subr.bf16.mxu0 %v1304
    %1852 = vmatpush1.bf16.msra.mxu0 %v1303
    %1853 = vmatprep.subr.bf16.mxu0 %v1306
    %1854 = vmatpush1.bf16.msra.mxu0 %v1305
    %1855 = vmatprep.subr.bf16.mxu0 %v1308
    %1856 = vmatpush1.bf16.msra.mxu0 %v1307
    %1857 = vmatprep.subr.bf16.mxu0 %v1310
    %1858 = vmatpush1.bf16.msra.mxu0 %v1309
    %1859 = vmatprep.subr.bf16.mxu0 %v1312
    %1860 = vmatpush1.bf16.msra.mxu0 %v1311
    %1861 = vmatprep.subr.bf16.mxu0 %v1314
    %1862 = vmatpush1.bf16.msra.mxu0 %v1313
    %1863 = vmatprep.subr.bf16.mxu0 %v1316
    %1864 = vmatpush1.bf16.msra.mxu0 %v1315
    %1865 = vmatprep.mubr.bf16.mxu0 %v366
    %1866 = vmatmul.mubr.bf16.gmra.mrb[0].mxu0 %v365
    %v1867 = vpop.f32.mrb[0].mxu0
    %v1868 = vadd.f32 %v1827, %v1867
    %v1869 = vpop.f32.mrb[0].mxu0
    %v1870 = vadd.f32 %v1829, %v1869
    %v1871 = vpop.f32.mrb[0].mxu0
    %v1872 = vpop.f32.mrb[0].mxu0
    %1873 = vdwg.mxu0
    %1874 = vmatprep.subr.bf16.mxu0 %v1318
    %1875 = vmatpush1.bf16.msra.mxu0 %v1317
    %1876 = vmatprep.subr.bf16.mxu0 %v1320
    %1877 = vmatpush1.bf16.msra.mxu0 %v1319
    %1878 = vmatprep.subr.bf16.mxu0 %v1322
    %1879 = vmatpush1.bf16.msra.mxu0 %v1321
    %1880 = vmatprep.subr.bf16.mxu0 %v1324
    %1881 = vmatpush1.bf16.msra.mxu0 %v1323
    %1882 = vmatprep.subr.bf16.mxu0 %v1326
    %1883 = vmatpush1.bf16.msra.mxu0 %v1325
    %1884 = vmatprep.subr.bf16.mxu0 %v1328
    %1885 = vmatpush1.bf16.msra.mxu0 %v1327
    %1886 = vmatprep.subr.bf16.mxu0 %v1330
    %1887 = vmatpush1.bf16.msra.mxu0 %v1329
    %1888 = vmatprep.subr.bf16.mxu0 %v1332
    %1889 = vmatpush1.bf16.msra.mxu0 %v1331
    %1890 = vmatprep.subr.bf16.mxu0 %v1334
    %1891 = vmatpush1.bf16.msra.mxu0 %v1333
    %1892 = vmatprep.subr.bf16.mxu0 %v1336
    %1893 = vmatpush1.bf16.msra.mxu0 %v1335
    %1894 = vmatprep.subr.bf16.mxu0 %v1338
    %1895 = vmatpush1.bf16.msra.mxu0 %v1337
    %1896 = vmatprep.subr.bf16.mxu0 %v1340
    %1897 = vmatpush1.bf16.msra.mxu0 %v1339
    %1898 = vmatprep.subr.bf16.mxu0 %v1342
    %1899 = vmatpush1.bf16.msra.mxu0 %v1341
    %1900 = vmatprep.subr.bf16.mxu0 %v1344
    %1901 = vmatpush1.bf16.msra.mxu0 %v1343
    %1902 = vmatprep.subr.bf16.mxu0 %v1346
    %1903 = vmatpush1.bf16.msra.mxu0 %v1345
    %1904 = vmatprep.subr.bf16.mxu0 %v1348
    %1905 = vmatpush1.bf16.msra.mxu0 %v1347
    %1906 = vmatprep.mubr.bf16.mxu0 %v368
    %1907 = vmatmul.mubr.bf16.gmra.mrb[0].mxu0 %v367
    %v1908 = vpop.f32.mrb[0].mxu0
    %v1909 = vadd.f32 %v1868, %v1908
    %v1910 = vpop.f32.mrb[0].mxu0
    %v1911 = vadd.f32 %v1870, %v1910
    %v1912 = vpop.f32.mrb[0].mxu0
    %v1913 = vpop.f32.mrb[0].mxu0
    %1914 = vdwg.mxu0
    %1915 = vmatprep.subr.bf16.mxu0 %v1350
    %1916 = vmatpush1.bf16.msra.mxu0 %v1349
    %1917 = vmatprep.subr.bf16.mxu0 %v1352
    %1918 = vmatpush1.bf16.msra.mxu0 %v1351
    %1919 = vmatprep.subr.bf16.mxu0 %v1354
    %1920 = vmatpush1.bf16.msra.mxu0 %v1353
    %1921 = vmatprep.subr.bf16.mxu0 %v1356
    %1922 = vmatpush1.bf16.msra.mxu0 %v1355
    %1923 = vmatprep.subr.bf16.mxu0 %v1358
    %1924 = vmatpush1.bf16.msra.mxu0 %v1357
    %1925 = vmatprep.subr.bf16.mxu0 %v1360
    %1926 = vmatpush1.bf16.msra.mxu0 %v1359
    %1927 = vmatprep.subr.bf16.mxu0 %v1362
    %1928 = vmatpush1.bf16.msra.mxu0 %v1361
    %1929 = vmatprep.subr.bf16.mxu0 %v1364
    %1930 = vmatpush1.bf16.msra.mxu0 %v1363
    %1931 = vmatprep.subr.bf16.mxu0 %v1366
    %1932 = vmatpush1.bf16.msra.mxu0 %v1365
    %1933 = vmatprep.subr.bf16.mxu0 %v1368
    %1934 = vmatpush1.bf16.msra.mxu0 %v1367
    %1935 = vmatprep.subr.bf16.mxu0 %v1370
    %1936 = vmatpush1.bf16.msra.mxu0 %v1369
    %1937 = vmatprep.subr.bf16.mxu0 %v1372
    %1938 = vmatpush1.bf16.msra.mxu0 %v1371
    %1939 = vmatprep.subr.bf16.mxu0 %v1374
    %1940 = vmatpush1.bf16.msra.mxu0 %v1373
    %1941 = vmatprep.subr.bf16.mxu0 %v1376
    %1942 = vmatpush1.bf16.msra.mxu0 %v1375
    %1943 = vmatprep.subr.bf16.mxu0 %v1378
    %1944 = vmatpush1.bf16.msra.mxu0 %v1377
    %1945 = vmatprep.subr.bf16.mxu0 %v1380
    %1946 = vmatpush1.bf16.msra.mxu0 %v1379
    %1947 = vmatprep.mubr.bf16.mxu0 %v370
    %1948 = vmatmul.mubr.bf16.gmra.mrb[0].mxu0 %v369
    %v1949 = vpop.f32.mrb[0].mxu0
    %v1950 = vadd.f32 %v1909, %v1949
    %v1951 = vpop.f32.mrb[0].mxu0
    %v1952 = vadd.f32 %v1911, %v1951
    %v1953 = vpop.f32.mrb[0].mxu0
    %v1954 = vpop.f32.mrb[0].mxu0
    %1955 = vdwg.mxu0
    %1956 = vmatprep.subr.bf16.mxu0 %v1382
    %1957 = vmatpush1.bf16.msra.mxu0 %v1381
    %1958 = vmatprep.subr.bf16.mxu0 %v1384
    %1959 = vmatpush1.bf16.msra.mxu0 %v1383
    %1960 = vmatprep.subr.bf16.mxu0 %v1386
    %1961 = vmatpush1.bf16.msra.mxu0 %v1385
    %1962 = vmatprep.subr.bf16.mxu0 %v1388
    %1963 = vmatpush1.bf16.msra.mxu0 %v1387
    %1964 = vmatprep.subr.bf16.mxu0 %v1390
    %1965 = vmatpush1.bf16.msra.mxu0 %v1389
    %1966 = vmatprep.subr.bf16.mxu0 %v1392
    %1967 = vmatpush1.bf16.msra.mxu0 %v1391
    %1968 = vmatprep.subr.bf16.mxu0 %v1394
    %1969 = vmatpush1.bf16.msra.mxu0 %v1393
    %1970 = vmatprep.subr.bf16.mxu0 %v1396
    %1971 = vmatpush1.bf16.msra.mxu0 %v1395
    %1972 = vmatprep.subr.bf16.mxu0 %v1398
    %1973 = vmatpush1.bf16.msra.mxu0 %v1397
    %1974 = vmatprep.subr.bf16.mxu0 %v1400
    %1975 = vmatpush1.bf16.msra.mxu0 %v1399
    %1976 = vmatprep.subr.bf16.mxu0 %v1402
    %1977 = vmatpush1.bf16.msra.mxu0 %v1401
    %1978 = vmatprep.subr.bf16.mxu0 %v1404
    %1979 = vmatpush1.bf16.msra.mxu0 %v1403
    %1980 = vmatprep.subr.bf16.mxu0 %v1406
    %1981 = vmatpush1.bf16.msra.mxu0 %v1405
    %1982 = vmatprep.subr.bf16.mxu0 %v1408
    %1983 = vmatpush1.bf16.msra.mxu0 %v1407
    %1984 = vmatprep.subr.bf16.mxu0 %v1410
    %1985 = vmatpush1.bf16.msra.mxu0 %v1409
    %1986 = vmatprep.subr.bf16.mxu0 %v1412
    %1987 = vmatpush1.bf16.msra.mxu0 %v1411
    %1988 = vmatprep.mubr.bf16.mxu0 %v372
    %1989 = vmatmul.mubr.bf16.gmra.mrb[0].mxu0 %v371
    %v1990 = vpop.f32.mrb[0].mxu0
    %v1991 = vadd.f32 %v1950, %v1990
    %v1992 = vpop.f32.mrb[0].mxu0
    %v1993 = vadd.f32 %v1952, %v1992
    %v1994 = vpop.f32.mrb[0].mxu0
    %v1995 = vpop.f32.mrb[0].mxu0
    %1996 = vdwg.mxu0
    %v1997 = vmax.f32 %v1991, 0.0
    %v1998 = vmax.f32 %v1993, 0.0
    %v1999 = vld [vmem:[%s0] sm:$0x22]
    %v2000 = vld [vmem:[%s0 + $0x8] sm:$0x22]
    %v2001 = vld [vmem:[%s0 + $0x10] sm:$0x22]
    %v2002 = vld [vmem:[%s0 + $0x18] sm:$0x22]
    %v2003 = vld [vmem:[%s0 + $0x20] sm:$0x22]
    %v2004 = vld [vmem:[%s0 + $0x28] sm:$0x22]
    %v2005 = vld [vmem:[%s0 + $0x30] sm:$0x22]
    %v2006 = vld [vmem:[%s0 + $0x38] sm:$0x22]
    %v2015 = vunpack.c.l.b16 %v1999
    %v2016 = vunpack.c.h.b16 %v1999
    %v2017 = vunpack.c.l.b16 %v2000
    %v2018 = vunpack.c.h.b16 %v2000
    %v2019 = vunpack.c.l.b16 %v2001
    %v2020 = vunpack.c.h.b16 %v2001
    %v2021 = vunpack.c.l.b16 %v2002
    %v2022 = vunpack.c.h.b16 %v2002
    %v2023 = vunpack.c.l.b16 %v2003
    %v2024 = vunpack.c.h.b16 %v2003
    %v2025 = vunpack.c.l.b16 %v2004
    %v2026 = vunpack.c.h.b16 %v2004
    %v2027 = vunpack.c.l.b16 %v2005
    %v2028 = vunpack.c.h.b16 %v2005
    %v2029 = vunpack.c.l.b16 %v2006
    %v2030 = vunpack.c.h.b16 %v2006
    %v2031 = vpack.c.b16 %v2015, %v2015
    %v2032 = vpack.c.b16 %v2016, %v2016
    %v2033 = vpack.c.b16 %v2017, %v2017
    %v2034 = vpack.c.b16 %v2018, %v2018
    %v2035 = vpack.c.b16 %v2019, %v2019
    %v2036 = vpack.c.b16 %v2020, %v2020
    %v2037 = vpack.c.b16 %v2021, %v2021
    %v2038 = vpack.c.b16 %v2022, %v2022
    %v2039 = vpack.c.b16 %v2023, %v2023
    %v2040 = vpack.c.b16 %v2024, %v2024
    %v2041 = vpack.c.b16 %v2025, %v2025
    %v2042 = vpack.c.b16 %v2026, %v2026
    %v2043 = vpack.c.b16 %v2027, %v2027
    %v2044 = vpack.c.b16 %v2028, %v2028
    %v2045 = vpack.c.b16 %v2029, %v2029
    %v2046 = vpack.c.b16 %v2030, %v2030
    %v2047 = vrot.slane %v2031, 1
    %v2048 = vrot.slane %v2032, 1
    %v2049 = vrot.slane %v2033, 1
    %v2050 = vrot.slane %v2034, 1
    %v2051 = vrot.slane %v2035, 1
    %v2052 = vrot.slane %v2036, 1
    %v2053 = vrot.slane %v2037, 1
    %v2054 = vrot.slane %v2038, 1
    %v2055 = vrot.slane %v2039, 1
    %v2056 = vrot.slane %v2040, 1
    %v2057 = vrot.slane %v2041, 1
    %v2058 = vrot.slane %v2042, 1
    %v2059 = vrot.slane %v2043, 1
    %v2060 = vrot.slane %v2044, 1
    %v2061 = vrot.slane %v2045, 1
    %v2062 = vrot.slane %v2046, 1
    %2079 = vmatprep.subr.bf16.mxu0 %v1158
    %2080 = vmatpush1.bf16.msra.mxu0 %v1157
    %2081 = vmatprep.subr.bf16.mxu0 %v1160
    %2082 = vmatpush1.bf16.msra.mxu0 %v1159
    %2083 = vmatprep.subr.bf16.mxu0 %v1162
    %2084 = vmatpush1.bf16.msra.mxu0 %v1161
    %2085 = vmatprep.subr.bf16.mxu0 %v1164
    %2086 = vmatpush1.bf16.msra.mxu0 %v1163
    %2087 = vmatprep.subr.bf16.mxu0 %v1166
    %2088 = vmatpush1.bf16.msra.mxu0 %v1165
    %2089 = vmatprep.subr.bf16.mxu0 %v1168
    %2090 = vmatpush1.bf16.msra.mxu0 %v1167
    %2091 = vmatprep.subr.bf16.mxu0 %v1170
    %2092 = vmatpush1.bf16.msra.mxu0 %v1169
    %2093 = vmatprep.subr.bf16.mxu0 %v1172
    %2094 = vmatpush1.bf16.msra.mxu0 %v1171
    %2095 = vmatprep.subr.bf16.mxu0 %v1174
    %2096 = vmatpush1.bf16.msra.mxu0 %v1173
    %2097 = vmatprep.subr.bf16.mxu0 %v1176
    %2098 = vmatpush1.bf16.msra.mxu0 %v1175
    %2099 = vmatprep.subr.bf16.mxu0 %v1178
    %2100 = vmatpush1.bf16.msra.mxu0 %v1177
    %2101 = vmatprep.subr.bf16.mxu0 %v1180
    %2102 = vmatpush1.bf16.msra.mxu0 %v1179
    %2103 = vmatprep.subr.bf16.mxu0 %v1182
    %2104 = vmatpush1.bf16.msra.mxu0 %v1181
    %2105 = vmatprep.subr.bf16.mxu0 %v1184
    %2106 = vmatpush1.bf16.msra.mxu0 %v1183
    %2107 = vmatprep.subr.bf16.mxu0 %v1186
    %2108 = vmatpush1.bf16.msra.mxu0 %v1185
    %2109 = vmatprep.subr.bf16.mxu0 %v1188
    %2110 = vmatpush1.bf16.msra.mxu0 %v1187
    %2111 = vmatprep.mubr.bf16.mxu0 %v2048
    %2112 = vmatmul.mubr.bf16.gmra.mrb[0].mxu0 %v2047
    %v2113 = vpop.f32.mrb[0].mxu0
    %v2114 = vadd.f32 %v326, %v2113
    %v2115 = vpop.f32.mrb[0].mxu0
    %v2116 = vadd.f32 %v330, %v2115
    %v2117 = vpop.f32.mrb[0].mxu0
    %v2118 = vpop.f32.mrb[0].mxu0
    %2119 = vdwg.mxu0
    %2120 = vmatprep.subr.bf16.mxu0 %v1190
    %2121 = vmatpush1.bf16.msra.mxu0 %v1189
    %2122 = vmatprep.subr.bf16.mxu0 %v1192
    %2123 = vmatpush1.bf16.msra.mxu0 %v1191
    %2124 = vmatprep.subr.bf16.mxu0 %v1194
    %2125 = vmatpush1.bf16.msra.mxu0 %v1193
    %2126 = vmatprep.subr.bf16.mxu0 %v1196
    %2127 = vmatpush1.bf16.msra.mxu0 %v1195
    %2128 = vmatprep.subr.bf16.mxu0 %v1198
    %2129 = vmatpush1.bf16.msra.mxu0 %v1197
    %2130 = vmatprep.subr.bf16.mxu0 %v1200
    %2131 = vmatpush1.bf16.msra.mxu0 %v1199
    %2132 = vmatprep.subr.bf16.mxu0 %v1202
    %2133 = vmatpush1.bf16.msra.mxu0 %v1201
    %2134 = vmatprep.subr.bf16.mxu0 %v1204
    %2135 = vmatpush1.bf16.msra.mxu0 %v1203
    %2136 = vmatprep.subr.bf16.mxu0 %v1206
    %2137 = vmatpush1.bf16.msra.mxu0 %v1205
    %2138 = vmatprep.subr.bf16.mxu0 %v1208
    %2139 = vmatpush1.bf16.msra.mxu0 %v1207
    %2140 = vmatprep.subr.bf16.mxu0 %v1210
    %2141 = vmatpush1.bf16.msra.mxu0 %v1209
    %2142 = vmatprep.subr.bf16.mxu0 %v1212
    %2143 = vmatpush1.bf16.msra.mxu0 %v1211
    %2144 = vmatprep.subr.bf16.mxu0 %v1214
    %2145 = vmatpush1.bf16.msra.mxu0 %v1213
    %2146 = vmatprep.subr.bf16.mxu0 %v1216
    %2147 = vmatpush1.bf16.msra.mxu0 %v1215
    %2148 = vmatprep.subr.bf16.mxu0 %v1218
    %2149 = vmatpush1.bf16.msra.mxu0 %v1217
    %2150 = vmatprep.subr.bf16.mxu0 %v1220
    %2151 = vmatpush1.bf16.msra.mxu0 %v1219
    %2152 = vmatprep.mubr.bf16.mxu0 %v2050
    %2153 = vmatmul.mubr.bf16.gmra.mrb[0].mxu0 %v2049
    %v2154 = vpop.f32.mrb[0].mxu0
    %v2155 = vadd.f32 %v2114, %v2154
    %v2156 = vpop.f32.mrb[0].mxu0
    %v2157 = vadd.f32 %v2116, %v2156
    %v2158 = vpop.f32.mrb[0].mxu0
    %v2159 = vpop.f32.mrb[0].mxu0
    %2160 = vdwg.mxu0
    %2161 = vmatprep.subr.bf16.mxu0 %v1222
    %2162 = vmatpush1.bf16.msra.mxu0 %v1221
    %2163 = vmatprep.subr.bf16.mxu0 %v1224
    %2164 = vmatpush1.bf16.msra.mxu0 %v1223
    %2165 = vmatprep.subr.bf16.mxu0 %v1226
    %2166 = vmatpush1.bf16.msra.mxu0 %v1225
    %2167 = vmatprep.subr.bf16.mxu0 %v1228
    %2168 = vmatpush1.bf16.msra.mxu0 %v1227
    %2169 = vmatprep.subr.bf16.mxu0 %v1230
    %2170 = vmatpush1.bf16.msra.mxu0 %v1229
    %2171 = vmatprep.subr.bf16.mxu0 %v1232
    %2172 = vmatpush1.bf16.msra.mxu0 %v1231
    %2173 = vmatprep.subr.bf16.mxu0 %v1234
    %2174 = vmatpush1.bf16.msra.mxu0 %v1233
    %2175 = vmatprep.subr.bf16.mxu0 %v1236
    %2176 = vmatpush1.bf16.msra.mxu0 %v1235
    %2177 = vmatprep.subr.bf16.mxu0 %v1238
    %2178 = vmatpush1.bf16.msra.mxu0 %v1237
    %2179 = vmatprep.subr.bf16.mxu0 %v1240
    %2180 = vmatpush1.bf16.msra.mxu0 %v1239
    %2181 = vmatprep.subr.bf16.mxu0 %v1242
    %2182 = vmatpush1.bf16.msra.mxu0 %v1241
    %2183 = vmatprep.subr.bf16.mxu0 %v1244
    %2184 = vmatpush1.bf16.msra.mxu0 %v1243
    %2185 = vmatprep.subr.bf16.mxu0 %v1246
    %2186 = vmatpush1.bf16.msra.mxu0 %v1245
    %2187 = vmatprep.subr.bf16.mxu0 %v1248
    %2188 = vmatpush1.bf16.msra.mxu0 %v1247
    %2189 = vmatprep.subr.bf16.mxu0 %v1250
    %2190 = vmatpush1.bf16.msra.mxu0 %v1249
    %2191 = vmatprep.subr.bf16.mxu0 %v1252
    %2192 = vmatpush1.bf16.msra.mxu0 %v1251
    %2193 = vmatprep.mubr.bf16.mxu0 %v2052
    %2194 = vmatmul.mubr.bf16.gmra.mrb[0].mxu0 %v2051
    %v2195 = vpop.f32.mrb[0].mxu0
    %v2196 = vadd.f32 %v2155, %v2195
    %v2197 = vpop.f32.mrb[0].mxu0
    %v2198 = vadd.f32 %v2157, %v2197
    %v2199 = vpop.f32.mrb[0].mxu0
    %v2200 = vpop.f32.mrb[0].mxu0
    %2201 = vdwg.mxu0
    %2202 = vmatprep.subr.bf16.mxu0 %v1254
    %2203 = vmatpush1.bf16.msra.mxu0 %v1253
    %2204 = vmatprep.subr.bf16.mxu0 %v1256
    %2205 = vmatpush1.bf16.msra.mxu0 %v1255
    %2206 = vmatprep.subr.bf16.mxu0 %v1258
    %2207 = vmatpush1.bf16.msra.mxu0 %v1257
    %2208 = vmatprep.subr.bf16.mxu0 %v1260
    %2209 = vmatpush1.bf16.msra.mxu0 %v1259
    %2210 = vmatprep.subr.bf16.mxu0 %v1262
    %2211 = vmatpush1.bf16.msra.mxu0 %v1261
    %2212 = vmatprep.subr.bf16.mxu0 %v1264
    %2213 = vmatpush1.bf16.msra.mxu0 %v1263
    %2214 = vmatprep.subr.bf16.mxu0 %v1266
    %2215 = vmatpush1.bf16.msra.mxu0 %v1265
    %2216 = vmatprep.subr.bf16.mxu0 %v1268
    %2217 = vmatpush1.bf16.msra.mxu0 %v1267
    %2218 = vmatprep.subr.bf16.mxu0 %v1270
    %2219 = vmatpush1.bf16.msra.mxu0 %v1269
    %2220 = vmatprep.subr.bf16.mxu0 %v1272
    %2221 = vmatpush1.bf16.msra.mxu0 %v1271
    %2222 = vmatprep.subr.bf16.mxu0 %v1274
    %2223 = vmatpush1.bf16.msra.mxu0 %v1273
    %2224 = vmatprep.subr.bf16.mxu0 %v1276
    %2225 = vmatpush1.bf16.msra.mxu0 %v1275
    %2226 = vmatprep.subr.bf16.mxu0 %v1278
    %2227 = vmatpush1.bf16.msra.mxu0 %v1277
    %2228 = vmatprep.subr.bf16.mxu0 %v1280
    %2229 = vmatpush1.bf16.msra.mxu0 %v1279
    %2230 = vmatprep.subr.bf16.mxu0 %v1282
    %2231 = vmatpush1.bf16.msra.mxu0 %v1281
    %2232 = vmatprep.subr.bf16.mxu0 %v1284
    %2233 = vmatpush1.bf16.msra.mxu0 %v1283
    %2234 = vmatprep.mubr.bf16.mxu0 %v2054
    %2235 = vmatmul.mubr.bf16.gmra.mrb[0].mxu0 %v2053
    %v2236 = vpop.f32.mrb[0].mxu0
    %v2237 = vadd.f32 %v2196, %v2236
    %v2238 = vpop.f32.mrb[0].mxu0
    %v2239 = vadd.f32 %v2198, %v2238
    %v2240 = vpop.f32.mrb[0].mxu0
    %v2241 = vpop.f32.mrb[0].mxu0
    %2242 = vdwg.mxu0
    %2243 = vmatprep.subr.bf16.mxu0 %v1286
    %2244 = vmatpush1.bf16.msra.mxu0 %v1285
    %2245 = vmatprep.subr.bf16.mxu0 %v1288
    %2246 = vmatpush1.bf16.msra.mxu0 %v1287
    %2247 = vmatprep.subr.bf16.mxu0 %v1290
    %2248 = vmatpush1.bf16.msra.mxu0 %v1289
    %2249 = vmatprep.subr.bf16.mxu0 %v1292
    %2250 = vmatpush1.bf16.msra.mxu0 %v1291
    %2251 = vmatprep.subr.bf16.mxu0 %v1294
    %2252 = vmatpush1.bf16.msra.mxu0 %v1293
    %2253 = vmatprep.subr.bf16.mxu0 %v1296
    %2254 = vmatpush1.bf16.msra.mxu0 %v1295
    %2255 = vmatprep.subr.bf16.mxu0 %v1298
    %2256 = vmatpush1.bf16.msra.mxu0 %v1297
    %2257 = vmatprep.subr.bf16.mxu0 %v1300
    %2258 = vmatpush1.bf16.msra.mxu0 %v1299
    %2259 = vmatprep.subr.bf16.mxu0 %v1302
    %2260 = vmatpush1.bf16.msra.mxu0 %v1301
    %2261 = vmatprep.subr.bf16.mxu0 %v1304
    %2262 = vmatpush1.bf16.msra.mxu0 %v1303
    %2263 = vmatprep.subr.bf16.mxu0 %v1306
    %2264 = vmatpush1.bf16.msra.mxu0 %v1305
    %2265 = vmatprep.subr.bf16.mxu0 %v1308
    %2266 = vmatpush1.bf16.msra.mxu0 %v1307
    %2267 = vmatprep.subr.bf16.mxu0 %v1310
    %2268 = vmatpush1.bf16.msra.mxu0 %v1309
    %2269 = vmatprep.subr.bf16.mxu0 %v1312
    %2270 = vmatpush1.bf16.msra.mxu0 %v1311
    %2271 = vmatprep.subr.bf16.mxu0 %v1314
    %2272 = vmatpush1.bf16.msra.mxu0 %v1313
    %2273 = vmatprep.subr.bf16.mxu0 %v1316
    %2274 = vmatpush1.bf16.msra.mxu0 %v1315
    %2275 = vmatprep.mubr.bf16.mxu0 %v2056
    %2276 = vmatmul.mubr.bf16.gmra.mrb[0].mxu0 %v2055
    %v2277 = vpop.f32.mrb[0].mxu0
    %v2278 = vadd.f32 %v2237, %v2277
    %v2279 = vpop.f32.mrb[0].mxu0
    %v2280 = vadd.f32 %v2239, %v2279
    %v2281 = vpop.f32.mrb[0].mxu0
    %v2282 = vpop.f32.mrb[0].mxu0
    %2283 = vdwg.mxu0
    %2284 = vmatprep.subr.bf16.mxu0 %v1318
    %2285 = vmatpush1.bf16.msra.mxu0 %v1317
    %2286 = vmatprep.subr.bf16.mxu0 %v1320
    %2287 = vmatpush1.bf16.msra.mxu0 %v1319
    %2288 = vmatprep.subr.bf16.mxu0 %v1322
    %2289 = vmatpush1.bf16.msra.mxu0 %v1321
    %2290 = vmatprep.subr.bf16.mxu0 %v1324
    %2291 = vmatpush1.bf16.msra.mxu0 %v1323
    %2292 = vmatprep.subr.bf16.mxu0 %v1326
    %2293 = vmatpush1.bf16.msra.mxu0 %v1325
    %2294 = vmatprep.subr.bf16.mxu0 %v1328
    %2295 = vmatpush1.bf16.msra.mxu0 %v1327
    %2296 = vmatprep.subr.bf16.mxu0 %v1330
    %2297 = vmatpush1.bf16.msra.mxu0 %v1329
    %2298 = vmatprep.subr.bf16.mxu0 %v1332
    %2299 = vmatpush1.bf16.msra.mxu0 %v1331
    %2300 = vmatprep.subr.bf16.mxu0 %v1334
    %2301 = vmatpush1.bf16.msra.mxu0 %v1333
    %2302 = vmatprep.subr.bf16.mxu0 %v1336
    %2303 = vmatpush1.bf16.msra.mxu0 %v1335
    %2304 = vmatprep.subr.bf16.mxu0 %v1338
    %2305 = vmatpush1.bf16.msra.mxu0 %v1337
    %2306 = vmatprep.subr.bf16.mxu0 %v1340
    %2307 = vmatpush1.bf16.msra.mxu0 %v1339
    %2308 = vmatprep.subr.bf16.mxu0 %v1342
    %2309 = vmatpush1.bf16.msra.mxu0 %v1341
    %2310 = vmatprep.subr.bf16.mxu0 %v1344
    %2311 = vmatpush1.bf16.msra.mxu0 %v1343
    %2312 = vmatprep.subr.bf16.mxu0 %v1346
    %2313 = vmatpush1.bf16.msra.mxu0 %v1345
    %2314 = vmatprep.subr.bf16.mxu0 %v1348
    %2315 = vmatpush1.bf16.msra.mxu0 %v1347
    %2316 = vmatprep.mubr.bf16.mxu0 %v2058
    %2317 = vmatmul.mubr.bf16.gmra.mrb[0].mxu0 %v2057
    %v2318 = vpop.f32.mrb[0].mxu0
    %v2319 = vadd.f32 %v2278, %v2318
    %v2320 = vpop.f32.mrb[0].mxu0
    %v2321 = vadd.f32 %v2280, %v2320
    %v2322 = vpop.f32.mrb[0].mxu0
    %v2323 = vpop.f32.mrb[0].mxu0
    %2324 = vdwg.mxu0
    %2325 = vmatprep.subr.bf16.mxu0 %v1350
    %2326 = vmatpush1.bf16.msra.mxu0 %v1349
    %2327 = vmatprep.subr.bf16.mxu0 %v1352
    %2328 = vmatpush1.bf16.msra.mxu0 %v1351
    %2329 = vmatprep.subr.bf16.mxu0 %v1354
    %2330 = vmatpush1.bf16.msra.mxu0 %v1353
    %2331 = vmatprep.subr.bf16.mxu0 %v1356
    %2332 = vmatpush1.bf16.msra.mxu0 %v1355
    %2333 = vmatprep.subr.bf16.mxu0 %v1358
    %2334 = vmatpush1.bf16.msra.mxu0 %v1357
    %2335 = vmatprep.subr.bf16.mxu0 %v1360
    %2336 = vmatpush1.bf16.msra.mxu0 %v1359
    %2337 = vmatprep.subr.bf16.mxu0 %v1362
    %2338 = vmatpush1.bf16.msra.mxu0 %v1361
    %2339 = vmatprep.subr.bf16.mxu0 %v1364
    %2340 = vmatpush1.bf16.msra.mxu0 %v1363
    %2341 = vmatprep.subr.bf16.mxu0 %v1366
    %2342 = vmatpush1.bf16.msra.mxu0 %v1365
    %2343 = vmatprep.subr.bf16.mxu0 %v1368
    %2344 = vmatpush1.bf16.msra.mxu0 %v1367
    %2345 = vmatprep.subr.bf16.mxu0 %v1370
    %2346 = vmatpush1.bf16.msra.mxu0 %v1369
    %2347 = vmatprep.subr.bf16.mxu0 %v1372
    %2348 = vmatpush1.bf16.msra.mxu0 %v1371
    %2349 = vmatprep.subr.bf16.mxu0 %v1374
    %2350 = vmatpush1.bf16.msra.mxu0 %v1373
    %2351 = vmatprep.subr.bf16.mxu0 %v1376
    %2352 = vmatpush1.bf16.msra.mxu0 %v1375
    %2353 = vmatprep.subr.bf16.mxu0 %v1378
    %2354 = vmatpush1.bf16.msra.mxu0 %v1377
    %2355 = vmatprep.subr.bf16.mxu0 %v1380
    %2356 = vmatpush1.bf16.msra.mxu0 %v1379
    %2357 = vmatprep.mubr.bf16.mxu0 %v2060
    %2358 = vmatmul.mubr.bf16.gmra.mrb[0].mxu0 %v2059
    %v2359 = vpop.f32.mrb[0].mxu0
    %v2360 = vadd.f32 %v2319, %v2359
    %v2361 = vpop.f32.mrb[0].mxu0
    %v2362 = vadd.f32 %v2321, %v2361
    %v2363 = vpop.f32.mrb[0].mxu0
    %v2364 = vpop.f32.mrb[0].mxu0
    %2365 = vdwg.mxu0
    %2366 = vmatprep.subr.bf16.mxu0 %v1382
    %2367 = vmatpush1.bf16.msra.mxu0 %v1381
    %2368 = vmatprep.subr.bf16.mxu0 %v1384
    %2369 = vmatpush1.bf16.msra.mxu0 %v1383
    %2370 = vmatprep.subr.bf16.mxu0 %v1386
    %2371 = vmatpush1.bf16.msra.mxu0 %v1385
    %2372 = vmatprep.subr.bf16.mxu0 %v1388
    %2373 = vmatpush1.bf16.msra.mxu0 %v1387
    %2374 = vmatprep.subr.bf16.mxu0 %v1390
    %2375 = vmatpush1.bf16.msra.mxu0 %v1389
    %2376 = vmatprep.subr.bf16.mxu0 %v1392
    %2377 = vmatpush1.bf16.msra.mxu0 %v1391
    %2378 = vmatprep.subr.bf16.mxu0 %v1394
    %2379 = vmatpush1.bf16.msra.mxu0 %v1393
    %2380 = vmatprep.subr.bf16.mxu0 %v1396
    %2381 = vmatpush1.bf16.msra.mxu0 %v1395
    %2382 = vmatprep.subr.bf16.mxu0 %v1398
    %2383 = vmatpush1.bf16.msra.mxu0 %v1397
    %2384 = vmatprep.subr.bf16.mxu0 %v1400
    %2385 = vmatpush1.bf16.msra.mxu0 %v1399
    %2386 = vmatprep.subr.bf16.mxu0 %v1402
    %2387 = vmatpush1.bf16.msra.mxu0 %v1401
    %2388 = vmatprep.subr.bf16.mxu0 %v1404
    %2389 = vmatpush1.bf16.msra.mxu0 %v1403
    %2390 = vmatprep.subr.bf16.mxu0 %v1406
    %2391 = vmatpush1.bf16.msra.mxu0 %v1405
    %2392 = vmatprep.subr.bf16.mxu0 %v1408
    %2393 = vmatpush1.bf16.msra.mxu0 %v1407
    %2394 = vmatprep.subr.bf16.mxu0 %v1410
    %2395 = vmatpush1.bf16.msra.mxu0 %v1409
    %2396 = vmatprep.subr.bf16.mxu0 %v1412
    %2397 = vmatpush1.bf16.msra.mxu0 %v1411
    %2398 = vmatprep.mubr.bf16.mxu0 %v2062
    %2399 = vmatmul.mubr.bf16.gmra.mrb[0].mxu0 %v2061
    %v2400 = vpop.f32.mrb[0].mxu0
    %v2401 = vadd.f32 %v2360, %v2400
    %v2402 = vpop.f32.mrb[0].mxu0
    %v2403 = vadd.f32 %v2362, %v2402
    %v2404 = vpop.f32.mrb[0].mxu0
    %v2405 = vpop.f32.mrb[0].mxu0
    %2406 = vdwg.mxu0
    %v2407 = vmax.f32 %v2401, 0.0
    %v2408 = vmax.f32 %v2403, 0.0
    %v2409 = vld [vmem:[%s0] sm:$0x44]
    %v2410 = vld [vmem:[%s0 + $0x8] sm:$0x44]
    %v2411 = vld [vmem:[%s0 + $0x10] sm:$0x44]
    %v2412 = vld [vmem:[%s0 + $0x18] sm:$0x44]
    %v2413 = vld [vmem:[%s0 + $0x20] sm:$0x44]
    %v2414 = vld [vmem:[%s0 + $0x28] sm:$0x44]
    %v2415 = vld [vmem:[%s0 + $0x30] sm:$0x44]
    %v2416 = vld [vmem:[%s0 + $0x38] sm:$0x44]
    %v2425 = vunpack.c.l.b16 %v2409
    %v2426 = vunpack.c.h.b16 %v2409
    %v2427 = vunpack.c.l.b16 %v2410
    %v2428 = vunpack.c.h.b16 %v2410
    %v2429 = vunpack.c.l.b16 %v2411
    %v2430 = vunpack.c.h.b16 %v2411
    %v2431 = vunpack.c.l.b16 %v2412
    %v2432 = vunpack.c.h.b16 %v2412
    %v2433 = vunpack.c.l.b16 %v2413
    %v2434 = vunpack.c.h.b16 %v2413
    %v2435 = vunpack.c.l.b16 %v2414
    %v2436 = vunpack.c.h.b16 %v2414
    %v2437 = vunpack.c.l.b16 %v2415
    %v2438 = vunpack.c.h.b16 %v2415
    %v2439 = vunpack.c.l.b16 %v2416
    %v2440 = vunpack.c.h.b16 %v2416
    %v2441 = vpack.c.b16 %v2425, %v2425
    %v2442 = vpack.c.b16 %v2426, %v2426
    %v2443 = vpack.c.b16 %v2427, %v2427
    %v2444 = vpack.c.b16 %v2428, %v2428
    %v2445 = vpack.c.b16 %v2429, %v2429
    %v2446 = vpack.c.b16 %v2430, %v2430
    %v2447 = vpack.c.b16 %v2431, %v2431
    %v2448 = vpack.c.b16 %v2432, %v2432
    %v2449 = vpack.c.b16 %v2433, %v2433
    %v2450 = vpack.c.b16 %v2434, %v2434
    %v2451 = vpack.c.b16 %v2435, %v2435
    %v2452 = vpack.c.b16 %v2436, %v2436
    %v2453 = vpack.c.b16 %v2437, %v2437
    %v2454 = vpack.c.b16 %v2438, %v2438
    %v2455 = vpack.c.b16 %v2439, %v2439
    %v2456 = vpack.c.b16 %v2440, %v2440
    %v2457 = vrot.slane %v2441, 2
    %v2458 = vrot.slane %v2442, 2
    %v2459 = vrot.slane %v2443, 2
    %v2460 = vrot.slane %v2444, 2
    %v2461 = vrot.slane %v2445, 2
    %v2462 = vrot.slane %v2446, 2
    %v2463 = vrot.slane %v2447, 2
    %v2464 = vrot.slane %v2448, 2
    %v2465 = vrot.slane %v2449, 2
    %v2466 = vrot.slane %v2450, 2
    %v2467 = vrot.slane %v2451, 2
    %v2468 = vrot.slane %v2452, 2
    %v2469 = vrot.slane %v2453, 2
    %v2470 = vrot.slane %v2454, 2
    %v2471 = vrot.slane %v2455, 2
    %v2472 = vrot.slane %v2456, 2
    %2489 = vmatprep.subr.bf16.mxu0 %v1158
    %2490 = vmatpush1.bf16.msra.mxu0 %v1157
    %2491 = vmatprep.subr.bf16.mxu0 %v1160
    %2492 = vmatpush1.bf16.msra.mxu0 %v1159
    %2493 = vmatprep.subr.bf16.mxu0 %v1162
    %2494 = vmatpush1.bf16.msra.mxu0 %v1161
    %2495 = vmatprep.subr.bf16.mxu0 %v1164
    %2496 = vmatpush1.bf16.msra.mxu0 %v1163
    %2497 = vmatprep.subr.bf16.mxu0 %v1166
    %2498 = vmatpush1.bf16.msra.mxu0 %v1165
    %2499 = vmatprep.subr.bf16.mxu0 %v1168
    %2500 = vmatpush1.bf16.msra.mxu0 %v1167
    %2501 = vmatprep.subr.bf16.mxu0 %v1170
    %2502 = vmatpush1.bf16.msra.mxu0 %v1169
    %2503 = vmatprep.subr.bf16.mxu0 %v1172
    %2504 = vmatpush1.bf16.msra.mxu0 %v1171
    %2505 = vmatprep.subr.bf16.mxu0 %v1174
    %2506 = vmatpush1.bf16.msra.mxu0 %v1173
    %2507 = vmatprep.subr.bf16.mxu0 %v1176
    %2508 = vmatpush1.bf16.msra.mxu0 %v1175
    %2509 = vmatprep.subr.bf16.mxu0 %v1178
    %2510 = vmatpush1.bf16.msra.mxu0 %v1177
    %2511 = vmatprep.subr.bf16.mxu0 %v1180
    %2512 = vmatpush1.bf16.msra.mxu0 %v1179
    %2513 = vmatprep.subr.bf16.mxu0 %v1182
    %2514 = vmatpush1.bf16.msra.mxu0 %v1181
    %2515 = vmatprep.subr.bf16.mxu0 %v1184
    %2516 = vmatpush1.bf16.msra.mxu0 %v1183
    %2517 = vmatprep.subr.bf16.mxu0 %v1186
    %2518 = vmatpush1.bf16.msra.mxu0 %v1185
    %2519 = vmatprep.subr.bf16.mxu0 %v1188
    %2520 = vmatpush1.bf16.msra.mxu0 %v1187
    %2521 = vmatprep.mubr.bf16.mxu0 %v2458
    %2522 = vmatmul.mubr.bf16.gmra.mrb[0].mxu0 %v2457
    %v2523 = vpop.f32.mrb[0].mxu0
    %v2524 = vadd.f32 %v326, %v2523
    %v2525 = vpop.f32.mrb[0].mxu0
    %v2526 = vadd.f32 %v330, %v2525
    %v2527 = vpop.f32.mrb[0].mxu0
    %v2528 = vpop.f32.mrb[0].mxu0
    %2529 = vdwg.mxu0
    %2530 = vmatprep.subr.bf16.mxu0 %v1190
    %2531 = vmatpush1.bf16.msra.mxu0 %v1189
    %2532 = vmatprep.subr.bf16.mxu0 %v1192
    %2533 = vmatpush1.bf16.msra.mxu0 %v1191
    %2534 = vmatprep.subr.bf16.mxu0 %v1194
    %2535 = vmatpush1.bf16.msra.mxu0 %v1193
    %2536 = vmatprep.subr.bf16.mxu0 %v1196
    %2537 = vmatpush1.bf16.msra.mxu0 %v1195
    %2538 = vmatprep.subr.bf16.mxu0 %v1198
    %2539 = vmatpush1.bf16.msra.mxu0 %v1197
    %2540 = vmatprep.subr.bf16.mxu0 %v1200
    %2541 = vmatpush1.bf16.msra.mxu0 %v1199
    %2542 = vmatprep.subr.bf16.mxu0 %v1202
    %2543 = vmatpush1.bf16.msra.mxu0 %v1201
    %2544 = vmatprep.subr.bf16.mxu0 %v1204
    %2545 = vmatpush1.bf16.msra.mxu0 %v1203
    %2546 = vmatprep.subr.bf16.mxu0 %v1206
    %2547 = vmatpush1.bf16.msra.mxu0 %v1205
    %2548 = vmatprep.subr.bf16.mxu0 %v1208
    %2549 = vmatpush1.bf16.msra.mxu0 %v1207
    %2550 = vmatprep.subr.bf16.mxu0 %v1210
    %2551 = vmatpush1.bf16.msra.mxu0 %v1209
    %2552 = vmatprep.subr.bf16.mxu0 %v1212
    %2553 = vmatpush1.bf16.msra.mxu0 %v1211
    %2554 = vmatprep.subr.bf16.mxu0 %v1214
    %2555 = vmatpush1.bf16.msra.mxu0 %v1213
    %2556 = vmatprep.subr.bf16.mxu0 %v1216
    %2557 = vmatpush1.bf16.msra.mxu0 %v1215
    %2558 = vmatprep.subr.bf16.mxu0 %v1218
    %2559 = vmatpush1.bf16.msra.mxu0 %v1217
    %2560 = vmatprep.subr.bf16.mxu0 %v1220
    %2561 = vmatpush1.bf16.msra.mxu0 %v1219
    %2562 = vmatprep.mubr.bf16.mxu0 %v2460
    %2563 = vmatmul.mubr.bf16.gmra.mrb[0].mxu0 %v2459
    %v2564 = vpop.f32.mrb[0].mxu0
    %v2565 = vadd.f32 %v2524, %v2564
    %v2566 = vpop.f32.mrb[0].mxu0
    %v2567 = vadd.f32 %v2526, %v2566
    %v2568 = vpop.f32.mrb[0].mxu0
    %v2569 = vpop.f32.mrb[0].mxu0
    %2570 = vdwg.mxu0
    %2571 = vmatprep.subr.bf16.mxu0 %v1222
    %2572 = vmatpush1.bf16.msra.mxu0 %v1221
    %2573 = vmatprep.subr.bf16.mxu0 %v1224
    %2574 = vmatpush1.bf16.msra.mxu0 %v1223
    %2575 = vmatprep.subr.bf16.mxu0 %v1226
    %2576 = vmatpush1.bf16.msra.mxu0 %v1225
    %2577 = vmatprep.subr.bf16.mxu0 %v1228
    %2578 = vmatpush1.bf16.msra.mxu0 %v1227
    %2579 = vmatprep.subr.bf16.mxu0 %v1230
    %2580 = vmatpush1.bf16.msra.mxu0 %v1229
    %2581 = vmatprep.subr.bf16.mxu0 %v1232
    %2582 = vmatpush1.bf16.msra.mxu0 %v1231
    %2583 = vmatprep.subr.bf16.mxu0 %v1234
    %2584 = vmatpush1.bf16.msra.mxu0 %v1233
    %2585 = vmatprep.subr.bf16.mxu0 %v1236
    %2586 = vmatpush1.bf16.msra.mxu0 %v1235
    %2587 = vmatprep.subr.bf16.mxu0 %v1238
    %2588 = vmatpush1.bf16.msra.mxu0 %v1237
    %2589 = vmatprep.subr.bf16.mxu0 %v1240
    %2590 = vmatpush1.bf16.msra.mxu0 %v1239
    %2591 = vmatprep.subr.bf16.mxu0 %v1242
    %2592 = vmatpush1.bf16.msra.mxu0 %v1241
    %2593 = vmatprep.subr.bf16.mxu0 %v1244
    %2594 = vmatpush1.bf16.msra.mxu0 %v1243
    %2595 = vmatprep.subr.bf16.mxu0 %v1246
    %2596 = vmatpush1.bf16.msra.mxu0 %v1245
    %2597 = vmatprep.subr.bf16.mxu0 %v1248
    %2598 = vmatpush1.bf16.msra.mxu0 %v1247
    %2599 = vmatprep.subr.bf16.mxu0 %v1250
    %2600 = vmatpush1.bf16.msra.mxu0 %v1249
    %2601 = vmatprep.subr.bf16.mxu0 %v1252
    %2602 = vmatpush1.bf16.msra.mxu0 %v1251
    %2603 = vmatprep.mubr.bf16.mxu0 %v2462
    %2604 = vmatmul.mubr.bf16.gmra.mrb[0].mxu0 %v2461
    %v2605 = vpop.f32.mrb[0].mxu0
    %v2606 = vadd.f32 %v2565, %v2605
    %v2607 = vpop.f32.mrb[0].mxu0
    %v2608 = vadd.f32 %v2567, %v2607
    %v2609 = vpop.f32.mrb[0].mxu0
    %v2610 = vpop.f32.mrb[0].mxu0
    %2611 = vdwg.mxu0
    %2612 = vmatprep.subr.bf16.mxu0 %v1254
    %2613 = vmatpush1.bf16.msra.mxu0 %v1253
    %2614 = vmatprep.subr.bf16.mxu0 %v1256
    %2615 = vmatpush1.bf16.msra.mxu0 %v1255
    %2616 = vmatprep.subr.bf16.mxu0 %v1258
    %2617 = vmatpush1.bf16.msra.mxu0 %v1257
    %2618 = vmatprep.subr.bf16.mxu0 %v1260
    %2619 = vmatpush1.bf16.msra.mxu0 %v1259
    %2620 = vmatprep.subr.bf16.mxu0 %v1262
    %2621 = vmatpush1.bf16.msra.mxu0 %v1261
    %2622 = vmatprep.subr.bf16.mxu0 %v1264
    %2623 = vmatpush1.bf16.msra.mxu0 %v1263
    %2624 = vmatprep.subr.bf16.mxu0 %v1266
    %2625 = vmatpush1.bf16.msra.mxu0 %v1265
    %2626 = vmatprep.subr.bf16.mxu0 %v1268
    %2627 = vmatpush1.bf16.msra.mxu0 %v1267
    %2628 = vmatprep.subr.bf16.mxu0 %v1270
    %2629 = vmatpush1.bf16.msra.mxu0 %v1269
    %2630 = vmatprep.subr.bf16.mxu0 %v1272
    %2631 = vmatpush1.bf16.msra.mxu0 %v1271
    %2632 = vmatprep.subr.bf16.mxu0 %v1274
    %2633 = vmatpush1.bf16.msra.mxu0 %v1273
    %2634 = vmatprep.subr.bf16.mxu0 %v1276
    %2635 = vmatpush1.bf16.msra.mxu0 %v1275
    %2636 = vmatprep.subr.bf16.mxu0 %v1278
    %2637 = vmatpush1.bf16.msra.mxu0 %v1277
    %2638 = vmatprep.subr.bf16.mxu0 %v1280
    %2639 = vmatpush1.bf16.msra.mxu0 %v1279
    %2640 = vmatprep.subr.bf16.mxu0 %v1282
    %2641 = vmatpush1.bf16.msra.mxu0 %v1281
    %2642 = vmatprep.subr.bf16.mxu0 %v1284
    %2643 = vmatpush1.bf16.msra.mxu0 %v1283
    %2644 = vmatprep.mubr.bf16.mxu0 %v2464
    %2645 = vmatmul.mubr.bf16.gmra.mrb[0].mxu0 %v2463
    %v2646 = vpop.f32.mrb[0].mxu0
    %v2647 = vadd.f32 %v2606, %v2646
    %v2648 = vpop.f32.mrb[0].mxu0
    %v2649 = vadd.f32 %v2608, %v2648
    %v2650 = vpop.f32.mrb[0].mxu0
    %v2651 = vpop.f32.mrb[0].mxu0
    %2652 = vdwg.mxu0
    %2653 = vmatprep.subr.bf16.mxu0 %v1286
    %2654 = vmatpush1.bf16.msra.mxu0 %v1285
    %2655 = vmatprep.subr.bf16.mxu0 %v1288
    %2656 = vmatpush1.bf16.msra.mxu0 %v1287
    %2657 = vmatprep.subr.bf16.mxu0 %v1290
    %2658 = vmatpush1.bf16.msra.mxu0 %v1289
    %2659 = vmatprep.subr.bf16.mxu0 %v1292
    %2660 = vmatpush1.bf16.msra.mxu0 %v1291
    %2661 = vmatprep.subr.bf16.mxu0 %v1294
    %2662 = vmatpush1.bf16.msra.mxu0 %v1293
    %2663 = vmatprep.subr.bf16.mxu0 %v1296
    %2664 = vmatpush1.bf16.msra.mxu0 %v1295
    %2665 = vmatprep.subr.bf16.mxu0 %v1298
    %2666 = vmatpush1.bf16.msra.mxu0 %v1297
    %2667 = vmatprep.subr.bf16.mxu0 %v1300
    %2668 = vmatpush1.bf16.msra.mxu0 %v1299
    %2669 = vmatprep.subr.bf16.mxu0 %v1302
    %2670 = vmatpush1.bf16.msra.mxu0 %v1301
    %2671 = vmatprep.subr.bf16.mxu0 %v1304
    %2672 = vmatpush1.bf16.msra.mxu0 %v1303
    %2673 = vmatprep.subr.bf16.mxu0 %v1306
    %2674 = vmatpush1.bf16.msra.mxu0 %v1305
    %2675 = vmatprep.subr.bf16.mxu0 %v1308
    %2676 = vmatpush1.bf16.msra.mxu0 %v1307
    %2677 = vmatprep.subr.bf16.mxu0 %v1310
    %2678 = vmatpush1.bf16.msra.mxu0 %v1309
    %2679 = vmatprep.subr.bf16.mxu0 %v1312
    %2680 = vmatpush1.bf16.msra.mxu0 %v1311
    %2681 = vmatprep.subr.bf16.mxu0 %v1314
    %2682 = vmatpush1.bf16.msra.mxu0 %v1313
    %2683 = vmatprep.subr.bf16.mxu0 %v1316
    %2684 = vmatpush1.bf16.msra.mxu0 %v1315
    %2685 = vmatprep.mubr.bf16.mxu0 %v2466
    %2686 = vmatmul.mubr.bf16.gmra.mrb[0].mxu0 %v2465
    %v2687 = vpop.f32.mrb[0].mxu0
    %v2688 = vadd.f32 %v2647, %v2687
    %v2689 = vpop.f32.mrb[0].mxu0
    %v2690 = vadd.f32 %v2649, %v2689
    %v2691 = vpop.f32.mrb[0].mxu0
    %v2692 = vpop.f32.mrb[0].mxu0
    %2693 = vdwg.mxu0
    %2694 = vmatprep.subr.bf16.mxu0 %v1318
    %2695 = vmatpush1.bf16.msra.mxu0 %v1317
    %2696 = vmatprep.subr.bf16.mxu0 %v1320
    %2697 = vmatpush1.bf16.msra.mxu0 %v1319
    %2698 = vmatprep.subr.bf16.mxu0 %v1322
    %2699 = vmatpush1.bf16.msra.mxu0 %v1321
    %2700 = vmatprep.subr.bf16.mxu0 %v1324
    %2701 = vmatpush1.bf16.msra.mxu0 %v1323
    %2702 = vmatprep.subr.bf16.mxu0 %v1326
    %2703 = vmatpush1.bf16.msra.mxu0 %v1325
    %2704 = vmatprep.subr.bf16.mxu0 %v1328
    %2705 = vmatpush1.bf16.msra.mxu0 %v1327
    %2706 = vmatprep.subr.bf16.mxu0 %v1330
    %2707 = vmatpush1.bf16.msra.mxu0 %v1329
    %2708 = vmatprep.subr.bf16.mxu0 %v1332
    %2709 = vmatpush1.bf16.msra.mxu0 %v1331
    %2710 = vmatprep.subr.bf16.mxu0 %v1334
    %2711 = vmatpush1.bf16.msra.mxu0 %v1333
    %2712 = vmatprep.subr.bf16.mxu0 %v1336
    %2713 = vmatpush1.bf16.msra.mxu0 %v1335
    %2714 = vmatprep.subr.bf16.mxu0 %v1338
    %2715 = vmatpush1.bf16.msra.mxu0 %v1337
    %2716 = vmatprep.subr.bf16.mxu0 %v1340
    %2717 = vmatpush1.bf16.msra.mxu0 %v1339
    %2718 = vmatprep.subr.bf16.mxu0 %v1342
    %2719 = vmatpush1.bf16.msra.mxu0 %v1341
    %2720 = vmatprep.subr.bf16.mxu0 %v1344
    %2721 = vmatpush1.bf16.msra.mxu0 %v1343
    %2722 = vmatprep.subr.bf16.mxu0 %v1346
    %2723 = vmatpush1.bf16.msra.mxu0 %v1345
    %2724 = vmatprep.subr.bf16.mxu0 %v1348
    %2725 = vmatpush1.bf16.msra.mxu0 %v1347
    %2726 = vmatprep.mubr.bf16.mxu0 %v2468
    %2727 = vmatmul.mubr.bf16.gmra.mrb[0].mxu0 %v2467
    %v2728 = vpop.f32.mrb[0].mxu0
    %v2729 = vadd.f32 %v2688, %v2728
    %v2730 = vpop.f32.mrb[0].mxu0
    %v2731 = vadd.f32 %v2690, %v2730
    %v2732 = vpop.f32.mrb[0].mxu0
    %v2733 = vpop.f32.mrb[0].mxu0
    %2734 = vdwg.mxu0
    %2735 = vmatprep.subr.bf16.mxu0 %v1350
    %2736 = vmatpush1.bf16.msra.mxu0 %v1349
    %2737 = vmatprep.subr.bf16.mxu0 %v1352
    %2738 = vmatpush1.bf16.msra.mxu0 %v1351
    %2739 = vmatprep.subr.bf16.mxu0 %v1354
    %2740 = vmatpush1.bf16.msra.mxu0 %v1353
    %2741 = vmatprep.subr.bf16.mxu0 %v1356
    %2742 = vmatpush1.bf16.msra.mxu0 %v1355
    %2743 = vmatprep.subr.bf16.mxu0 %v1358
    %2744 = vmatpush1.bf16.msra.mxu0 %v1357
    %2745 = vmatprep.subr.bf16.mxu0 %v1360
    %2746 = vmatpush1.bf16.msra.mxu0 %v1359
    %2747 = vmatprep.subr.bf16.mxu0 %v1362
    %2748 = vmatpush1.bf16.msra.mxu0 %v1361
    %2749 = vmatprep.subr.bf16.mxu0 %v1364
    %2750 = vmatpush1.bf16.msra.mxu0 %v1363
    %2751 = vmatprep.subr.bf16.mxu0 %v1366
    %2752 = vmatpush1.bf16.msra.mxu0 %v1365
    %2753 = vmatprep.subr.bf16.mxu0 %v1368
    %2754 = vmatpush1.bf16.msra.mxu0 %v1367
    %2755 = vmatprep.subr.bf16.mxu0 %v1370
    %2756 = vmatpush1.bf16.msra.mxu0 %v1369
    %2757 = vmatprep.subr.bf16.mxu0 %v1372
    %2758 = vmatpush1.bf16.msra.mxu0 %v1371
    %2759 = vmatprep.subr.bf16.mxu0 %v1374
    %2760 = vmatpush1.bf16.msra.mxu0 %v1373
    %2761 = vmatprep.subr.bf16.mxu0 %v1376
    %2762 = vmatpush1.bf16.msra.mxu0 %v1375
    %2763 = vmatprep.subr.bf16.mxu0 %v1378
    %2764 = vmatpush1.bf16.msra.mxu0 %v1377
    %2765 = vmatprep.subr.bf16.mxu0 %v1380
    %2766 = vmatpush1.bf16.msra.mxu0 %v1379
    %2767 = vmatprep.mubr.bf16.mxu0 %v2470
    %2768 = vmatmul.mubr.bf16.gmra.mrb[0].mxu0 %v2469
    %v2769 = vpop.f32.mrb[0].mxu0
    %v2770 = vadd.f32 %v2729, %v2769
    %v2771 = vpop.f32.mrb[0].mxu0
    %v2772 = vadd.f32 %v2731, %v2771
    %v2773 = vpop.f32.mrb[0].mxu0
    %v2774 = vpop.f32.mrb[0].mxu0
    %2775 = vdwg.mxu0
    %2776 = vmatprep.subr.bf16.mxu0 %v1382
    %2777 = vmatpush1.bf16.msra.mxu0 %v1381
    %2778 = vmatprep.subr.bf16.mxu0 %v1384
    %2779 = vmatpush1.bf16.msra.mxu0 %v1383
    %2780 = vmatprep.subr.bf16.mxu0 %v1386
    %2781 = vmatpush1.bf16.msra.mxu0 %v1385
    %2782 = vmatprep.subr.bf16.mxu0 %v1388
    %2783 = vmatpush1.bf16.msra.mxu0 %v1387
    %2784 = vmatprep.subr.bf16.mxu0 %v1390
    %2785 = vmatpush1.bf16.msra.mxu0 %v1389
    %2786 = vmatprep.subr.bf16.mxu0 %v1392
    %2787 = vmatpush1.bf16.msra.mxu0 %v1391
    %2788 = vmatprep.subr.bf16.mxu0 %v1394
    %2789 = vmatpush1.bf16.msra.mxu0 %v1393
    %2790 = vmatprep.subr.bf16.mxu0 %v1396
    %2791 = vmatpush1.bf16.msra.mxu0 %v1395
    %2792 = vmatprep.subr.bf16.mxu0 %v1398
    %2793 = vmatpush1.bf16.msra.mxu0 %v1397
    %2794 = vmatprep.subr.bf16.mxu0 %v1400
    %2795 = vmatpush1.bf16.msra.mxu0 %v1399
    %2796 = vmatprep.subr.bf16.mxu0 %v1402
    %2797 = vmatpush1.bf16.msra.mxu0 %v1401
    %2798 = vmatprep.subr.bf16.mxu0 %v1404
    %2799 = vmatpush1.bf16.msra.mxu0 %v1403
    %2800 = vmatprep.subr.bf16.mxu0 %v1406
    %2801 = vmatpush1.bf16.msra.mxu0 %v1405
    %2802 = vmatprep.subr.bf16.mxu0 %v1408
    %2803 = vmatpush1.bf16.msra.mxu0 %v1407
    %2804 = vmatprep.subr.bf16.mxu0 %v1410
    %2805 = vmatpush1.bf16.msra.mxu0 %v1409
    %2806 = vmatprep.subr.bf16.mxu0 %v1412
    %2807 = vmatpush1.bf16.msra.mxu0 %v1411
    %2808 = vmatprep.mubr.bf16.mxu0 %v2472
    %2809 = vmatmul.mubr.bf16.gmra.mrb[0].mxu0 %v2471
    %v2810 = vpop.f32.mrb[0].mxu0
    %v2811 = vadd.f32 %v2770, %v2810
    %v2812 = vpop.f32.mrb[0].mxu0
    %v2813 = vadd.f32 %v2772, %v2812
    %v2814 = vpop.f32.mrb[0].mxu0
    %v2815 = vpop.f32.mrb[0].mxu0
    %2816 = vdwg.mxu0
    %v2817 = vmax.f32 %v2811, 0.0
    %v2818 = vmax.f32 %v2813, 0.0
    %v2819 = vld [vmem:[%s0] sm:$0x88]
    %v2820 = vld [vmem:[%s0 + $0x8] sm:$0x88]
    %v2821 = vld [vmem:[%s0 + $0x10] sm:$0x88]
    %v2822 = vld [vmem:[%s0 + $0x18] sm:$0x88]
    %v2823 = vld [vmem:[%s0 + $0x20] sm:$0x88]
    %v2824 = vld [vmem:[%s0 + $0x28] sm:$0x88]
    %v2825 = vld [vmem:[%s0 + $0x30] sm:$0x88]
    %v2826 = vld [vmem:[%s0 + $0x38] sm:$0x88]
    %v2835 = vunpack.c.l.b16 %v2819
    %v2836 = vunpack.c.h.b16 %v2819
    %v2837 = vunpack.c.l.b16 %v2820
    %v2838 = vunpack.c.h.b16 %v2820
    %v2839 = vunpack.c.l.b16 %v2821
    %v2840 = vunpack.c.h.b16 %v2821
    %v2841 = vunpack.c.l.b16 %v2822
    %v2842 = vunpack.c.h.b16 %v2822
    %v2843 = vunpack.c.l.b16 %v2823
    %v2844 = vunpack.c.h.b16 %v2823
    %v2845 = vunpack.c.l.b16 %v2824
    %v2846 = vunpack.c.h.b16 %v2824
    %v2847 = vunpack.c.l.b16 %v2825
    %v2848 = vunpack.c.h.b16 %v2825
    %v2849 = vunpack.c.l.b16 %v2826
    %v2850 = vunpack.c.h.b16 %v2826
    %v2851 = vpack.c.b16 %v2835, %v2835
    %v2852 = vpack.c.b16 %v2836, %v2836
    %v2853 = vpack.c.b16 %v2837, %v2837
    %v2854 = vpack.c.b16 %v2838, %v2838
    %v2855 = vpack.c.b16 %v2839, %v2839
    %v2856 = vpack.c.b16 %v2840, %v2840
    %v2857 = vpack.c.b16 %v2841, %v2841
    %v2858 = vpack.c.b16 %v2842, %v2842
    %v2859 = vpack.c.b16 %v2843, %v2843
    %v2860 = vpack.c.b16 %v2844, %v2844
    %v2861 = vpack.c.b16 %v2845, %v2845
    %v2862 = vpack.c.b16 %v2846, %v2846
    %v2863 = vpack.c.b16 %v2847, %v2847
    %v2864 = vpack.c.b16 %v2848, %v2848
    %v2865 = vpack.c.b16 %v2849, %v2849
    %v2866 = vpack.c.b16 %v2850, %v2850
    %v2867 = vrot.slane %v2851, 3
    %v2868 = vrot.slane %v2852, 3
    %v2869 = vrot.slane %v2853, 3
    %v2870 = vrot.slane %v2854, 3
    %v2871 = vrot.slane %v2855, 3
    %v2872 = vrot.slane %v2856, 3
    %v2873 = vrot.slane %v2857, 3
    %v2874 = vrot.slane %v2858, 3
    %v2875 = vrot.slane %v2859, 3
    %v2876 = vrot.slane %v2860, 3
    %v2877 = vrot.slane %v2861, 3
    %v2878 = vrot.slane %v2862, 3
    %v2879 = vrot.slane %v2863, 3
    %v2880 = vrot.slane %v2864, 3
    %v2881 = vrot.slane %v2865, 3
    %v2882 = vrot.slane %v2866, 3
    %2899 = vmatprep.subr.bf16.mxu0 %v1158
    %2900 = vmatpush1.bf16.msra.mxu0 %v1157
    %2901 = vmatprep.subr.bf16.mxu0 %v1160
    %2902 = vmatpush1.bf16.msra.mxu0 %v1159
    %2903 = vmatprep.subr.bf16.mxu0 %v1162
    %2904 = vmatpush1.bf16.msra.mxu0 %v1161
    %2905 = vmatprep.subr.bf16.mxu0 %v1164
    %2906 = vmatpush1.bf16.msra.mxu0 %v1163
    %2907 = vmatprep.subr.bf16.mxu0 %v1166
    %2908 = vmatpush1.bf16.msra.mxu0 %v1165
    %2909 = vmatprep.subr.bf16.mxu0 %v1168
    %2910 = vmatpush1.bf16.msra.mxu0 %v1167
    %2911 = vmatprep.subr.bf16.mxu0 %v1170
    %2912 = vmatpush1.bf16.msra.mxu0 %v1169
    %2913 = vmatprep.subr.bf16.mxu0 %v1172
    %2914 = vmatpush1.bf16.msra.mxu0 %v1171
    %2915 = vmatprep.subr.bf16.mxu0 %v1174
    %2916 = vmatpush1.bf16.msra.mxu0 %v1173
    %2917 = vmatprep.subr.bf16.mxu0 %v1176
    %2918 = vmatpush1.bf16.msra.mxu0 %v1175
    %2919 = vmatprep.subr.bf16.mxu0 %v1178
    %2920 = vmatpush1.bf16.msra.mxu0 %v1177
    %2921 = vmatprep.subr.bf16.mxu0 %v1180
    %2922 = vmatpush1.bf16.msra.mxu0 %v1179
    %2923 = vmatprep.subr.bf16.mxu0 %v1182
    %2924 = vmatpush1.bf16.msra.mxu0 %v1181
    %2925 = vmatprep.subr.bf16.mxu0 %v1184
    %2926 = vmatpush1.bf16.msra.mxu0 %v1183
    %2927 = vmatprep.subr.bf16.mxu0 %v1186
    %2928 = vmatpush1.bf16.msra.mxu0 %v1185
    %2929 = vmatprep.subr.bf16.mxu0 %v1188
    %2930 = vmatpush1.bf16.msra.mxu0 %v1187
    %2931 = vmatprep.mubr.bf16.mxu0 %v2868
    %2932 = vmatmul.mubr.bf16.gmra.mrb[0].mxu0 %v2867
    %v2933 = vpop.f32.mrb[0].mxu0
    %v2934 = vadd.f32 %v326, %v2933
    %v2935 = vpop.f32.mrb[0].mxu0
    %v2936 = vadd.f32 %v330, %v2935
    %v2937 = vpop.f32.mrb[0].mxu0
    %v2938 = vpop.f32.mrb[0].mxu0
    %2939 = vdwg.mxu0
    %2940 = vmatprep.subr.bf16.mxu0 %v1190
    %2941 = vmatpush1.bf16.msra.mxu0 %v1189
    %2942 = vmatprep.subr.bf16.mxu0 %v1192
    %2943 = vmatpush1.bf16.msra.mxu0 %v1191
    %2944 = vmatprep.subr.bf16.mxu0 %v1194
    %2945 = vmatpush1.bf16.msra.mxu0 %v1193
    %2946 = vmatprep.subr.bf16.mxu0 %v1196
    %2947 = vmatpush1.bf16.msra.mxu0 %v1195
    %2948 = vmatprep.subr.bf16.mxu0 %v1198
    %2949 = vmatpush1.bf16.msra.mxu0 %v1197
    %2950 = vmatprep.subr.bf16.mxu0 %v1200
    %2951 = vmatpush1.bf16.msra.mxu0 %v1199
    %2952 = vmatprep.subr.bf16.mxu0 %v1202
    %2953 = vmatpush1.bf16.msra.mxu0 %v1201
    %2954 = vmatprep.subr.bf16.mxu0 %v1204
    %2955 = vmatpush1.bf16.msra.mxu0 %v1203
    %2956 = vmatprep.subr.bf16.mxu0 %v1206
    %2957 = vmatpush1.bf16.msra.mxu0 %v1205
    %2958 = vmatprep.subr.bf16.mxu0 %v1208
    %2959 = vmatpush1.bf16.msra.mxu0 %v1207
    %2960 = vmatprep.subr.bf16.mxu0 %v1210
    %2961 = vmatpush1.bf16.msra.mxu0 %v1209
    %2962 = vmatprep.subr.bf16.mxu0 %v1212
    %2963 = vmatpush1.bf16.msra.mxu0 %v1211
    %2964 = vmatprep.subr.bf16.mxu0 %v1214
    %2965 = vmatpush1.bf16.msra.mxu0 %v1213
    %2966 = vmatprep.subr.bf16.mxu0 %v1216
    %2967 = vmatpush1.bf16.msra.mxu0 %v1215
    %2968 = vmatprep.subr.bf16.mxu0 %v1218
    %2969 = vmatpush1.bf16.msra.mxu0 %v1217
    %2970 = vmatprep.subr.bf16.mxu0 %v1220
    %2971 = vmatpush1.bf16.msra.mxu0 %v1219
    %2972 = vmatprep.mubr.bf16.mxu0 %v2870
    %2973 = vmatmul.mubr.bf16.gmra.mrb[0].mxu0 %v2869
    %v2974 = vpop.f32.mrb[0].mxu0
    %v2975 = vadd.f32 %v2934, %v2974
    %v2976 = vpop.f32.mrb[0].mxu0
    %v2977 = vadd.f32 %v2936, %v2976
    %v2978 = vpop.f32.mrb[0].mxu0
    %v2979 = vpop.f32.mrb[0].mxu0
    %2980 = vdwg.mxu0
    %2981 = vmatprep.subr.bf16.mxu0 %v1222
    %2982 = vmatpush1.bf16.msra.mxu0 %v1221
    %2983 = vmatprep.subr.bf16.mxu0 %v1224
    %2984 = vmatpush1.bf16.msra.mxu0 %v1223
    %2985 = vmatprep.subr.bf16.mxu0 %v1226
    %2986 = vmatpush1.bf16.msra.mxu0 %v1225
    %2987 = vmatprep.subr.bf16.mxu0 %v1228
    %2988 = vmatpush1.bf16.msra.mxu0 %v1227
    %2989 = vmatprep.subr.bf16.mxu0 %v1230
    %2990 = vmatpush1.bf16.msra.mxu0 %v1229
    %2991 = vmatprep.subr.bf16.mxu0 %v1232
    %2992 = vmatpush1.bf16.msra.mxu0 %v1231
    %2993 = vmatprep.subr.bf16.mxu0 %v1234
    %2994 = vmatpush1.bf16.msra.mxu0 %v1233
    %2995 = vmatprep.subr.bf16.mxu0 %v1236
    %2996 = vmatpush1.bf16.msra.mxu0 %v1235
    %2997 = vmatprep.subr.bf16.mxu0 %v1238
    %2998 = vmatpush1.bf16.msra.mxu0 %v1237
    %2999 = vmatprep.subr.bf16.mxu0 %v1240
    %3000 = vmatpush1.bf16.msra.mxu0 %v1239
    %3001 = vmatprep.subr.bf16.mxu0 %v1242
    %3002 = vmatpush1.bf16.msra.mxu0 %v1241
    %3003 = vmatprep.subr.bf16.mxu0 %v1244
    %3004 = vmatpush1.bf16.msra.mxu0 %v1243
    %3005 = vmatprep.subr.bf16.mxu0 %v1246
    %3006 = vmatpush1.bf16.msra.mxu0 %v1245
    %3007 = vmatprep.subr.bf16.mxu0 %v1248
    %3008 = vmatpush1.bf16.msra.mxu0 %v1247
    %3009 = vmatprep.subr.bf16.mxu0 %v1250
    %3010 = vmatpush1.bf16.msra.mxu0 %v1249
    %3011 = vmatprep.subr.bf16.mxu0 %v1252
    %3012 = vmatpush1.bf16.msra.mxu0 %v1251
    %3013 = vmatprep.mubr.bf16.mxu0 %v2872
    %3014 = vmatmul.mubr.bf16.gmra.mrb[0].mxu0 %v2871
    %v3015 = vpop.f32.mrb[0].mxu0
    %v3016 = vadd.f32 %v2975, %v3015
    %v3017 = vpop.f32.mrb[0].mxu0
    %v3018 = vadd.f32 %v2977, %v3017
    %v3019 = vpop.f32.mrb[0].mxu0
    %v3020 = vpop.f32.mrb[0].mxu0
    %3021 = vdwg.mxu0
    %3022 = vmatprep.subr.bf16.mxu0 %v1254
    %3023 = vmatpush1.bf16.msra.mxu0 %v1253
    %3024 = vmatprep.subr.bf16.mxu0 %v1256
    %3025 = vmatpush1.bf16.msra.mxu0 %v1255
    %3026 = vmatprep.subr.bf16.mxu0 %v1258
    %3027 = vmatpush1.bf16.msra.mxu0 %v1257
    %3028 = vmatprep.subr.bf16.mxu0 %v1260
    %3029 = vmatpush1.bf16.msra.mxu0 %v1259
    %3030 = vmatprep.subr.bf16.mxu0 %v1262
    %3031 = vmatpush1.bf16.msra.mxu0 %v1261
    %3032 = vmatprep.subr.bf16.mxu0 %v1264
    %3033 = vmatpush1.bf16.msra.mxu0 %v1263
    %3034 = vmatprep.subr.bf16.mxu0 %v1266
    %3035 = vmatpush1.bf16.msra.mxu0 %v1265
    %3036 = vmatprep.subr.bf16.mxu0 %v1268
    %3037 = vmatpush1.bf16.msra.mxu0 %v1267
    %3038 = vmatprep.subr.bf16.mxu0 %v1270
    %3039 = vmatpush1.bf16.msra.mxu0 %v1269
    %3040 = vmatprep.subr.bf16.mxu0 %v1272
    %3041 = vmatpush1.bf16.msra.mxu0 %v1271
    %3042 = vmatprep.subr.bf16.mxu0 %v1274
    %3043 = vmatpush1.bf16.msra.mxu0 %v1273
    %3044 = vmatprep.subr.bf16.mxu0 %v1276
    %3045 = vmatpush1.bf16.msra.mxu0 %v1275
    %3046 = vmatprep.subr.bf16.mxu0 %v1278
    %3047 = vmatpush1.bf16.msra.mxu0 %v1277
    %3048 = vmatprep.subr.bf16.mxu0 %v1280
    %3049 = vmatpush1.bf16.msra.mxu0 %v1279
    %3050 = vmatprep.subr.bf16.mxu0 %v1282
    %3051 = vmatpush1.bf16.msra.mxu0 %v1281
    %3052 = vmatprep.subr.bf16.mxu0 %v1284
    %3053 = vmatpush1.bf16.msra.mxu0 %v1283
    %3054 = vmatprep.mubr.bf16.mxu0 %v2874
    %3055 = vmatmul.mubr.bf16.gmra.mrb[0].mxu0 %v2873
    %v3056 = vpop.f32.mrb[0].mxu0
    %v3057 = vadd.f32 %v3016, %v3056
    %v3058 = vpop.f32.mrb[0].mxu0
    %v3059 = vadd.f32 %v3018, %v3058
    %v3060 = vpop.f32.mrb[0].mxu0
    %v3061 = vpop.f32.mrb[0].mxu0
    %3062 = vdwg.mxu0
    %3063 = vmatprep.subr.bf16.mxu0 %v1286
    %3064 = vmatpush1.bf16.msra.mxu0 %v1285
    %3065 = vmatprep.subr.bf16.mxu0 %v1288
    %3066 = vmatpush1.bf16.msra.mxu0 %v1287
    %3067 = vmatprep.subr.bf16.mxu0 %v1290
    %3068 = vmatpush1.bf16.msra.mxu0 %v1289
    %3069 = vmatprep.subr.bf16.mxu0 %v1292
    %3070 = vmatpush1.bf16.msra.mxu0 %v1291
    %3071 = vmatprep.subr.bf16.mxu0 %v1294
    %3072 = vmatpush1.bf16.msra.mxu0 %v1293
    %3073 = vmatprep.subr.bf16.mxu0 %v1296
    %3074 = vmatpush1.bf16.msra.mxu0 %v1295
    %3075 = vmatprep.subr.bf16.mxu0 %v1298
    %3076 = vmatpush1.bf16.msra.mxu0 %v1297
    %3077 = vmatprep.subr.bf16.mxu0 %v1300
    %3078 = vmatpush1.bf16.msra.mxu0 %v1299
    %3079 = vmatprep.subr.bf16.mxu0 %v1302
    %3080 = vmatpush1.bf16.msra.mxu0 %v1301
    %3081 = vmatprep.subr.bf16.mxu0 %v1304
    %3082 = vmatpush1.bf16.msra.mxu0 %v1303
    %3083 = vmatprep.subr.bf16.mxu0 %v1306
    %3084 = vmatpush1.bf16.msra.mxu0 %v1305
    %3085 = vmatprep.subr.bf16.mxu0 %v1308
    %3086 = vmatpush1.bf16.msra.mxu0 %v1307
    %3087 = vmatprep.subr.bf16.mxu0 %v1310
    %3088 = vmatpush1.bf16.msra.mxu0 %v1309
    %3089 = vmatprep.subr.bf16.mxu0 %v1312
    %3090 = vmatpush1.bf16.msra.mxu0 %v1311
    %3091 = vmatprep.subr.bf16.mxu0 %v1314
    %3092 = vmatpush1.bf16.msra.mxu0 %v1313
    %3093 = vmatprep.subr.bf16.mxu0 %v1316
    %3094 = vmatpush1.bf16.msra.mxu0 %v1315
    %3095 = vmatprep.mubr.bf16.mxu0 %v2876
    %3096 = vmatmul.mubr.bf16.gmra.mrb[0].mxu0 %v2875
    %v3097 = vpop.f32.mrb[0].mxu0
    %v3098 = vadd.f32 %v3057, %v3097
    %v3099 = vpop.f32.mrb[0].mxu0
    %v3100 = vadd.f32 %v3059, %v3099
    %v3101 = vpop.f32.mrb[0].mxu0
    %v3102 = vpop.f32.mrb[0].mxu0
    %3103 = vdwg.mxu0
    %3104 = vmatprep.subr.bf16.mxu0 %v1318
    %3105 = vmatpush1.bf16.msra.mxu0 %v1317
    %3106 = vmatprep.subr.bf16.mxu0 %v1320
    %3107 = vmatpush1.bf16.msra.mxu0 %v1319
    %3108 = vmatprep.subr.bf16.mxu0 %v1322
    %3109 = vmatpush1.bf16.msra.mxu0 %v1321
    %3110 = vmatprep.subr.bf16.mxu0 %v1324
    %3111 = vmatpush1.bf16.msra.mxu0 %v1323
    %3112 = vmatprep.subr.bf16.mxu0 %v1326
    %3113 = vmatpush1.bf16.msra.mxu0 %v1325
    %3114 = vmatprep.subr.bf16.mxu0 %v1328
    %3115 = vmatpush1.bf16.msra.mxu0 %v1327
    %3116 = vmatprep.subr.bf16.mxu0 %v1330
    %3117 = vmatpush1.bf16.msra.mxu0 %v1329
    %3118 = vmatprep.subr.bf16.mxu0 %v1332
    %3119 = vmatpush1.bf16.msra.mxu0 %v1331
    %3120 = vmatprep.subr.bf16.mxu0 %v1334
    %3121 = vmatpush1.bf16.msra.mxu0 %v1333
    %3122 = vmatprep.subr.bf16.mxu0 %v1336
    %3123 = vmatpush1.bf16.msra.mxu0 %v1335
    %3124 = vmatprep.subr.bf16.mxu0 %v1338
    %3125 = vmatpush1.bf16.msra.mxu0 %v1337
    %3126 = vmatprep.subr.bf16.mxu0 %v1340
    %3127 = vmatpush1.bf16.msra.mxu0 %v1339
    %3128 = vmatprep.subr.bf16.mxu0 %v1342
    %3129 = vmatpush1.bf16.msra.mxu0 %v1341
    %3130 = vmatprep.subr.bf16.mxu0 %v1344
    %3131 = vmatpush1.bf16.msra.mxu0 %v1343
    %3132 = vmatprep.subr.bf16.mxu0 %v1346
    %3133 = vmatpush1.bf16.msra.mxu0 %v1345
    %3134 = vmatprep.subr.bf16.mxu0 %v1348
    %3135 = vmatpush1.bf16.msra.mxu0 %v1347
    %3136 = vmatprep.mubr.bf16.mxu0 %v2878
    %3137 = vmatmul.mubr.bf16.gmra.mrb[0].mxu0 %v2877
    %v3138 = vpop.f32.mrb[0].mxu0
    %v3139 = vadd.f32 %v3098, %v3138
    %v3140 = vpop.f32.mrb[0].mxu0
    %v3141 = vadd.f32 %v3100, %v3140
    %v3142 = vpop.f32.mrb[0].mxu0
    %v3143 = vpop.f32.mrb[0].mxu0
    %3144 = vdwg.mxu0
    %3145 = vmatprep.subr.bf16.mxu0 %v1350
    %3146 = vmatpush1.bf16.msra.mxu0 %v1349
    %3147 = vmatprep.subr.bf16.mxu0 %v1352
    %3148 = vmatpush1.bf16.msra.mxu0 %v1351
    %3149 = vmatprep.subr.bf16.mxu0 %v1354
    %3150 = vmatpush1.bf16.msra.mxu0 %v1353
    %3151 = vmatprep.subr.bf16.mxu0 %v1356
    %3152 = vmatpush1.bf16.msra.mxu0 %v1355
    %3153 = vmatprep.subr.bf16.mxu0 %v1358
    %3154 = vmatpush1.bf16.msra.mxu0 %v1357
    %3155 = vmatprep.subr.bf16.mxu0 %v1360
    %3156 = vmatpush1.bf16.msra.mxu0 %v1359
    %3157 = vmatprep.subr.bf16.mxu0 %v1362
    %3158 = vmatpush1.bf16.msra.mxu0 %v1361
    %3159 = vmatprep.subr.bf16.mxu0 %v1364
    %3160 = vmatpush1.bf16.msra.mxu0 %v1363
    %3161 = vmatprep.subr.bf16.mxu0 %v1366
    %3162 = vmatpush1.bf16.msra.mxu0 %v1365
    %3163 = vmatprep.subr.bf16.mxu0 %v1368
    %3164 = vmatpush1.bf16.msra.mxu0 %v1367
    %3165 = vmatprep.subr.bf16.mxu0 %v1370
    %3166 = vmatpush1.bf16.msra.mxu0 %v1369
    %3167 = vmatprep.subr.bf16.mxu0 %v1372
    %3168 = vmatpush1.bf16.msra.mxu0 %v1371
    %3169 = vmatprep.subr.bf16.mxu0 %v1374
    %3170 = vmatpush1.bf16.msra.mxu0 %v1373
    %3171 = vmatprep.subr.bf16.mxu0 %v1376
    %3172 = vmatpush1.bf16.msra.mxu0 %v1375
    %3173 = vmatprep.subr.bf16.mxu0 %v1378
    %3174 = vmatpush1.bf16.msra.mxu0 %v1377
    %3175 = vmatprep.subr.bf16.mxu0 %v1380
    %3176 = vmatpush1.bf16.msra.mxu0 %v1379
    %3177 = vmatprep.mubr.bf16.mxu0 %v2880
    %3178 = vmatmul.mubr.bf16.gmra.mrb[0].mxu0 %v2879
    %v3179 = vpop.f32.mrb[0].mxu0
    %v3180 = vadd.f32 %v3139, %v3179
    %v3181 = vpop.f32.mrb[0].mxu0
    %v3182 = vadd.f32 %v3141, %v3181
    %v3183 = vpop.f32.mrb[0].mxu0
    %v3184 = vpop.f32.mrb[0].mxu0
    %3185 = vdwg.mxu0
    %3186 = vmatprep.subr.bf16.mxu0 %v1382
    %3187 = vmatpush1.bf16.msra.mxu0 %v1381
    %3188 = vmatprep.subr.bf16.mxu0 %v1384
    %3189 = vmatpush1.bf16.msra.mxu0 %v1383
    %3190 = vmatprep.subr.bf16.mxu0 %v1386
    %3191 = vmatpush1.bf16.msra.mxu0 %v1385
    %3192 = vmatprep.subr.bf16.mxu0 %v1388
    %3193 = vmatpush1.bf16.msra.mxu0 %v1387
    %3194 = vmatprep.subr.bf16.mxu0 %v1390
    %3195 = vmatpush1.bf16.msra.mxu0 %v1389
    %3196 = vmatprep.subr.bf16.mxu0 %v1392
    %3197 = vmatpush1.bf16.msra.mxu0 %v1391
    %3198 = vmatprep.subr.bf16.mxu0 %v1394
    %3199 = vmatpush1.bf16.msra.mxu0 %v1393
    %3200 = vmatprep.subr.bf16.mxu0 %v1396
    %3201 = vmatpush1.bf16.msra.mxu0 %v1395
    %3202 = vmatprep.subr.bf16.mxu0 %v1398
    %3203 = vmatpush1.bf16.msra.mxu0 %v1397
    %3204 = vmatprep.subr.bf16.mxu0 %v1400
    %3205 = vmatpush1.bf16.msra.mxu0 %v1399
    %3206 = vmatprep.subr.bf16.mxu0 %v1402
    %3207 = vmatpush1.bf16.msra.mxu0 %v1401
    %3208 = vmatprep.subr.bf16.mxu0 %v1404
    %3209 = vmatpush1.bf16.msra.mxu0 %v1403
    %3210 = vmatprep.subr.bf16.mxu0 %v1406
    %3211 = vmatpush1.bf16.msra.mxu0 %v1405
    %3212 = vmatprep.subr.bf16.mxu0 %v1408
    %3213 = vmatpush1.bf16.msra.mxu0 %v1407
    %3214 = vmatprep.subr.bf16.mxu0 %v1410
    %3215 = vmatpush1.bf16.msra.mxu0 %v1409
    %3216 = vmatprep.subr.bf16.mxu0 %v1412
    %3217 = vmatpush1.bf16.msra.mxu0 %v1411
    %3218 = vmatprep.mubr.bf16.mxu0 %v2882
    %3219 = vmatmul.mubr.bf16.gmra.mrb[0].mxu0 %v2881
    %v3220 = vpop.f32.mrb[0].mxu0
    %v3221 = vadd.f32 %v3180, %v3220
    %v3222 = vpop.f32.mrb[0].mxu0
    %v3223 = vadd.f32 %v3182, %v3222
    %v3224 = vpop.f32.mrb[0].mxu0
    %v3225 = vpop.f32.mrb[0].mxu0
    %3226 = vdwg.mxu0
    %v3227 = vmax.f32 %v3221, 0.0
    %v3228 = vmax.f32 %v3223, 0.0
    %v3229 = vpack.c.bf16 %v1997, %v1997
    %v3230 = vpack.c.bf16 %v1998, %v1998
    %v3231 = vpack.c.bf16 %v2407, %v2407
    %v3232 = vpack.c.bf16 %v2408, %v2408
    %v3233 = vpack.c.bf16 %v2817, %v2817
    %v3234 = vpack.c.bf16 %v2818, %v2818
    %v3235 = vpack.c.bf16 %v3227, %v3227
    %v3236 = vpack.c.bf16 %v3228, %v3228
    %v3237 = vld [vmem:[%s4] sm:$0xf]
    %v3238 = vld [vmem:[%s4 + $0x4] sm:$0xf]
    %v3239 = vld [vmem:[%s4 + $0x8] sm:$0xf]
    %v3240 = vld [vmem:[%s4 + $0xc] sm:$0xf]
    %v3241 = vld [vmem:[%s4 + $0x10] sm:$0xf]
    %v3242 = vld [vmem:[%s4 + $0x14] sm:$0xf]
    %v3243 = vld [vmem:[%s4 + $0x18] sm:$0xf]
    %v3244 = vld [vmem:[%s4 + $0x1c] sm:$0xf]
    %v3245 = vld [vmem:[%s4 + $0x20] sm:$0xf]
    %v3246 = vld [vmem:[%s4 + $0x24] sm:$0xf]
    %v3247 = vld [vmem:[%s4 + $0x28] sm:$0xf]
    %v3248 = vld [vmem:[%s4 + $0x2c] sm:$0xf]
    %v3249 = vld [vmem:[%s4 + $0x30] sm:$0xf]
    %v3250 = vld [vmem:[%s4 + $0x34] sm:$0xf]
    %v3251 = vld [vmem:[%s4 + $0x38] sm:$0xf]
    %v3252 = vld [vmem:[%s4 + $0x3c] sm:$0xf]
    %v3253 = vld [vmem:[%s4 + $0x40] sm:$0xf]
    %v3254 = vld [vmem:[%s4 + $0x44] sm:$0xf]
    %v3255 = vld [vmem:[%s4 + $0x48] sm:$0xf]
    %v3256 = vld [vmem:[%s4 + $0x4c] sm:$0xf]
    %v3257 = vld [vmem:[%s4 + $0x50] sm:$0xf]
    %v3258 = vld [vmem:[%s4 + $0x54] sm:$0xf]
    %v3259 = vld [vmem:[%s4 + $0x58] sm:$0xf]
    %v3260 = vld [vmem:[%s4 + $0x5c] sm:$0xf]
    %v3261 = vld [vmem:[%s4 + $0x60] sm:$0xf]
    %v3262 = vld [vmem:[%s4 + $0x64] sm:$0xf]
    %v3263 = vld [vmem:[%s4 + $0x68] sm:$0xf]
    %v3264 = vld [vmem:[%s4 + $0x6c] sm:$0xf]
    %v3265 = vld [vmem:[%s4 + $0x70] sm:$0xf]
    %v3266 = vld [vmem:[%s4 + $0x74] sm:$0xf]
    %v3267 = vld [vmem:[%s4 + $0x78] sm:$0xf]
    %v3268 = vld [vmem:[%s4 + $0x7c] sm:$0xf]
    %v3269 = vld [vmem:[%s4 + $0x80] sm:$0xf]
    %v3270 = vld [vmem:[%s4 + $0x84] sm:$0xf]
    %v3271 = vld [vmem:[%s4 + $0x88] sm:$0xf]
    %v3272 = vld [vmem:[%s4 + $0x8c] sm:$0xf]
    %v3273 = vld [vmem:[%s4 + $0x90] sm:$0xf]
    %v3274 = vld [vmem:[%s4 + $0x94] sm:$0xf]
    %v3275 = vld [vmem:[%s4 + $0x98] sm:$0xf]
    %v3276 = vld [vmem:[%s4 + $0x9c] sm:$0xf]
    %v3277 = vld [vmem:[%s4 + $0xa0] sm:$0xf]
    %v3278 = vld [vmem:[%s4 + $0xa4] sm:$0xf]
    %v3279 = vld [vmem:[%s4 + $0xa8] sm:$0xf]
    %v3280 = vld [vmem:[%s4 + $0xac] sm:$0xf]
    %v3281 = vld [vmem:[%s4 + $0xb0] sm:$0xf]
    %v3282 = vld [vmem:[%s4 + $0xb4] sm:$0xf]
    %v3283 = vld [vmem:[%s4 + $0xb8] sm:$0xf]
    %v3284 = vld [vmem:[%s4 + $0xbc] sm:$0xf]
    %v3285 = vld [vmem:[%s4 + $0xc0] sm:$0xf]
    %v3286 = vld [vmem:[%s4 + $0xc4] sm:$0xf]
    %v3287 = vld [vmem:[%s4 + $0xc8] sm:$0xf]
    %v3288 = vld [vmem:[%s4 + $0xcc] sm:$0xf]
    %v3289 = vld [vmem:[%s4 + $0xd0] sm:$0xf]
    %v3290 = vld [vmem:[%s4 + $0xd4] sm:$0xf]
    %v3291 = vld [vmem:[%s4 + $0xd8] sm:$0xf]
    %v3292 = vld [vmem:[%s4 + $0xdc] sm:$0xf]
    %v3293 = vld [vmem:[%s4 + $0xe0] sm:$0xf]
    %v3294 = vld [vmem:[%s4 + $0xe4] sm:$0xf]
    %v3295 = vld [vmem:[%s4 + $0xe8] sm:$0xf]
    %v3296 = vld [vmem:[%s4 + $0xec] sm:$0xf]
    %v3297 = vld [vmem:[%s4 + $0xf0] sm:$0xf]
    %v3298 = vld [vmem:[%s4 + $0xf4] sm:$0xf]
    %v3299 = vld [vmem:[%s4 + $0xf8] sm:$0xf]
    %v3300 = vld [vmem:[%s4 + $0xfc] sm:$0xf]
    %v3301 = vld [vmem:[%s4 + $0x100] sm:$0xf]
    %v3302 = vld [vmem:[%s4 + $0x104] sm:$0xf]
    %v3303 = vld [vmem:[%s4 + $0x108] sm:$0xf]
    %v3304 = vld [vmem:[%s4 + $0x10c] sm:$0xf]
    %v3305 = vld [vmem:[%s4 + $0x110] sm:$0xf]
    %v3306 = vld [vmem:[%s4 + $0x114] sm:$0xf]
    %v3307 = vld [vmem:[%s4 + $0x118] sm:$0xf]
    %v3308 = vld [vmem:[%s4 + $0x11c] sm:$0xf]
    %v3309 = vld [vmem:[%s4 + $0x120] sm:$0xf]
    %v3310 = vld [vmem:[%s4 + $0x124] sm:$0xf]
    %v3311 = vld [vmem:[%s4 + $0x128] sm:$0xf]
    %v3312 = vld [vmem:[%s4 + $0x12c] sm:$0xf]
    %v3313 = vld [vmem:[%s4 + $0x130] sm:$0xf]
    %v3314 = vld [vmem:[%s4 + $0x134] sm:$0xf]
    %v3315 = vld [vmem:[%s4 + $0x138] sm:$0xf]
    %v3316 = vld [vmem:[%s4 + $0x13c] sm:$0xf]
    %v3317 = vld [vmem:[%s4 + $0x140] sm:$0xf]
    %v3318 = vld [vmem:[%s4 + $0x144] sm:$0xf]
    %v3319 = vld [vmem:[%s4 + $0x148] sm:$0xf]
    %v3320 = vld [vmem:[%s4 + $0x14c] sm:$0xf]
    %v3321 = vld [vmem:[%s4 + $0x150] sm:$0xf]
    %v3322 = vld [vmem:[%s4 + $0x154] sm:$0xf]
    %v3323 = vld [vmem:[%s4 + $0x158] sm:$0xf]
    %v3324 = vld [vmem:[%s4 + $0x15c] sm:$0xf]
    %v3325 = vld [vmem:[%s4 + $0x160] sm:$0xf]
    %v3326 = vld [vmem:[%s4 + $0x164] sm:$0xf]
    %v3327 = vld [vmem:[%s4 + $0x168] sm:$0xf]
    %v3328 = vld [vmem:[%s4 + $0x16c] sm:$0xf]
    %v3329 = vld [vmem:[%s4 + $0x170] sm:$0xf]
    %v3330 = vld [vmem:[%s4 + $0x174] sm:$0xf]
    %v3331 = vld [vmem:[%s4 + $0x178] sm:$0xf]
    %v3332 = vld [vmem:[%s4 + $0x17c] sm:$0xf]
    %v3333 = vld [vmem:[%s4 + $0x180] sm:$0xf]
    %v3334 = vld [vmem:[%s4 + $0x184] sm:$0xf]
    %v3335 = vld [vmem:[%s4 + $0x188] sm:$0xf]
    %v3336 = vld [vmem:[%s4 + $0x18c] sm:$0xf]
    %v3337 = vld [vmem:[%s4 + $0x190] sm:$0xf]
    %v3338 = vld [vmem:[%s4 + $0x194] sm:$0xf]
    %v3339 = vld [vmem:[%s4 + $0x198] sm:$0xf]
    %v3340 = vld [vmem:[%s4 + $0x19c] sm:$0xf]
    %v3341 = vld [vmem:[%s4 + $0x1a0] sm:$0xf]
    %v3342 = vld [vmem:[%s4 + $0x1a4] sm:$0xf]
    %v3343 = vld [vmem:[%s4 + $0x1a8] sm:$0xf]
    %v3344 = vld [vmem:[%s4 + $0x1ac] sm:$0xf]
    %v3345 = vld [vmem:[%s4 + $0x1b0] sm:$0xf]
    %v3346 = vld [vmem:[%s4 + $0x1b4] sm:$0xf]
    %v3347 = vld [vmem:[%s4 + $0x1b8] sm:$0xf]
    %v3348 = vld [vmem:[%s4 + $0x1bc] sm:$0xf]
    %v3349 = vld [vmem:[%s4 + $0x1c0] sm:$0xf]
    %v3350 = vld [vmem:[%s4 + $0x1c4] sm:$0xf]
    %v3351 = vld [vmem:[%s4 + $0x1c8] sm:$0xf]
    %v3352 = vld [vmem:[%s4 + $0x1cc] sm:$0xf]
    %v3353 = vld [vmem:[%s4 + $0x1d0] sm:$0xf]
    %v3354 = vld [vmem:[%s4 + $0x1d4] sm:$0xf]
    %v3355 = vld [vmem:[%s4 + $0x1d8] sm:$0xf]
    %v3356 = vld [vmem:[%s4 + $0x1dc] sm:$0xf]
    %v3357 = vld [vmem:[%s4 + $0x1e0] sm:$0xf]
    %v3358 = vld [vmem:[%s4 + $0x1e4] sm:$0xf]
    %v3359 = vld [vmem:[%s4 + $0x1e8] sm:$0xf]
    %v3360 = vld [vmem:[%s4 + $0x1ec] sm:$0xf]
    %v3361 = vld [vmem:[%s4 + $0x1f0] sm:$0xf]
    %v3362 = vld [vmem:[%s4 + $0x1f4] sm:$0xf]
    %v3363 = vld [vmem:[%s4 + $0x1f8] sm:$0xf]
    %v3364 = vld [vmem:[%s4 + $0x1fc] sm:$0xf]
    %v3365 = vld [vmem:[%s5] sm:$0x1]
    %v3367 = vlaneseq
    %v3368 = vshrl.u32 %v3367, 7
    %v3369 = vsub.s32 0, %v3368
    %v3370 = vrot.slane %v3365, %v3369
    %v3500 = vunpack.c.l.b16 %v3237
    %v3501 = vunpack.c.l.b16 %v3238
    %v3502 = vunpack.c.l.b16 %v3239
    %v3503 = vunpack.c.l.b16 %v3240
    %v3504 = vunpack.c.l.b16 %v3241
    %v3505 = vunpack.c.l.b16 %v3242
    %v3506 = vunpack.c.l.b16 %v3243
    %v3507 = vunpack.c.l.b16 %v3244
    %v3508 = vunpack.c.l.b16 %v3245
    %v3509 = vunpack.c.l.b16 %v3246
    %v3510 = vunpack.c.l.b16 %v3247
    %v3511 = vunpack.c.l.b16 %v3248
    %v3512 = vunpack.c.l.b16 %v3249
    %v3513 = vunpack.c.l.b16 %v3250
    %v3514 = vunpack.c.l.b16 %v3251
    %v3515 = vunpack.c.l.b16 %v3252
    %v3516 = vunpack.c.l.b16 %v3253
    %v3517 = vunpack.c.l.b16 %v3254
    %v3518 = vunpack.c.l.b16 %v3255
    %v3519 = vunpack.c.l.b16 %v3256
    %v3520 = vunpack.c.l.b16 %v3257
    %v3521 = vunpack.c.l.b16 %v3258
    %v3522 = vunpack.c.l.b16 %v3259
    %v3523 = vunpack.c.l.b16 %v3260
    %v3524 = vunpack.c.l.b16 %v3261
    %v3525 = vunpack.c.l.b16 %v3262
    %v3526 = vunpack.c.l.b16 %v3263
    %v3527 = vunpack.c.l.b16 %v3264
    %v3528 = vunpack.c.l.b16 %v3265
    %v3529 = vunpack.c.l.b16 %v3266
    %v3530 = vunpack.c.l.b16 %v3267
    %v3531 = vunpack.c.l.b16 %v3268
    %v3532 = vunpack.c.l.b16 %v3269
    %v3533 = vunpack.c.l.b16 %v3270
    %v3534 = vunpack.c.l.b16 %v3271
    %v3535 = vunpack.c.l.b16 %v3272
    %v3536 = vunpack.c.l.b16 %v3273
    %v3537 = vunpack.c.l.b16 %v3274
    %v3538 = vunpack.c.l.b16 %v3275
    %v3539 = vunpack.c.l.b16 %v3276
    %v3540 = vunpack.c.l.b16 %v3277
    %v3541 = vunpack.c.l.b16 %v3278
    %v3542 = vunpack.c.l.b16 %v3279
    %v3543 = vunpack.c.l.b16 %v3280
    %v3544 = vunpack.c.l.b16 %v3281
    %v3545 = vunpack.c.l.b16 %v3282
    %v3546 = vunpack.c.l.b16 %v3283
    %v3547 = vunpack.c.l.b16 %v3284
    %v3548 = vunpack.c.l.b16 %v3285
    %v3549 = vunpack.c.l.b16 %v3286
    %v3550 = vunpack.c.l.b16 %v3287
    %v3551 = vunpack.c.l.b16 %v3288
    %v3552 = vunpack.c.l.b16 %v3289
    %v3553 = vunpack.c.l.b16 %v3290
    %v3554 = vunpack.c.l.b16 %v3291
    %v3555 = vunpack.c.l.b16 %v3292
    %v3556 = vunpack.c.l.b16 %v3293
    %v3557 = vunpack.c.l.b16 %v3294
    %v3558 = vunpack.c.l.b16 %v3295
    %v3559 = vunpack.c.l.b16 %v3296
    %v3560 = vunpack.c.l.b16 %v3297
    %v3561 = vunpack.c.l.b16 %v3298
    %v3562 = vunpack.c.l.b16 %v3299
    %v3563 = vunpack.c.l.b16 %v3300
    %v3564 = vunpack.c.l.b16 %v3301
    %v3565 = vunpack.c.l.b16 %v3302
    %v3566 = vunpack.c.l.b16 %v3303
    %v3567 = vunpack.c.l.b16 %v3304
    %v3568 = vunpack.c.l.b16 %v3305
    %v3569 = vunpack.c.l.b16 %v3306
    %v3570 = vunpack.c.l.b16 %v3307
    %v3571 = vunpack.c.l.b16 %v3308
    %v3572 = vunpack.c.l.b16 %v3309
    %v3573 = vunpack.c.l.b16 %v3310
    %v3574 = vunpack.c.l.b16 %v3311
    %v3575 = vunpack.c.l.b16 %v3312
    %v3576 = vunpack.c.l.b16 %v3313
    %v3577 = vunpack.c.l.b16 %v3314
    %v3578 = vunpack.c.l.b16 %v3315
    %v3579 = vunpack.c.l.b16 %v3316
    %v3580 = vunpack.c.l.b16 %v3317
    %v3581 = vunpack.c.l.b16 %v3318
    %v3582 = vunpack.c.l.b16 %v3319
    %v3583 = vunpack.c.l.b16 %v3320
    %v3584 = vunpack.c.l.b16 %v3321
    %v3585 = vunpack.c.l.b16 %v3322
    %v3586 = vunpack.c.l.b16 %v3323
    %v3587 = vunpack.c.l.b16 %v3324
    %v3588 = vunpack.c.l.b16 %v3325
    %v3589 = vunpack.c.l.b16 %v3326
    %v3590 = vunpack.c.l.b16 %v3327
    %v3591 = vunpack.c.l.b16 %v3328
    %v3592 = vunpack.c.l.b16 %v3329
    %v3593 = vunpack.c.l.b16 %v3330
    %v3594 = vunpack.c.l.b16 %v3331
    %v3595 = vunpack.c.l.b16 %v3332
    %v3596 = vunpack.c.l.b16 %v3333
    %v3597 = vunpack.c.l.b16 %v3334
    %v3598 = vunpack.c.l.b16 %v3335
    %v3599 = vunpack.c.l.b16 %v3336
    %v3600 = vunpack.c.l.b16 %v3337
    %v3601 = vunpack.c.l.b16 %v3338
    %v3602 = vunpack.c.l.b16 %v3339
    %v3603 = vunpack.c.l.b16 %v3340
    %v3604 = vunpack.c.l.b16 %v3341
    %v3605 = vunpack.c.l.b16 %v3342
    %v3606 = vunpack.c.l.b16 %v3343
    %v3607 = vunpack.c.l.b16 %v3344
    %v3608 = vunpack.c.l.b16 %v3345
    %v3609 = vunpack.c.l.b16 %v3346
    %v3610 = vunpack.c.l.b16 %v3347
    %v3611 = vunpack.c.l.b16 %v3348
    %v3612 = vunpack.c.l.b16 %v3349
    %v3613 = vunpack.c.l.b16 %v3350
    %v3614 = vunpack.c.l.b16 %v3351
    %v3615 = vunpack.c.l.b16 %v3352
    %v3616 = vunpack.c.l.b16 %v3353
    %v3617 = vunpack.c.l.b16 %v3354
    %v3618 = vunpack.c.l.b16 %v3355
    %v3619 = vunpack.c.l.b16 %v3356
    %v3620 = vunpack.c.l.b16 %v3357
    %v3621 = vunpack.c.l.b16 %v3358
    %v3622 = vunpack.c.l.b16 %v3359
    %v3623 = vunpack.c.l.b16 %v3360
    %v3624 = vunpack.c.l.b16 %v3361
    %v3625 = vunpack.c.l.b16 %v3362
    %v3626 = vunpack.c.l.b16 %v3363
    %v3627 = vunpack.c.l.b16 %v3364
    %v3628 = vpack.c.b16 %v3501, %v3500
    %v3629 = vpack.c.b16 %v3503, %v3502
    %v3630 = vpack.c.b16 %v3505, %v3504
    %v3631 = vpack.c.b16 %v3507, %v3506
    %v3632 = vpack.c.b16 %v3509, %v3508
    %v3633 = vpack.c.b16 %v3511, %v3510
    %v3634 = vpack.c.b16 %v3513, %v3512
    %v3635 = vpack.c.b16 %v3515, %v3514
    %v3636 = vpack.c.b16 %v3517, %v3516
    %v3637 = vpack.c.b16 %v3519, %v3518
    %v3638 = vpack.c.b16 %v3521, %v3520
    %v3639 = vpack.c.b16 %v3523, %v3522
    %v3640 = vpack.c.b16 %v3525, %v3524
    %v3641 = vpack.c.b16 %v3527, %v3526
    %v3642 = vpack.c.b16 %v3529, %v3528
    %v3643 = vpack.c.b16 %v3531, %v3530
    %v3644 = vpack.c.b16 %v3533, %v3532
    %v3645 = vpack.c.b16 %v3535, %v3534
    %v3646 = vpack.c.b16 %v3537, %v3536
    %v3647 = vpack.c.b16 %v3539, %v3538
    %v3648 = vpack.c.b16 %v3541, %v3540
    %v3649 = vpack.c.b16 %v3543, %v3542
    %v3650 = vpack.c.b16 %v3545, %v3544
    %v3651 = vpack.c.b16 %v3547, %v3546
    %v3652 = vpack.c.b16 %v3549, %v3548
    %v3653 = vpack.c.b16 %v3551, %v3550
    %v3654 = vpack.c.b16 %v3553, %v3552
    %v3655 = vpack.c.b16 %v3555, %v3554
    %v3656 = vpack.c.b16 %v3557, %v3556
    %v3657 = vpack.c.b16 %v3559, %v3558
    %v3658 = vpack.c.b16 %v3561, %v3560
    %v3659 = vpack.c.b16 %v3563, %v3562
    %v3660 = vpack.c.b16 %v3565, %v3564
    %v3661 = vpack.c.b16 %v3567, %v3566
    %v3662 = vpack.c.b16 %v3569, %v3568
    %v3663 = vpack.c.b16 %v3571, %v3570
    %v3664 = vpack.c.b16 %v3573, %v3572
    %v3665 = vpack.c.b16 %v3575, %v3574
    %v3666 = vpack.c.b16 %v3577, %v3576
    %v3667 = vpack.c.b16 %v3579, %v3578
    %v3668 = vpack.c.b16 %v3581, %v3580
    %v3669 = vpack.c.b16 %v3583, %v3582
    %v3670 = vpack.c.b16 %v3585, %v3584
    %v3671 = vpack.c.b16 %v3587, %v3586
    %v3672 = vpack.c.b16 %v3589, %v3588
    %v3673 = vpack.c.b16 %v3591, %v3590
    %v3674 = vpack.c.b16 %v3593, %v3592
    %v3675 = vpack.c.b16 %v3595, %v3594
    %v3676 = vpack.c.b16 %v3597, %v3596
    %v3677 = vpack.c.b16 %v3599, %v3598
    %v3678 = vpack.c.b16 %v3601, %v3600
    %v3679 = vpack.c.b16 %v3603, %v3602
    %v3680 = vpack.c.b16 %v3605, %v3604
    %v3681 = vpack.c.b16 %v3607, %v3606
    %v3682 = vpack.c.b16 %v3609, %v3608
    %v3683 = vpack.c.b16 %v3611, %v3610
    %v3684 = vpack.c.b16 %v3613, %v3612
    %v3685 = vpack.c.b16 %v3615, %v3614
    %v3686 = vpack.c.b16 %v3617, %v3616
    %v3687 = vpack.c.b16 %v3619, %v3618
    %v3688 = vpack.c.b16 %v3621, %v3620
    %v3689 = vpack.c.b16 %v3623, %v3622
    %v3690 = vpack.c.b16 %v3625, %v3624
    %v3691 = vpack.c.b16 %v3627, %v3626
    %3756 = vmatprep.subr.bf16.mxu0 0
    %3757 = vmatpush1.bf16.msra.mxu0 %v3628
    %3758 = vmatprep.subr.bf16.mxu0 0
    %3759 = vmatpush1.bf16.msra.mxu0 %v3629
    %3760 = vmatprep.subr.bf16.mxu0 0
    %3761 = vmatpush1.bf16.msra.mxu0 %v3630
    %3762 = vmatprep.subr.bf16.mxu0 0
    %3763 = vmatpush1.bf16.msra.mxu0 %v3631
    %3764 = vmatprep.subr.bf16.mxu0 0
    %3765 = vmatpush1.bf16.msra.mxu0 %v3632
    %3766 = vmatprep.subr.bf16.mxu0 0
    %3767 = vmatpush1.bf16.msra.mxu0 %v3633
    %3768 = vmatprep.subr.bf16.mxu0 0
    %3769 = vmatpush1.bf16.msra.mxu0 %v3634
    %3770 = vmatprep.subr.bf16.mxu0 0
    %3771 = vmatpush1.bf16.msra.mxu0 %v3635
    %3772 = vmatprep.subr.bf16.mxu0 0
    %3773 = vmatpush1.bf16.msra.mxu0 %v3636
    %3774 = vmatprep.subr.bf16.mxu0 0
    %3775 = vmatpush1.bf16.msra.mxu0 %v3637
    %3776 = vmatprep.subr.bf16.mxu0 0
    %3777 = vmatpush1.bf16.msra.mxu0 %v3638
    %3778 = vmatprep.subr.bf16.mxu0 0
    %3779 = vmatpush1.bf16.msra.mxu0 %v3639
    %3780 = vmatprep.subr.bf16.mxu0 0
    %3781 = vmatpush1.bf16.msra.mxu0 %v3640
    %3782 = vmatprep.subr.bf16.mxu0 0
    %3783 = vmatpush1.bf16.msra.mxu0 %v3641
    %3784 = vmatprep.subr.bf16.mxu0 0
    %3785 = vmatpush1.bf16.msra.mxu0 %v3642
    %3786 = vmatprep.subr.bf16.mxu0 0
    %3787 = vmatpush1.bf16.msra.mxu0 %v3643
    %3788 = vmatprep.mubr.bf16.mxu0 %v3230
    %3789 = vmatmul.mubr.bf16.gmra.mrb[0].mxu0 %v3229
    %v3790 = vpop.f32.mrb[0].mxu0
    %v3791 = vadd.f32 %v3370, %v3790
    %v3792 = vpop.f32.mrb[0].mxu0
    %v3793 = vpop.f32.mrb[0].mxu0
    %v3794 = vpop.f32.mrb[0].mxu0
    %3795 = vdwg.mxu0
    %3796 = vmatprep.subr.bf16.mxu0 0
    %3797 = vmatpush1.bf16.msra.mxu0 %v3644
    %3798 = vmatprep.subr.bf16.mxu0 0
    %3799 = vmatpush1.bf16.msra.mxu0 %v3645
    %3800 = vmatprep.subr.bf16.mxu0 0
    %3801 = vmatpush1.bf16.msra.mxu0 %v3646
    %3802 = vmatprep.subr.bf16.mxu0 0
    %3803 = vmatpush1.bf16.msra.mxu0 %v3647
    %3804 = vmatprep.subr.bf16.mxu0 0
    %3805 = vmatpush1.bf16.msra.mxu0 %v3648
    %3806 = vmatprep.subr.bf16.mxu0 0
    %3807 = vmatpush1.bf16.msra.mxu0 %v3649
    %3808 = vmatprep.subr.bf16.mxu0 0
    %3809 = vmatpush1.bf16.msra.mxu0 %v3650
    %3810 = vmatprep.subr.bf16.mxu0 0
    %3811 = vmatpush1.bf16.msra.mxu0 %v3651
    %3812 = vmatprep.subr.bf16.mxu0 0
    %3813 = vmatpush1.bf16.msra.mxu0 %v3652
    %3814 = vmatprep.subr.bf16.mxu0 0
    %3815 = vmatpush1.bf16.msra.mxu0 %v3653
    %3816 = vmatprep.subr.bf16.mxu0 0
    %3817 = vmatpush1.bf16.msra.mxu0 %v3654
    %3818 = vmatprep.subr.bf16.mxu0 0
    %3819 = vmatpush1.bf16.msra.mxu0 %v3655
    %3820 = vmatprep.subr.bf16.mxu0 0
    %3821 = vmatpush1.bf16.msra.mxu0 %v3656
    %3822 = vmatprep.subr.bf16.mxu0 0
    %3823 = vmatpush1.bf16.msra.mxu0 %v3657
    %3824 = vmatprep.subr.bf16.mxu0 0
    %3825 = vmatpush1.bf16.msra.mxu0 %v3658
    %3826 = vmatprep.subr.bf16.mxu0 0
    %3827 = vmatpush1.bf16.msra.mxu0 %v3659
    %3828 = vmatprep.mubr.bf16.mxu0 %v3232
    %3829 = vmatmul.mubr.bf16.gmra.mrb[0].mxu0 %v3231
    %v3830 = vpop.f32.mrb[0].mxu0
    %v3831 = vadd.f32 %v3791, %v3830
    %v3832 = vpop.f32.mrb[0].mxu0
    %v3833 = vpop.f32.mrb[0].mxu0
    %v3834 = vpop.f32.mrb[0].mxu0
    %3835 = vdwg.mxu0
    %3836 = vmatprep.subr.bf16.mxu0 0
    %3837 = vmatpush1.bf16.msra.mxu0 %v3660
    %3838 = vmatprep.subr.bf16.mxu0 0
    %3839 = vmatpush1.bf16.msra.mxu0 %v3661
    %3840 = vmatprep.subr.bf16.mxu0 0
    %3841 = vmatpush1.bf16.msra.mxu0 %v3662
    %3842 = vmatprep.subr.bf16.mxu0 0
    %3843 = vmatpush1.bf16.msra.mxu0 %v3663
    %3844 = vmatprep.subr.bf16.mxu0 0
    %3845 = vmatpush1.bf16.msra.mxu0 %v3664
    %3846 = vmatprep.subr.bf16.mxu0 0
    %3847 = vmatpush1.bf16.msra.mxu0 %v3665
    %3848 = vmatprep.subr.bf16.mxu0 0
    %3849 = vmatpush1.bf16.msra.mxu0 %v3666
    %3850 = vmatprep.subr.bf16.mxu0 0
    %3851 = vmatpush1.bf16.msra.mxu0 %v3667
    %3852 = vmatprep.subr.bf16.mxu0 0
    %3853 = vmatpush1.bf16.msra.mxu0 %v3668
    %3854 = vmatprep.subr.bf16.mxu0 0
    %3855 = vmatpush1.bf16.msra.mxu0 %v3669
    %3856 = vmatprep.subr.bf16.mxu0 0
    %3857 = vmatpush1.bf16.msra.mxu0 %v3670
    %3858 = vmatprep.subr.bf16.mxu0 0
    %3859 = vmatpush1.bf16.msra.mxu0 %v3671
    %3860 = vmatprep.subr.bf16.mxu0 0
    %3861 = vmatpush1.bf16.msra.mxu0 %v3672
    %3862 = vmatprep.subr.bf16.mxu0 0
    %3863 = vmatpush1.bf16.msra.mxu0 %v3673
    %3864 = vmatprep.subr.bf16.mxu0 0
    %3865 = vmatpush1.bf16.msra.mxu0 %v3674
    %3866 = vmatprep.subr.bf16.mxu0 0
    %3867 = vmatpush1.bf16.msra.mxu0 %v3675
    %3868 = vmatprep.mubr.bf16.mxu0 %v3234
    %3869 = vmatmul.mubr.bf16.gmra.mrb[0].mxu0 %v3233
    %v3870 = vpop.f32.mrb[0].mxu0
    %v3871 = vadd.f32 %v3831, %v3870
    %v3872 = vpop.f32.mrb[0].mxu0
    %v3873 = vpop.f32.mrb[0].mxu0
    %v3874 = vpop.f32.mrb[0].mxu0
    %3875 = vdwg.mxu0
    %3876 = vmatprep.subr.bf16.mxu0 0
    %3877 = vmatpush1.bf16.msra.mxu0 %v3676
    %3878 = vmatprep.subr.bf16.mxu0 0
    %3879 = vmatpush1.bf16.msra.mxu0 %v3677
    %3880 = vmatprep.subr.bf16.mxu0 0
    %3881 = vmatpush1.bf16.msra.mxu0 %v3678
    %3882 = vmatprep.subr.bf16.mxu0 0
    %3883 = vmatpush1.bf16.msra.mxu0 %v3679
    %3884 = vmatprep.subr.bf16.mxu0 0
    %3885 = vmatpush1.bf16.msra.mxu0 %v3680
    %3886 = vmatprep.subr.bf16.mxu0 0
    %3887 = vmatpush1.bf16.msra.mxu0 %v3681
    %3888 = vmatprep.subr.bf16.mxu0 0
    %3889 = vmatpush1.bf16.msra.mxu0 %v3682
    %3890 = vmatprep.subr.bf16.mxu0 0
    %3891 = vmatpush1.bf16.msra.mxu0 %v3683
    %3892 = vmatprep.subr.bf16.mxu0 0
    %3893 = vmatpush1.bf16.msra.mxu0 %v3684
    %3894 = vmatprep.subr.bf16.mxu0 0
    %3895 = vmatpush1.bf16.msra.mxu0 %v3685
    %3896 = vmatprep.subr.bf16.mxu0 0
    %3897 = vmatpush1.bf16.msra.mxu0 %v3686
    %3898 = vmatprep.subr.bf16.mxu0 0
    %3899 = vmatpush1.bf16.msra.mxu0 %v3687
    %3900 = vmatprep.subr.bf16.mxu0 0
    %3901 = vmatpush1.bf16.msra.mxu0 %v3688
    %3902 = vmatprep.subr.bf16.mxu0 0
    %3903 = vmatpush1.bf16.msra.mxu0 %v3689
    %3904 = vmatprep.subr.bf16.mxu0 0
    %3905 = vmatpush1.bf16.msra.mxu0 %v3690
    %3906 = vmatprep.subr.bf16.mxu0 0
    %3907 = vmatpush1.bf16.msra.mxu0 %v3691
    %3908 = vmatprep.mubr.bf16.mxu0 %v3236
    %3909 = vmatmul.mubr.bf16.gmra.mrb[0].mxu0 %v3235
    %v3910 = vpop.f32.mrb[0].mxu0
    %v3911 = vadd.f32 %v3871, %v3910
    %v3912 = vpop.f32.mrb[0].mxu0
    %v3913 = vpop.f32.mrb[0].mxu0
    %v3914 = vpop.f32.mrb[0].mxu0
    %3915 = vdwg.mxu0
    %vm3916 = vcmask 254976
    %3917 = vst.msk [vmem:[#allocation2] sm:$0x3] %vm3916, %v3911
    %v3918 = vld [vmem:[%s1] sm:$0x3]
    %v3919 = vmul.f32 %v3911, 1.442695
    %v3920 = vpow.pop %v3919
    %3922 = vrot.lane.b32.xlu0 %v3920, 112
    %v3923 = vpop.permute.xlu0 %3922
    %v3925 = vmul.f32 %v3918, %v3923
    %v3926 = vadd.f32 %v3925, %v3911
    %v3927 = vmax.f32 %v3926, 0.0
    %v3928 = vpack.c.bf16 %v3926, %v3926
    %v3929 = vld [vmem:[%s6] sm:$0xff]
    %v3930 = vld [vmem:[%s6 + $0x8] sm:$0xff]
    %v3931 = vld [vmem:[%s6 + $0x10] sm:$0xff]
    %v3932 = vld [vmem:[%s6 + $0x18] sm:$0xff]
    %v3933 = vld [vmem:[%s6 + $0x20] sm:$0xff]
    %v3934 = vld [vmem:[%s6 + $0x28] sm:$0xff]
    %v3935 = vld [vmem:[%s6 + $0x30] sm:$0xff]
    %v3936 = vld [vmem:[%s6 + $0x38] sm:$0xff]
    %v3937 = vld [vmem:[%s7] sm:$0xff]
    %v3939 = vlaneseq
    %v3940 = vshrl.u32 %v3939, 7
    %v3941 = vsub.s32 0, %v3940
    %v3942 = vrot.slane %v3937, %v3941
    %v3943 = vlaneseq
    %v3944 = vshrl.u32 %v3943, 7
    %v3945 = vsub.s32 1, %v3944
    %v3946 = vrot.slane %v3937, %v3945
    %v3947 = vlaneseq
    %v3948 = vshrl.u32 %v3947, 7
    %v3949 = vsub.s32 2, %v3948
    %v3950 = vrot.slane %v3937, %v3949
    %v3951 = vlaneseq
    %v3952 = vshrl.u32 %v3951, 7
    %v3953 = vsub.s32 3, %v3952
    %v3954 = vrot.slane %v3937, %v3953
    %v3955 = vlaneseq
    %v3956 = vshrl.u32 %v3955, 7
    %v3957 = vsub.s32 4, %v3956
    %v3958 = vrot.slane %v3937, %v3957
    %v3959 = vlaneseq
    %v3960 = vshrl.u32 %v3959, 7
    %v3961 = vsub.s32 5, %v3960
    %v3962 = vrot.slane %v3937, %v3961
    %v3963 = vlaneseq
    %v3964 = vshrl.u32 %v3963, 7
    %v3965 = vsub.s32 6, %v3964
    %v3966 = vrot.slane %v3937, %v3965
    %v3967 = vlaneseq
    %v3968 = vshrl.u32 %v3967, 7
    %v3969 = vsub.s32 7, %v3968
    %v3970 = vrot.slane %v3937, %v3969
    %v3987 = vunpack.c.l.b16 %v3929
    %v3988 = vunpack.c.h.b16 %v3929
    %v3989 = vunpack.c.l.b16 %v3930
    %v3990 = vunpack.c.h.b16 %v3930
    %v3991 = vunpack.c.l.b16 %v3931
    %v3992 = vunpack.c.h.b16 %v3931
    %v3993 = vunpack.c.l.b16 %v3932
    %v3994 = vunpack.c.h.b16 %v3932
    %v3995 = vunpack.c.l.b16 %v3933
    %v3996 = vunpack.c.h.b16 %v3933
    %v3997 = vunpack.c.l.b16 %v3934
    %v3998 = vunpack.c.h.b16 %v3934
    %v3999 = vunpack.c.l.b16 %v3935
    %v4000 = vunpack.c.h.b16 %v3935
    %v4001 = vunpack.c.l.b16 %v3936
    %v4002 = vunpack.c.h.b16 %v3936
    %v4003 = vpack.c.b16 %v3995, %v3987
    %v4004 = vpack.c.b16 %v3996, %v3988
    %v4005 = vpack.c.b16 %v3997, %v3989
    %v4006 = vpack.c.b16 %v3998, %v3990
    %v4007 = vpack.c.b16 %v3999, %v3991
    %v4008 = vpack.c.b16 %v4000, %v3992
    %v4009 = vpack.c.b16 %v4001, %v3993
    %v4010 = vpack.c.b16 %v4002, %v3994
    %vm4019 = vcmask 130048
    %v4021 = vsel %vm4019, %v3928, 0
    %4023 = vmatprep.subr.bf16.mxu0 %v4004
    %4024 = vmatpush1.bf16.msra.mxu0 %v4003
    %4025 = vmatprep.subr.bf16.mxu0 0
    %4026 = vmatpush1.bf16.msra.mxu0 0
    %4027 = vmatprep.subr.bf16.mxu0 0
    %4028 = vmatpush1.bf16.msra.mxu0 0
    %4029 = vmatprep.subr.bf16.mxu0 0
    %4030 = vmatpush1.bf16.msra.mxu0 0
    %4031 = vmatprep.subr.bf16.mxu0 0
    %4032 = vmatpush1.bf16.msra.mxu0 0
    %4033 = vmatprep.subr.bf16.mxu0 0
    %4034 = vmatpush1.bf16.msra.mxu0 0
    %4035 = vmatprep.subr.bf16.mxu0 0
    %4036 = vmatpush1.bf16.msra.mxu0 0
    %4037 = vmatprep.subr.bf16.mxu0 0
    %4038 = vmatpush1.bf16.msra.mxu0 0
    %4039 = vmatprep.subr.bf16.mxu0 0
    %4040 = vmatpush1.bf16.msra.mxu0 0
    %4041 = vmatprep.subr.bf16.mxu0 0
    %4042 = vmatpush1.bf16.msra.mxu0 0
    %4043 = vmatprep.subr.bf16.mxu0 0
    %4044 = vmatpush1.bf16.msra.mxu0 0
    %4045 = vmatprep.subr.bf16.mxu0 0
    %4046 = vmatpush1.bf16.msra.mxu0 0
    %4047 = vmatprep.subr.bf16.mxu0 0
    %4048 = vmatpush1.bf16.msra.mxu0 0
    %4049 = vmatprep.subr.bf16.mxu0 0
    %4050 = vmatpush1.bf16.msra.mxu0 0
    %4051 = vmatprep.subr.bf16.mxu0 0
    %4052 = vmatpush1.bf16.msra.mxu0 0
    %4053 = vmatprep.subr.bf16.mxu0 0
    %4054 = vmatpush1.bf16.msra.mxu0 0
    %4055 = vmatprep.mubr.bf16.mxu0 0
    %4056 = vmatmul.mubr.bf16.gmra.mrb[0].mxu0 %v4021
    %v4057 = vpop.f32.mrb[0].mxu0
    %v4058 = vadd.f32 %v3942, %v4057
    %v4059 = vpop.f32.mrb[0].mxu0
    %v4060 = vadd.f32 %v3946, %v4059
    %v4061 = vpop.f32.mrb[0].mxu0
    %v4062 = vpop.f32.mrb[0].mxu0
    %4063 = vdwg.mxu0
    %4064 = vmatprep.subr.bf16.mxu0 %v4006
    %4065 = vmatpush1.bf16.msra.mxu0 %v4005
    %4066 = vmatprep.subr.bf16.mxu0 0
    %4067 = vmatpush1.bf16.msra.mxu0 0
    %4068 = vmatprep.subr.bf16.mxu0 0
    %4069 = vmatpush1.bf16.msra.mxu0 0
    %4070 = vmatprep.subr.bf16.mxu0 0
    %4071 = vmatpush1.bf16.msra.mxu0 0
    %4072 = vmatprep.subr.bf16.mxu0 0
    %4073 = vmatpush1.bf16.msra.mxu0 0
    %4074 = vmatprep.subr.bf16.mxu0 0
    %4075 = vmatpush1.bf16.msra.mxu0 0
    %4076 = vmatprep.subr.bf16.mxu0 0
    %4077 = vmatpush1.bf16.msra.mxu0 0
    %4078 = vmatprep.subr.bf16.mxu0 0
    %4079 = vmatpush1.bf16.msra.mxu0 0
    %4080 = vmatprep.subr.bf16.mxu0 0
    %4081 = vmatpush1.bf16.msra.mxu0 0
    %4082 = vmatprep.subr.bf16.mxu0 0
    %4083 = vmatpush1.bf16.msra.mxu0 0
    %4084 = vmatprep.subr.bf16.mxu0 0
    %4085 = vmatpush1.bf16.msra.mxu0 0
    %4086 = vmatprep.subr.bf16.mxu0 0
    %4087 = vmatpush1.bf16.msra.mxu0 0
    %4088 = vmatprep.subr.bf16.mxu0 0
    %4089 = vmatpush1.bf16.msra.mxu0 0
    %4090 = vmatprep.subr.bf16.mxu0 0
    %4091 = vmatpush1.bf16.msra.mxu0 0
    %4092 = vmatprep.subr.bf16.mxu0 0
    %4093 = vmatpush1.bf16.msra.mxu0 0
    %4094 = vmatprep.subr.bf16.mxu0 0
    %4095 = vmatpush1.bf16.msra.mxu0 0
    %4096 = vmatprep.mubr.bf16.mxu0 0
    %4097 = vmatmul.mubr.bf16.gmra.mrb[0].mxu0 %v4021
    %v4098 = vpop.f32.mrb[0].mxu0
    %v4099 = vadd.f32 %v3950, %v4098
    %v4100 = vpop.f32.mrb[0].mxu0
    %v4101 = vadd.f32 %v3954, %v4100
    %v4102 = vpop.f32.mrb[0].mxu0
    %v4103 = vpop.f32.mrb[0].mxu0
    %4104 = vdwg.mxu0
    %4105 = vmatprep.subr.bf16.mxu0 %v4008
    %4106 = vmatpush1.bf16.msra.mxu0 %v4007
    %4107 = vmatprep.subr.bf16.mxu0 0
    %4108 = vmatpush1.bf16.msra.mxu0 0
    %4109 = vmatprep.subr.bf16.mxu0 0
    %4110 = vmatpush1.bf16.msra.mxu0 0
    %4111 = vmatprep.subr.bf16.mxu0 0
    %4112 = vmatpush1.bf16.msra.mxu0 0
    %4113 = vmatprep.subr.bf16.mxu0 0
    %4114 = vmatpush1.bf16.msra.mxu0 0
    %4115 = vmatprep.subr.bf16.mxu0 0
    %4116 = vmatpush1.bf16.msra.mxu0 0
    %4117 = vmatprep.subr.bf16.mxu0 0
    %4118 = vmatpush1.bf16.msra.mxu0 0
    %4119 = vmatprep.subr.bf16.mxu0 0
    %4120 = vmatpush1.bf16.msra.mxu0 0
    %4121 = vmatprep.subr.bf16.mxu0 0
    %4122 = vmatpush1.bf16.msra.mxu0 0
    %4123 = vmatprep.subr.bf16.mxu0 0
    %4124 = vmatpush1.bf16.msra.mxu0 0
    %4125 = vmatprep.subr.bf16.mxu0 0
    %4126 = vmatpush1.bf16.msra.mxu0 0
    %4127 = vmatprep.subr.bf16.mxu0 0
    %4128 = vmatpush1.bf16.msra.mxu0 0
    %4129 = vmatprep.subr.bf16.mxu0 0
    %4130 = vmatpush1.bf16.msra.mxu0 0
    %4131 = vmatprep.subr.bf16.mxu0 0
    %4132 = vmatpush1.bf16.msra.mxu0 0
    %4133 = vmatprep.subr.bf16.mxu0 0
    %4134 = vmatpush1.bf16.msra.mxu0 0
    %4135 = vmatprep.subr.bf16.mxu0 0
    %4136 = vmatpush1.bf16.msra.mxu0 0
    %4137 = vmatprep.mubr.bf16.mxu0 0
    %4138 = vmatmul.mubr.bf16.gmra.mrb[0].mxu0 %v4021
    %v4139 = vpop.f32.mrb[0].mxu0
    %v4140 = vadd.f32 %v3958, %v4139
    %v4141 = vpop.f32.mrb[0].mxu0
    %v4142 = vadd.f32 %v3962, %v4141
    %v4143 = vpop.f32.mrb[0].mxu0
    %v4144 = vpop.f32.mrb[0].mxu0
    %4145 = vdwg.mxu0
    %4146 = vmatprep.subr.bf16.mxu0 %v4010
    %4147 = vmatpush1.bf16.msra.mxu0 %v4009
    %4148 = vmatprep.subr.bf16.mxu0 0
    %4149 = vmatpush1.bf16.msra.mxu0 0
    %4150 = vmatprep.subr.bf16.mxu0 0
    %4151 = vmatpush1.bf16.msra.mxu0 0
    %4152 = vmatprep.subr.bf16.mxu0 0
    %4153 = vmatpush1.bf16.msra.mxu0 0
    %4154 = vmatprep.subr.bf16.mxu0 0
    %4155 = vmatpush1.bf16.msra.mxu0 0
    %4156 = vmatprep.subr.bf16.mxu0 0
    %4157 = vmatpush1.bf16.msra.mxu0 0
    %4158 = vmatprep.subr.bf16.mxu0 0
    %4159 = vmatpush1.bf16.msra.mxu0 0
    %4160 = vmatprep.subr.bf16.mxu0 0
    %4161 = vmatpush1.bf16.msra.mxu0 0
    %4162 = vmatprep.subr.bf16.mxu0 0
    %4163 = vmatpush1.bf16.msra.mxu0 0
    %4164 = vmatprep.subr.bf16.mxu0 0
    %4165 = vmatpush1.bf16.msra.mxu0 0
    %4166 = vmatprep.subr.bf16.mxu0 0
    %4167 = vmatpush1.bf16.msra.mxu0 0
    %4168 = vmatprep.subr.bf16.mxu0 0
    %4169 = vmatpush1.bf16.msra.mxu0 0
    %4170 = vmatprep.subr.bf16.mxu0 0
    %4171 = vmatpush1.bf16.msra.mxu0 0
    %4172 = vmatprep.subr.bf16.mxu0 0
    %4173 = vmatpush1.bf16.msra.mxu0 0
    %4174 = vmatprep.subr.bf16.mxu0 0
    %4175 = vmatpush1.bf16.msra.mxu0 0
    %4176 = vmatprep.subr.bf16.mxu0 0
    %4177 = vmatpush1.bf16.msra.mxu0 0
    %4178 = vmatprep.mubr.bf16.mxu0 0
    %4179 = vmatmul.mubr.bf16.gmra.mrb[0].mxu0 %v4021
    %v4180 = vpop.f32.mrb[0].mxu0
    %v4181 = vadd.f32 %v3966, %v4180
    %v4182 = vpop.f32.mrb[0].mxu0
    %v4183 = vadd.f32 %v3970, %v4182
    %v4184 = vpop.f32.mrb[0].mxu0
    %v4185 = vpop.f32.mrb[0].mxu0
    %4186 = vdwg.mxu0
    %v4187 = vmax.f32 %v4058, 0.0
    %v4188 = vmax.f32 %v4060, 0.0
    %v4189 = vmax.f32 %v4099, 0.0
    %v4190 = vmax.f32 %v4101, 0.0
    %v4191 = vmax.f32 %v4140, 0.0
    %v4192 = vmax.f32 %v4142, 0.0
    %v4193 = vmax.f32 %v4181, 0.0
    %v4194 = vmax.f32 %v4183, 0.0
    %v4197 = vrot.slane %v4189, 6
    %v4198 = vrot.slane %v4190, 6
    %v4203 = vrot.slane %v4191, 4
    %v4204 = vrot.slane %v4192, 4
    %v4209 = vrot.slane %v4193, 2
    %v4210 = vrot.slane %v4194, 2
    %vm4213 = vcmask 1041408
    %v4214 = vsel %vm4213, %v4187, %v4197
    %v4215 = vsel %vm4213, %v4188, %v4198
    %vm4216 = vcmask 1043456
    %v4217 = vsel %vm4216, %v4214, %v4203
    %v4218 = vsel %vm4216, %v4215, %v4204
    %vm4219 = vcmask 1045504
    %v4220 = vsel %vm4219, %v4217, %v4209
    %v4221 = vsel %vm4219, %v4218, %v4210
    %v4222 = vpack.c.bf16 %v4220, %v4220
    %v4223 = vpack.c.bf16 %v4221, %v4221
    %v4224 = vld [vmem:[%s8] sm:$0xff]
    %v4225 = vld [vmem:[%s8 + $0x8] sm:$0xff]
    %v4226 = vld [vmem:[%s8 + $0x10] sm:$0xff]
    %v4227 = vld [vmem:[%s8 + $0x18] sm:$0xff]
    %v4228 = vld [vmem:[%s8 + $0x20] sm:$0xff]
    %v4229 = vld [vmem:[%s8 + $0x28] sm:$0xff]
    %v4230 = vld [vmem:[%s8 + $0x30] sm:$0xff]
    %v4231 = vld [vmem:[%s8 + $0x38] sm:$0xff]
    %v4232 = vld [vmem:[%s8 + $0x40] sm:$0xff]
    %v4233 = vld [vmem:[%s8 + $0x48] sm:$0xff]
    %v4234 = vld [vmem:[%s8 + $0x50] sm:$0xff]
    %v4235 = vld [vmem:[%s8 + $0x58] sm:$0xff]
    %v4236 = vld [vmem:[%s8 + $0x60] sm:$0xff]
    %v4237 = vld [vmem:[%s8 + $0x68] sm:$0xff]
    %v4238 = vld [vmem:[%s8 + $0x70] sm:$0xff]
    %v4239 = vld [vmem:[%s8 + $0x78] sm:$0xff]
    %v4240 = vld [vmem:[%s8 + $0x80] sm:$0xff]
    %v4241 = vld [vmem:[%s8 + $0x88] sm:$0xff]
    %v4242 = vld [vmem:[%s8 + $0x90] sm:$0xff]
    %v4243 = vld [vmem:[%s8 + $0x98] sm:$0xff]
    %v4244 = vld [vmem:[%s8 + $0xa0] sm:$0xff]
    %v4245 = vld [vmem:[%s8 + $0xa8] sm:$0xff]
    %v4246 = vld [vmem:[%s8 + $0xb0] sm:$0xff]
    %v4247 = vld [vmem:[%s8 + $0xb8] sm:$0xff]
    %v4248 = vld [vmem:[%s8 + $0xc0] sm:$0xff]
    %v4249 = vld [vmem:[%s8 + $0xc8] sm:$0xff]
    %v4250 = vld [vmem:[%s8 + $0xd0] sm:$0xff]
    %v4251 = vld [vmem:[%s8 + $0xd8] sm:$0xff]
    %v4252 = vld [vmem:[%s8 + $0xe0] sm:$0xff]
    %v4253 = vld [vmem:[%s8 + $0xe8] sm:$0xff]
    %v4254 = vld [vmem:[%s8 + $0xf0] sm:$0xff]
    %v4255 = vld [vmem:[%s8 + $0xf8] sm:$0xff]
    %v4256 = vld [vmem:[%s8 + $0x100] sm:$0xff]
    %v4257 = vld [vmem:[%s8 + $0x108] sm:$0xff]
    %v4258 = vld [vmem:[%s8 + $0x110] sm:$0xff]
    %v4259 = vld [vmem:[%s8 + $0x118] sm:$0xff]
    %v4260 = vld [vmem:[%s8 + $0x120] sm:$0xff]
    %v4261 = vld [vmem:[%s8 + $0x128] sm:$0xff]
    %v4262 = vld [vmem:[%s8 + $0x130] sm:$0xff]
    %v4263 = vld [vmem:[%s8 + $0x138] sm:$0xff]
    %v4264 = vld [vmem:[%s8 + $0x140] sm:$0xff]
    %v4265 = vld [vmem:[%s8 + $0x148] sm:$0xff]
    %v4266 = vld [vmem:[%s8 + $0x150] sm:$0xff]
    %v4267 = vld [vmem:[%s8 + $0x158] sm:$0xff]
    %v4268 = vld [vmem:[%s8 + $0x160] sm:$0xff]
    %v4269 = vld [vmem:[%s8 + $0x168] sm:$0xff]
    %v4270 = vld [vmem:[%s8 + $0x170] sm:$0xff]
    %v4271 = vld [vmem:[%s8 + $0x178] sm:$0xff]
    %v4272 = vld [vmem:[%s8 + $0x180] sm:$0xff]
    %v4273 = vld [vmem:[%s8 + $0x188] sm:$0xff]
    %v4274 = vld [vmem:[%s8 + $0x190] sm:$0xff]
    %v4275 = vld [vmem:[%s8 + $0x198] sm:$0xff]
    %v4276 = vld [vmem:[%s8 + $0x1a0] sm:$0xff]
    %v4277 = vld [vmem:[%s8 + $0x1a8] sm:$0xff]
    %v4278 = vld [vmem:[%s8 + $0x1b0] sm:$0xff]
    %v4279 = vld [vmem:[%s8 + $0x1b8] sm:$0xff]
    %v4280 = vld [vmem:[%s8 + $0x1c0] sm:$0xff]
    %v4281 = vld [vmem:[%s8 + $0x1c8] sm:$0xff]
    %v4282 = vld [vmem:[%s8 + $0x1d0] sm:$0xff]
    %v4283 = vld [vmem:[%s8 + $0x1d8] sm:$0xff]
    %v4284 = vld [vmem:[%s8 + $0x1e0] sm:$0xff]
    %v4285 = vld [vmem:[%s8 + $0x1e8] sm:$0xff]
    %v4286 = vld [vmem:[%s8 + $0x1f0] sm:$0xff]
    %v4287 = vld [vmem:[%s8 + $0x1f8] sm:$0xff]
    %v4288 = vld [vmem:[%s8 + $0x200] sm:$0xff]
    %v4289 = vld [vmem:[%s8 + $0x208] sm:$0xff]
    %v4290 = vld [vmem:[%s8 + $0x210] sm:$0xff]
    %v4291 = vld [vmem:[%s8 + $0x218] sm:$0xff]
    %v4292 = vld [vmem:[%s8 + $0x220] sm:$0xff]
    %v4293 = vld [vmem:[%s8 + $0x228] sm:$0xff]
    %v4294 = vld [vmem:[%s8 + $0x230] sm:$0xff]
    %v4295 = vld [vmem:[%s8 + $0x238] sm:$0xff]
    %v4296 = vld [vmem:[%s8 + $0x240] sm:$0xff]
    %v4297 = vld [vmem:[%s8 + $0x248] sm:$0xff]
    %v4298 = vld [vmem:[%s8 + $0x250] sm:$0xff]
    %v4299 = vld [vmem:[%s8 + $0x258] sm:$0xff]
    %v4300 = vld [vmem:[%s8 + $0x260] sm:$0xff]
    %v4301 = vld [vmem:[%s8 + $0x268] sm:$0xff]
    %v4302 = vld [vmem:[%s8 + $0x270] sm:$0xff]
    %v4303 = vld [vmem:[%s8 + $0x278] sm:$0xff]
    %v4304 = vld [vmem:[%s8 + $0x280] sm:$0xff]
    %v4305 = vld [vmem:[%s8 + $0x288] sm:$0xff]
    %v4306 = vld [vmem:[%s8 + $0x290] sm:$0xff]
    %v4307 = vld [vmem:[%s8 + $0x298] sm:$0xff]
    %v4308 = vld [vmem:[%s8 + $0x2a0] sm:$0xff]
    %v4309 = vld [vmem:[%s8 + $0x2a8] sm:$0xff]
    %v4310 = vld [vmem:[%s8 + $0x2b0] sm:$0xff]
    %v4311 = vld [vmem:[%s8 + $0x2b8] sm:$0xff]
    %v4312 = vld [vmem:[%s8 + $0x2c0] sm:$0xff]
    %v4313 = vld [vmem:[%s8 + $0x2c8] sm:$0xff]
    %v4314 = vld [vmem:[%s8 + $0x2d0] sm:$0xff]
    %v4315 = vld [vmem:[%s8 + $0x2d8] sm:$0xff]
    %v4316 = vld [vmem:[%s8 + $0x2e0] sm:$0xff]
    %v4317 = vld [vmem:[%s8 + $0x2e8] sm:$0xff]
    %v4318 = vld [vmem:[%s8 + $0x2f0] sm:$0xff]
    %v4319 = vld [vmem:[%s8 + $0x2f8] sm:$0xff]
    %v4320 = vld [vmem:[%s8 + $0x300] sm:$0xff]
    %v4321 = vld [vmem:[%s8 + $0x308] sm:$0xff]
    %v4322 = vld [vmem:[%s8 + $0x310] sm:$0xff]
    %v4323 = vld [vmem:[%s8 + $0x318] sm:$0xff]
    %v4324 = vld [vmem:[%s8 + $0x320] sm:$0xff]
    %v4325 = vld [vmem:[%s8 + $0x328] sm:$0xff]
    %v4326 = vld [vmem:[%s8 + $0x330] sm:$0xff]
    %v4327 = vld [vmem:[%s8 + $0x338] sm:$0xff]
    %v4328 = vld [vmem:[%s8 + $0x340] sm:$0xff]
    %v4329 = vld [vmem:[%s8 + $0x348] sm:$0xff]
    %v4330 = vld [vmem:[%s8 + $0x350] sm:$0xff]
    %v4331 = vld [vmem:[%s8 + $0x358] sm:$0xff]
    %v4332 = vld [vmem:[%s8 + $0x360] sm:$0xff]
    %v4333 = vld [vmem:[%s8 + $0x368] sm:$0xff]
    %v4334 = vld [vmem:[%s8 + $0x370] sm:$0xff]
    %v4335 = vld [vmem:[%s8 + $0x378] sm:$0xff]
    %v4336 = vld [vmem:[%s8 + $0x380] sm:$0xff]
    %v4337 = vld [vmem:[%s8 + $0x388] sm:$0xff]
    %v4338 = vld [vmem:[%s8 + $0x390] sm:$0xff]
    %v4339 = vld [vmem:[%s8 + $0x398] sm:$0xff]
    %v4340 = vld [vmem:[%s8 + $0x3a0] sm:$0xff]
    %v4341 = vld [vmem:[%s8 + $0x3a8] sm:$0xff]
    %v4342 = vld [vmem:[%s8 + $0x3b0] sm:$0xff]
    %v4343 = vld [vmem:[%s8 + $0x3b8] sm:$0xff]
    %v4344 = vld [vmem:[%s8 + $0x3c0] sm:$0xff]
    %v4345 = vld [vmem:[%s8 + $0x3c8] sm:$0xff]
    %v4346 = vld [vmem:[%s8 + $0x3d0] sm:$0xff]
    %v4347 = vld [vmem:[%s8 + $0x3d8] sm:$0xff]
    %v4348 = vld [vmem:[%s8 + $0x3e0] sm:$0xff]
    %v4349 = vld [vmem:[%s8 + $0x3e8] sm:$0xff]
    %v4350 = vld [vmem:[%s8 + $0x3f0] sm:$0xff]
    %v4351 = vld [vmem:[%s8 + $0x3f8] sm:$0xff]
    %v4352 = vld [vmem:[%s8 + $0x400] sm:$0xff]
    %v4353 = vld [vmem:[%s8 + $0x408] sm:$0xff]
    %v4354 = vld [vmem:[%s8 + $0x410] sm:$0xff]
    %v4355 = vld [vmem:[%s8 + $0x418] sm:$0xff]
    %v4356 = vld [vmem:[%s8 + $0x420] sm:$0xff]
    %v4357 = vld [vmem:[%s8 + $0x428] sm:$0xff]
    %v4358 = vld [vmem:[%s8 + $0x430] sm:$0xff]
    %v4359 = vld [vmem:[%s8 + $0x438] sm:$0xff]
    %v4360 = vld [vmem:[%s8 + $0x440] sm:$0xff]
    %v4361 = vld [vmem:[%s8 + $0x448] sm:$0xff]
    %v4362 = vld [vmem:[%s8 + $0x450] sm:$0xff]
    %v4363 = vld [vmem:[%s8 + $0x458] sm:$0xff]
    %v4364 = vld [vmem:[%s8 + $0x460] sm:$0xff]
    %v4365 = vld [vmem:[%s8 + $0x468] sm:$0xff]
    %v4366 = vld [vmem:[%s8 + $0x470] sm:$0xff]
    %v4367 = vld [vmem:[%s8 + $0x478] sm:$0xff]
    %v4368 = vld [vmem:[%s8 + $0x480] sm:$0xff]
    %v4369 = vld [vmem:[%s8 + $0x488] sm:$0xff]
    %v4370 = vld [vmem:[%s8 + $0x490] sm:$0xff]
    %v4371 = vld [vmem:[%s8 + $0x498] sm:$0xff]
    %v4372 = vld [vmem:[%s8 + $0x4a0] sm:$0xff]
    %v4373 = vld [vmem:[%s8 + $0x4a8] sm:$0xff]
    %v4374 = vld [vmem:[%s8 + $0x4b0] sm:$0xff]
    %v4375 = vld [vmem:[%s8 + $0x4b8] sm:$0xff]
    %v4376 = vld [vmem:[%s8 + $0x4c0] sm:$0xff]
    %v4377 = vld [vmem:[%s8 + $0x4c8] sm:$0xff]
    %v4378 = vld [vmem:[%s8 + $0x4d0] sm:$0xff]
    %v4379 = vld [vmem:[%s8 + $0x4d8] sm:$0xff]
    %v4380 = vld [vmem:[%s8 + $0x4e0] sm:$0xff]
    %v4381 = vld [vmem:[%s8 + $0x4e8] sm:$0xff]
    %v4382 = vld [vmem:[%s8 + $0x4f0] sm:$0xff]
    %v4383 = vld [vmem:[%s8 + $0x4f8] sm:$0xff]
    %v4384 = vld [vmem:[%s8 + $0x500] sm:$0xff]
    %v4385 = vld [vmem:[%s8 + $0x508] sm:$0xff]
    %v4386 = vld [vmem:[%s8 + $0x510] sm:$0xff]
    %v4387 = vld [vmem:[%s8 + $0x518] sm:$0xff]
    %v4388 = vld [vmem:[%s8 + $0x520] sm:$0xff]
    %v4389 = vld [vmem:[%s8 + $0x528] sm:$0xff]
    %v4390 = vld [vmem:[%s8 + $0x530] sm:$0xff]
    %v4391 = vld [vmem:[%s8 + $0x538] sm:$0xff]
    %v4392 = vld [vmem:[%s8 + $0x540] sm:$0xff]
    %v4393 = vld [vmem:[%s8 + $0x548] sm:$0xff]
    %v4394 = vld [vmem:[%s8 + $0x550] sm:$0xff]
    %v4395 = vld [vmem:[%s8 + $0x558] sm:$0xff]
    %v4396 = vld [vmem:[%s8 + $0x560] sm:$0xff]
    %v4397 = vld [vmem:[%s8 + $0x568] sm:$0xff]
    %v4398 = vld [vmem:[%s8 + $0x570] sm:$0xff]
    %v4399 = vld [vmem:[%s8 + $0x578] sm:$0xff]
    %v4400 = vld [vmem:[%s8 + $0x580] sm:$0xff]
    %v4401 = vld [vmem:[%s8 + $0x588] sm:$0xff]
    %v4402 = vld [vmem:[%s8 + $0x590] sm:$0xff]
    %v4403 = vld [vmem:[%s8 + $0x598] sm:$0xff]
    %v4404 = vld [vmem:[%s8 + $0x5a0] sm:$0xff]
    %v4405 = vld [vmem:[%s8 + $0x5a8] sm:$0xff]
    %v4406 = vld [vmem:[%s8 + $0x5b0] sm:$0xff]
    %v4407 = vld [vmem:[%s8 + $0x5b8] sm:$0xff]
    %v4408 = vld [vmem:[%s8 + $0x5c0] sm:$0xff]
    %v4409 = vld [vmem:[%s8 + $0x5c8] sm:$0xff]
    %v4410 = vld [vmem:[%s8 + $0x5d0] sm:$0xff]
    %v4411 = vld [vmem:[%s8 + $0x5d8] sm:$0xff]
    %v4412 = vld [vmem:[%s8 + $0x5e0] sm:$0xff]
    %v4413 = vld [vmem:[%s8 + $0x5e8] sm:$0xff]
    %v4414 = vld [vmem:[%s8 + $0x5f0] sm:$0xff]
    %v4415 = vld [vmem:[%s8 + $0x5f8] sm:$0xff]
    %v4416 = vld [vmem:[%s8 + $0x600] sm:$0xff]
    %v4417 = vld [vmem:[%s8 + $0x608] sm:$0xff]
    %v4418 = vld [vmem:[%s8 + $0x610] sm:$0xff]
    %v4419 = vld [vmem:[%s8 + $0x618] sm:$0xff]
    %v4420 = vld [vmem:[%s8 + $0x620] sm:$0xff]
    %v4421 = vld [vmem:[%s8 + $0x628] sm:$0xff]
    %v4422 = vld [vmem:[%s8 + $0x630] sm:$0xff]
    %v4423 = vld [vmem:[%s8 + $0x638] sm:$0xff]
    %v4424 = vld [vmem:[%s8 + $0x640] sm:$0xff]
    %v4425 = vld [vmem:[%s8 + $0x648] sm:$0xff]
    %v4426 = vld [vmem:[%s8 + $0x650] sm:$0xff]
    %v4427 = vld [vmem:[%s8 + $0x658] sm:$0xff]
    %v4428 = vld [vmem:[%s8 + $0x660] sm:$0xff]
    %v4429 = vld [vmem:[%s8 + $0x668] sm:$0xff]
    %v4430 = vld [vmem:[%s8 + $0x670] sm:$0xff]
    %v4431 = vld [vmem:[%s8 + $0x678] sm:$0xff]
    %v4432 = vld [vmem:[%s8 + $0x680] sm:$0xff]
    %v4433 = vld [vmem:[%s8 + $0x688] sm:$0xff]
    %v4434 = vld [vmem:[%s8 + $0x690] sm:$0xff]
    %v4435 = vld [vmem:[%s8 + $0x698] sm:$0xff]
    %v4436 = vld [vmem:[%s8 + $0x6a0] sm:$0xff]
    %v4437 = vld [vmem:[%s8 + $0x6a8] sm:$0xff]
    %v4438 = vld [vmem:[%s8 + $0x6b0] sm:$0xff]
    %v4439 = vld [vmem:[%s8 + $0x6b8] sm:$0xff]
    %v4440 = vld [vmem:[%s8 + $0x6c0] sm:$0xff]
    %v4441 = vld [vmem:[%s8 + $0x6c8] sm:$0xff]
    %v4442 = vld [vmem:[%s8 + $0x6d0] sm:$0xff]
    %v4443 = vld [vmem:[%s8 + $0x6d8] sm:$0xff]
    %v4444 = vld [vmem:[%s8 + $0x6e0] sm:$0xff]
    %v4445 = vld [vmem:[%s8 + $0x6e8] sm:$0xff]
    %v4446 = vld [vmem:[%s8 + $0x6f0] sm:$0xff]
    %v4447 = vld [vmem:[%s8 + $0x6f8] sm:$0xff]
    %v4448 = vld [vmem:[%s8 + $0x700] sm:$0xff]
    %v4449 = vld [vmem:[%s8 + $0x708] sm:$0xff]
    %v4450 = vld [vmem:[%s8 + $0x710] sm:$0xff]
    %v4451 = vld [vmem:[%s8 + $0x718] sm:$0xff]
    %v4452 = vld [vmem:[%s8 + $0x720] sm:$0xff]
    %v4453 = vld [vmem:[%s8 + $0x728] sm:$0xff]
    %v4454 = vld [vmem:[%s8 + $0x730] sm:$0xff]
    %v4455 = vld [vmem:[%s8 + $0x738] sm:$0xff]
    %v4456 = vld [vmem:[%s8 + $0x740] sm:$0xff]
    %v4457 = vld [vmem:[%s8 + $0x748] sm:$0xff]
    %v4458 = vld [vmem:[%s8 + $0x750] sm:$0xff]
    %v4459 = vld [vmem:[%s8 + $0x758] sm:$0xff]
    %v4460 = vld [vmem:[%s8 + $0x760] sm:$0xff]
    %v4461 = vld [vmem:[%s8 + $0x768] sm:$0xff]
    %v4462 = vld [vmem:[%s8 + $0x770] sm:$0xff]
    %v4463 = vld [vmem:[%s8 + $0x778] sm:$0xff]
    %v4464 = vld [vmem:[%s8 + $0x780] sm:$0xff]
    %v4465 = vld [vmem:[%s8 + $0x788] sm:$0xff]
    %v4466 = vld [vmem:[%s8 + $0x790] sm:$0xff]
    %v4467 = vld [vmem:[%s8 + $0x798] sm:$0xff]
    %v4468 = vld [vmem:[%s8 + $0x7a0] sm:$0xff]
    %v4469 = vld [vmem:[%s8 + $0x7a8] sm:$0xff]
    %v4470 = vld [vmem:[%s8 + $0x7b0] sm:$0xff]
    %v4471 = vld [vmem:[%s8 + $0x7b8] sm:$0xff]
    %v4472 = vld [vmem:[%s8 + $0x7c0] sm:$0xff]
    %v4473 = vld [vmem:[%s8 + $0x7c8] sm:$0xff]
    %v4474 = vld [vmem:[%s8 + $0x7d0] sm:$0xff]
    %v4475 = vld [vmem:[%s8 + $0x7d8] sm:$0xff]
    %v4476 = vld [vmem:[%s8 + $0x7e0] sm:$0xff]
    %v4477 = vld [vmem:[%s8 + $0x7e8] sm:$0xff]
    %v4478 = vld [vmem:[%s8 + $0x7f0] sm:$0xff]
    %v4479 = vld [vmem:[%s8 + $0x7f8] sm:$0xff]
    %v4736 = vunpack.c.l.b16 %v4224
    %v4737 = vunpack.c.h.b16 %v4224
    %v4738 = vunpack.c.l.b16 %v4225
    %v4739 = vunpack.c.h.b16 %v4225
    %v4740 = vunpack.c.l.b16 %v4226
    %v4741 = vunpack.c.h.b16 %v4226
    %v4742 = vunpack.c.l.b16 %v4227
    %v4743 = vunpack.c.h.b16 %v4227
    %v4744 = vunpack.c.l.b16 %v4228
    %v4745 = vunpack.c.h.b16 %v4228
    %v4746 = vunpack.c.l.b16 %v4229
    %v4747 = vunpack.c.h.b16 %v4229
    %v4748 = vunpack.c.l.b16 %v4230
    %v4749 = vunpack.c.h.b16 %v4230
    %v4750 = vunpack.c.l.b16 %v4231
    %v4751 = vunpack.c.h.b16 %v4231
    %v4752 = vunpack.c.l.b16 %v4232
    %v4753 = vunpack.c.h.b16 %v4232
    %v4754 = vunpack.c.l.b16 %v4233
    %v4755 = vunpack.c.h.b16 %v4233
    %v4756 = vunpack.c.l.b16 %v4234
    %v4757 = vunpack.c.h.b16 %v4234
    %v4758 = vunpack.c.l.b16 %v4235
    %v4759 = vunpack.c.h.b16 %v4235
    %v4760 = vunpack.c.l.b16 %v4236
    %v4761 = vunpack.c.h.b16 %v4236
    %v4762 = vunpack.c.l.b16 %v4237
    %v4763 = vunpack.c.h.b16 %v4237
    %v4764 = vunpack.c.l.b16 %v4238
    %v4765 = vunpack.c.h.b16 %v4238
    %v4766 = vunpack.c.l.b16 %v4239
    %v4767 = vunpack.c.h.b16 %v4239
    %v4768 = vunpack.c.l.b16 %v4240
    %v4769 = vunpack.c.h.b16 %v4240
    %v4770 = vunpack.c.l.b16 %v4241
    %v4771 = vunpack.c.h.b16 %v4241
    %v4772 = vunpack.c.l.b16 %v4242
    %v4773 = vunpack.c.h.b16 %v4242
    %v4774 = vunpack.c.l.b16 %v4243
    %v4775 = vunpack.c.h.b16 %v4243
    %v4776 = vunpack.c.l.b16 %v4244
    %v4777 = vunpack.c.h.b16 %v4244
    %v4778 = vunpack.c.l.b16 %v4245
    %v4779 = vunpack.c.h.b16 %v4245
    %v4780 = vunpack.c.l.b16 %v4246
    %v4781 = vunpack.c.h.b16 %v4246
    %v4782 = vunpack.c.l.b16 %v4247
    %v4783 = vunpack.c.h.b16 %v4247
    %v4784 = vunpack.c.l.b16 %v4248
    %v4785 = vunpack.c.h.b16 %v4248
    %v4786 = vunpack.c.l.b16 %v4249
    %v4787 = vunpack.c.h.b16 %v4249
    %v4788 = vunpack.c.l.b16 %v4250
    %v4789 = vunpack.c.h.b16 %v4250
    %v4790 = vunpack.c.l.b16 %v4251
    %v4791 = vunpack.c.h.b16 %v4251
    %v4792 = vunpack.c.l.b16 %v4252
    %v4793 = vunpack.c.h.b16 %v4252
    %v4794 = vunpack.c.l.b16 %v4253
    %v4795 = vunpack.c.h.b16 %v4253
    %v4796 = vunpack.c.l.b16 %v4254
    %v4797 = vunpack.c.h.b16 %v4254
    %v4798 = vunpack.c.l.b16 %v4255
    %v4799 = vunpack.c.h.b16 %v4255
    %v4800 = vunpack.c.l.b16 %v4256
    %v4801 = vunpack.c.h.b16 %v4256
    %v4802 = vunpack.c.l.b16 %v4257
    %v4803 = vunpack.c.h.b16 %v4257
    %v4804 = vunpack.c.l.b16 %v4258
    %v4805 = vunpack.c.h.b16 %v4258
    %v4806 = vunpack.c.l.b16 %v4259
    %v4807 = vunpack.c.h.b16 %v4259
    %v4808 = vunpack.c.l.b16 %v4260
    %v4809 = vunpack.c.h.b16 %v4260
    %v4810 = vunpack.c.l.b16 %v4261
    %v4811 = vunpack.c.h.b16 %v4261
    %v4812 = vunpack.c.l.b16 %v4262
    %v4813 = vunpack.c.h.b16 %v4262
    %v4814 = vunpack.c.l.b16 %v4263
    %v4815 = vunpack.c.h.b16 %v4263
    %v4816 = vunpack.c.l.b16 %v4264
    %v4817 = vunpack.c.h.b16 %v4264
    %v4818 = vunpack.c.l.b16 %v4265
    %v4819 = vunpack.c.h.b16 %v4265
    %v4820 = vunpack.c.l.b16 %v4266
    %v4821 = vunpack.c.h.b16 %v4266
    %v4822 = vunpack.c.l.b16 %v4267
    %v4823 = vunpack.c.h.b16 %v4267
    %v4824 = vunpack.c.l.b16 %v4268
    %v4825 = vunpack.c.h.b16 %v4268
    %v4826 = vunpack.c.l.b16 %v4269
    %v4827 = vunpack.c.h.b16 %v4269
    %v4828 = vunpack.c.l.b16 %v4270
    %v4829 = vunpack.c.h.b16 %v4270
    %v4830 = vunpack.c.l.b16 %v4271
    %v4831 = vunpack.c.h.b16 %v4271
    %v4832 = vunpack.c.l.b16 %v4272
    %v4833 = vunpack.c.h.b16 %v4272
    %v4834 = vunpack.c.l.b16 %v4273
    %v4835 = vunpack.c.h.b16 %v4273
    %v4836 = vunpack.c.l.b16 %v4274
    %v4837 = vunpack.c.h.b16 %v4274
    %v4838 = vunpack.c.l.b16 %v4275
    %v4839 = vunpack.c.h.b16 %v4275
    %v4840 = vunpack.c.l.b16 %v4276
    %v4841 = vunpack.c.h.b16 %v4276
    %v4842 = vunpack.c.l.b16 %v4277
    %v4843 = vunpack.c.h.b16 %v4277
    %v4844 = vunpack.c.l.b16 %v4278
    %v4845 = vunpack.c.h.b16 %v4278
    %v4846 = vunpack.c.l.b16 %v4279
    %v4847 = vunpack.c.h.b16 %v4279
    %v4848 = vunpack.c.l.b16 %v4280
    %v4849 = vunpack.c.h.b16 %v4280
    %v4850 = vunpack.c.l.b16 %v4281
    %v4851 = vunpack.c.h.b16 %v4281
    %v4852 = vunpack.c.l.b16 %v4282
    %v4853 = vunpack.c.h.b16 %v4282
    %v4854 = vunpack.c.l.b16 %v4283
    %v4855 = vunpack.c.h.b16 %v4283
    %v4856 = vunpack.c.l.b16 %v4284
    %v4857 = vunpack.c.h.b16 %v4284
    %v4858 = vunpack.c.l.b16 %v4285
    %v4859 = vunpack.c.h.b16 %v4285
    %v4860 = vunpack.c.l.b16 %v4286
    %v4861 = vunpack.c.h.b16 %v4286
    %v4862 = vunpack.c.l.b16 %v4287
    %v4863 = vunpack.c.h.b16 %v4287
    %v4864 = vunpack.c.l.b16 %v4288
    %v4865 = vunpack.c.h.b16 %v4288
    %v4866 = vunpack.c.l.b16 %v4289
    %v4867 = vunpack.c.h.b16 %v4289
    %v4868 = vunpack.c.l.b16 %v4290
    %v4869 = vunpack.c.h.b16 %v4290
    %v4870 = vunpack.c.l.b16 %v4291
    %v4871 = vunpack.c.h.b16 %v4291
    %v4872 = vunpack.c.l.b16 %v4292
    %v4873 = vunpack.c.h.b16 %v4292
    %v4874 = vunpack.c.l.b16 %v4293
    %v4875 = vunpack.c.h.b16 %v4293
    %v4876 = vunpack.c.l.b16 %v4294
    %v4877 = vunpack.c.h.b16 %v4294
    %v4878 = vunpack.c.l.b16 %v4295
    %v4879 = vunpack.c.h.b16 %v4295
    %v4880 = vunpack.c.l.b16 %v4296
    %v4881 = vunpack.c.h.b16 %v4296
    %v4882 = vunpack.c.l.b16 %v4297
    %v4883 = vunpack.c.h.b16 %v4297
    %v4884 = vunpack.c.l.b16 %v4298
    %v4885 = vunpack.c.h.b16 %v4298
    %v4886 = vunpack.c.l.b16 %v4299
    %v4887 = vunpack.c.h.b16 %v4299
    %v4888 = vunpack.c.l.b16 %v4300
    %v4889 = vunpack.c.h.b16 %v4300
    %v4890 = vunpack.c.l.b16 %v4301
    %v4891 = vunpack.c.h.b16 %v4301
    %v4892 = vunpack.c.l.b16 %v4302
    %v4893 = vunpack.c.h.b16 %v4302
    %v4894 = vunpack.c.l.b16 %v4303
    %v4895 = vunpack.c.h.b16 %v4303
    %v4896 = vunpack.c.l.b16 %v4304
    %v4897 = vunpack.c.h.b16 %v4304
    %v4898 = vunpack.c.l.b16 %v4305
    %v4899 = vunpack.c.h.b16 %v4305
    %v4900 = vunpack.c.l.b16 %v4306
    %v4901 = vunpack.c.h.b16 %v4306
    %v4902 = vunpack.c.l.b16 %v4307
    %v4903 = vunpack.c.h.b16 %v4307
    %v4904 = vunpack.c.l.b16 %v4308
    %v4905 = vunpack.c.h.b16 %v4308
    %v4906 = vunpack.c.l.b16 %v4309
    %v4907 = vunpack.c.h.b16 %v4309
    %v4908 = vunpack.c.l.b16 %v4310
    %v4909 = vunpack.c.h.b16 %v4310
    %v4910 = vunpack.c.l.b16 %v4311
    %v4911 = vunpack.c.h.b16 %v4311
    %v4912 = vunpack.c.l.b16 %v4312
    %v4913 = vunpack.c.h.b16 %v4312
    %v4914 = vunpack.c.l.b16 %v4313
    %v4915 = vunpack.c.h.b16 %v4313
    %v4916 = vunpack.c.l.b16 %v4314
    %v4917 = vunpack.c.h.b16 %v4314
    %v4918 = vunpack.c.l.b16 %v4315
    %v4919 = vunpack.c.h.b16 %v4315
    %v4920 = vunpack.c.l.b16 %v4316
    %v4921 = vunpack.c.h.b16 %v4316
    %v4922 = vunpack.c.l.b16 %v4317
    %v4923 = vunpack.c.h.b16 %v4317
    %v4924 = vunpack.c.l.b16 %v4318
    %v4925 = vunpack.c.h.b16 %v4318
    %v4926 = vunpack.c.l.b16 %v4319
    %v4927 = vunpack.c.h.b16 %v4319
    %v4928 = vunpack.c.l.b16 %v4320
    %v4929 = vunpack.c.h.b16 %v4320
    %v4930 = vunpack.c.l.b16 %v4321
    %v4931 = vunpack.c.h.b16 %v4321
    %v4932 = vunpack.c.l.b16 %v4322
    %v4933 = vunpack.c.h.b16 %v4322
    %v4934 = vunpack.c.l.b16 %v4323
    %v4935 = vunpack.c.h.b16 %v4323
    %v4936 = vunpack.c.l.b16 %v4324
    %v4937 = vunpack.c.h.b16 %v4324
    %v4938 = vunpack.c.l.b16 %v4325
    %v4939 = vunpack.c.h.b16 %v4325
    %v4940 = vunpack.c.l.b16 %v4326
    %v4941 = vunpack.c.h.b16 %v4326
    %v4942 = vunpack.c.l.b16 %v4327
    %v4943 = vunpack.c.h.b16 %v4327
    %v4944 = vunpack.c.l.b16 %v4328
    %v4945 = vunpack.c.h.b16 %v4328
    %v4946 = vunpack.c.l.b16 %v4329
    %v4947 = vunpack.c.h.b16 %v4329
    %v4948 = vunpack.c.l.b16 %v4330
    %v4949 = vunpack.c.h.b16 %v4330
    %v4950 = vunpack.c.l.b16 %v4331
    %v4951 = vunpack.c.h.b16 %v4331
    %v4952 = vunpack.c.l.b16 %v4332
    %v4953 = vunpack.c.h.b16 %v4332
    %v4954 = vunpack.c.l.b16 %v4333
    %v4955 = vunpack.c.h.b16 %v4333
    %v4956 = vunpack.c.l.b16 %v4334
    %v4957 = vunpack.c.h.b16 %v4334
    %v4958 = vunpack.c.l.b16 %v4335
    %v4959 = vunpack.c.h.b16 %v4335
    %v4960 = vunpack.c.l.b16 %v4336
    %v4961 = vunpack.c.h.b16 %v4336
    %v4962 = vunpack.c.l.b16 %v4337
    %v4963 = vunpack.c.h.b16 %v4337
    %v4964 = vunpack.c.l.b16 %v4338
    %v4965 = vunpack.c.h.b16 %v4338
    %v4966 = vunpack.c.l.b16 %v4339
    %v4967 = vunpack.c.h.b16 %v4339
    %v4968 = vunpack.c.l.b16 %v4340
    %v4969 = vunpack.c.h.b16 %v4340
    %v4970 = vunpack.c.l.b16 %v4341
    %v4971 = vunpack.c.h.b16 %v4341
    %v4972 = vunpack.c.l.b16 %v4342
    %v4973 = vunpack.c.h.b16 %v4342
    %v4974 = vunpack.c.l.b16 %v4343
    %v4975 = vunpack.c.h.b16 %v4343
    %v4976 = vunpack.c.l.b16 %v4344
    %v4977 = vunpack.c.h.b16 %v4344
    %v4978 = vunpack.c.l.b16 %v4345
    %v4979 = vunpack.c.h.b16 %v4345
    %v4980 = vunpack.c.l.b16 %v4346
    %v4981 = vunpack.c.h.b16 %v4346
    %v4982 = vunpack.c.l.b16 %v4347
    %v4983 = vunpack.c.h.b16 %v4347
    %v4984 = vunpack.c.l.b16 %v4348
    %v4985 = vunpack.c.h.b16 %v4348
    %v4986 = vunpack.c.l.b16 %v4349
    %v4987 = vunpack.c.h.b16 %v4349
    %v4988 = vunpack.c.l.b16 %v4350
    %v4989 = vunpack.c.h.b16 %v4350
    %v4990 = vunpack.c.l.b16 %v4351
    %v4991 = vunpack.c.h.b16 %v4351
    %v4992 = vunpack.c.l.b16 %v4352
    %v4993 = vunpack.c.h.b16 %v4352
    %v4994 = vunpack.c.l.b16 %v4353
    %v4995 = vunpack.c.h.b16 %v4353
    %v4996 = vunpack.c.l.b16 %v4354
    %v4997 = vunpack.c.h.b16 %v4354
    %v4998 = vunpack.c.l.b16 %v4355
    %v4999 = vunpack.c.h.b16 %v4355
    %v5000 = vunpack.c.l.b16 %v4356
    %v5001 = vunpack.c.h.b16 %v4356
    %v5002 = vunpack.c.l.b16 %v4357
    %v5003 = vunpack.c.h.b16 %v4357
    %v5004 = vunpack.c.l.b16 %v4358
    %v5005 = vunpack.c.h.b16 %v4358
    %v5006 = vunpack.c.l.b16 %v4359
    %v5007 = vunpack.c.h.b16 %v4359
    %v5008 = vunpack.c.l.b16 %v4360
    %v5009 = vunpack.c.h.b16 %v4360
    %v5010 = vunpack.c.l.b16 %v4361
    %v5011 = vunpack.c.h.b16 %v4361
    %v5012 = vunpack.c.l.b16 %v4362
    %v5013 = vunpack.c.h.b16 %v4362
    %v5014 = vunpack.c.l.b16 %v4363
    %v5015 = vunpack.c.h.b16 %v4363
    %v5016 = vunpack.c.l.b16 %v4364
    %v5017 = vunpack.c.h.b16 %v4364
    %v5018 = vunpack.c.l.b16 %v4365
    %v5019 = vunpack.c.h.b16 %v4365
    %v5020 = vunpack.c.l.b16 %v4366
    %v5021 = vunpack.c.h.b16 %v4366
    %v5022 = vunpack.c.l.b16 %v4367
    %v5023 = vunpack.c.h.b16 %v4367
    %v5024 = vunpack.c.l.b16 %v4368
    %v5025 = vunpack.c.h.b16 %v4368
    %v5026 = vunpack.c.l.b16 %v4369
    %v5027 = vunpack.c.h.b16 %v4369
    %v5028 = vunpack.c.l.b16 %v4370
    %v5029 = vunpack.c.h.b16 %v4370
    %v5030 = vunpack.c.l.b16 %v4371
    %v5031 = vunpack.c.h.b16 %v4371
    %v5032 = vunpack.c.l.b16 %v4372
    %v5033 = vunpack.c.h.b16 %v4372
    %v5034 = vunpack.c.l.b16 %v4373
    %v5035 = vunpack.c.h.b16 %v4373
    %v5036 = vunpack.c.l.b16 %v4374
    %v5037 = vunpack.c.h.b16 %v4374
    %v5038 = vunpack.c.l.b16 %v4375
    %v5039 = vunpack.c.h.b16 %v4375
    %v5040 = vunpack.c.l.b16 %v4376
    %v5041 = vunpack.c.h.b16 %v4376
    %v5042 = vunpack.c.l.b16 %v4377
    %v5043 = vunpack.c.h.b16 %v4377
    %v5044 = vunpack.c.l.b16 %v4378
    %v5045 = vunpack.c.h.b16 %v4378
    %v5046 = vunpack.c.l.b16 %v4379
    %v5047 = vunpack.c.h.b16 %v4379
    %v5048 = vunpack.c.l.b16 %v4380
    %v5049 = vunpack.c.h.b16 %v4380
    %v5050 = vunpack.c.l.b16 %v4381
    %v5051 = vunpack.c.h.b16 %v4381
    %v5052 = vunpack.c.l.b16 %v4382
    %v5053 = vunpack.c.h.b16 %v4382
    %v5054 = vunpack.c.l.b16 %v4383
    %v5055 = vunpack.c.h.b16 %v4383
    %v5056 = vunpack.c.l.b16 %v4384
    %v5057 = vunpack.c.h.b16 %v4384
    %v5058 = vunpack.c.l.b16 %v4385
    %v5059 = vunpack.c.h.b16 %v4385
    %v5060 = vunpack.c.l.b16 %v4386
    %v5061 = vunpack.c.h.b16 %v4386
    %v5062 = vunpack.c.l.b16 %v4387
    %v5063 = vunpack.c.h.b16 %v4387
    %v5064 = vunpack.c.l.b16 %v4388
    %v5065 = vunpack.c.h.b16 %v4388
    %v5066 = vunpack.c.l.b16 %v4389
    %v5067 = vunpack.c.h.b16 %v4389
    %v5068 = vunpack.c.l.b16 %v4390
    %v5069 = vunpack.c.h.b16 %v4390
    %v5070 = vunpack.c.l.b16 %v4391
    %v5071 = vunpack.c.h.b16 %v4391
    %v5072 = vunpack.c.l.b16 %v4392
    %v5073 = vunpack.c.h.b16 %v4392
    %v5074 = vunpack.c.l.b16 %v4393
    %v5075 = vunpack.c.h.b16 %v4393
    %v5076 = vunpack.c.l.b16 %v4394
    %v5077 = vunpack.c.h.b16 %v4394
    %v5078 = vunpack.c.l.b16 %v4395
    %v5079 = vunpack.c.h.b16 %v4395
    %v5080 = vunpack.c.l.b16 %v4396
    %v5081 = vunpack.c.h.b16 %v4396
    %v5082 = vunpack.c.l.b16 %v4397
    %v5083 = vunpack.c.h.b16 %v4397
    %v5084 = vunpack.c.l.b16 %v4398
    %v5085 = vunpack.c.h.b16 %v4398
    %v5086 = vunpack.c.l.b16 %v4399
    %v5087 = vunpack.c.h.b16 %v4399
    %v5088 = vunpack.c.l.b16 %v4400
    %v5089 = vunpack.c.h.b16 %v4400
    %v5090 = vunpack.c.l.b16 %v4401
    %v5091 = vunpack.c.h.b16 %v4401
    %v5092 = vunpack.c.l.b16 %v4402
    %v5093 = vunpack.c.h.b16 %v4402
    %v5094 = vunpack.c.l.b16 %v4403
    %v5095 = vunpack.c.h.b16 %v4403
    %v5096 = vunpack.c.l.b16 %v4404
    %v5097 = vunpack.c.h.b16 %v4404
    %v5098 = vunpack.c.l.b16 %v4405
    %v5099 = vunpack.c.h.b16 %v4405
    %v5100 = vunpack.c.l.b16 %v4406
    %v5101 = vunpack.c.h.b16 %v4406
    %v5102 = vunpack.c.l.b16 %v4407
    %v5103 = vunpack.c.h.b16 %v4407
    %v5104 = vunpack.c.l.b16 %v4408
    %v5105 = vunpack.c.h.b16 %v4408
    %v5106 = vunpack.c.l.b16 %v4409
    %v5107 = vunpack.c.h.b16 %v4409
    %v5108 = vunpack.c.l.b16 %v4410
    %v5109 = vunpack.c.h.b16 %v4410
    %v5110 = vunpack.c.l.b16 %v4411
    %v5111 = vunpack.c.h.b16 %v4411
    %v5112 = vunpack.c.l.b16 %v4412
    %v5113 = vunpack.c.h.b16 %v4412
    %v5114 = vunpack.c.l.b16 %v4413
    %v5115 = vunpack.c.h.b16 %v4413
    %v5116 = vunpack.c.l.b16 %v4414
    %v5117 = vunpack.c.h.b16 %v4414
    %v5118 = vunpack.c.l.b16 %v4415
    %v5119 = vunpack.c.h.b16 %v4415
    %v5120 = vunpack.c.l.b16 %v4416
    %v5121 = vunpack.c.h.b16 %v4416
    %v5122 = vunpack.c.l.b16 %v4417
    %v5123 = vunpack.c.h.b16 %v4417
    %v5124 = vunpack.c.l.b16 %v4418
    %v5125 = vunpack.c.h.b16 %v4418
    %v5126 = vunpack.c.l.b16 %v4419
    %v5127 = vunpack.c.h.b16 %v4419
    %v5128 = vunpack.c.l.b16 %v4420
    %v5129 = vunpack.c.h.b16 %v4420
    %v5130 = vunpack.c.l.b16 %v4421
    %v5131 = vunpack.c.h.b16 %v4421
    %v5132 = vunpack.c.l.b16 %v4422
    %v5133 = vunpack.c.h.b16 %v4422
    %v5134 = vunpack.c.l.b16 %v4423
    %v5135 = vunpack.c.h.b16 %v4423
    %v5136 = vunpack.c.l.b16 %v4424
    %v5137 = vunpack.c.h.b16 %v4424
    %v5138 = vunpack.c.l.b16 %v4425
    %v5139 = vunpack.c.h.b16 %v4425
    %v5140 = vunpack.c.l.b16 %v4426
    %v5141 = vunpack.c.h.b16 %v4426
    %v5142 = vunpack.c.l.b16 %v4427
    %v5143 = vunpack.c.h.b16 %v4427
    %v5144 = vunpack.c.l.b16 %v4428
    %v5145 = vunpack.c.h.b16 %v4428
    %v5146 = vunpack.c.l.b16 %v4429
    %v5147 = vunpack.c.h.b16 %v4429
    %v5148 = vunpack.c.l.b16 %v4430
    %v5149 = vunpack.c.h.b16 %v4430
    %v5150 = vunpack.c.l.b16 %v4431
    %v5151 = vunpack.c.h.b16 %v4431
    %v5152 = vunpack.c.l.b16 %v4432
    %v5153 = vunpack.c.h.b16 %v4432
    %v5154 = vunpack.c.l.b16 %v4433
    %v5155 = vunpack.c.h.b16 %v4433
    %v5156 = vunpack.c.l.b16 %v4434
    %v5157 = vunpack.c.h.b16 %v4434
    %v5158 = vunpack.c.l.b16 %v4435
    %v5159 = vunpack.c.h.b16 %v4435
    %v5160 = vunpack.c.l.b16 %v4436
    %v5161 = vunpack.c.h.b16 %v4436
    %v5162 = vunpack.c.l.b16 %v4437
    %v5163 = vunpack.c.h.b16 %v4437
    %v5164 = vunpack.c.l.b16 %v4438
    %v5165 = vunpack.c.h.b16 %v4438
    %v5166 = vunpack.c.l.b16 %v4439
    %v5167 = vunpack.c.h.b16 %v4439
    %v5168 = vunpack.c.l.b16 %v4440
    %v5169 = vunpack.c.h.b16 %v4440
    %v5170 = vunpack.c.l.b16 %v4441
    %v5171 = vunpack.c.h.b16 %v4441
    %v5172 = vunpack.c.l.b16 %v4442
    %v5173 = vunpack.c.h.b16 %v4442
    %v5174 = vunpack.c.l.b16 %v4443
    %v5175 = vunpack.c.h.b16 %v4443
    %v5176 = vunpack.c.l.b16 %v4444
    %v5177 = vunpack.c.h.b16 %v4444
    %v5178 = vunpack.c.l.b16 %v4445
    %v5179 = vunpack.c.h.b16 %v4445
    %v5180 = vunpack.c.l.b16 %v4446
    %v5181 = vunpack.c.h.b16 %v4446
    %v5182 = vunpack.c.l.b16 %v4447
    %v5183 = vunpack.c.h.b16 %v4447
    %v5184 = vunpack.c.l.b16 %v4448
    %v5185 = vunpack.c.h.b16 %v4448
    %v5186 = vunpack.c.l.b16 %v4449
    %v5187 = vunpack.c.h.b16 %v4449
    %v5188 = vunpack.c.l.b16 %v4450
    %v5189 = vunpack.c.h.b16 %v4450
    %v5190 = vunpack.c.l.b16 %v4451
    %v5191 = vunpack.c.h.b16 %v4451
    %v5192 = vunpack.c.l.b16 %v4452
    %v5193 = vunpack.c.h.b16 %v4452
    %v5194 = vunpack.c.l.b16 %v4453
    %v5195 = vunpack.c.h.b16 %v4453
    %v5196 = vunpack.c.l.b16 %v4454
    %v5197 = vunpack.c.h.b16 %v4454
    %v5198 = vunpack.c.l.b16 %v4455
    %v5199 = vunpack.c.h.b16 %v4455
    %v5200 = vunpack.c.l.b16 %v4456
    %v5201 = vunpack.c.h.b16 %v4456
    %v5202 = vunpack.c.l.b16 %v4457
    %v5203 = vunpack.c.h.b16 %v4457
    %v5204 = vunpack.c.l.b16 %v4458
    %v5205 = vunpack.c.h.b16 %v4458
    %v5206 = vunpack.c.l.b16 %v4459
    %v5207 = vunpack.c.h.b16 %v4459
    %v5208 = vunpack.c.l.b16 %v4460
    %v5209 = vunpack.c.h.b16 %v4460
    %v5210 = vunpack.c.l.b16 %v4461
    %v5211 = vunpack.c.h.b16 %v4461
    %v5212 = vunpack.c.l.b16 %v4462
    %v5213 = vunpack.c.h.b16 %v4462
    %v5214 = vunpack.c.l.b16 %v4463
    %v5215 = vunpack.c.h.b16 %v4463
    %v5216 = vunpack.c.l.b16 %v4464
    %v5217 = vunpack.c.h.b16 %v4464
    %v5218 = vunpack.c.l.b16 %v4465
    %v5219 = vunpack.c.h.b16 %v4465
    %v5220 = vunpack.c.l.b16 %v4466
    %v5221 = vunpack.c.h.b16 %v4466
    %v5222 = vunpack.c.l.b16 %v4467
    %v5223 = vunpack.c.h.b16 %v4467
    %v5224 = vunpack.c.l.b16 %v4468
    %v5225 = vunpack.c.h.b16 %v4468
    %v5226 = vunpack.c.l.b16 %v4469
    %v5227 = vunpack.c.h.b16 %v4469
    %v5228 = vunpack.c.l.b16 %v4470
    %v5229 = vunpack.c.h.b16 %v4470
    %v5230 = vunpack.c.l.b16 %v4471
    %v5231 = vunpack.c.h.b16 %v4471
    %v5232 = vunpack.c.l.b16 %v4472
    %v5233 = vunpack.c.h.b16 %v4472
    %v5234 = vunpack.c.l.b16 %v4473
    %v5235 = vunpack.c.h.b16 %v4473
    %v5236 = vunpack.c.l.b16 %v4474
    %v5237 = vunpack.c.h.b16 %v4474
    %v5238 = vunpack.c.l.b16 %v4475
    %v5239 = vunpack.c.h.b16 %v4475
    %v5240 = vunpack.c.l.b16 %v4476
    %v5241 = vunpack.c.h.b16 %v4476
    %v5242 = vunpack.c.l.b16 %v4477
    %v5243 = vunpack.c.h.b16 %v4477
    %v5244 = vunpack.c.l.b16 %v4478
    %v5245 = vunpack.c.h.b16 %v4478
    %v5246 = vunpack.c.l.b16 %v4479
    %v5247 = vunpack.c.h.b16 %v4479
    %v5248 = vpack.c.b16 %v4752, %v4736
    %v5249 = vpack.c.b16 %v4753, %v4737
    %v5250 = vpack.c.b16 %v4754, %v4738
    %v5251 = vpack.c.b16 %v4755, %v4739
    %v5252 = vpack.c.b16 %v4756, %v4740
    %v5253 = vpack.c.b16 %v4757, %v4741
    %v5254 = vpack.c.b16 %v4758, %v4742
    %v5255 = vpack.c.b16 %v4759, %v4743
    %v5256 = vpack.c.b16 %v4760, %v4744
    %v5257 = vpack.c.b16 %v4761, %v4745
    %v5258 = vpack.c.b16 %v4762, %v4746
    %v5259 = vpack.c.b16 %v4763, %v4747
    %v5260 = vpack.c.b16 %v4764, %v4748
    %v5261 = vpack.c.b16 %v4765, %v4749
    %v5262 = vpack.c.b16 %v4766, %v4750
    %v5263 = vpack.c.b16 %v4767, %v4751
    %v5264 = vpack.c.b16 %v4784, %v4768
    %v5265 = vpack.c.b16 %v4785, %v4769
    %v5266 = vpack.c.b16 %v4786, %v4770
    %v5267 = vpack.c.b16 %v4787, %v4771
    %v5268 = vpack.c.b16 %v4788, %v4772
    %v5269 = vpack.c.b16 %v4789, %v4773
    %v5270 = vpack.c.b16 %v4790, %v4774
    %v5271 = vpack.c.b16 %v4791, %v4775
    %v5272 = vpack.c.b16 %v4792, %v4776
    %v5273 = vpack.c.b16 %v4793, %v4777
    %v5274 = vpack.c.b16 %v4794, %v4778
    %v5275 = vpack.c.b16 %v4795, %v4779
    %v5276 = vpack.c.b16 %v4796, %v4780
    %v5277 = vpack.c.b16 %v4797, %v4781
    %v5278 = vpack.c.b16 %v4798, %v4782
    %v5279 = vpack.c.b16 %v4799, %v4783
    %v5280 = vpack.c.b16 %v4816, %v4800
    %v5281 = vpack.c.b16 %v4817, %v4801
    %v5282 = vpack.c.b16 %v4818, %v4802
    %v5283 = vpack.c.b16 %v4819, %v4803
    %v5284 = vpack.c.b16 %v4820, %v4804
    %v5285 = vpack.c.b16 %v4821, %v4805
    %v5286 = vpack.c.b16 %v4822, %v4806
    %v5287 = vpack.c.b16 %v4823, %v4807
    %v5288 = vpack.c.b16 %v4824, %v4808
    %v5289 = vpack.c.b16 %v4825, %v4809
    %v5290 = vpack.c.b16 %v4826, %v4810
    %v5291 = vpack.c.b16 %v4827, %v4811
    %v5292 = vpack.c.b16 %v4828, %v4812
    %v5293 = vpack.c.b16 %v4829, %v4813
    %v5294 = vpack.c.b16 %v4830, %v4814
    %v5295 = vpack.c.b16 %v4831, %v4815
    %v5296 = vpack.c.b16 %v4848, %v4832
    %v5297 = vpack.c.b16 %v4849, %v4833
    %v5298 = vpack.c.b16 %v4850, %v4834
    %v5299 = vpack.c.b16 %v4851, %v4835
    %v5300 = vpack.c.b16 %v4852, %v4836
    %v5301 = vpack.c.b16 %v4853, %v4837
    %v5302 = vpack.c.b16 %v4854, %v4838
    %v5303 = vpack.c.b16 %v4855, %v4839
    %v5304 = vpack.c.b16 %v4856, %v4840
    %v5305 = vpack.c.b16 %v4857, %v4841
    %v5306 = vpack.c.b16 %v4858, %v4842
    %v5307 = vpack.c.b16 %v4859, %v4843
    %v5308 = vpack.c.b16 %v4860, %v4844
    %v5309 = vpack.c.b16 %v4861, %v4845
    %v5310 = vpack.c.b16 %v4862, %v4846
    %v5311 = vpack.c.b16 %v4863, %v4847
    %v5312 = vpack.c.b16 %v4880, %v4864
    %v5313 = vpack.c.b16 %v4881, %v4865
    %v5314 = vpack.c.b16 %v4882, %v4866
    %v5315 = vpack.c.b16 %v4883, %v4867
    %v5316 = vpack.c.b16 %v4884, %v4868
    %v5317 = vpack.c.b16 %v4885, %v4869
    %v5318 = vpack.c.b16 %v4886, %v4870
    %v5319 = vpack.c.b16 %v4887, %v4871
    %v5320 = vpack.c.b16 %v4888, %v4872
    %v5321 = vpack.c.b16 %v4889, %v4873
    %v5322 = vpack.c.b16 %v4890, %v4874
    %v5323 = vpack.c.b16 %v4891, %v4875
    %v5324 = vpack.c.b16 %v4892, %v4876
    %v5325 = vpack.c.b16 %v4893, %v4877
    %v5326 = vpack.c.b16 %v4894, %v4878
    %v5327 = vpack.c.b16 %v4895, %v4879
    %v5328 = vpack.c.b16 %v4912, %v4896
    %v5329 = vpack.c.b16 %v4913, %v4897
    %v5330 = vpack.c.b16 %v4914, %v4898
    %v5331 = vpack.c.b16 %v4915, %v4899
    %v5332 = vpack.c.b16 %v4916, %v4900
    %v5333 = vpack.c.b16 %v4917, %v4901
    %v5334 = vpack.c.b16 %v4918, %v4902
    %v5335 = vpack.c.b16 %v4919, %v4903
    %v5336 = vpack.c.b16 %v4920, %v4904
    %v5337 = vpack.c.b16 %v4921, %v4905
    %v5338 = vpack.c.b16 %v4922, %v4906
    %v5339 = vpack.c.b16 %v4923, %v4907
    %v5340 = vpack.c.b16 %v4924, %v4908
    %v5341 = vpack.c.b16 %v4925, %v4909
    %v5342 = vpack.c.b16 %v4926, %v4910
    %v5343 = vpack.c.b16 %v4927, %v4911
    %v5344 = vpack.c.b16 %v4944, %v4928
    %v5345 = vpack.c.b16 %v4945, %v4929
    %v5346 = vpack.c.b16 %v4946, %v4930
    %v5347 = vpack.c.b16 %v4947, %v4931
    %v5348 = vpack.c.b16 %v4948, %v4932
    %v5349 = vpack.c.b16 %v4949, %v4933
    %v5350 = vpack.c.b16 %v4950, %v4934
    %v5351 = vpack.c.b16 %v4951, %v4935
    %v5352 = vpack.c.b16 %v4952, %v4936
    %v5353 = vpack.c.b16 %v4953, %v4937
    %v5354 = vpack.c.b16 %v4954, %v4938
    %v5355 = vpack.c.b16 %v4955, %v4939
    %v5356 = vpack.c.b16 %v4956, %v4940
    %v5357 = vpack.c.b16 %v4957, %v4941
    %v5358 = vpack.c.b16 %v4958, %v4942
    %v5359 = vpack.c.b16 %v4959, %v4943
    %v5360 = vpack.c.b16 %v4976, %v4960
    %v5361 = vpack.c.b16 %v4977, %v4961
    %v5362 = vpack.c.b16 %v4978, %v4962
    %v5363 = vpack.c.b16 %v4979, %v4963
    %v5364 = vpack.c.b16 %v4980, %v4964
    %v5365 = vpack.c.b16 %v4981, %v4965
    %v5366 = vpack.c.b16 %v4982, %v4966
    %v5367 = vpack.c.b16 %v4983, %v4967
    %v5368 = vpack.c.b16 %v4984, %v4968
    %v5369 = vpack.c.b16 %v4985, %v4969
    %v5370 = vpack.c.b16 %v4986, %v4970
    %v5371 = vpack.c.b16 %v4987, %v4971
    %v5372 = vpack.c.b16 %v4988, %v4972
    %v5373 = vpack.c.b16 %v4989, %v4973
    %v5374 = vpack.c.b16 %v4990, %v4974
    %v5375 = vpack.c.b16 %v4991, %v4975
    %v5376 = vpack.c.b16 %v5008, %v4992
    %v5377 = vpack.c.b16 %v5009, %v4993
    %v5378 = vpack.c.b16 %v5010, %v4994
    %v5379 = vpack.c.b16 %v5011, %v4995
    %v5380 = vpack.c.b16 %v5012, %v4996
    %v5381 = vpack.c.b16 %v5013, %v4997
    %v5382 = vpack.c.b16 %v5014, %v4998
    %v5383 = vpack.c.b16 %v5015, %v4999
    %v5384 = vpack.c.b16 %v5016, %v5000
    %v5385 = vpack.c.b16 %v5017, %v5001
    %v5386 = vpack.c.b16 %v5018, %v5002
    %v5387 = vpack.c.b16 %v5019, %v5003
    %v5388 = vpack.c.b16 %v5020, %v5004
    %v5389 = vpack.c.b16 %v5021, %v5005
    %v5390 = vpack.c.b16 %v5022, %v5006
    %v5391 = vpack.c.b16 %v5023, %v5007
    %v5392 = vpack.c.b16 %v5040, %v5024
    %v5393 = vpack.c.b16 %v5041, %v5025
    %v5394 = vpack.c.b16 %v5042, %v5026
    %v5395 = vpack.c.b16 %v5043, %v5027
    %v5396 = vpack.c.b16 %v5044, %v5028
    %v5397 = vpack.c.b16 %v5045, %v5029
    %v5398 = vpack.c.b16 %v5046, %v5030
    %v5399 = vpack.c.b16 %v5047, %v5031
    %v5400 = vpack.c.b16 %v5048, %v5032
    %v5401 = vpack.c.b16 %v5049, %v5033
    %v5402 = vpack.c.b16 %v5050, %v5034
    %v5403 = vpack.c.b16 %v5051, %v5035
    %v5404 = vpack.c.b16 %v5052, %v5036
    %v5405 = vpack.c.b16 %v5053, %v5037
    %v5406 = vpack.c.b16 %v5054, %v5038
    %v5407 = vpack.c.b16 %v5055, %v5039
    %v5408 = vpack.c.b16 %v5072, %v5056
    %v5409 = vpack.c.b16 %v5073, %v5057
    %v5410 = vpack.c.b16 %v5074, %v5058
    %v5411 = vpack.c.b16 %v5075, %v5059
    %v5412 = vpack.c.b16 %v5076, %v5060
    %v5413 = vpack.c.b16 %v5077, %v5061
    %v5414 = vpack.c.b16 %v5078, %v5062
    %v5415 = vpack.c.b16 %v5079, %v5063
    %v5416 = vpack.c.b16 %v5080, %v5064
    %v5417 = vpack.c.b16 %v5081, %v5065
    %v5418 = vpack.c.b16 %v5082, %v5066
    %v5419 = vpack.c.b16 %v5083, %v5067
    %v5420 = vpack.c.b16 %v5084, %v5068
    %v5421 = vpack.c.b16 %v5085, %v5069
    %v5422 = vpack.c.b16 %v5086, %v5070
    %v5423 = vpack.c.b16 %v5087, %v5071
    %v5424 = vpack.c.b16 %v5104, %v5088
    %v5425 = vpack.c.b16 %v5105, %v5089
    %v5426 = vpack.c.b16 %v5106, %v5090
    %v5427 = vpack.c.b16 %v5107, %v5091
    %v5428 = vpack.c.b16 %v5108, %v5092
    %v5429 = vpack.c.b16 %v5109, %v5093
    %v5430 = vpack.c.b16 %v5110, %v5094
    %v5431 = vpack.c.b16 %v5111, %v5095
    %v5432 = vpack.c.b16 %v5112, %v5096
    %v5433 = vpack.c.b16 %v5113, %v5097
    %v5434 = vpack.c.b16 %v5114, %v5098
    %v5435 = vpack.c.b16 %v5115, %v5099
    %v5436 = vpack.c.b16 %v5116, %v5100
    %v5437 = vpack.c.b16 %v5117, %v5101
    %v5438 = vpack.c.b16 %v5118, %v5102
    %v5439 = vpack.c.b16 %v5119, %v5103
    %v5440 = vpack.c.b16 %v5136, %v5120
    %v5441 = vpack.c.b16 %v5137, %v5121
    %v5442 = vpack.c.b16 %v5138, %v5122
    %v5443 = vpack.c.b16 %v5139, %v5123
    %v5444 = vpack.c.b16 %v5140, %v5124
    %v5445 = vpack.c.b16 %v5141, %v5125
    %v5446 = vpack.c.b16 %v5142, %v5126
    %v5447 = vpack.c.b16 %v5143, %v5127
    %v5448 = vpack.c.b16 %v5144, %v5128
    %v5449 = vpack.c.b16 %v5145, %v5129
    %v5450 = vpack.c.b16 %v5146, %v5130
    %v5451 = vpack.c.b16 %v5147, %v5131
    %v5452 = vpack.c.b16 %v5148, %v5132
    %v5453 = vpack.c.b16 %v5149, %v5133
    %v5454 = vpack.c.b16 %v5150, %v5134
    %v5455 = vpack.c.b16 %v5151, %v5135
    %v5456 = vpack.c.b16 %v5168, %v5152
    %v5457 = vpack.c.b16 %v5169, %v5153
    %v5458 = vpack.c.b16 %v5170, %v5154
    %v5459 = vpack.c.b16 %v5171, %v5155
    %v5460 = vpack.c.b16 %v5172, %v5156
    %v5461 = vpack.c.b16 %v5173, %v5157
    %v5462 = vpack.c.b16 %v5174, %v5158
    %v5463 = vpack.c.b16 %v5175, %v5159
    %v5464 = vpack.c.b16 %v5176, %v5160
    %v5465 = vpack.c.b16 %v5177, %v5161
    %v5466 = vpack.c.b16 %v5178, %v5162
    %v5467 = vpack.c.b16 %v5179, %v5163
    %v5468 = vpack.c.b16 %v5180, %v5164
    %v5469 = vpack.c.b16 %v5181, %v5165
    %v5470 = vpack.c.b16 %v5182, %v5166
    %v5471 = vpack.c.b16 %v5183, %v5167
    %v5472 = vpack.c.b16 %v5200, %v5184
    %v5473 = vpack.c.b16 %v5201, %v5185
    %v5474 = vpack.c.b16 %v5202, %v5186
    %v5475 = vpack.c.b16 %v5203, %v5187
    %v5476 = vpack.c.b16 %v5204, %v5188
    %v5477 = vpack.c.b16 %v5205, %v5189
    %v5478 = vpack.c.b16 %v5206, %v5190
    %v5479 = vpack.c.b16 %v5207, %v5191
    %v5480 = vpack.c.b16 %v5208, %v5192
    %v5481 = vpack.c.b16 %v5209, %v5193
    %v5482 = vpack.c.b16 %v5210, %v5194
    %v5483 = vpack.c.b16 %v5211, %v5195
    %v5484 = vpack.c.b16 %v5212, %v5196
    %v5485 = vpack.c.b16 %v5213, %v5197
    %v5486 = vpack.c.b16 %v5214, %v5198
    %v5487 = vpack.c.b16 %v5215, %v5199
    %v5488 = vpack.c.b16 %v5232, %v5216
    %v5489 = vpack.c.b16 %v5233, %v5217
    %v5490 = vpack.c.b16 %v5234, %v5218
    %v5491 = vpack.c.b16 %v5235, %v5219
    %v5492 = vpack.c.b16 %v5236, %v5220
    %v5493 = vpack.c.b16 %v5237, %v5221
    %v5494 = vpack.c.b16 %v5238, %v5222
    %v5495 = vpack.c.b16 %v5239, %v5223
    %v5496 = vpack.c.b16 %v5240, %v5224
    %v5497 = vpack.c.b16 %v5241, %v5225
    %v5498 = vpack.c.b16 %v5242, %v5226
    %v5499 = vpack.c.b16 %v5243, %v5227
    %v5500 = vpack.c.b16 %v5244, %v5228
    %v5501 = vpack.c.b16 %v5245, %v5229
    %v5502 = vpack.c.b16 %v5246, %v5230
    %v5503 = vpack.c.b16 %v5247, %v5231
    %5760 = vmatprep.subr.bf16.mxu0 %v5249
    %5761 = vmatpush1.bf16.msra.mxu0 %v5248
    %5762 = vmatprep.subr.bf16.mxu0 %v5265
    %5763 = vmatpush1.bf16.msra.mxu0 %v5264
    %5764 = vmatprep.subr.bf16.mxu0 %v5281
    %5765 = vmatpush1.bf16.msra.mxu0 %v5280
    %5766 = vmatprep.subr.bf16.mxu0 %v5297
    %5767 = vmatpush1.bf16.msra.mxu0 %v5296
    %5768 = vmatprep.subr.bf16.mxu0 %v5313
    %5769 = vmatpush1.bf16.msra.mxu0 %v5312
    %5770 = vmatprep.subr.bf16.mxu0 %v5329
    %5771 = vmatpush1.bf16.msra.mxu0 %v5328
    %5772 = vmatprep.subr.bf16.mxu0 %v5345
    %5773 = vmatpush1.bf16.msra.mxu0 %v5344
    %5774 = vmatprep.subr.bf16.mxu0 %v5361
    %5775 = vmatpush1.bf16.msra.mxu0 %v5360
    %5776 = vmatprep.subr.bf16.mxu0 %v5377
    %5777 = vmatpush1.bf16.msra.mxu0 %v5376
    %5778 = vmatprep.subr.bf16.mxu0 %v5393
    %5779 = vmatpush1.bf16.msra.mxu0 %v5392
    %5780 = vmatprep.subr.bf16.mxu0 %v5409
    %5781 = vmatpush1.bf16.msra.mxu0 %v5408
    %5782 = vmatprep.subr.bf16.mxu0 %v5425
    %5783 = vmatpush1.bf16.msra.mxu0 %v5424
    %5784 = vmatprep.subr.bf16.mxu0 %v5441
    %5785 = vmatpush1.bf16.msra.mxu0 %v5440
    %5786 = vmatprep.subr.bf16.mxu0 %v5457
    %5787 = vmatpush1.bf16.msra.mxu0 %v5456
    %5788 = vmatprep.subr.bf16.mxu0 %v5473
    %5789 = vmatpush1.bf16.msra.mxu0 %v5472
    %5790 = vmatprep.subr.bf16.mxu0 %v5489
    %5791 = vmatpush1.bf16.msra.mxu0 %v5488
    %5792 = vmatprep.mubr.bf16.mxu0 %v4223
    %5793 = vmatmul.mubr.bf16.gmra.mrb[0].mxu0 %v4222
    %v5794 = vpop.f32.mrb[0].mxu0
    %v5795 = vadd.f32 0.0, %v5794
    %v5796 = vpop.f32.mrb[0].mxu0
    %v5797 = vadd.f32 0.0, %v5796
    %v5798 = vpop.f32.mrb[0].mxu0
    %v5799 = vpop.f32.mrb[0].mxu0
    %5800 = vdwg.mxu0
    %5801 = vmatprep.subr.bf16.mxu0 %v5251
    %5802 = vmatpush1.bf16.msra.mxu0 %v5250
    %5803 = vmatprep.subr.bf16.mxu0 %v5267
    %5804 = vmatpush1.bf16.msra.mxu0 %v5266
    %5805 = vmatprep.subr.bf16.mxu0 %v5283
    %5806 = vmatpush1.bf16.msra.mxu0 %v5282
    %5807 = vmatprep.subr.bf16.mxu0 %v5299
    %5808 = vmatpush1.bf16.msra.mxu0 %v5298
    %5809 = vmatprep.subr.bf16.mxu0 %v5315
    %5810 = vmatpush1.bf16.msra.mxu0 %v5314
    %5811 = vmatprep.subr.bf16.mxu0 %v5331
    %5812 = vmatpush1.bf16.msra.mxu0 %v5330
    %5813 = vmatprep.subr.bf16.mxu0 %v5347
    %5814 = vmatpush1.bf16.msra.mxu0 %v5346
    %5815 = vmatprep.subr.bf16.mxu0 %v5363
    %5816 = vmatpush1.bf16.msra.mxu0 %v5362
    %5817 = vmatprep.subr.bf16.mxu0 %v5379
    %5818 = vmatpush1.bf16.msra.mxu0 %v5378
    %5819 = vmatprep.subr.bf16.mxu0 %v5395
    %5820 = vmatpush1.bf16.msra.mxu0 %v5394
    %5821 = vmatprep.subr.bf16.mxu0 %v5411
    %5822 = vmatpush1.bf16.msra.mxu0 %v5410
    %5823 = vmatprep.subr.bf16.mxu0 %v5427
    %5824 = vmatpush1.bf16.msra.mxu0 %v5426
    %5825 = vmatprep.subr.bf16.mxu0 %v5443
    %5826 = vmatpush1.bf16.msra.mxu0 %v5442
    %5827 = vmatprep.subr.bf16.mxu0 %v5459
    %5828 = vmatpush1.bf16.msra.mxu0 %v5458
    %5829 = vmatprep.subr.bf16.mxu0 %v5475
    %5830 = vmatpush1.bf16.msra.mxu0 %v5474
    %5831 = vmatprep.subr.bf16.mxu0 %v5491
    %5832 = vmatpush1.bf16.msra.mxu0 %v5490
    %5833 = vmatprep.mubr.bf16.mxu0 %v4223
    %5834 = vmatmul.mubr.bf16.gmra.mrb[0].mxu0 %v4222
    %v5835 = vpop.f32.mrb[0].mxu0
    %v5836 = vadd.f32 0.0, %v5835
    %v5837 = vpop.f32.mrb[0].mxu0
    %v5838 = vadd.f32 0.0, %v5837
    %v5839 = vpop.f32.mrb[0].mxu0
    %v5840 = vpop.f32.mrb[0].mxu0
    %5841 = vdwg.mxu0
    %5842 = vmatprep.subr.bf16.mxu0 %v5253
    %5843 = vmatpush1.bf16.msra.mxu0 %v5252
    %5844 = vmatprep.subr.bf16.mxu0 %v5269
    %5845 = vmatpush1.bf16.msra.mxu0 %v5268
    %5846 = vmatprep.subr.bf16.mxu0 %v5285
    %5847 = vmatpush1.bf16.msra.mxu0 %v5284
    %5848 = vmatprep.subr.bf16.mxu0 %v5301
    %5849 = vmatpush1.bf16.msra.mxu0 %v5300
    %5850 = vmatprep.subr.bf16.mxu0 %v5317
    %5851 = vmatpush1.bf16.msra.mxu0 %v5316
    %5852 = vmatprep.subr.bf16.mxu0 %v5333
    %5853 = vmatpush1.bf16.msra.mxu0 %v5332
    %5854 = vmatprep.subr.bf16.mxu0 %v5349
    %5855 = vmatpush1.bf16.msra.mxu0 %v5348
    %5856 = vmatprep.subr.bf16.mxu0 %v5365
    %5857 = vmatpush1.bf16.msra.mxu0 %v5364
    %5858 = vmatprep.subr.bf16.mxu0 %v5381
    %5859 = vmatpush1.bf16.msra.mxu0 %v5380
    %5860 = vmatprep.subr.bf16.mxu0 %v5397
    %5861 = vmatpush1.bf16.msra.mxu0 %v5396
    %5862 = vmatprep.subr.bf16.mxu0 %v5413
    %5863 = vmatpush1.bf16.msra.mxu0 %v5412
    %5864 = vmatprep.subr.bf16.mxu0 %v5429
    %5865 = vmatpush1.bf16.msra.mxu0 %v5428
    %5866 = vmatprep.subr.bf16.mxu0 %v5445
    %5867 = vmatpush1.bf16.msra.mxu0 %v5444
    %5868 = vmatprep.subr.bf16.mxu0 %v5461
    %5869 = vmatpush1.bf16.msra.mxu0 %v5460
    %5870 = vmatprep.subr.bf16.mxu0 %v5477
    %5871 = vmatpush1.bf16.msra.mxu0 %v5476
    %5872 = vmatprep.subr.bf16.mxu0 %v5493
    %5873 = vmatpush1.bf16.msra.mxu0 %v5492
    %5874 = vmatprep.mubr.bf16.mxu0 %v4223
    %5875 = vmatmul.mubr.bf16.gmra.mrb[0].mxu0 %v4222
    %v5876 = vpop.f32.mrb[0].mxu0
    %v5877 = vadd.f32 0.0, %v5876
    %v5878 = vpop.f32.mrb[0].mxu0
    %v5879 = vadd.f32 0.0, %v5878
    %v5880 = vpop.f32.mrb[0].mxu0
    %v5881 = vpop.f32.mrb[0].mxu0
    %5882 = vdwg.mxu0
    %5883 = vmatprep.subr.bf16.mxu0 %v5255
    %5884 = vmatpush1.bf16.msra.mxu0 %v5254
    %5885 = vmatprep.subr.bf16.mxu0 %v5271
    %5886 = vmatpush1.bf16.msra.mxu0 %v5270
    %5887 = vmatprep.subr.bf16.mxu0 %v5287
    %5888 = vmatpush1.bf16.msra.mxu0 %v5286
    %5889 = vmatprep.subr.bf16.mxu0 %v5303
    %5890 = vmatpush1.bf16.msra.mxu0 %v5302
    %5891 = vmatprep.subr.bf16.mxu0 %v5319
    %5892 = vmatpush1.bf16.msra.mxu0 %v5318
    %5893 = vmatprep.subr.bf16.mxu0 %v5335
    %5894 = vmatpush1.bf16.msra.mxu0 %v5334
    %5895 = vmatprep.subr.bf16.mxu0 %v5351
    %5896 = vmatpush1.bf16.msra.mxu0 %v5350
    %5897 = vmatprep.subr.bf16.mxu0 %v5367
    %5898 = vmatpush1.bf16.msra.mxu0 %v5366
    %5899 = vmatprep.subr.bf16.mxu0 %v5383
    %5900 = vmatpush1.bf16.msra.mxu0 %v5382
    %5901 = vmatprep.subr.bf16.mxu0 %v5399
    %5902 = vmatpush1.bf16.msra.mxu0 %v5398
    %5903 = vmatprep.subr.bf16.mxu0 %v5415
    %5904 = vmatpush1.bf16.msra.mxu0 %v5414
    %5905 = vmatprep.subr.bf16.mxu0 %v5431
    %5906 = vmatpush1.bf16.msra.mxu0 %v5430
    %5907 = vmatprep.subr.bf16.mxu0 %v5447
    %5908 = vmatpush1.bf16.msra.mxu0 %v5446
    %5909 = vmatprep.subr.bf16.mxu0 %v5463
    %5910 = vmatpush1.bf16.msra.mxu0 %v5462
    %5911 = vmatprep.subr.bf16.mxu0 %v5479
    %5912 = vmatpush1.bf16.msra.mxu0 %v5478
    %5913 = vmatprep.subr.bf16.mxu0 %v5495
    %5914 = vmatpush1.bf16.msra.mxu0 %v5494
    %5915 = vmatprep.mubr.bf16.mxu0 %v4223
    %5916 = vmatmul.mubr.bf16.gmra.mrb[0].mxu0 %v4222
    %v5917 = vpop.f32.mrb[0].mxu0
    %v5918 = vadd.f32 0.0, %v5917
    %v5919 = vpop.f32.mrb[0].mxu0
    %v5920 = vadd.f32 0.0, %v5919
    %v5921 = vpop.f32.mrb[0].mxu0
    %v5922 = vpop.f32.mrb[0].mxu0
    %5923 = vdwg.mxu0
    %5924 = vmatprep.subr.bf16.mxu0 %v5257
    %5925 = vmatpush1.bf16.msra.mxu0 %v5256
    %5926 = vmatprep.subr.bf16.mxu0 %v5273
    %5927 = vmatpush1.bf16.msra.mxu0 %v5272
    %5928 = vmatprep.subr.bf16.mxu0 %v5289
    %5929 = vmatpush1.bf16.msra.mxu0 %v5288
    %5930 = vmatprep.subr.bf16.mxu0 %v5305
    %5931 = vmatpush1.bf16.msra.mxu0 %v5304
    %5932 = vmatprep.subr.bf16.mxu0 %v5321
    %5933 = vmatpush1.bf16.msra.mxu0 %v5320
    %5934 = vmatprep.subr.bf16.mxu0 %v5337
    %5935 = vmatpush1.bf16.msra.mxu0 %v5336
    %5936 = vmatprep.subr.bf16.mxu0 %v5353
    %5937 = vmatpush1.bf16.msra.mxu0 %v5352
    %5938 = vmatprep.subr.bf16.mxu0 %v5369
    %5939 = vmatpush1.bf16.msra.mxu0 %v5368
    %5940 = vmatprep.subr.bf16.mxu0 %v5385
    %5941 = vmatpush1.bf16.msra.mxu0 %v5384
    %5942 = vmatprep.subr.bf16.mxu0 %v5401
    %5943 = vmatpush1.bf16.msra.mxu0 %v5400
    %5944 = vmatprep.subr.bf16.mxu0 %v5417
    %5945 = vmatpush1.bf16.msra.mxu0 %v5416
    %5946 = vmatprep.subr.bf16.mxu0 %v5433
    %5947 = vmatpush1.bf16.msra.mxu0 %v5432
    %5948 = vmatprep.subr.bf16.mxu0 %v5449
    %5949 = vmatpush1.bf16.msra.mxu0 %v5448
    %5950 = vmatprep.subr.bf16.mxu0 %v5465
    %5951 = vmatpush1.bf16.msra.mxu0 %v5464
    %5952 = vmatprep.subr.bf16.mxu0 %v5481
    %5953 = vmatpush1.bf16.msra.mxu0 %v5480
    %5954 = vmatprep.subr.bf16.mxu0 %v5497
    %5955 = vmatpush1.bf16.msra.mxu0 %v5496
    %5956 = vmatprep.mubr.bf16.mxu0 %v4223
    %5957 = vmatmul.mubr.bf16.gmra.mrb[0].mxu0 %v4222
    %v5958 = vpop.f32.mrb[0].mxu0
    %v5959 = vadd.f32 0.0, %v5958
    %v5960 = vpop.f32.mrb[0].mxu0
    %v5961 = vadd.f32 0.0, %v5960
    %v5962 = vpop.f32.mrb[0].mxu0
    %v5963 = vpop.f32.mrb[0].mxu0
    %5964 = vdwg.mxu0
    %5965 = vmatprep.subr.bf16.mxu0 %v5259
    %5966 = vmatpush1.bf16.msra.mxu0 %v5258
    %5967 = vmatprep.subr.bf16.mxu0 %v5275
    %5968 = vmatpush1.bf16.msra.mxu0 %v5274
    %5969 = vmatprep.subr.bf16.mxu0 %v5291
    %5970 = vmatpush1.bf16.msra.mxu0 %v5290
    %5971 = vmatprep.subr.bf16.mxu0 %v5307
    %5972 = vmatpush1.bf16.msra.mxu0 %v5306
    %5973 = vmatprep.subr.bf16.mxu0 %v5323
    %5974 = vmatpush1.bf16.msra.mxu0 %v5322
    %5975 = vmatprep.subr.bf16.mxu0 %v5339
    %5976 = vmatpush1.bf16.msra.mxu0 %v5338
    %5977 = vmatprep.subr.bf16.mxu0 %v5355
    %5978 = vmatpush1.bf16.msra.mxu0 %v5354
    %5979 = vmatprep.subr.bf16.mxu0 %v5371
    %5980 = vmatpush1.bf16.msra.mxu0 %v5370
    %5981 = vmatprep.subr.bf16.mxu0 %v5387
    %5982 = vmatpush1.bf16.msra.mxu0 %v5386
    %5983 = vmatprep.subr.bf16.mxu0 %v5403
    %5984 = vmatpush1.bf16.msra.mxu0 %v5402
    %5985 = vmatprep.subr.bf16.mxu0 %v5419
    %5986 = vmatpush1.bf16.msra.mxu0 %v5418
    %5987 = vmatprep.subr.bf16.mxu0 %v5435
    %5988 = vmatpush1.bf16.msra.mxu0 %v5434
    %5989 = vmatprep.subr.bf16.mxu0 %v5451
    %5990 = vmatpush1.bf16.msra.mxu0 %v5450
    %5991 = vmatprep.subr.bf16.mxu0 %v5467
    %5992 = vmatpush1.bf16.msra.mxu0 %v5466
    %5993 = vmatprep.subr.bf16.mxu0 %v5483
    %5994 = vmatpush1.bf16.msra.mxu0 %v5482
    %5995 = vmatprep.subr.bf16.mxu0 %v5499
    %5996 = vmatpush1.bf16.msra.mxu0 %v5498
    %5997 = vmatprep.mubr.bf16.mxu0 %v4223
    %5998 = vmatmul.mubr.bf16.gmra.mrb[0].mxu0 %v4222
    %v5999 = vpop.f32.mrb[0].mxu0
    %v6000 = vadd.f32 0.0, %v5999
    %v6001 = vpop.f32.mrb[0].mxu0
    %v6002 = vadd.f32 0.0, %v6001
    %v6003 = vpop.f32.mrb[0].mxu0
    %v6004 = vpop.f32.mrb[0].mxu0
    %6005 = vdwg.mxu0
    %6006 = vmatprep.subr.bf16.mxu0 %v5261
    %6007 = vmatpush1.bf16.msra.mxu0 %v5260
    %6008 = vmatprep.subr.bf16.mxu0 %v5277
    %6009 = vmatpush1.bf16.msra.mxu0 %v5276
    %6010 = vmatprep.subr.bf16.mxu0 %v5293
    %6011 = vmatpush1.bf16.msra.mxu0 %v5292
    %6012 = vmatprep.subr.bf16.mxu0 %v5309
    %6013 = vmatpush1.bf16.msra.mxu0 %v5308
    %6014 = vmatprep.subr.bf16.mxu0 %v5325
    %6015 = vmatpush1.bf16.msra.mxu0 %v5324
    %6016 = vmatprep.subr.bf16.mxu0 %v5341
    %6017 = vmatpush1.bf16.msra.mxu0 %v5340
    %6018 = vmatprep.subr.bf16.mxu0 %v5357
    %6019 = vmatpush1.bf16.msra.mxu0 %v5356
    %6020 = vmatprep.subr.bf16.mxu0 %v5373
    %6021 = vmatpush1.bf16.msra.mxu0 %v5372
    %6022 = vmatprep.subr.bf16.mxu0 %v5389
    %6023 = vmatpush1.bf16.msra.mxu0 %v5388
    %6024 = vmatprep.subr.bf16.mxu0 %v5405
    %6025 = vmatpush1.bf16.msra.mxu0 %v5404
    %6026 = vmatprep.subr.bf16.mxu0 %v5421
    %6027 = vmatpush1.bf16.msra.mxu0 %v5420
    %6028 = vmatprep.subr.bf16.mxu0 %v5437
    %6029 = vmatpush1.bf16.msra.mxu0 %v5436
    %6030 = vmatprep.subr.bf16.mxu0 %v5453
    %6031 = vmatpush1.bf16.msra.mxu0 %v5452
    %6032 = vmatprep.subr.bf16.mxu0 %v5469
    %6033 = vmatpush1.bf16.msra.mxu0 %v5468
    %6034 = vmatprep.subr.bf16.mxu0 %v5485
    %6035 = vmatpush1.bf16.msra.mxu0 %v5484
    %6036 = vmatprep.subr.bf16.mxu0 %v5501
    %6037 = vmatpush1.bf16.msra.mxu0 %v5500
    %6038 = vmatprep.mubr.bf16.mxu0 %v4223
    %6039 = vmatmul.mubr.bf16.gmra.mrb[0].mxu0 %v4222
    %v6040 = vpop.f32.mrb[0].mxu0
    %v6041 = vadd.f32 0.0, %v6040
    %v6042 = vpop.f32.mrb[0].mxu0
    %v6043 = vadd.f32 0.0, %v6042
    %v6044 = vpop.f32.mrb[0].mxu0
    %v6045 = vpop.f32.mrb[0].mxu0
    %6046 = vdwg.mxu0
    %6047 = vmatprep.subr.bf16.mxu0 %v5263
    %6048 = vmatpush1.bf16.msra.mxu0 %v5262
    %6049 = vmatprep.subr.bf16.mxu0 %v5279
    %6050 = vmatpush1.bf16.msra.mxu0 %v5278
    %6051 = vmatprep.subr.bf16.mxu0 %v5295
    %6052 = vmatpush1.bf16.msra.mxu0 %v5294
    %6053 = vmatprep.subr.bf16.mxu0 %v5311
    %6054 = vmatpush1.bf16.msra.mxu0 %v5310
    %6055 = vmatprep.subr.bf16.mxu0 %v5327
    %6056 = vmatpush1.bf16.msra.mxu0 %v5326
    %6057 = vmatprep.subr.bf16.mxu0 %v5343
    %6058 = vmatpush1.bf16.msra.mxu0 %v5342
    %6059 = vmatprep.subr.bf16.mxu0 %v5359
    %6060 = vmatpush1.bf16.msra.mxu0 %v5358
    %6061 = vmatprep.subr.bf16.mxu0 %v5375
    %6062 = vmatpush1.bf16.msra.mxu0 %v5374
    %6063 = vmatprep.subr.bf16.mxu0 %v5391
    %6064 = vmatpush1.bf16.msra.mxu0 %v5390
    %6065 = vmatprep.subr.bf16.mxu0 %v5407
    %6066 = vmatpush1.bf16.msra.mxu0 %v5406
    %6067 = vmatprep.subr.bf16.mxu0 %v5423
    %6068 = vmatpush1.bf16.msra.mxu0 %v5422
    %6069 = vmatprep.subr.bf16.mxu0 %v5439
    %6070 = vmatpush1.bf16.msra.mxu0 %v5438
    %6071 = vmatprep.subr.bf16.mxu0 %v5455
    %6072 = vmatpush1.bf16.msra.mxu0 %v5454
    %6073 = vmatprep.subr.bf16.mxu0 %v5471
    %6074 = vmatpush1.bf16.msra.mxu0 %v5470
    %6075 = vmatprep.subr.bf16.mxu0 %v5487
    %6076 = vmatpush1.bf16.msra.mxu0 %v5486
    %6077 = vmatprep.subr.bf16.mxu0 %v5503
    %6078 = vmatpush1.bf16.msra.mxu0 %v5502
    %6079 = vmatprep.mubr.bf16.mxu0 %v4223
    %6080 = vmatmul.mubr.bf16.gmra.mrb[0].mxu0 %v4222
    %v6081 = vpop.f32.mrb[0].mxu0
    %v6082 = vadd.f32 0.0, %v6081
    %v6083 = vpop.f32.mrb[0].mxu0
    %v6084 = vadd.f32 0.0, %v6083
    %v6085 = vpop.f32.mrb[0].mxu0
    %v6086 = vpop.f32.mrb[0].mxu0
    %6087 = vdwg.mxu0
    %v6088 = vpack.c.bf16 %v5795, %v5795
    %v6089 = vpack.c.bf16 %v5797, %v5797
    %v6090 = vpack.c.bf16 %v5836, %v5836
    %v6091 = vpack.c.bf16 %v5838, %v5838
    %v6092 = vpack.c.bf16 %v5877, %v5877
    %v6093 = vpack.c.bf16 %v5879, %v5879
    %v6094 = vpack.c.bf16 %v5918, %v5918
    %v6095 = vpack.c.bf16 %v5920, %v5920
    %v6096 = vpack.c.bf16 %v5959, %v5959
    %v6097 = vpack.c.bf16 %v5961, %v5961
    %v6098 = vpack.c.bf16 %v6000, %v6000
    %v6099 = vpack.c.bf16 %v6002, %v6002
    %v6100 = vpack.c.bf16 %v6041, %v6041
    %v6101 = vpack.c.bf16 %v6043, %v6043
    %v6102 = vpack.c.bf16 %v6082, %v6082
    %v6103 = vpack.c.bf16 %v6084, %v6084
    %v6120 = vunpack.c.l.b16 %v6088
    %v6121 = vunpack.c.l.b16 %v6089
    %v6122 = vunpack.c.l.b16 %v6090
    %v6123 = vunpack.c.l.b16 %v6091
    %v6124 = vunpack.c.l.b16 %v6092
    %v6125 = vunpack.c.l.b16 %v6093
    %v6126 = vunpack.c.l.b16 %v6094
    %v6127 = vunpack.c.l.b16 %v6095
    %v6128 = vunpack.c.l.b16 %v6096
    %v6129 = vunpack.c.l.b16 %v6097
    %v6130 = vunpack.c.l.b16 %v6098
    %v6131 = vunpack.c.l.b16 %v6099
    %v6132 = vunpack.c.l.b16 %v6100
    %v6133 = vunpack.c.l.b16 %v6101
    %v6134 = vunpack.c.l.b16 %v6102
    %v6135 = vunpack.c.l.b16 %v6103
    %v6136 = vpack.c.b16 %v6121, %v6120
    %v6137 = vpack.c.b16 %v6123, %v6122
    %v6138 = vpack.c.b16 %v6125, %v6124
    %v6139 = vpack.c.b16 %v6127, %v6126
    %v6140 = vpack.c.b16 %v6129, %v6128
    %v6141 = vpack.c.b16 %v6131, %v6130
    %v6142 = vpack.c.b16 %v6133, %v6132
    %v6143 = vpack.c.b16 %v6135, %v6134
    %6152 = vst [vmem:[%s18] sm:$0xff] %v6136
    %6153 = vst [vmem:[%s18 + $0x8] sm:$0xff] %v6137
    %6154 = vst [vmem:[%s18 + $0x10] sm:$0xff] %v6138
    %6155 = vst [vmem:[%s18 + $0x18] sm:$0xff] %v6139
    %6156 = vst [vmem:[%s18 + $0x20] sm:$0xff] %v6140
    %6157 = vst [vmem:[%s18 + $0x28] sm:$0xff] %v6141
    %6158 = vst [vmem:[%s18 + $0x30] sm:$0xff] %v6142
    %6159 = vst [vmem:[%s18 + $0x38] sm:$0xff] %v6143
    %v6160 = vpack.c.bf16 %v3927, %v3927
    %v6161 = vld [vmem:[%s9] sm:$0xf]
    %v6162 = vld [vmem:[%s9 + $0x4] sm:$0xf]
    %v6163 = vld [vmem:[%s10] sm:$0x1]
    %v6165 = vlaneseq
    %v6166 = vshrl.u32 %v6165, 7
    %v6167 = vsub.s32 0, %v6166
    %v6168 = vrot.slane %v6163, %v6167
    %v6172 = vunpack.c.l.b16 %v6161
    %v6173 = vunpack.c.l.b16 %v6162
    %v6174 = vpack.c.b16 %v6173, %v6172
    %v6177 = vsel %vm4019, %v6160, 0
    %6179 = vmatprep.subr.bf16.mxu0 0
    %6180 = vmatpush1.bf16.msra.mxu0 %v6174
    %6181 = vmatprep.subr.bf16.mxu0 0
    %6182 = vmatpush1.bf16.msra.mxu0 0
    %6183 = vmatprep.subr.bf16.mxu0 0
    %6184 = vmatpush1.bf16.msra.mxu0 0
    %6185 = vmatprep.subr.bf16.mxu0 0
    %6186 = vmatpush1.bf16.msra.mxu0 0
    %6187 = vmatprep.subr.bf16.mxu0 0
    %6188 = vmatpush1.bf16.msra.mxu0 0
    %6189 = vmatprep.subr.bf16.mxu0 0
    %6190 = vmatpush1.bf16.msra.mxu0 0
    %6191 = vmatprep.subr.bf16.mxu0 0
    %6192 = vmatpush1.bf16.msra.mxu0 0
    %6193 = vmatprep.subr.bf16.mxu0 0
    %6194 = vmatpush1.bf16.msra.mxu0 0
    %6195 = vmatprep.subr.bf16.mxu0 0
    %6196 = vmatpush1.bf16.msra.mxu0 0
    %6197 = vmatprep.subr.bf16.mxu0 0
    %6198 = vmatpush1.bf16.msra.mxu0 0
    %6199 = vmatprep.subr.bf16.mxu0 0
    %6200 = vmatpush1.bf16.msra.mxu0 0
    %6201 = vmatprep.subr.bf16.mxu0 0
    %6202 = vmatpush1.bf16.msra.mxu0 0
    %6203 = vmatprep.subr.bf16.mxu0 0
    %6204 = vmatpush1.bf16.msra.mxu0 0
    %6205 = vmatprep.subr.bf16.mxu0 0
    %6206 = vmatpush1.bf16.msra.mxu0 0
    %6207 = vmatprep.subr.bf16.mxu0 0
    %6208 = vmatpush1.bf16.msra.mxu0 0
    %6209 = vmatprep.subr.bf16.mxu0 0
    %6210 = vmatpush1.bf16.msra.mxu0 0
    %6211 = vmatprep.mubr.bf16.mxu0 0
    %6212 = vmatmul.mubr.bf16.gmra.mrb[0].mxu0 %v6177
    %v6213 = vpop.f32.mrb[0].mxu0
    %v6214 = vadd.f32 %v6168, %v6213
    %v6215 = vpop.f32.mrb[0].mxu0
    %v6216 = vpop.f32.mrb[0].mxu0
    %v6217 = vpop.f32.mrb[0].mxu0
    %6218 = vdwg.mxu0
    %v6219 = vmax.f32 %v6214, 0.0
    %v6220 = vpack.c.bf16 %v6219, %v6219
    %v6221 = vld [vmem:[%s11] sm:$0xf]
    %v6222 = vld [vmem:[%s11 + $0x4] sm:$0xf]
    %v6223 = vld [vmem:[%s11 + $0x8] sm:$0xf]
    %v6224 = vld [vmem:[%s11 + $0xc] sm:$0xf]
    %v6225 = vld [vmem:[%s11 + $0x10] sm:$0xf]
    %v6226 = vld [vmem:[%s11 + $0x14] sm:$0xf]
    %v6227 = vld [vmem:[%s11 + $0x18] sm:$0xf]
    %v6228 = vld [vmem:[%s11 + $0x1c] sm:$0xf]
    %v6229 = vld [vmem:[%s11 + $0x20] sm:$0xf]
    %v6230 = vld [vmem:[%s11 + $0x24] sm:$0xf]
    %v6231 = vld [vmem:[%s11 + $0x28] sm:$0xf]
    %v6232 = vld [vmem:[%s11 + $0x2c] sm:$0xf]
    %v6233 = vld [vmem:[%s11 + $0x30] sm:$0xf]
    %v6234 = vld [vmem:[%s11 + $0x34] sm:$0xf]
    %v6235 = vld [vmem:[%s11 + $0x38] sm:$0xf]
    %v6236 = vld [vmem:[%s11 + $0x3c] sm:$0xf]
    %v6237 = vld [vmem:[%s12] sm:$0x1]
    %v6239 = vlaneseq
    %v6240 = vshrl.u32 %v6239, 7
    %v6241 = vsub.s32 0, %v6240
    %v6242 = vrot.slane %v6237, %v6241
    %v6260 = vunpack.c.l.b16 %v6221
    %v6261 = vunpack.c.l.b16 %v6222
    %v6262 = vunpack.c.l.b16 %v6223
    %v6263 = vunpack.c.l.b16 %v6224
    %v6264 = vunpack.c.l.b16 %v6225
    %v6265 = vunpack.c.l.b16 %v6226
    %v6266 = vunpack.c.l.b16 %v6227
    %v6267 = vunpack.c.l.b16 %v6228
    %v6268 = vunpack.c.l.b16 %v6229
    %v6269 = vunpack.c.l.b16 %v6230
    %v6270 = vunpack.c.l.b16 %v6231
    %v6271 = vunpack.c.l.b16 %v6232
    %v6272 = vunpack.c.l.b16 %v6233
    %v6273 = vunpack.c.l.b16 %v6234
    %v6274 = vunpack.c.l.b16 %v6235
    %v6275 = vunpack.c.l.b16 %v6236
    %v6276 = vpack.c.b16 %v6261, %v6260
    %v6277 = vpack.c.b16 %v6263, %v6262
    %v6278 = vpack.c.b16 %v6265, %v6264
    %v6279 = vpack.c.b16 %v6267, %v6266
    %v6280 = vpack.c.b16 %v6269, %v6268
    %v6281 = vpack.c.b16 %v6271, %v6270
    %v6282 = vpack.c.b16 %v6273, %v6272
    %v6283 = vpack.c.b16 %v6275, %v6274
    %6292 = vmatprep.subr.bf16.mxu0 0
    %6293 = vmatpush1.bf16.msra.mxu0 %v6276
    %6294 = vmatprep.subr.bf16.mxu0 0
    %6295 = vmatpush1.bf16.msra.mxu0 %v6277
    %6296 = vmatprep.subr.bf16.mxu0 0
    %6297 = vmatpush1.bf16.msra.mxu0 %v6278
    %6298 = vmatprep.subr.bf16.mxu0 0
    %6299 = vmatpush1.bf16.msra.mxu0 %v6279
    %6300 = vmatprep.subr.bf16.mxu0 0
    %6301 = vmatpush1.bf16.msra.mxu0 %v6280
    %6302 = vmatprep.subr.bf16.mxu0 0
    %6303 = vmatpush1.bf16.msra.mxu0 %v6281
    %6304 = vmatprep.subr.bf16.mxu0 0
    %6305 = vmatpush1.bf16.msra.mxu0 %v6282
    %6306 = vmatprep.subr.bf16.mxu0 0
    %6307 = vmatpush1.bf16.msra.mxu0 %v6283
    %6308 = vmatprep.subr.bf16.mxu0 0
    %6309 = vmatpush1.bf16.msra.mxu0 0
    %6310 = vmatprep.subr.bf16.mxu0 0
    %6311 = vmatpush1.bf16.msra.mxu0 0
    %6312 = vmatprep.subr.bf16.mxu0 0
    %6313 = vmatpush1.bf16.msra.mxu0 0
    %6314 = vmatprep.subr.bf16.mxu0 0
    %6315 = vmatpush1.bf16.msra.mxu0 0
    %6316 = vmatprep.subr.bf16.mxu0 0
    %6317 = vmatpush1.bf16.msra.mxu0 0
    %6318 = vmatprep.subr.bf16.mxu0 0
    %6319 = vmatpush1.bf16.msra.mxu0 0
    %6320 = vmatprep.subr.bf16.mxu0 0
    %6321 = vmatpush1.bf16.msra.mxu0 0
    %6322 = vmatprep.subr.bf16.mxu0 0
    %6323 = vmatpush1.bf16.msra.mxu0 0
    %6324 = vmatprep.mubr.bf16.mxu0 0
    %6325 = vmatmul.mubr.bf16.gmra.mrb[0].mxu0 %v6220
    %v6326 = vpop.f32.mrb[0].mxu0
    %v6327 = vadd.f32 %v6242, %v6326
    %v6328 = vpop.f32.mrb[0].mxu0
    %v6329 = vpop.f32.mrb[0].mxu0
    %v6330 = vpop.f32.mrb[0].mxu0
    %6331 = vdwg.mxu0
    %v6332 = vmax.f32 %v6327, 0.0
    %v6333 = vpack.c.bf16 %v6332, %v6332
    %v6334 = vld [vmem:[%s13] sm:$0xf]
    %v6335 = vld [vmem:[%s13 + $0x4] sm:$0xf]
    %v6336 = vld [vmem:[%s13 + $0x8] sm:$0xf]
    %v6337 = vld [vmem:[%s13 + $0xc] sm:$0xf]
    %v6338 = vld [vmem:[%s13 + $0x10] sm:$0xf]
    %v6339 = vld [vmem:[%s13 + $0x14] sm:$0xf]
    %v6340 = vld [vmem:[%s13 + $0x18] sm:$0xf]
    %v6341 = vld [vmem:[%s13 + $0x1c] sm:$0xf]
    %v6342 = vld [vmem:[%s13 + $0x20] sm:$0xf]
    %v6343 = vld [vmem:[%s13 + $0x24] sm:$0xf]
    %v6344 = vld [vmem:[%s13 + $0x28] sm:$0xf]
    %v6345 = vld [vmem:[%s13 + $0x2c] sm:$0xf]
    %v6346 = vld [vmem:[%s13 + $0x30] sm:$0xf]
    %v6347 = vld [vmem:[%s13 + $0x34] sm:$0xf]
    %v6348 = vld [vmem:[%s13 + $0x38] sm:$0xf]
    %v6349 = vld [vmem:[%s13 + $0x3c] sm:$0xf]
    %v6350 = vld [vmem:[%s14] sm:$0x1]
    %v6352 = vlaneseq
    %v6353 = vshrl.u32 %v6352, 7
    %v6354 = vsub.s32 0, %v6353
    %v6355 = vrot.slane %v6350, %v6354
    %v6373 = vunpack.c.l.b16 %v6334
    %v6374 = vunpack.c.l.b16 %v6335
    %v6375 = vunpack.c.l.b16 %v6336
    %v6376 = vunpack.c.l.b16 %v6337
    %v6377 = vunpack.c.l.b16 %v6338
    %v6378 = vunpack.c.l.b16 %v6339
    %v6379 = vunpack.c.l.b16 %v6340
    %v6380 = vunpack.c.l.b16 %v6341
    %v6381 = vunpack.c.l.b16 %v6342
    %v6382 = vunpack.c.l.b16 %v6343
    %v6383 = vunpack.c.l.b16 %v6344
    %v6384 = vunpack.c.l.b16 %v6345
    %v6385 = vunpack.c.l.b16 %v6346
    %v6386 = vunpack.c.l.b16 %v6347
    %v6387 = vunpack.c.l.b16 %v6348
    %v6388 = vunpack.c.l.b16 %v6349
    %v6389 = vpack.c.b16 %v6374, %v6373
    %v6390 = vpack.c.b16 %v6376, %v6375
    %v6391 = vpack.c.b16 %v6378, %v6377
    %v6392 = vpack.c.b16 %v6380, %v6379
    %v6393 = vpack.c.b16 %v6382, %v6381
    %v6394 = vpack.c.b16 %v6384, %v6383
    %v6395 = vpack.c.b16 %v6386, %v6385
    %v6396 = vpack.c.b16 %v6388, %v6387
    %6405 = vmatprep.subr.bf16.mxu0 0
    %6406 = vmatpush1.bf16.msra.mxu0 %v6389
    %6407 = vmatprep.subr.bf16.mxu0 0
    %6408 = vmatpush1.bf16.msra.mxu0 %v6390
    %6409 = vmatprep.subr.bf16.mxu0 0
    %6410 = vmatpush1.bf16.msra.mxu0 %v6391
    %6411 = vmatprep.subr.bf16.mxu0 0
    %6412 = vmatpush1.bf16.msra.mxu0 %v6392
    %6413 = vmatprep.subr.bf16.mxu0 0
    %6414 = vmatpush1.bf16.msra.mxu0 %v6393
    %6415 = vmatprep.subr.bf16.mxu0 0
    %6416 = vmatpush1.bf16.msra.mxu0 %v6394
    %6417 = vmatprep.subr.bf16.mxu0 0
    %6418 = vmatpush1.bf16.msra.mxu0 %v6395
    %6419 = vmatprep.subr.bf16.mxu0 0
    %6420 = vmatpush1.bf16.msra.mxu0 %v6396
    %6421 = vmatprep.subr.bf16.mxu0 0
    %6422 = vmatpush1.bf16.msra.mxu0 0
    %6423 = vmatprep.subr.bf16.mxu0 0
    %6424 = vmatpush1.bf16.msra.mxu0 0
    %6425 = vmatprep.subr.bf16.mxu0 0
    %6426 = vmatpush1.bf16.msra.mxu0 0
    %6427 = vmatprep.subr.bf16.mxu0 0
    %6428 = vmatpush1.bf16.msra.mxu0 0
    %6429 = vmatprep.subr.bf16.mxu0 0
    %6430 = vmatpush1.bf16.msra.mxu0 0
    %6431 = vmatprep.subr.bf16.mxu0 0
    %6432 = vmatpush1.bf16.msra.mxu0 0
    %6433 = vmatprep.subr.bf16.mxu0 0
    %6434 = vmatpush1.bf16.msra.mxu0 0
    %6435 = vmatprep.subr.bf16.mxu0 0
    %6436 = vmatpush1.bf16.msra.mxu0 0
    %6437 = vmatprep.mubr.bf16.mxu0 0
    %6438 = vmatmul.mubr.bf16.gmra.mrb[0].mxu0 %v6333
    %v6439 = vpop.f32.mrb[0].mxu0
    %v6440 = vadd.f32 %v6355, %v6439
    %v6441 = vpop.f32.mrb[0].mxu0
    %v6442 = vpop.f32.mrb[0].mxu0
    %v6443 = vpop.f32.mrb[0].mxu0
    %6444 = vdwg.mxu0
    %vm6445 = vcmask 115712
    %v6446 = vsel %vm6445, %v6440, -inf
    %6447 = vmax.xlane.f32.xlu0 %v6446
    %v6448 = vpop.xlane.xlu0 %6447
    %v6449 = vsub.f32 %v6440, %v6448
    %v6450 = vmul.f32 %v6449, 1.442695
    %v6451 = vpow.pop %v6450
    %v6452 = vsel %vm6445, %v6451, 0.0
    %6453 = vadd.xlane.f32.xlu0 %v6452
    %v6454 = vpop.xlane.xlu0 %6453
    %v6455 = vrcp.pop %v6454
    %v6456 = vmul.f32 %v6451, %v6455
    %6457 = vst.msk [vmem:[#allocation4] sm:$0x3] %vm6445, %v6456
    %6459 = vrot.lane.b32.xlu0 %v6440, 113
    %v6460 = vpop.permute.xlu0 %6459
    %vm6462 = vcmask 1024
    %6463 = vst.msk [vmem:[%s17] sm:$0x3] %vm6462, %v6460
    // Predicated region
    $region62: #{vae_policy_forward.10} parent=1 // pred_check
      _
    $region63: #{vae_policy_forward.10} parent=1 // pred_check_branch
      %6465 = sbr.rel (0) target = $region65
    $region64: #{vae_policy_forward.10} parent=1 // pred_region
      %s6467 = ssub.s32 32, 32
      %6468 = vsyncadd [#allocation3], %s6467
      %s6470 = sshll.u32 [#allocation2], 4
      %s6471 = int_to_ptr.vmem [resolvable:$true] %s6470
      %6473 = dma.vmem_to_hbm [thread:$0]  %s6471, 32, %s15, [#allocation3]
    $region65: #{vae_policy_forward.10} parent=1 // pred_fallthru
      _
    // Predicated region
    $region66: #{vae_policy_forward.10} parent=1 // pred_check
      _
    $region67: #{vae_policy_forward.10} parent=1 // pred_check_branch
      %6475 = sbr.rel (0) target = $region69
    $region68: #{vae_policy_forward.10} parent=1 // pred_region
      %s6477 = ssub.s32 32, 32
      %6478 = vsyncadd [#allocation5], %s6477
      %s6480 = sshll.u32 [#allocation4], 4
      %s6481 = int_to_ptr.vmem [resolvable:$true] %s6480
      %6483 = dma.vmem_to_hbm [thread:$0]  %s6481, 32, %s16, [#allocation5]
    $region69: #{vae_policy_forward.10} parent=1 // pred_fallthru
      _
    // Predicated region
    $region70: #{vae_policy_forward.10} parent=1 // pred_check
      _
    $region71: #{vae_policy_forward.10} parent=1 // pred_check_branch
      %6485 = sbr.rel (0) target = $region73
    $region72: #{vae_policy_forward.10} parent=1 // pred_region
      _
    $region73: #{vae_policy_forward.10} parent=1 // pred_fallthru
      _
    // Predicated region
    $region74: #{vae_policy_forward.10} parent=1 // pred_check
      _
    $region75: #{vae_policy_forward.10} parent=1 // pred_check_branch
      %6487 = sbr.rel (0) target = $region77
    $region76: #{vae_policy_forward.10} parent=1 // pred_region
      _
    $region77: #{vae_policy_forward.10} parent=1 // pred_fallthru
      _
    // Predicated region
    $region78: #{vae_policy_forward.10} parent=1 // pred_check
      _
    $region79: #{vae_policy_forward.10} parent=1 // pred_check_branch
      %6489 = sbr.rel (0) target = $region81
    $region80: #{vae_policy_forward.10} parent=1 // pred_region
      %6490 = dma.done [#allocation3], 32
    $region81: #{vae_policy_forward.10} parent=1 // pred_fallthru
      _
    // Predicated region
    $region82: #{vae_policy_forward.10} parent=1 // pred_check
      _
    $region83: #{vae_policy_forward.10} parent=1 // pred_check_branch
      %6492 = sbr.rel (0) target = $region85
    $region84: #{vae_policy_forward.10} parent=1 // pred_region
      %6493 = dma.done [#allocation5], 32
    $region85: #{vae_policy_forward.10} parent=1 // pred_fallthru
      _
    // Predicated region
    $region86: #{vae_policy_forward.10} parent=1 // pred_check
      _
    $region87: #{vae_policy_forward.10} parent=1 // pred_check_branch
      %6495 = sbr.rel (0) target = $region89
    $region88: #{vae_policy_forward.10} parent=1 // pred_region
      _
    $region89: #{vae_policy_forward.10} parent=1 // pred_fallthru
      _
    // Predicated region
    $region90: #{vae_policy_forward.10} parent=1 // pred_check
      _
    $region91: #{vae_policy_forward.10} parent=1 // pred_check_branch
      %6497 = sbr.rel (0) target = $region93
    $region92: #{vae_policy_forward.10} parent=1 // pred_region
      _
    $region93: #{vae_policy_forward.10} parent=1 // pred_fallthru
      _
    %6498 = vsyncpa [#allocation3], 1
    %6499 = vsyncpa [#allocation5], 1

// kernel: vae_policy_forward.13
$region0: #{vae_policy_forward.13}
  #allocation0 [shape = 'u32[]', space=smem, size = 0x4, offset = 0x4, fixed_abs, tag = 'smem constant byte address 0x4 - core index']
  #allocation1 [shape = 'u32[144,128]{1,0:T(1,128)}', space=vmem, size = 0x12000, scoped, tag = 'internal scratch']
  %s0 = inlined_call_operand.vmem [shape: bf16[512,32], index: 0, kind: input, shape index: {}]
  %s1 = inlined_call_operand.vmem [shape: f32[1,32], index: 1, kind: input, shape index: {}]
  %s2 = inlined_call_operand.vmem [shape: bf16[32,48], index: 2, kind: input, shape index: {}]
  %s3 = inlined_call_operand.vmem [shape: f32[512,48], index: 3, kind: output, shape index: {}]
  %s4 = sld [smem:[#allocation0]]
  $region22: #{vae_policy_forward.13} parent=0
    _
  %s6 = ssub.s32 1, %s4
  %s7 = scalar_select 0, %s6, %s4
  // Predicated region
  $region2: #{vae_policy_forward.13} parent=0 // pred_check
    _
  $region3: #{vae_policy_forward.13} parent=0 // pred_check_branch
    %9 = sbr.rel (0) target = $region5
  $region4: #{vae_policy_forward.13} parent=0 // pred_region
    _
  $region5: #{vae_policy_forward.13} parent=0 // pred_fallthru
    _
  // Predicated region
  $region6: #{vae_policy_forward.13} parent=0 // pred_check
    _
  $region7: #{vae_policy_forward.13} parent=0 // pred_check_branch
    %11 = sbr.rel (0) target = $region9
  $region8: #{vae_policy_forward.13} parent=0 // pred_region
    _
  $region9: #{vae_policy_forward.13} parent=0 // pred_fallthru
    _
  // Predicated region
  $region10: #{vae_policy_forward.13} parent=0 // pred_check
    _
  $region11: #{vae_policy_forward.13} parent=0 // pred_check_branch
    %13 = sbr.rel (0) target = $region13
  $region12: #{vae_policy_forward.13} parent=0 // pred_region
    _
  $region13: #{vae_policy_forward.13} parent=0 // pred_fallthru
    _
  %v15 = vld [vmem:[%s0] sm:$0xf]
  %v16 = vld [vmem:[%s0 + $0x4] sm:$0xf]
  %v17 = vld [vmem:[%s0 + $0x8] sm:$0xf]
  %v18 = vld [vmem:[%s0 + $0xc] sm:$0xf]
  %v19 = vld [vmem:[%s0 + $0x10] sm:$0xf]
  %v20 = vld [vmem:[%s0 + $0x14] sm:$0xf]
  %v21 = vld [vmem:[%s0 + $0x18] sm:$0xf]
  %v22 = vld [vmem:[%s0 + $0x1c] sm:$0xf]
  %v23 = vld [vmem:[%s0 + $0x20] sm:$0xf]
  %v24 = vld [vmem:[%s0 + $0x24] sm:$0xf]
  %v25 = vld [vmem:[%s0 + $0x28] sm:$0xf]
  %v26 = vld [vmem:[%s0 + $0x2c] sm:$0xf]
  %v27 = vld [vmem:[%s0 + $0x30] sm:$0xf]
  %v28 = vld [vmem:[%s0 + $0x34] sm:$0xf]
  %v29 = vld [vmem:[%s0 + $0x38] sm:$0xf]
  %v30 = vld [vmem:[%s0 + $0x3c] sm:$0xf]
  %v31 = vld [vmem:[%s0 + $0x40] sm:$0xf]
  %v32 = vld [vmem:[%s0 + $0x44] sm:$0xf]
  %v33 = vld [vmem:[%s0 + $0x48] sm:$0xf]
  %v34 = vld [vmem:[%s0 + $0x4c] sm:$0xf]
  %v35 = vld [vmem:[%s0 + $0x50] sm:$0xf]
  %v36 = vld [vmem:[%s0 + $0x54] sm:$0xf]
  %v37 = vld [vmem:[%s0 + $0x58] sm:$0xf]
  %v38 = vld [vmem:[%s0 + $0x5c] sm:$0xf]
  %v39 = vld [vmem:[%s0 + $0x60] sm:$0xf]
  %v40 = vld [vmem:[%s0 + $0x64] sm:$0xf]
  %v41 = vld [vmem:[%s0 + $0x68] sm:$0xf]
  %v42 = vld [vmem:[%s0 + $0x6c] sm:$0xf]
  %v43 = vld [vmem:[%s0 + $0x70] sm:$0xf]
  %v44 = vld [vmem:[%s0 + $0x74] sm:$0xf]
  %v45 = vld [vmem:[%s0 + $0x78] sm:$0xf]
  %v46 = vld [vmem:[%s0 + $0x7c] sm:$0xf]
  %v47 = vld [vmem:[%s0 + $0x80] sm:$0xf]
  %v48 = vld [vmem:[%s0 + $0x84] sm:$0xf]
  %v49 = vld [vmem:[%s0 + $0x88] sm:$0xf]
  %v50 = vld [vmem:[%s0 + $0x8c] sm:$0xf]
  %v51 = vld [vmem:[%s0 + $0x90] sm:$0xf]
  %v52 = vld [vmem:[%s0 + $0x94] sm:$0xf]
  %v53 = vld [vmem:[%s0 + $0x98] sm:$0xf]
  %v54 = vld [vmem:[%s0 + $0x9c] sm:$0xf]
  %v55 = vld [vmem:[%s0 + $0xa0] sm:$0xf]
  %v56 = vld [vmem:[%s0 + $0xa4] sm:$0xf]
  %v57 = vld [vmem:[%s0 + $0xa8] sm:$0xf]
  %v58 = vld [vmem:[%s0 + $0xac] sm:$0xf]
  %v59 = vld [vmem:[%s0 + $0xb0] sm:$0xf]
  %v60 = vld [vmem:[%s0 + $0xb4] sm:$0xf]
  %v61 = vld [vmem:[%s0 + $0xb8] sm:$0xf]
  %v62 = vld [vmem:[%s0 + $0xbc] sm:$0xf]
  %v63 = vld [vmem:[%s0 + $0xc0] sm:$0xf]
  %v64 = vld [vmem:[%s0 + $0xc4] sm:$0xf]
  %v65 = vld [vmem:[%s0 + $0xc8] sm:$0xf]
  %v66 = vld [vmem:[%s0 + $0xcc] sm:$0xf]
  %v67 = vld [vmem:[%s0 + $0xd0] sm:$0xf]
  %v68 = vld [vmem:[%s0 + $0xd4] sm:$0xf]
  %v69 = vld [vmem:[%s0 + $0xd8] sm:$0xf]
  %v70 = vld [vmem:[%s0 + $0xdc] sm:$0xf]
  %v71 = vld [vmem:[%s0 + $0xe0] sm:$0xf]
  %v72 = vld [vmem:[%s0 + $0xe4] sm:$0xf]
  %v73 = vld [vmem:[%s0 + $0xe8] sm:$0xf]
  %v74 = vld [vmem:[%s0 + $0xec] sm:$0xf]
  %v75 = vld [vmem:[%s0 + $0xf0] sm:$0xf]
  %v76 = vld [vmem:[%s0 + $0xf4] sm:$0xf]
  %v77 = vld [vmem:[%s0 + $0xf8] sm:$0xf]
  %v78 = vld [vmem:[%s0 + $0xfc] sm:$0xf]
  %v79 = vunpack.c.l.bf16 %v15
  %v80 = vunpack.c.l.bf16 %v16
  %v81 = vunpack.c.l.bf16 %v17
  %v82 = vunpack.c.l.bf16 %v18
  %v83 = vunpack.c.l.bf16 %v19
  %v84 = vunpack.c.l.bf16 %v20
  %v85 = vunpack.c.l.bf16 %v21
  %v86 = vunpack.c.l.bf16 %v22
  %v87 = vunpack.c.l.bf16 %v23
  %v88 = vunpack.c.l.bf16 %v24
  %v89 = vunpack.c.l.bf16 %v25
  %v90 = vunpack.c.l.bf16 %v26
  %v91 = vunpack.c.l.bf16 %v27
  %v92 = vunpack.c.l.bf16 %v28
  %v93 = vunpack.c.l.bf16 %v29
  %v94 = vunpack.c.l.bf16 %v30
  %v95 = vunpack.c.l.bf16 %v31
  %v96 = vunpack.c.l.bf16 %v32
  %v97 = vunpack.c.l.bf16 %v33
  %v98 = vunpack.c.l.bf16 %v34
  %v99 = vunpack.c.l.bf16 %v35
  %v100 = vunpack.c.l.bf16 %v36
  %v101 = vunpack.c.l.bf16 %v37
  %v102 = vunpack.c.l.bf16 %v38
  %v103 = vunpack.c.l.bf16 %v39
  %v104 = vunpack.c.l.bf16 %v40
  %v105 = vunpack.c.l.bf16 %v41
  %v106 = vunpack.c.l.bf16 %v42
  %v107 = vunpack.c.l.bf16 %v43
  %v108 = vunpack.c.l.bf16 %v44
  %v109 = vunpack.c.l.bf16 %v45
  %v110 = vunpack.c.l.bf16 %v46
  %v111 = vunpack.c.l.bf16 %v47
  %v112 = vunpack.c.l.bf16 %v48
  %v113 = vunpack.c.l.bf16 %v49
  %v114 = vunpack.c.l.bf16 %v50
  %v115 = vunpack.c.l.bf16 %v51
  %v116 = vunpack.c.l.bf16 %v52
  %v117 = vunpack.c.l.bf16 %v53
  %v118 = vunpack.c.l.bf16 %v54
  %v119 = vunpack.c.l.bf16 %v55
  %v120 = vunpack.c.l.bf16 %v56
  %v121 = vunpack.c.l.bf16 %v57
  %v122 = vunpack.c.l.bf16 %v58
  %v123 = vunpack.c.l.bf16 %v59
  %v124 = vunpack.c.l.bf16 %v60
  %v125 = vunpack.c.l.bf16 %v61
  %v126 = vunpack.c.l.bf16 %v62
  %v127 = vunpack.c.l.bf16 %v63
  %v128 = vunpack.c.l.bf16 %v64
  %v129 = vunpack.c.l.bf16 %v65
  %v130 = vunpack.c.l.bf16 %v66
  %v131 = vunpack.c.l.bf16 %v67
  %v132 = vunpack.c.l.bf16 %v68
  %v133 = vunpack.c.l.bf16 %v69
  %v134 = vunpack.c.l.bf16 %v70
  %v135 = vunpack.c.l.bf16 %v71
  %v136 = vunpack.c.l.bf16 %v72
  %v137 = vunpack.c.l.bf16 %v73
  %v138 = vunpack.c.l.bf16 %v74
  %v139 = vunpack.c.l.bf16 %v75
  %v140 = vunpack.c.l.bf16 %v76
  %v141 = vunpack.c.l.bf16 %v77
  %v142 = vunpack.c.l.bf16 %v78
  %v143 = vld [vmem:[%s1] sm:$0x1]
  %v145 = vlaneseq
  %v146 = vshrl.u32 %v145, 7
  %v147 = vsub.s32 0, %v146
  %v148 = vrot.slane %v143, %v147
  %v150 = vadd.f32 %v79, %v148
  %v151 = vadd.f32 %v80, %v148
  %v152 = vadd.f32 %v81, %v148
  %v153 = vadd.f32 %v82, %v148
  %v154 = vadd.f32 %v83, %v148
  %v155 = vadd.f32 %v84, %v148
  %v156 = vadd.f32 %v85, %v148
  %v157 = vadd.f32 %v86, %v148
  %v158 = vadd.f32 %v87, %v148
  %v159 = vadd.f32 %v88, %v148
  %v160 = vadd.f32 %v89, %v148
  %v161 = vadd.f32 %v90, %v148
  %v162 = vadd.f32 %v91, %v148
  %v163 = vadd.f32 %v92, %v148
  %v164 = vadd.f32 %v93, %v148
  %v165 = vadd.f32 %v94, %v148
  %v166 = vadd.f32 %v95, %v148
  %v167 = vadd.f32 %v96, %v148
  %v168 = vadd.f32 %v97, %v148
  %v169 = vadd.f32 %v98, %v148
  %v170 = vadd.f32 %v99, %v148
  %v171 = vadd.f32 %v100, %v148
  %v172 = vadd.f32 %v101, %v148
  %v173 = vadd.f32 %v102, %v148
  %v174 = vadd.f32 %v103, %v148
  %v175 = vadd.f32 %v104, %v148
  %v176 = vadd.f32 %v105, %v148
  %v177 = vadd.f32 %v106, %v148
  %v178 = vadd.f32 %v107, %v148
  %v179 = vadd.f32 %v108, %v148
  %v180 = vadd.f32 %v109, %v148
  %v181 = vadd.f32 %v110, %v148
  %v182 = vadd.f32 %v111, %v148
  %v183 = vadd.f32 %v112, %v148
  %v184 = vadd.f32 %v113, %v148
  %v185 = vadd.f32 %v114, %v148
  %v186 = vadd.f32 %v115, %v148
  %v187 = vadd.f32 %v116, %v148
  %v188 = vadd.f32 %v117, %v148
  %v189 = vadd.f32 %v118, %v148
  %v190 = vadd.f32 %v119, %v148
  %v191 = vadd.f32 %v120, %v148
  %v192 = vadd.f32 %v121, %v148
  %v193 = vadd.f32 %v122, %v148
  %v194 = vadd.f32 %v123, %v148
  %v195 = vadd.f32 %v124, %v148
  %v196 = vadd.f32 %v125, %v148
  %v197 = vadd.f32 %v126, %v148
  %v198 = vadd.f32 %v127, %v148
  %v199 = vadd.f32 %v128, %v148
  %v200 = vadd.f32 %v129, %v148
  %v201 = vadd.f32 %v130, %v148
  %v202 = vadd.f32 %v131, %v148
  %v203 = vadd.f32 %v132, %v148
  %v204 = vadd.f32 %v133, %v148
  %v205 = vadd.f32 %v134, %v148
  %v206 = vadd.f32 %v135, %v148
  %v207 = vadd.f32 %v136, %v148
  %v208 = vadd.f32 %v137, %v148
  %v209 = vadd.f32 %v138, %v148
  %v210 = vadd.f32 %v139, %v148
  %v211 = vadd.f32 %v140, %v148
  %v212 = vadd.f32 %v141, %v148
  %v213 = vadd.f32 %v142, %v148
  %v214 = vmax.f32 %v150, 0.0
  %v215 = vmax.f32 %v151, 0.0
  %v216 = vmax.f32 %v152, 0.0
  %v217 = vmax.f32 %v153, 0.0
  %v218 = vmax.f32 %v154, 0.0
  %v219 = vmax.f32 %v155, 0.0
  %v220 = vmax.f32 %v156, 0.0
  %v221 = vmax.f32 %v157, 0.0
  %v222 = vmax.f32 %v158, 0.0
  %v223 = vmax.f32 %v159, 0.0
  %v224 = vmax.f32 %v160, 0.0
  %v225 = vmax.f32 %v161, 0.0
  %v226 = vmax.f32 %v162, 0.0
  %v227 = vmax.f32 %v163, 0.0
  %v228 = vmax.f32 %v164, 0.0
  %v229 = vmax.f32 %v165, 0.0
  %v230 = vmax.f32 %v166, 0.0
  %v231 = vmax.f32 %v167, 0.0
  %v232 = vmax.f32 %v168, 0.0
  %v233 = vmax.f32 %v169, 0.0
  %v234 = vmax.f32 %v170, 0.0
  %v235 = vmax.f32 %v171, 0.0
  %v236 = vmax.f32 %v172, 0.0
  %v237 = vmax.f32 %v173, 0.0
  %v238 = vmax.f32 %v174, 0.0
  %v239 = vmax.f32 %v175, 0.0
  %v240 = vmax.f32 %v176, 0.0
  %v241 = vmax.f32 %v177, 0.0
  %v242 = vmax.f32 %v178, 0.0
  %v243 = vmax.f32 %v179, 0.0
  %v244 = vmax.f32 %v180, 0.0
  %v245 = vmax.f32 %v181, 0.0
  %v246 = vmax.f32 %v182, 0.0
  %v247 = vmax.f32 %v183, 0.0
  %v248 = vmax.f32 %v184, 0.0
  %v249 = vmax.f32 %v185, 0.0
  %v250 = vmax.f32 %v186, 0.0
  %v251 = vmax.f32 %v187, 0.0
  %v252 = vmax.f32 %v188, 0.0
  %v253 = vmax.f32 %v189, 0.0
  %v254 = vmax.f32 %v190, 0.0
  %v255 = vmax.f32 %v191, 0.0
  %v256 = vmax.f32 %v192, 0.0
  %v257 = vmax.f32 %v193, 0.0
  %v258 = vmax.f32 %v194, 0.0
  %v259 = vmax.f32 %v195, 0.0
  %v260 = vmax.f32 %v196, 0.0
  %v261 = vmax.f32 %v197, 0.0
  %v262 = vmax.f32 %v198, 0.0
  %v263 = vmax.f32 %v199, 0.0
  %v264 = vmax.f32 %v200, 0.0
  %v265 = vmax.f32 %v201, 0.0
  %v266 = vmax.f32 %v202, 0.0
  %v267 = vmax.f32 %v203, 0.0
  %v268 = vmax.f32 %v204, 0.0
  %v269 = vmax.f32 %v205, 0.0
  %v270 = vmax.f32 %v206, 0.0
  %v271 = vmax.f32 %v207, 0.0
  %v272 = vmax.f32 %v208, 0.0
  %v273 = vmax.f32 %v209, 0.0
  %v274 = vmax.f32 %v210, 0.0
  %v275 = vmax.f32 %v211, 0.0
  %v276 = vmax.f32 %v212, 0.0
  %v277 = vmax.f32 %v213, 0.0
  %v278 = vpack.c.bf16 %v215, %v214
  %v279 = vpack.c.bf16 %v217, %v216
  %v280 = vpack.c.bf16 %v219, %v218
  %v281 = vpack.c.bf16 %v221, %v220
  %v282 = vpack.c.bf16 %v223, %v222
  %v283 = vpack.c.bf16 %v225, %v224
  %v284 = vpack.c.bf16 %v227, %v226
  %v285 = vpack.c.bf16 %v229, %v228
  %v286 = vpack.c.bf16 %v231, %v230
  %v287 = vpack.c.bf16 %v233, %v232
  %v288 = vpack.c.bf16 %v235, %v234
  %v289 = vpack.c.bf16 %v237, %v236
  %v290 = vpack.c.bf16 %v239, %v238
  %v291 = vpack.c.bf16 %v241, %v240
  %v292 = vpack.c.bf16 %v243, %v242
  %v293 = vpack.c.bf16 %v245, %v244
  %v294 = vpack.c.bf16 %v247, %v246
  %v295 = vpack.c.bf16 %v249, %v248
  %v296 = vpack.c.bf16 %v251, %v250
  %v297 = vpack.c.bf16 %v253, %v252
  %v298 = vpack.c.bf16 %v255, %v254
  %v299 = vpack.c.bf16 %v257, %v256
  %v300 = vpack.c.bf16 %v259, %v258
  %v301 = vpack.c.bf16 %v261, %v260
  %v302 = vpack.c.bf16 %v263, %v262
  %v303 = vpack.c.bf16 %v265, %v264
  %v304 = vpack.c.bf16 %v267, %v266
  %v305 = vpack.c.bf16 %v269, %v268
  %v306 = vpack.c.bf16 %v271, %v270
  %v307 = vpack.c.bf16 %v273, %v272
  %v308 = vpack.c.bf16 %v275, %v274
  %v309 = vpack.c.bf16 %v277, %v276
  %v310 = vld [vmem:[%s2] sm:$0xf]
  %v311 = vld [vmem:[%s2 + $0x4] sm:$0xf]
  %v312 = vld [vmem:[%s2 + $0x8] sm:$0xf]
  %v313 = vld [vmem:[%s2 + $0xc] sm:$0xf]
  %v318 = vunpack.c.l.b16 %v310
  %v319 = vunpack.c.l.b16 %v311
  %v320 = vunpack.c.l.b16 %v312
  %v321 = vunpack.c.l.b16 %v313
  %v322 = vpack.c.b16 %v319, %v318
  %v323 = vpack.c.b16 %v321, %v320
  %vm326 = vcmask 261120
  %v328 = vsel %vm326, %v278, 0
  %v331 = vsel %vm326, %v279, 0
  %v334 = vsel %vm326, %v280, 0
  %v337 = vsel %vm326, %v281, 0
  %v340 = vsel %vm326, %v282, 0
  %v343 = vsel %vm326, %v283, 0
  %v346 = vsel %vm326, %v284, 0
  %v349 = vsel %vm326, %v285, 0
  %v352 = vsel %vm326, %v286, 0
  %v355 = vsel %vm326, %v287, 0
  %v358 = vsel %vm326, %v288, 0
  %v361 = vsel %vm326, %v289, 0
  %v364 = vsel %vm326, %v290, 0
  %v367 = vsel %vm326, %v291, 0
  %v370 = vsel %vm326, %v292, 0
  %v373 = vsel %vm326, %v293, 0
  %v376 = vsel %vm326, %v294, 0
  %v379 = vsel %vm326, %v295, 0
  %v382 = vsel %vm326, %v296, 0
  %v385 = vsel %vm326, %v297, 0
  %v388 = vsel %vm326, %v298, 0
  %v391 = vsel %vm326, %v299, 0
  %v394 = vsel %vm326, %v300, 0
  %v397 = vsel %vm326, %v301, 0
  %v400 = vsel %vm326, %v302, 0
  %v403 = vsel %vm326, %v303, 0
  %v406 = vsel %vm326, %v304, 0
  %v409 = vsel %vm326, %v305, 0
  %v412 = vsel %vm326, %v306, 0
  %v415 = vsel %vm326, %v307, 0
  %v418 = vsel %vm326, %v308, 0
  %v421 = vsel %vm326, %v309, 0
  %423 = vmatprep.subr.bf16.mxu0 0
  %424 = vmatpush1.bf16.msra.mxu0 %v322
  %425 = vmatprep.subr.bf16.mxu0 0
  %426 = vmatpush1.bf16.msra.mxu0 %v323
  %427 = vmatprep.subr.bf16.mxu0 0
  %428 = vmatpush1.bf16.msra.mxu0 0
  %429 = vmatprep.subr.bf16.mxu0 0
  %430 = vmatpush1.bf16.msra.mxu0 0
  %431 = vmatprep.subr.bf16.mxu0 0
  %432 = vmatpush1.bf16.msra.mxu0 0
  %433 = vmatprep.subr.bf16.mxu0 0
  %434 = vmatpush1.bf16.msra.mxu0 0
  %435 = vmatprep.subr.bf16.mxu0 0
  %436 = vmatpush1.bf16.msra.mxu0 0
  %437 = vmatprep.subr.bf16.mxu0 0
  %438 = vmatpush1.bf16.msra.mxu0 0
  %439 = vmatprep.subr.bf16.mxu0 0
  %440 = vmatpush1.bf16.msra.mxu0 0
  %441 = vmatprep.subr.bf16.mxu0 0
  %442 = vmatpush1.bf16.msra.mxu0 0
  %443 = vmatprep.subr.bf16.mxu0 0
  %444 = vmatpush1.bf16.msra.mxu0 0
  %445 = vmatprep.subr.bf16.mxu0 0
  %446 = vmatpush1.bf16.msra.mxu0 0
  %447 = vmatprep.subr.bf16.mxu0 0
  %448 = vmatpush1.bf16.msra.mxu0 0
  %449 = vmatprep.subr.bf16.mxu0 0
  %450 = vmatpush1.bf16.msra.mxu0 0
  %451 = vmatprep.subr.bf16.mxu0 0
  %452 = vmatpush1.bf16.msra.mxu0 0
  %453 = vmatprep.subr.bf16.mxu0 0
  %454 = vmatpush1.bf16.msra.mxu0 0
  %455 = vmatprep.mubr.bf16.mxu0 0
  %456 = vmatmul.mubr.bf16.gmra.mrb[0].mxu0 %v328
  %v457 = vpop.f32.mrb[0].mxu0
  %v458 = vadd.f32 0.0, %v457
  %v459 = vpop.f32.mrb[0].mxu0
  %v460 = vpop.f32.mrb[0].mxu0
  %v461 = vadd.f32 0.0, %v460
  %v462 = vpop.f32.mrb[0].mxu0
  %463 = vmatprep.mubr.bf16.mxu0 0
  %464 = vmatmul.mubr.bf16.gmra.mrb[0].mxu0 %v331
  %v465 = vpop.f32.mrb[0].mxu0
  %v466 = vadd.f32 0.0, %v465
  %v467 = vpop.f32.mrb[0].mxu0
  %v468 = vpop.f32.mrb[0].mxu0
  %v469 = vadd.f32 0.0, %v468
  %v470 = vpop.f32.mrb[0].mxu0
  %471 = vmatprep.mubr.bf16.mxu0 0
  %472 = vmatmul.mubr.bf16.gmra.mrb[0].mxu0 %v334
  %v473 = vpop.f32.mrb[0].mxu0
  %v474 = vadd.f32 0.0, %v473
  %v475 = vpop.f32.mrb[0].mxu0
  %v476 = vpop.f32.mrb[0].mxu0
  %v477 = vadd.f32 0.0, %v476
  %v478 = vpop.f32.mrb[0].mxu0
  %479 = vmatprep.mubr.bf16.mxu0 0
  %480 = vmatmul.mubr.bf16.gmra.mrb[0].mxu0 %v337
  %v481 = vpop.f32.mrb[0].mxu0
  %v482 = vadd.f32 0.0, %v481
  %v483 = vpop.f32.mrb[0].mxu0
  %v484 = vpop.f32.mrb[0].mxu0
  %v485 = vadd.f32 0.0, %v484
  %v486 = vpop.f32.mrb[0].mxu0
  %487 = vmatprep.mubr.bf16.mxu0 0
  %488 = vmatmul.mubr.bf16.gmra.mrb[0].mxu0 %v340
  %v489 = vpop.f32.mrb[0].mxu0
  %v490 = vadd.f32 0.0, %v489
  %v491 = vpop.f32.mrb[0].mxu0
  %v492 = vpop.f32.mrb[0].mxu0
  %v493 = vadd.f32 0.0, %v492
  %v494 = vpop.f32.mrb[0].mxu0
  %495 = vmatprep.mubr.bf16.mxu0 0
  %496 = vmatmul.mubr.bf16.gmra.mrb[0].mxu0 %v343
  %v497 = vpop.f32.mrb[0].mxu0
  %v498 = vadd.f32 0.0, %v497
  %v499 = vpop.f32.mrb[0].mxu0
  %v500 = vpop.f32.mrb[0].mxu0
  %v501 = vadd.f32 0.0, %v500
  %v502 = vpop.f32.mrb[0].mxu0
  %503 = vmatprep.mubr.bf16.mxu0 0
  %504 = vmatmul.mubr.bf16.gmra.mrb[0].mxu0 %v346
  %v505 = vpop.f32.mrb[0].mxu0
  %v506 = vadd.f32 0.0, %v505
  %v507 = vpop.f32.mrb[0].mxu0
  %v508 = vpop.f32.mrb[0].mxu0
  %v509 = vadd.f32 0.0, %v508
  %v510 = vpop.f32.mrb[0].mxu0
  %511 = vmatprep.mubr.bf16.mxu0 0
  %512 = vmatmul.mubr.bf16.gmra.mrb[0].mxu0 %v349
  %v513 = vpop.f32.mrb[0].mxu0
  %v514 = vadd.f32 0.0, %v513
  %v515 = vpop.f32.mrb[0].mxu0
  %v516 = vpop.f32.mrb[0].mxu0
  %v517 = vadd.f32 0.0, %v516
  %v518 = vpop.f32.mrb[0].mxu0
  %519 = vmatprep.mubr.bf16.mxu0 0
  %520 = vmatmul.mubr.bf16.gmra.mrb[0].mxu0 %v352
  %v521 = vpop.f32.mrb[0].mxu0
  %v522 = vadd.f32 0.0, %v521
  %v523 = vpop.f32.mrb[0].mxu0
  %v524 = vpop.f32.mrb[0].mxu0
  %v525 = vadd.f32 0.0, %v524
  %v526 = vpop.f32.mrb[0].mxu0
  %527 = vmatprep.mubr.bf16.mxu0 0
  %528 = vmatmul.mubr.bf16.gmra.mrb[0].mxu0 %v355
  %v529 = vpop.f32.mrb[0].mxu0
  %v530 = vadd.f32 0.0, %v529
  %v531 = vpop.f32.mrb[0].mxu0
  %v532 = vpop.f32.mrb[0].mxu0
  %v533 = vadd.f32 0.0, %v532
  %v534 = vpop.f32.mrb[0].mxu0
  %535 = vmatprep.mubr.bf16.mxu0 0
  %536 = vmatmul.mubr.bf16.gmra.mrb[0].mxu0 %v358
  %v537 = vpop.f32.mrb[0].mxu0
  %v538 = vadd.f32 0.0, %v537
  %v539 = vpop.f32.mrb[0].mxu0
  %v540 = vpop.f32.mrb[0].mxu0
  %v541 = vadd.f32 0.0, %v540
  %v542 = vpop.f32.mrb[0].mxu0
  %543 = vmatprep.mubr.bf16.mxu0 0
  %544 = vmatmul.mubr.bf16.gmra.mrb[0].mxu0 %v361
  %v545 = vpop.f32.mrb[0].mxu0
  %v546 = vadd.f32 0.0, %v545
  %v547 = vpop.f32.mrb[0].mxu0
  %v548 = vpop.f32.mrb[0].mxu0
  %v549 = vadd.f32 0.0, %v548
  %v550 = vpop.f32.mrb[0].mxu0
  %551 = vmatprep.mubr.bf16.mxu0 0
  %552 = vmatmul.mubr.bf16.gmra.mrb[0].mxu0 %v364
  %v553 = vpop.f32.mrb[0].mxu0
  %v554 = vadd.f32 0.0, %v553
  %v555 = vpop.f32.mrb[0].mxu0
  %v556 = vpop.f32.mrb[0].mxu0
  %v557 = vadd.f32 0.0, %v556
  %v558 = vpop.f32.mrb[0].mxu0
  %559 = vmatprep.mubr.bf16.mxu0 0
  %560 = vmatmul.mubr.bf16.gmra.mrb[0].mxu0 %v367
  %v561 = vpop.f32.mrb[0].mxu0
  %v562 = vadd.f32 0.0, %v561
  %v563 = vpop.f32.mrb[0].mxu0
  %v564 = vpop.f32.mrb[0].mxu0
  %v565 = vadd.f32 0.0, %v564
  %v566 = vpop.f32.mrb[0].mxu0
  %567 = vmatprep.mubr.bf16.mxu0 0
  %568 = vmatmul.mubr.bf16.gmra.mrb[0].mxu0 %v370
  %v569 = vpop.f32.mrb[0].mxu0
  %v570 = vadd.f32 0.0, %v569
  %v571 = vpop.f32.mrb[0].mxu0
  %v572 = vpop.f32.mrb[0].mxu0
  %v573 = vadd.f32 0.0, %v572
  %v574 = vpop.f32.mrb[0].mxu0
  %575 = vmatprep.mubr.bf16.mxu0 0
  %576 = vmatmul.mubr.bf16.gmra.mrb[0].mxu0 %v373
  %v577 = vpop.f32.mrb[0].mxu0
  %v578 = vadd.f32 0.0, %v577
  %v579 = vpop.f32.mrb[0].mxu0
  %v580 = vpop.f32.mrb[0].mxu0
  %v581 = vadd.f32 0.0, %v580
  %v582 = vpop.f32.mrb[0].mxu0
  %583 = vmatprep.mubr.bf16.mxu0 0
  %584 = vmatmul.mubr.bf16.gmra.mrb[0].mxu0 %v376
  %v585 = vpop.f32.mrb[0].mxu0
  %v586 = vadd.f32 0.0, %v585
  %v587 = vpop.f32.mrb[0].mxu0
  %v588 = vpop.f32.mrb[0].mxu0
  %v589 = vadd.f32 0.0, %v588
  %v590 = vpop.f32.mrb[0].mxu0
  %591 = vmatprep.mubr.bf16.mxu0 0
  %592 = vmatmul.mubr.bf16.gmra.mrb[0].mxu0 %v379
  %v593 = vpop.f32.mrb[0].mxu0
  %v594 = vadd.f32 0.0, %v593
  %v595 = vpop.f32.mrb[0].mxu0
  %v596 = vpop.f32.mrb[0].mxu0
  %v597 = vadd.f32 0.0, %v596
  %v598 = vpop.f32.mrb[0].mxu0
  %599 = vmatprep.mubr.bf16.mxu0 0
  %600 = vmatmul.mubr.bf16.gmra.mrb[0].mxu0 %v382
  %v601 = vpop.f32.mrb[0].mxu0
  %v602 = vadd.f32 0.0, %v601
  %v603 = vpop.f32.mrb[0].mxu0
  %v604 = vpop.f32.mrb[0].mxu0
  %v605 = vadd.f32 0.0, %v604
  %v606 = vpop.f32.mrb[0].mxu0
  %607 = vmatprep.mubr.bf16.mxu0 0
  %608 = vmatmul.mubr.bf16.gmra.mrb[0].mxu0 %v385
  %v609 = vpop.f32.mrb[0].mxu0
  %v610 = vadd.f32 0.0, %v609
  %v611 = vpop.f32.mrb[0].mxu0
  %v612 = vpop.f32.mrb[0].mxu0
  %v613 = vadd.f32 0.0, %v612
  %v614 = vpop.f32.mrb[0].mxu0
  %615 = vmatprep.mubr.bf16.mxu0 0
  %616 = vmatmul.mubr.bf16.gmra.mrb[0].mxu0 %v388
  %v617 = vpop.f32.mrb[0].mxu0
  %v618 = vadd.f32 0.0, %v617
  %v619 = vpop.f32.mrb[0].mxu0
  %v620 = vpop.f32.mrb[0].mxu0
  %v621 = vadd.f32 0.0, %v620
  %v622 = vpop.f32.mrb[0].mxu0
  %623 = vmatprep.mubr.bf16.mxu0 0
  %624 = vmatmul.mubr.bf16.gmra.mrb[0].mxu0 %v391
  %v625 = vpop.f32.mrb[0].mxu0
  %v626 = vadd.f32 0.0, %v625
  %v627 = vpop.f32.mrb[0].mxu0
  %v628 = vpop.f32.mrb[0].mxu0
  %v629 = vadd.f32 0.0, %v628
  %v630 = vpop.f32.mrb[0].mxu0
  %631 = vmatprep.mubr.bf16.mxu0 0
  %632 = vmatmul.mubr.bf16.gmra.mrb[0].mxu0 %v394
  %v633 = vpop.f32.mrb[0].mxu0
  %v634 = vadd.f32 0.0, %v633
  %v635 = vpop.f32.mrb[0].mxu0
  %v636 = vpop.f32.mrb[0].mxu0
  %v637 = vadd.f32 0.0, %v636
  %v638 = vpop.f32.mrb[0].mxu0
  %639 = vmatprep.mubr.bf16.mxu0 0
  %640 = vmatmul.mubr.bf16.gmra.mrb[0].mxu0 %v397
  %v641 = vpop.f32.mrb[0].mxu0
  %v642 = vadd.f32 0.0, %v641
  %v643 = vpop.f32.mrb[0].mxu0
  %v644 = vpop.f32.mrb[0].mxu0
  %v645 = vadd.f32 0.0, %v644
  %v646 = vpop.f32.mrb[0].mxu0
  %647 = vmatprep.mubr.bf16.mxu0 0
  %648 = vmatmul.mubr.bf16.gmra.mrb[0].mxu0 %v400
  %v649 = vpop.f32.mrb[0].mxu0
  %v650 = vadd.f32 0.0, %v649
  %v651 = vpop.f32.mrb[0].mxu0
  %v652 = vpop.f32.mrb[0].mxu0
  %v653 = vadd.f32 0.0, %v652
  %v654 = vpop.f32.mrb[0].mxu0
  %655 = vmatprep.mubr.bf16.mxu0 0
  %656 = vmatmul.mubr.bf16.gmra.mrb[0].mxu0 %v403
  %v657 = vpop.f32.mrb[0].mxu0
  %v658 = vadd.f32 0.0, %v657
  %v659 = vpop.f32.mrb[0].mxu0
  %v660 = vpop.f32.mrb[0].mxu0
  %v661 = vadd.f32 0.0, %v660
  %v662 = vpop.f32.mrb[0].mxu0
  %663 = vmatprep.mubr.bf16.mxu0 0
  %664 = vmatmul.mubr.bf16.gmra.mrb[0].mxu0 %v406
  %v665 = vpop.f32.mrb[0].mxu0
  %v666 = vadd.f32 0.0, %v665
  %v667 = vpop.f32.mrb[0].mxu0
  %v668 = vpop.f32.mrb[0].mxu0
  %v669 = vadd.f32 0.0, %v668
  %v670 = vpop.f32.mrb[0].mxu0
  %671 = vmatprep.mubr.bf16.mxu0 0
  %672 = vmatmul.mubr.bf16.gmra.mrb[0].mxu0 %v409
  %v673 = vpop.f32.mrb[0].mxu0
  %v674 = vadd.f32 0.0, %v673
  %v675 = vpop.f32.mrb[0].mxu0
  %v676 = vpop.f32.mrb[0].mxu0
  %v677 = vadd.f32 0.0, %v676
  %v678 = vpop.f32.mrb[0].mxu0
  %679 = vmatprep.mubr.bf16.mxu0 0
  %680 = vmatmul.mubr.bf16.gmra.mrb[0].mxu0 %v412
  %v681 = vpop.f32.mrb[0].mxu0
  %v682 = vadd.f32 0.0, %v681
  %v683 = vpop.f32.mrb[0].mxu0
  %v684 = vpop.f32.mrb[0].mxu0
  %v685 = vadd.f32 0.0, %v684
  %v686 = vpop.f32.mrb[0].mxu0
  %687 = vmatprep.mubr.bf16.mxu0 0
  %688 = vmatmul.mubr.bf16.gmra.mrb[0].mxu0 %v415
  %v689 = vpop.f32.mrb[0].mxu0
  %v690 = vadd.f32 0.0, %v689
  %v691 = vpop.f32.mrb[0].mxu0
  %v692 = vpop.f32.mrb[0].mxu0
  %v693 = vadd.f32 0.0, %v692
  %v694 = vpop.f32.mrb[0].mxu0
  %695 = vmatprep.mubr.bf16.mxu0 0
  %696 = vmatmul.mubr.bf16.gmra.mrb[0].mxu0 %v418
  %v697 = vpop.f32.mrb[0].mxu0
  %v698 = vadd.f32 0.0, %v697
  %v699 = vpop.f32.mrb[0].mxu0
  %v700 = vpop.f32.mrb[0].mxu0
  %v701 = vadd.f32 0.0, %v700
  %v702 = vpop.f32.mrb[0].mxu0
  %703 = vmatprep.mubr.bf16.mxu0 0
  %704 = vmatmul.mubr.bf16.gmra.mrb[0].mxu0 %v421
  %v705 = vpop.f32.mrb[0].mxu0
  %v706 = vadd.f32 0.0, %v705
  %v707 = vpop.f32.mrb[0].mxu0
  %v708 = vpop.f32.mrb[0].mxu0
  %v709 = vadd.f32 0.0, %v708
  %v710 = vpop.f32.mrb[0].mxu0
  %711 = vdwg.mxu0
  %vm712 = vcmask 392192
  %713 = vst.msk [vmem:[%s3] sm:$0xff] %vm712, %v458
  %714 = vst.msk [vmem:[%s3 + $0x8] sm:$0xff] %vm712, %v461
  %715 = vst.msk [vmem:[%s3 + $0x10] sm:$0xff] %vm712, %v466
  %716 = vst.msk [vmem:[%s3 + $0x18] sm:$0xff] %vm712, %v469
  %717 = vst.msk [vmem:[%s3 + $0x20] sm:$0xff] %vm712, %v474
  %718 = vst.msk [vmem:[%s3 + $0x28] sm:$0xff] %vm712, %v477
  %719 = vst.msk [vmem:[%s3 + $0x30] sm:$0xff] %vm712, %v482
  %720 = vst.msk [vmem:[%s3 + $0x38] sm:$0xff] %vm712, %v485
  %721 = vst.msk [vmem:[%s3 + $0x40] sm:$0xff] %vm712, %v490
  %722 = vst.msk [vmem:[%s3 + $0x48] sm:$0xff] %vm712, %v493
  %723 = vst.msk [vmem:[%s3 + $0x50] sm:$0xff] %vm712, %v498
  %724 = vst.msk [vmem:[%s3 + $0x58] sm:$0xff] %vm712, %v501
  %725 = vst.msk [vmem:[%s3 + $0x60] sm:$0xff] %vm712, %v506
  %726 = vst.msk [vmem:[%s3 + $0x68] sm:$0xff] %vm712, %v509
  %727 = vst.msk [vmem:[%s3 + $0x70] sm:$0xff] %vm712, %v514
  %728 = vst.msk [vmem:[%s3 + $0x78] sm:$0xff] %vm712, %v517
  %729 = vst.msk [vmem:[%s3 + $0x80] sm:$0xff] %vm712, %v522
  %730 = vst.msk [vmem:[%s3 + $0x88] sm:$0xff] %vm712, %v525
  %731 = vst.msk [vmem:[%s3 + $0x90] sm:$0xff] %vm712, %v530
  %732 = vst.msk [vmem:[%s3 + $0x98] sm:$0xff] %vm712, %v533
  %733 = vst.msk [vmem:[%s3 + $0xa0] sm:$0xff] %vm712, %v538
  %734 = vst.msk [vmem:[%s3 + $0xa8] sm:$0xff] %vm712, %v541
  %735 = vst.msk [vmem:[%s3 + $0xb0] sm:$0xff] %vm712, %v546
  %736 = vst.msk [vmem:[%s3 + $0xb8] sm:$0xff] %vm712, %v549
  %737 = vst.msk [vmem:[%s3 + $0xc0] sm:$0xff] %vm712, %v554
  %738 = vst.msk [vmem:[%s3 + $0xc8] sm:$0xff] %vm712, %v557
  %739 = vst.msk [vmem:[%s3 + $0xd0] sm:$0xff] %vm712, %v562
  %740 = vst.msk [vmem:[%s3 + $0xd8] sm:$0xff] %vm712, %v565
  %741 = vst.msk [vmem:[%s3 + $0xe0] sm:$0xff] %vm712, %v570
  %742 = vst.msk [vmem:[%s3 + $0xe8] sm:$0xff] %vm712, %v573
  %743 = vst.msk [vmem:[%s3 + $0xf0] sm:$0xff] %vm712, %v578
  %744 = vst.msk [vmem:[%s3 + $0xf8] sm:$0xff] %vm712, %v581
  %745 = vst.msk [vmem:[%s3 + $0x100] sm:$0xff] %vm712, %v586
  %746 = vst.msk [vmem:[%s3 + $0x108] sm:$0xff] %vm712, %v589
  %747 = vst.msk [vmem:[%s3 + $0x110] sm:$0xff] %vm712, %v594
  %748 = vst.msk [vmem:[%s3 + $0x118] sm:$0xff] %vm712, %v597
  %749 = vst.msk [vmem:[%s3 + $0x120] sm:$0xff] %vm712, %v602
  %750 = vst.msk [vmem:[%s3 + $0x128] sm:$0xff] %vm712, %v605
  %751 = vst.msk [vmem:[%s3 + $0x130] sm:$0xff] %vm712, %v610
  %752 = vst.msk [vmem:[%s3 + $0x138] sm:$0xff] %vm712, %v613
  %753 = vst.msk [vmem:[%s3 + $0x140] sm:$0xff] %vm712, %v618
  %754 = vst.msk [vmem:[%s3 + $0x148] sm:$0xff] %vm712, %v621
  %755 = vst.msk [vmem:[%s3 + $0x150] sm:$0xff] %vm712, %v626
  %756 = vst.msk [vmem:[%s3 + $0x158] sm:$0xff] %vm712, %v629
  %757 = vst.msk [vmem:[%s3 + $0x160] sm:$0xff] %vm712, %v634
  %758 = vst.msk [vmem:[%s3 + $0x168] sm:$0xff] %vm712, %v637
  %759 = vst.msk [vmem:[%s3 + $0x170] sm:$0xff] %vm712, %v642
  %760 = vst.msk [vmem:[%s3 + $0x178] sm:$0xff] %vm712, %v645
  %761 = vst.msk [vmem:[%s3 + $0x180] sm:$0xff] %vm712, %v650
  %762 = vst.msk [vmem:[%s3 + $0x188] sm:$0xff] %vm712, %v653
  %763 = vst.msk [vmem:[%s3 + $0x190] sm:$0xff] %vm712, %v658
  %764 = vst.msk [vmem:[%s3 + $0x198] sm:$0xff] %vm712, %v661
  %765 = vst.msk [vmem:[%s3 + $0x1a0] sm:$0xff] %vm712, %v666
  %766 = vst.msk [vmem:[%s3 + $0x1a8] sm:$0xff] %vm712, %v669
  %767 = vst.msk [vmem:[%s3 + $0x1b0] sm:$0xff] %vm712, %v674
  %768 = vst.msk [vmem:[%s3 + $0x1b8] sm:$0xff] %vm712, %v677
  %769 = vst.msk [vmem:[%s3 + $0x1c0] sm:$0xff] %vm712, %v682
  %770 = vst.msk [vmem:[%s3 + $0x1c8] sm:$0xff] %vm712, %v685
  %771 = vst.msk [vmem:[%s3 + $0x1d0] sm:$0xff] %vm712, %v690
  %772 = vst.msk [vmem:[%s3 + $0x1d8] sm:$0xff] %vm712, %v693
  %773 = vst.msk [vmem:[%s3 + $0x1e0] sm:$0xff] %vm712, %v698
  %774 = vst.msk [vmem:[%s3 + $0x1e8] sm:$0xff] %vm712, %v701
  %775 = vst.msk [vmem:[%s3 + $0x1f0] sm:$0xff] %vm712, %v706
  %776 = vst.msk [vmem:[%s3 + $0x1f8] sm:$0xff] %vm712, %v709
  // Predicated region
  $region14: #{vae_policy_forward.13} parent=0 // pred_check
    _
  $region15: #{vae_policy_forward.13} parent=0 // pred_check_branch
    %778 = sbr.rel (0) target = $region17
  $region16: #{vae_policy_forward.13} parent=0 // pred_region
    _
  $region17: #{vae_policy_forward.13} parent=0 // pred_fallthru
    _
  // Predicated region
  $region18: #{vae_policy_forward.13} parent=0 // pred_check
    _
  $region19: #{vae_policy_forward.13} parent=0 // pred_check_branch
    %780 = sbr.rel (0) target = $region21
  $region20: #{vae_policy_forward.13} parent=0 // pred_region
    _
  $region21: #{vae_policy_forward.13} parent=0 // pred_fallthru
    _

</llo_original>
